<compile_context>
chip_gen: v5e
topology: v5e:2x2
jax: 0.10.0
libtpu: 0.0.40
codegen_flags: <defaults>
</compile_context>

<pallas_src>
import functools

import jax
import jax.numpy as jnp
from jax.experimental import pallas as pl
from jax.experimental.pallas import tpu as pltpu

ACT_DTYPE = jnp.bfloat16   # HBM / MXU-input dtype; accumulation stays f32.


# ---------------------------------------------------------------------------
# In-kernel helpers (values / refs inside a pallas_call body).
# In-kernel value plumbing is kept in f32 (safest lowering path); bf16 is used
# on the HBM side and at the MXU inputs.
# ---------------------------------------------------------------------------
def _leaky(x):
    return jnp.where(x >= 0.0, x, 0.1 * x)


def _pad_rows(v, pad):
    """Zero-pad a (L, C) value with `pad` rows on both ends."""
    if pad == 0:
        return v
    z = jnp.zeros((pad, v.shape[1]), v.dtype)
    return jnp.concatenate([z, v, z], axis=0)


def _im2col_value(v, k, lo, dilation=1):
    """Stack K dilated taps of a padded (Lp, C) value into (lo, K*C)."""
    taps = [v[t * dilation:t * dilation + lo, :] for t in range(k)]
    return taps[0] if k == 1 else jnp.concatenate(taps, axis=-1)


def _im2col_ref(ref, k, lo, stride, dilation=1):
    """Stack K (possibly strided) taps of a padded (Lp, C) ref into (lo, K*C)."""
    taps = []
    for t in range(k):
        if stride == 1:
            taps.append(ref[pl.ds(t * dilation, lo), :])
        else:
            taps.append(ref[pl.ds(t * dilation, lo, stride), :])
    return taps[0] if k == 1 else jnp.concatenate(taps, axis=-1)


def _conv_mm(cols, w_ref, b_ref, act):
    """(lo, K*Cin) @ (K*Cin, Cout) on the MXU (bf16 in, f32 acc) + bias + act."""
    acc = jnp.dot(cols.astype(ACT_DTYPE), w_ref[...],
                  preferred_element_type=jnp.float32)
    acc = acc + b_ref[...]
    if act == "leaky":
        acc = _leaky(acc)
    elif act == "tanh":
        acc = jnp.tanh(acc)
    return acc


# ---------------------------------------------------------------------------
# Weight preparation (PyTorch layouts -> im2col (K*Cin, Cout) bf16 matrices).
# ---------------------------------------------------------------------------
def _prep_conv_w(w_oik):
    """Conv1d weight (Cout, Cin, K) -> (K*Cin, Cout)."""
    cout, cin, k = w_oik.shape
    return jnp.transpose(w_oik, (2, 1, 0)).reshape(k * cin, cout).astype(ACT_DTYPE)


def _prep_tconv_w(w_iok):
    """ConvTranspose1d weight (Cin, Cout, K) -> flipped (K*Cin, Cout)."""
    cin, cout, k = w_iok.shape
    w = jnp.flip(jnp.transpose(w_iok, (2, 0, 1)), axis=0)   # (K, Cin, Cout)
    return w.reshape(k * cin, cout).astype(ACT_DTYPE)


def _prep_bias(b):
    return b.reshape(1, -1).astype(jnp.float32)


def _wspec(w):
    return pl.BlockSpec(w.shape, lambda b: (0, 0))


# ---------------------------------------------------------------------------
# Fused DownBlock: pre (dilated) + post (dilated) + strided down conv.
# ---------------------------------------------------------------------------
def down_block(x, p, *, stride, dilation):
    """x: (B, L, Cin) bf16.  Returns (down (B, Ld, Oc), short (B, L1, Sc))."""
    B, L, Cin = x.shape
    k = p["pre"][0].shape[2]
    wp, bp = _prep_conv_w(p["pre"][0]), _prep_bias(p["pre"][1])
    wq, bq = _prep_conv_w(p["post"][0]), _prep_bias(p["post"][1])
    wd, bd = _prep_conv_w(p["down"][0]), _prep_bias(p["down"][1])
    Sc, Oc = wp.shape[1], wq.shape[1]

    pad_d = dilation * (k // 2)                 # padding of pre/post convs
    pad_1 = k // 2                              # padding of the strided down conv
    L1 = L + 2 * pad_d - dilation * (k - 1)     # pre-conv length  (== L, odd k)
    L2 = L1 + 2 * pad_d - dilation * (k - 1)    # post-conv length (== L, odd k)
    Ld = (L2 + 2 * pad_1 - k) // stride + 1     # down-conv length
    L_scr = L2 + 2 * pad_1                      # padded VMEM buffer for strided taps

    def kernel(x_ref, wp_ref, bp_ref, wq_ref, bq_ref, wd_ref, bd_ref,
               down_ref, short_ref, mid_scr):
        # ---- pre conv (dilated, stride 1) -------------------------------
        xv = x_ref[...].astype(jnp.float32)
        cols = _im2col_value(_pad_rows(xv, pad_d), k, L1, dilation)
        short = _conv_mm(cols, wp_ref, bp_ref, "leaky")
        short_ref[...] = short.astype(short_ref.dtype)
        # ---- post conv (dilated, stride 1) ------------------------------
        cols = _im2col_value(_pad_rows(short, pad_d), k, L2, dilation)
        mid = _conv_mm(cols, wq_ref, bq_ref, "leaky")
        # keep the zero-padded intermediate in VMEM scratch for strided reads
        if pad_1:
            zeros = jnp.zeros((pad_1, Oc), mid_scr.dtype)
            mid_scr[pl.ds(0, pad_1), :] = zeros
            mid_scr[pl.ds(pad_1 + L2, pad_1), :] = zeros
        mid_scr[pl.ds(pad_1, L2), :] = mid
        # ---- down conv: strided taps, no compute-then-decimate ----------
        cols = _im2col_ref(mid_scr, k, Ld, stride)
        down = _conv_mm(cols, wd_ref, bd_ref, "leaky")
        down_ref[...] = down.astype(down_ref.dtype)

    down, short = pl.pallas_call(
        kernel,
        out_shape=(jax.ShapeDtypeStruct((B, Ld, Oc), ACT_DTYPE),
                   jax.ShapeDtypeStruct((B, L1, Sc), ACT_DTYPE)),
        grid_spec=pltpu.PrefetchScalarGridSpec(
            num_scalar_prefetch=0,
            grid=(B,),
            in_specs=[
                pl.BlockSpec((None, L, Cin), lambda b: (b, 0, 0)),
                _wspec(wp), _wspec(bp), _wspec(wq), _wspec(bq),
                _wspec(wd), _wspec(bd),
            ],
            out_specs=(pl.BlockSpec((None, Ld, Oc), lambda b: (b, 0, 0)),
                       pl.BlockSpec((None, L1, Sc), lambda b: (b, 0, 0))),
            scratch_shapes=[pltpu.VMEM((L_scr, Oc), jnp.float32)],
        ),
        compiler_params=pltpu.CompilerParams(
            dimension_semantics=("parallel",)),
    )(x, wp, bp, wq, bq, wd, bd)
    return down, short


# ---------------------------------------------------------------------------
# Fused UpBlock: transposed conv + pre conv + center-crop + post conv (split
# weights instead of a channel concatenate).
# ---------------------------------------------------------------------------
def up_block(x, shortcut, p, *, stride):
    """x: (B, Lx, Ci) bf16; shortcut: (B, Lsc, Sc) bf16 -> (B, Lo, Oc) bf16."""
    B, Lx, Ci = x.shape
    _, Lsc, Sc = shortcut.shape
    k = p["up"][0].shape[2]
    wu, bu = _prep_tconv_w(p["up"][0]), _prep_bias(p["up"][1])
    wpre, bpre = _prep_conv_w(p["pre"][0]), _prep_bias(p["pre"][1])
    w_post, b_post = p["post"]
    Oc = w_post.shape[0]
    # split the post-conv weight along input channels: shortcut part / upsampled part
    wps = _prep_conv_w(w_post[:, :Sc, :])     # (K*Sc, Oc)
    wpu = _prep_conv_w(w_post[:, Sc:, :])     # (K*Oc, Oc)
    bpo = _prep_bias(b_post)

    pad = k // 2
    edge = k - 1 - pad                          # conv padding of the stuffed input
    lup = (Lx - 1) * stride + 1                 # zero-stuffed length
    Lo = lup + 2 * edge - (k - 1)               # trans/pre/post output length
    off = (Lsc - Lo) // 2                       # center-crop offset into shortcut

    def kernel(x_ref, sc_ref, wu_ref, bu_ref, wpre_ref, bpre_ref,
               wps_ref, wpu_ref, bpo_ref, o_ref):
        # ---- transposed conv: zero-stuff in VMEM, conv with flipped kernel
        xv = x_ref[...].astype(jnp.float32)                   # (Lx, Ci)
        if stride > 1:
            wide = jnp.concatenate(
                [xv[:, None, :],
                 jnp.zeros((Lx, stride - 1, Ci), jnp.float32)], axis=1)
            stuffed = wide.reshape(Lx * stride, Ci)[:lup, :]
        else:
            stuffed = xv
        cols = _im2col_value(_pad_rows(stuffed, edge), k, Lo)
        up = _conv_mm(cols, wu_ref, bu_ref, "leaky")
        # ---- pre conv ----------------------------------------------------
        cols = _im2col_value(_pad_rows(up, pad), k, Lo)
        pre = _conv_mm(cols, wpre_ref, bpre_ref, "leaky")
        # ---- center crop + post conv (two accumulated matmuls) -----------
        sc = sc_ref[pl.ds(off, Lo), :].astype(jnp.float32)
        cols_s = _im2col_value(_pad_rows(sc, pad), k, Lo)
        cols_u = _im2col_value(_pad_rows(pre, pad), k, Lo)
        acc = jnp.dot(cols_s.astype(ACT_DTYPE), wps_ref[...],
                      preferred_element_type=jnp.float32)
        acc = acc + jnp.dot(cols_u.astype(ACT_DTYPE), wpu_ref[...],
                            preferred_element_type=jnp.float32)
        acc = _leaky(acc + bpo_ref[...])
        o_ref[...] = acc.astype(o_ref.dtype)

    return pl.pallas_call(
        kernel,
        out_shape=jax.ShapeDtypeStruct((B, Lo, Oc), ACT_DTYPE),
        grid_spec=pltpu.PrefetchScalarGridSpec(
            num_scalar_prefetch=0,
            grid=(B,),
            in_specs=[
                pl.BlockSpec((None, Lx, Ci), lambda b: (b, 0, 0)),
                pl.BlockSpec((None, Lsc, Sc), lambda b: (b, 0, 0)),
                _wspec(wu), _wspec(bu), _wspec(wpre), _wspec(bpre),
                _wspec(wps), _wspec(wpu), _wspec(bpo),
            ],
            out_specs=pl.BlockSpec((None, Lo, Oc), lambda b: (b, 0, 0)),
        ),
        compiler_params=pltpu.CompilerParams(
            dimension_semantics=("parallel",)),
    )(x, shortcut, wu, bu, wpre, bpre, wps, wpu, bpo)


# ---------------------------------------------------------------------------
# Single fused conv (+ activation), stride 1 (center conv and final 1x1+Tanh).
# ---------------------------------------------------------------------------
def conv_block(x, w_oik, b, *, dilation=1, act="leaky", out_dtype=None):
    B, L, Cin = x.shape
    k = w_oik.shape[2]
    w, bb = _prep_conv_w(w_oik), _prep_bias(b)
    Cout = w.shape[1]
    pad = dilation * (k // 2)
    Lo = L + 2 * pad - dilation * (k - 1)
    out_dtype = ACT_DTYPE if out_dtype is None else out_dtype

    def kernel(x_ref, w_ref, b_ref, o_ref):
        xv = x_ref[...].astype(jnp.float32)
        cols = _im2col_value(_pad_rows(xv, pad), k, Lo, dilation)
        o_ref[...] = _conv_mm(cols, w_ref, b_ref, act).astype(o_ref.dtype)

    return pl.pallas_call(
        kernel,
        out_shape=jax.ShapeDtypeStruct((B, Lo, Cout), out_dtype),
        grid_spec=pltpu.PrefetchScalarGridSpec(
            num_scalar_prefetch=0,
            grid=(B,),
            in_specs=[pl.BlockSpec((None, L, Cin), lambda b: (b, 0, 0)),
                      _wspec(w), _wspec(bb)],
            out_specs=pl.BlockSpec((None, Lo, Cout), lambda b: (b, 0, 0)),
        ),
        compiler_params=pltpu.CompilerParams(
            dimension_semantics=("parallel",)),
    )(x, w, bb)


# ---------------------------------------------------------------------------
# Deterministic parameter init (shapes follow WaveUNet.__init__).
# ---------------------------------------------------------------------------
def _init_conv(key, cin, cout, k):
    kw, kb = jax.random.split(key)
    w = jax.random.normal(kw, (cout, cin, k), jnp.float32) * (2.0 / (cin * k)) ** 0.5
    b = 0.01 * jax.random.normal(kb, (cout,), jnp.float32)
    return w, b


def _init_trans_conv(key, cin, cout, k):
    kw, kb = jax.random.split(key)
    w = jax.random.normal(kw, (cin, cout, k), jnp.float32) * (2.0 / (cout * k)) ** 0.5
    b = 0.01 * jax.random.normal(kb, (cout,), jnp.float32)
    return w, b


def init_wave_unet(key, *, layers, ch_in, ch_out, fd, fu, num_chs):
    in_chs = [num_chs * 2 ** i for i in range(layers + 1)]
    out_chs = in_chs[::-1]
    ki = iter(jax.random.split(key, 6 * layers + 2))
    params = {}
    for i in range(layers):
        ic = ch_in if i == 0 else in_chs[i]
        sc = in_chs[i]
        oc = in_chs[i + 1]
        params[f"down_{i}"] = dict(
            pre=_init_conv(next(ki), ic, sc, fd),
            post=_init_conv(next(ki), sc, oc, fd),
            down=_init_conv(next(ki), oc, oc, fd),
        )
    params["center"] = _init_conv(next(ki), in_chs[-1], out_chs[0], fd)
    for i in range(layers):
        ic = out_chs[i]
        sc = out_chs[i + 1]
        oc = out_chs[i + 1]
        params[f"up_{i}"] = dict(
            up=_init_trans_conv(next(ki), ic, ic, fu),
            pre=_init_conv(next(ki), ic, oc, fu),
            post=_init_conv(next(ki), oc + sc, oc, fu),
        )
    params["out"] = _init_conv(next(ki), out_chs[-1], ch_out, 1)
    return params


# ---------------------------------------------------------------------------
# Forward pass (mirrors WaveUNet.forward / DownBlock / UpBlock).
# ---------------------------------------------------------------------------
def wave_unet_forward(params, x_ncl, *, layers, stride, dilation=1, training=True):
    x = jnp.transpose(x_ncl, (0, 2, 1)).astype(ACT_DTYPE)   # NCL -> NLC (bf16)
    merges = []
    for i in range(layers):
        x, short = down_block(x, params[f"down_{i}"],
                              stride=stride, dilation=dilation)
        merges.append(short)
    x = conv_block(x, *params["center"])                    # center
    for i in range(layers):
        x = up_block(x, merges[-1 - i], params[f"up_{i}"], stride=stride)
    y = conv_block(x, *params["out"], act="tanh", out_dtype=jnp.float32)
    if not training:
        y = jnp.clip(y, -1.0, 1.0)
    return jnp.transpose(y, (0, 2, 1))                      # NLC -> NCL


if __name__ == "__main__":
    key = jax.random.PRNGKey(0)
    kp, kx = jax.random.split(key)

    # small config: WaveUNet(layers=2, ch_in=1, ch_out=1, fd=5, fu=5,
    #                        num_chs=8, stride=2)
    layers, ch_in, ch_out, fd, fu, num_chs, stride = 2, 1, 1, 5, 5, 8, 2
    params = init_wave_unet(kp, layers=layers, ch_in=ch_in, ch_out=ch_out,
                            fd=fd, fu=fu, num_chs=num_chs)

    x = jax.random.normal(kx, (2, ch_in, 64), jnp.float32)  # NCL, like PyTorch
    fwd = jax.jit(functools.partial(wave_unet_forward, layers=layers,
                                    stride=stride, dilation=1, training=True))
    y = jax.block_until_ready(fwd(params, x))

    assert y.shape == (2, ch_out, 61), y.shape
    assert bool(jnp.all(jnp.isfinite(y)))
    print("KERNEL_OK")
</pallas_src>

<mosaic_0001>
module attributes {stable_mosaic.version = 11 : i64} {
  func.func @kernel(%arg0: i32, %arg1: memref<1x64x1xbf16, #tpu.memory_space<vmem>>, %arg2: memref<5x8xbf16, #tpu.memory_space<vmem>>, %arg3: memref<1x8xf32, #tpu.memory_space<vmem>>, %arg4: memref<40x16xbf16, #tpu.memory_space<vmem>>, %arg5: memref<1x16xf32, #tpu.memory_space<vmem>>, %arg6: memref<80x16xbf16, #tpu.memory_space<vmem>>, %arg7: memref<1x16xf32, #tpu.memory_space<vmem>>, %arg8: memref<1x32x16xbf16, #tpu.memory_space<vmem>>, %arg9: memref<1x64x8xbf16, #tpu.memory_space<vmem>>, %arg10: memref<68x16xf32, #tpu.memory_space<vmem>>) attributes {dimension_semantics = [#tpu.dimension_semantics<parallel>], iteration_bounds = array<i64: 2>, scalar_prefetch = 0 : i64, scratch_operands = 1 : i64, tpu.core_type = #tpu.core_type<tc>, window_params = [{transform_indices = @transform_0, window_bounds = array<i64: 1, 64, 1>}, {pipeline_mode = #tpu.pipeline_mode<synchronous>, transform_indices = @transform_1, window_bounds = array<i64: 5, 8>}, {pipeline_mode = #tpu.pipeline_mode<synchronous>, transform_indices = @transform_2, window_bounds = array<i64: 1, 8>}, {pipeline_mode = #tpu.pipeline_mode<synchronous>, transform_indices = @transform_3, window_bounds = array<i64: 40, 16>}, {pipeline_mode = #tpu.pipeline_mode<synchronous>, transform_indices = @transform_4, window_bounds = array<i64: 1, 16>}, {pipeline_mode = #tpu.pipeline_mode<synchronous>, transform_indices = @transform_5, window_bounds = array<i64: 80, 16>}, {pipeline_mode = #tpu.pipeline_mode<synchronous>, transform_indices = @transform_6, window_bounds = array<i64: 1, 16>}, {transform_indices = @transform_7, window_bounds = array<i64: 1, 32, 16>}, {transform_indices = @transform_8, window_bounds = array<i64: 1, 64, 8>}]} {
    %c0 = arith.constant 0 : index
    %c0_0 = arith.constant 0 : index
    %c0_1 = arith.constant 0 : index
    %0 = vector.load %arg1[%c0, %c0_0, %c0_1] : memref<1x64x1xbf16, #tpu.memory_space<vmem>>, vector<1x64x1xbf16>
    %1 = vector.shape_cast %0 : vector<1x64x1xbf16> to vector<64x1xbf16>
    %2 = arith.extf %1 : vector<64x1xbf16> to vector<64x1xf32>
    %cst = arith.constant 0.000000e+00 : f32
    %3 = vector.broadcast %cst : f32 to vector<2x1xf32>
    %4 = tpu.concatenate %3, %2, %3 in 0 : vector<2x1xf32>, vector<64x1xf32>, vector<2x1xf32> -> vector<68x1xf32>
    %5 = vector.extract_strided_slice %4 {offsets = [0, 0], sizes = [64, 1], strides = [1, 1]} : vector<68x1xf32> to vector<64x1xf32>
    %6 = vector.extract_strided_slice %4 {offsets = [1, 0], sizes = [64, 1], strides = [1, 1]} : vector<68x1xf32> to vector<64x1xf32>
    %7 = vector.extract_strided_slice %4 {offsets = [2, 0], sizes = [64, 1], strides = [1, 1]} : vector<68x1xf32> to vector<64x1xf32>
    %8 = vector.extract_strided_slice %4 {offsets = [3, 0], sizes = [64, 1], strides = [1, 1]} : vector<68x1xf32> to vector<64x1xf32>
    %9 = vector.extract_strided_slice %4 {offsets = [4, 0], sizes = [64, 1], strides = [1, 1]} : vector<68x1xf32> to vector<64x1xf32>
    %10 = tpu.concatenate %5, %6, %7, %8, %9 in 1 : vector<64x1xf32>, vector<64x1xf32>, vector<64x1xf32>, vector<64x1xf32>, vector<64x1xf32> -> vector<64x5xf32>
    %11 = arith.truncf %10 : vector<64x5xf32> to vector<64x5xbf16>
    %c0_2 = arith.constant 0 : index
    %c0_3 = arith.constant 0 : index
    %12 = vector.load %arg2[%c0_2, %c0_3] : memref<5x8xbf16, #tpu.memory_space<vmem>>, vector<5x8xbf16>
    %cst_4 = arith.constant dense<0.000000e+00> : vector<64x8xf32>
    %13 = tpu.matmul %11, %12, %cst_4 {dimension_numbers = #tpu.dot_dimension_numbers<[1], [0], [0], [1], [0, 0, 1, 1], [], []>} : vector<64x5xbf16>, vector<5x8xbf16>, vector<64x8xf32> -> vector<64x8xf32>
    %c0_5 = arith.constant 0 : index
    %c0_6 = arith.constant 0 : index
    %14 = vector.load %arg3[%c0_5, %c0_6] : memref<1x8xf32, #tpu.memory_space<vmem>>, vector<1x8xf32>
    %15 = vector.broadcast %14 : vector<1x8xf32> to vector<64x8xf32>
    %16 = arith.addf %13, %15 : vector<64x8xf32>
    %cst_7 = arith.constant 0.000000e+00 : f32
    %17 = vector.broadcast %cst_7 : f32 to vector<64x8xf32>
    %18 = arith.cmpf oge, %16, %17 : vector<64x8xf32>
    %cst_8 = arith.constant 1.000000e-01 : f32
    %19 = vector.broadcast %cst_8 : f32 to vector<64x8xf32>
    %20 = arith.mulf %19, %16 : vector<64x8xf32>
    %21 = arith.select %18, %16, %20 : vector<64x8xi1>, vector<64x8xf32>
    %22 = arith.truncf %21 : vector<64x8xf32> to vector<64x8xbf16>
    %c0_9 = arith.constant 0 : index
    %c0_10 = arith.constant 0 : index
    %c0_11 = arith.constant 0 : index
    %23 = vector.load %arg9[%c0_9, %c0_10, %c0_11] : memref<1x64x8xbf16, #tpu.memory_space<vmem>>, vector<1x64x8xbf16>
    %24 = vector.shape_cast %23 : vector<1x64x8xbf16> to vector<64x8xbf16>
    %25 = vector.shape_cast %22 : vector<64x8xbf16> to vector<1x64x8xbf16>
    tpu.vector_store %arg9[%c0_9, %c0_10, %c0_11], %25 {strides = array<i32>} : memref<1x64x8xbf16, #tpu.memory_space<vmem>>, vector<1x64x8xbf16>,
    %cst_12 = arith.constant 0.000000e+00 : f32
    %26 = vector.broadcast %cst_12 : f32 to vector<2x8xf32>
    %27 = tpu.concatenate %26, %21, %26 in 0 : vector<2x8xf32>, vector<64x8xf32>, vector<2x8xf32> -> vector<68x8xf32>
    %28 = vector.extract_strided_slice %27 {offsets = [0, 0], sizes = [64, 8], strides = [1, 1]} : vector<68x8xf32> to vector<64x8xf32>
    %29 = vector.extract_strided_slice %27 {offsets = [1, 0], sizes = [64, 8], strides = [1, 1]} : vector<68x8xf32> to vector<64x8xf32>
    %30 = vector.extract_strided_slice %27 {offsets = [2, 0], sizes = [64, 8], strides = [1, 1]} : vector<68x8xf32> to vector<64x8xf32>
    %31 = vector.extract_strided_slice %27 {offsets = [3, 0], sizes = [64, 8], strides = [1, 1]} : vector<68x8xf32> to vector<64x8xf32>
    %32 = vector.extract_strided_slice %27 {offsets = [4, 0], sizes = [64, 8], strides = [1, 1]} : vector<68x8xf32> to vector<64x8xf32>
    %33 = tpu.concatenate %28, %29, %30, %31, %32 in 1 : vector<64x8xf32>, vector<64x8xf32>, vector<64x8xf32>, vector<64x8xf32>, vector<64x8xf32> -> vector<64x40xf32>
    %34 = arith.truncf %33 : vector<64x40xf32> to vector<64x40xbf16>
    %c0_13 = arith.constant 0 : index
    %c0_14 = arith.constant 0 : index
    %35 = vector.load %arg4[%c0_13, %c0_14] : memref<40x16xbf16, #tpu.memory_space<vmem>>, vector<40x16xbf16>
    %cst_15 = arith.constant dense<0.000000e+00> : vector<64x16xf32>
    %36 = tpu.matmul %34, %35, %cst_15 {dimension_numbers = #tpu.dot_dimension_numbers<[1], [0], [0], [1], [0, 0, 1, 1], [], []>} : vector<64x40xbf16>, vector<40x16xbf16>, vector<64x16xf32> -> vector<64x16xf32>
    %c0_16 = arith.constant 0 : index
    %c0_17 = arith.constant 0 : index
    %37 = vector.load %arg5[%c0_16, %c0_17] : memref<1x16xf32, #tpu.memory_space<vmem>>, vector<1x16xf32>
    %38 = vector.broadcast %37 : vector<1x16xf32> to vector<64x16xf32>
    %39 = arith.addf %36, %38 : vector<64x16xf32>
    %cst_18 = arith.constant 0.000000e+00 : f32
    %40 = vector.broadcast %cst_18 : f32 to vector<64x16xf32>
    %41 = arith.cmpf oge, %39, %40 : vector<64x16xf32>
    %cst_19 = arith.constant 1.000000e-01 : f32
    %42 = vector.broadcast %cst_19 : f32 to vector<64x16xf32>
    %43 = arith.mulf %42, %39 : vector<64x16xf32>
    %44 = arith.select %41, %39, %43 : vector<64x16xi1>, vector<64x16xf32>
    %cst_20 = arith.constant 0.000000e+00 : f32
    %45 = vector.broadcast %cst_20 : f32 to vector<2x16xf32>
    %c0_21 = arith.constant 0 : index
    %c0_22 = arith.constant 0 : index
    %46 = vector.load %arg10[%c0_21, %c0_22] : memref<68x16xf32, #tpu.memory_space<vmem>>, vector<2x16xf32>
    tpu.vector_store %arg10[%c0_21, %c0_22], %45 {strides = array<i32>} : memref<68x16xf32, #tpu.memory_space<vmem>>, vector<2x16xf32>,
    %c66 = arith.constant 66 : index
    %c0_23 = arith.constant 0 : index
    %47 = vector.load %arg10[%c66, %c0_23] : memref<68x16xf32, #tpu.memory_space<vmem>>, vector<2x16xf32>
    tpu.vector_store %arg10[%c66, %c0_23], %45 {strides = array<i32>} : memref<68x16xf32, #tpu.memory_space<vmem>>, vector<2x16xf32>,
    %c2 = arith.constant 2 : index
    %c0_24 = arith.constant 0 : index
    %48 = vector.load %arg10[%c2, %c0_24] : memref<68x16xf32, #tpu.memory_space<vmem>>, vector<64x16xf32>
    tpu.vector_store %arg10[%c2, %c0_24], %44 {strides = array<i32>} : memref<68x16xf32, #tpu.memory_space<vmem>>, vector<64x16xf32>,
    %c0_25 = arith.constant 0 : index
    %c0_26 = arith.constant 0 : index
    %49 = tpu.strided_load %arg10[%c0_25, %c0_26] {strides = array<i32: 2, 1>} : memref<68x16xf32, #tpu.memory_space<vmem>>, vector<32x16xf32>
    %c1 = arith.constant 1 : index
    %c0_27 = arith.constant 0 : index
    %50 = tpu.strided_load %arg10[%c1, %c0_27] {strides = array<i32: 2, 1>} : memref<68x16xf32, #tpu.memory_space<vmem>>, vector<32x16xf32>
    %c2_28 = arith.constant 2 : index
    %c0_29 = arith.constant 0 : index
    %51 = tpu.strided_load %arg10[%c2_28, %c0_29] {strides = array<i32: 2, 1>} : memref<68x16xf32, #tpu.memory_space<vmem>>, vector<32x16xf32>
    %c3 = arith.constant 3 : index
    %c0_30 = arith.constant 0 : index
    %52 = tpu.strided_load %arg10[%c3, %c0_30] {strides = array<i32: 2, 1>} : memref<68x16xf32, #tpu.memory_space<vmem>>, vector<32x16xf32>
    %c4 = arith.constant 4 : index
    %c0_31 = arith.constant 0 : index
    %53 = tpu.strided_load %arg10[%c4, %c0_31] {strides = array<i32: 2, 1>} : memref<68x16xf32, #tpu.memory_space<vmem>>, vector<32x16xf32>
    %54 = tpu.concatenate %49, %50, %51, %52, %53 in 1 : vector<32x16xf32>, vector<32x16xf32>, vector<32x16xf32>, vector<32x16xf32>, vector<32x16xf32> -> vector<32x80xf32>
    %55 = arith.truncf %54 : vector<32x80xf32> to vector<32x80xbf16>
    %c0_32 = arith.constant 0 : index
    %c0_33 = arith.constant 0 : index
    %56 = vector.load %arg6[%c0_32, %c0_33] : memref<80x16xbf16, #tpu.memory_space<vmem>>, vector<80x16xbf16>
    %cst_34 = arith.constant dense<0.000000e+00> : vector<32x16xf32>
    %57 = tpu.matmul %55, %56, %cst_34 {dimension_numbers = #tpu.dot_dimension_numbers<[1], [0], [0], [1], [0, 0, 1, 1], [], []>} : vector<32x80xbf16>, vector<80x16xbf16>, vector<32x16xf32> -> vector<32x16xf32>
    %c0_35 = arith.constant 0 : index
    %c0_36 = arith.constant 0 : index
    %58 = vector.load %arg7[%c0_35, %c0_36] : memref<1x16xf32, #tpu.memory_space<vmem>>, vector<1x16xf32>
    %59 = vector.broadcast %58 : vector<1x16xf32> to vector<32x16xf32>
    %60 = arith.addf %57, %59 : vector<32x16xf32>
    %cst_37 = arith.constant 0.000000e+00 : f32
    %61 = vector.broadcast %cst_37 : f32 to vector<32x16xf32>
    %62 = arith.cmpf oge, %60, %61 : vector<32x16xf32>
    %cst_38 = arith.constant 1.000000e-01 : f32
    %63 = vector.broadcast %cst_38 : f32 to vector<32x16xf32>
    %64 = arith.mulf %63, %60 : vector<32x16xf32>
    %65 = arith.select %62, %60, %64 : vector<32x16xi1>, vector<32x16xf32>
    %66 = arith.truncf %65 : vector<32x16xf32> to vector<32x16xbf16>
    %c0_39 = arith.constant 0 : index
    %c0_40 = arith.constant 0 : index
    %c0_41 = arith.constant 0 : index
    %67 = vector.load %arg8[%c0_39, %c0_40, %c0_41] : memref<1x32x16xbf16, #tpu.memory_space<vmem>>, vector<1x32x16xbf16>
    %68 = vector.shape_cast %67 : vector<1x32x16xbf16> to vector<32x16xbf16>
    %69 = vector.shape_cast %66 : vector<32x16xbf16> to vector<1x32x16xbf16>
    tpu.vector_store %arg8[%c0_39, %c0_40, %c0_41], %69 {strides = array<i32>} : memref<1x32x16xbf16, #tpu.memory_space<vmem>>, vector<1x32x16xbf16>,
    return
  }
  func.func @transform_0(%arg0: i32) -> (i32, i32, i32) {
    %c0_i32 = arith.constant 0 : i32
    %c0_i32_0 = arith.constant 0 : i32
    %c0_i32_1 = arith.constant 0 : i32
    return %arg0, %c0_i32, %c0_i32_0 : i32, i32, i32
  }
  func.func @transform_1(%arg0: i32) -> (i32, i32) {
    %c0_i32 = arith.constant 0 : i32
    %c0_i32_0 = arith.constant 0 : i32
    %c0_i32_1 = arith.constant 0 : i32
    return %c0_i32, %c0_i32_0 : i32, i32
  }
  func.func @transform_2(%arg0: i32) -> (i32, i32) {
    %c0_i32 = arith.constant 0 : i32
    %c0_i32_0 = arith.constant 0 : i32
    %c0_i32_1 = arith.constant 0 : i32
    return %c0_i32, %c0_i32_0 : i32, i32
  }
  func.func @transform_3(%arg0: i32) -> (i32, i32) {
    %c0_i32 = arith.constant 0 : i32
    %c0_i32_0 = arith.constant 0 : i32
    %c0_i32_1 = arith.constant 0 : i32
    return %c0_i32, %c0_i32_0 : i32, i32
  }
  func.func @transform_4(%arg0: i32) -> (i32, i32) {
    %c0_i32 = arith.constant 0 : i32
    %c0_i32_0 = arith.constant 0 : i32
    %c0_i32_1 = arith.constant 0 : i32
    return %c0_i32, %c0_i32_0 : i32, i32
  }
  func.func @transform_5(%arg0: i32) -> (i32, i32) {
    %c0_i32 = arith.constant 0 : i32
    %c0_i32_0 = arith.constant 0 : i32
    %c0_i32_1 = arith.constant 0 : i32
    return %c0_i32, %c0_i32_0 : i32, i32
  }
  func.func @transform_6(%arg0: i32) -> (i32, i32) {
    %c0_i32 = arith.constant 0 : i32
    %c0_i32_0 = arith.constant 0 : i32
    %c0_i32_1 = arith.constant 0 : i32
    return %c0_i32, %c0_i32_0 : i32, i32
  }
  func.func @transform_7(%arg0: i32) -> (i32, i32, i32) {
    %c0_i32 = arith.constant 0 : i32
    %c0_i32_0 = arith.constant 0 : i32
    %c0_i32_1 = arith.constant 0 : i32
    return %arg0, %c0_i32, %c0_i32_0 : i32, i32, i32
  }
  func.func @transform_8(%arg0: i32) -> (i32, i32, i32) {
    %c0_i32 = arith.constant 0 : i32
    %c0_i32_0 = arith.constant 0 : i32
    %c0_i32_1 = arith.constant 0 : i32
    return %arg0, %c0_i32, %c0_i32_0 : i32, i32, i32
  }
}

module attributes {stable_mosaic.version = 11 : i64} {
  func.func @kernel(%arg0: i32, %arg1: memref<1x16x32xbf16, #tpu.memory_space<vmem>>, %arg2: memref<160x32xbf16, #tpu.memory_space<vmem>>, %arg3: memref<1x32xf32, #tpu.memory_space<vmem>>, %arg4: memref<1x16x32xbf16, #tpu.memory_space<vmem>>) attributes {dimension_semantics = [#tpu.dimension_semantics<parallel>], iteration_bounds = array<i64: 2>, scalar_prefetch = 0 : i64, scratch_operands = 0 : i64, tpu.core_type = #tpu.core_type<tc>, window_params = [{transform_indices = @transform_0, window_bounds = array<i64: 1, 16, 32>}, {pipeline_mode = #tpu.pipeline_mode<synchronous>, transform_indices = @transform_1, window_bounds = array<i64: 160, 32>}, {pipeline_mode = #tpu.pipeline_mode<synchronous>, transform_indices = @transform_2, window_bounds = array<i64: 1, 32>}, {transform_indices = @transform_3, window_bounds = array<i64: 1, 16, 32>}]} {
    %c0 = arith.constant 0 : index
    %c0_0 = arith.constant 0 : index
    %c0_1 = arith.constant 0 : index
    %0 = vector.load %arg1[%c0, %c0_0, %c0_1] : memref<1x16x32xbf16, #tpu.memory_space<vmem>>, vector<1x16x32xbf16>
    %1 = vector.shape_cast %0 : vector<1x16x32xbf16> to vector<16x32xbf16>
    %2 = arith.extf %1 : vector<16x32xbf16> to vector<16x32xf32>
    %cst = arith.constant 0.000000e+00 : f32
    %3 = vector.broadcast %cst : f32 to vector<2x32xf32>
    %4 = tpu.concatenate %3, %2, %3 in 0 : vector<2x32xf32>, vector<16x32xf32>, vector<2x32xf32> -> vector<20x32xf32>
    %5 = vector.extract_strided_slice %4 {offsets = [0, 0], sizes = [16, 32], strides = [1, 1]} : vector<20x32xf32> to vector<16x32xf32>
    %6 = vector.extract_strided_slice %4 {offsets = [1, 0], sizes = [16, 32], strides = [1, 1]} : vector<20x32xf32> to vector<16x32xf32>
    %7 = vector.extract_strided_slice %4 {offsets = [2, 0], sizes = [16, 32], strides = [1, 1]} : vector<20x32xf32> to vector<16x32xf32>
    %8 = vector.extract_strided_slice %4 {offsets = [3, 0], sizes = [16, 32], strides = [1, 1]} : vector<20x32xf32> to vector<16x32xf32>
    %9 = vector.extract_strided_slice %4 {offsets = [4, 0], sizes = [16, 32], strides = [1, 1]} : vector<20x32xf32> to vector<16x32xf32>
    %10 = tpu.concatenate %5, %6, %7, %8, %9 in 1 : vector<16x32xf32>, vector<16x32xf32>, vector<16x32xf32>, vector<16x32xf32>, vector<16x32xf32> -> vector<16x160xf32>
    %11 = arith.truncf %10 : vector<16x160xf32> to vector<16x160xbf16>
    %c0_2 = arith.constant 0 : index
    %c0_3 = arith.constant 0 : index
    %12 = vector.load %arg2[%c0_2, %c0_3] : memref<160x32xbf16, #tpu.memory_space<vmem>>, vector<160x32xbf16>
    %cst_4 = arith.constant dense<0.000000e+00> : vector<16x32xf32>
    %13 = tpu.matmul %11, %12, %cst_4 {dimension_numbers = #tpu.dot_dimension_numbers<[1], [0], [0], [1], [0, 0, 1, 1], [], []>} : vector<16x160xbf16>, vector<160x32xbf16>, vector<16x32xf32> -> vector<16x32xf32>
    %c0_5 = arith.constant 0 : index
    %c0_6 = arith.constant 0 : index
    %14 = vector.load %arg3[%c0_5, %c0_6] : memref<1x32xf32, #tpu.memory_space<vmem>>, vector<1x32xf32>
    %15 = vector.broadcast %14 : vector<1x32xf32> to vector<16x32xf32>
    %16 = arith.addf %13, %15 : vector<16x32xf32>
    %cst_7 = arith.constant 0.000000e+00 : f32
    %17 = vector.broadcast %cst_7 : f32 to vector<16x32xf32>
    %18 = arith.cmpf oge, %16, %17 : vector<16x32xf32>
    %cst_8 = arith.constant 1.000000e-01 : f32
    %19 = vector.broadcast %cst_8 : f32 to vector<16x32xf32>
    %20 = arith.mulf %19, %16 : vector<16x32xf32>
    %21 = arith.select %18, %16, %20 : vector<16x32xi1>, vector<16x32xf32>
    %22 = arith.truncf %21 : vector<16x32xf32> to vector<16x32xbf16>
    %c0_9 = arith.constant 0 : index
    %c0_10 = arith.constant 0 : index
    %c0_11 = arith.constant 0 : index
    %23 = vector.load %arg4[%c0_9, %c0_10, %c0_11] : memref<1x16x32xbf16, #tpu.memory_space<vmem>>, vector<1x16x32xbf16>
    %24 = vector.shape_cast %23 : vector<1x16x32xbf16> to vector<16x32xbf16>
    %25 = vector.shape_cast %22 : vector<16x32xbf16> to vector<1x16x32xbf16>
    tpu.vector_store %arg4[%c0_9, %c0_10, %c0_11], %25 {strides = array<i32>} : memref<1x16x32xbf16, #tpu.memory_space<vmem>>, vector<1x16x32xbf16>,
    return
  }
  func.func @transform_0(%arg0: i32) -> (i32, i32, i32) {
    %c0_i32 = arith.constant 0 : i32
    %c0_i32_0 = arith.constant 0 : i32
    %c0_i32_1 = arith.constant 0 : i32
    return %arg0, %c0_i32, %c0_i32_0 : i32, i32, i32
  }
  func.func @transform_1(%arg0: i32) -> (i32, i32) {
    %c0_i32 = arith.constant 0 : i32
    %c0_i32_0 = arith.constant 0 : i32
    %c0_i32_1 = arith.constant 0 : i32
    return %c0_i32, %c0_i32_0 : i32, i32
  }
  func.func @transform_2(%arg0: i32) -> (i32, i32) {
    %c0_i32 = arith.constant 0 : i32
    %c0_i32_0 = arith.constant 0 : i32
    %c0_i32_1 = arith.constant 0 : i32
    return %c0_i32, %c0_i32_0 : i32, i32
  }
  func.func @transform_3(%arg0: i32) -> (i32, i32, i32) {
    %c0_i32 = arith.constant 0 : i32
    %c0_i32_0 = arith.constant 0 : i32
    %c0_i32_1 = arith.constant 0 : i32
    return %arg0, %c0_i32, %c0_i32_0 : i32, i32, i32
  }
}

module attributes {stable_mosaic.version = 11 : i64} {
  func.func @kernel(%arg0: i32, %arg1: memref<1x32x16xbf16, #tpu.memory_space<vmem>>, %arg2: memref<80x16xbf16, #tpu.memory_space<vmem>>, %arg3: memref<1x16xf32, #tpu.memory_space<vmem>>, %arg4: memref<80x32xbf16, #tpu.memory_space<vmem>>, %arg5: memref<1x32xf32, #tpu.memory_space<vmem>>, %arg6: memref<160x32xbf16, #tpu.memory_space<vmem>>, %arg7: memref<1x32xf32, #tpu.memory_space<vmem>>, %arg8: memref<1x16x32xbf16, #tpu.memory_space<vmem>>, %arg9: memref<1x32x16xbf16, #tpu.memory_space<vmem>>, %arg10: memref<36x32xf32, #tpu.memory_space<vmem>>) attributes {dimension_semantics = [#tpu.dimension_semantics<parallel>], iteration_bounds = array<i64: 2>, scalar_prefetch = 0 : i64, scratch_operands = 1 : i64, tpu.core_type = #tpu.core_type<tc>, window_params = [{transform_indices = @transform_0, window_bounds = array<i64: 1, 32, 16>}, {pipeline_mode = #tpu.pipeline_mode<synchronous>, transform_indices = @transform_1, window_bounds = array<i64: 80, 16>}, {pipeline_mode = #tpu.pipeline_mode<synchronous>, transform_indices = @transform_2, window_bounds = array<i64: 1, 16>}, {pipeline_mode = #tpu.pipeline_mode<synchronous>, transform_indices = @transform_3, window_bounds = array<i64: 80, 32>}, {pipeline_mode = #tpu.pipeline_mode<synchronous>, transform_indices = @transform_4, window_bounds = array<i64: 1, 32>}, {pipeline_mode = #tpu.pipeline_mode<synchronous>, transform_indices = @transform_5, window_bounds = array<i64: 160, 32>}, {pipeline_mode = #tpu.pipeline_mode<synchronous>, transform_indices = @transform_6, window_bounds = array<i64: 1, 32>}, {transform_indices = @transform_7, window_bounds = array<i64: 1, 16, 32>}, {transform_indices = @transform_8, window_bounds = array<i64: 1, 32, 16>}]} {
    %c0 = arith.constant 0 : index
    %c0_0 = arith.constant 0 : index
    %c0_1 = arith.constant 0 : index
    %0 = vector.load %arg1[%c0, %c0_0, %c0_1] : memref<1x32x16xbf16, #tpu.memory_space<vmem>>, vector<1x32x16xbf16>
    %1 = vector.shape_cast %0 : vector<1x32x16xbf16> to vector<32x16xbf16>
    %2 = arith.extf %1 : vector<32x16xbf16> to vector<32x16xf32>
    %cst = arith.constant 0.000000e+00 : f32
    %3 = vector.broadcast %cst : f32 to vector<2x16xf32>
    %4 = tpu.concatenate %3, %2, %3 in 0 : vector<2x16xf32>, vector<32x16xf32>, vector<2x16xf32> -> vector<36x16xf32>
    %5 = vector.extract_strided_slice %4 {offsets = [0, 0], sizes = [32, 16], strides = [1, 1]} : vector<36x16xf32> to vector<32x16xf32>
    %6 = vector.extract_strided_slice %4 {offsets = [1, 0], sizes = [32, 16], strides = [1, 1]} : vector<36x16xf32> to vector<32x16xf32>
    %7 = vector.extract_strided_slice %4 {offsets = [2, 0], sizes = [32, 16], strides = [1, 1]} : vector<36x16xf32> to vector<32x16xf32>
    %8 = vector.extract_strided_slice %4 {offsets = [3, 0], sizes = [32, 16], strides = [1, 1]} : vector<36x16xf32> to vector<32x16xf32>
    %9 = vector.extract_strided_slice %4 {offsets = [4, 0], sizes = [32, 16], strides = [1, 1]} : vector<36x16xf32> to vector<32x16xf32>
    %10 = tpu.concatenate %5, %6, %7, %8, %9 in 1 : vector<32x16xf32>, vector<32x16xf32>, vector<32x16xf32>, vector<32x16xf32>, vector<32x16xf32> -> vector<32x80xf32>
    %11 = arith.truncf %10 : vector<32x80xf32> to vector<32x80xbf16>
    %c0_2 = arith.constant 0 : index
    %c0_3 = arith.constant 0 : index
    %12 = vector.load %arg2[%c0_2, %c0_3] : memref<80x16xbf16, #tpu.memory_space<vmem>>, vector<80x16xbf16>
    %cst_4 = arith.constant dense<0.000000e+00> : vector<32x16xf32>
    %13 = tpu.matmul %11, %12, %cst_4 {dimension_numbers = #tpu.dot_dimension_numbers<[1], [0], [0], [1], [0, 0, 1, 1], [], []>} : vector<32x80xbf16>, vector<80x16xbf16>, vector<32x16xf32> -> vector<32x16xf32>
    %c0_5 = arith.constant 0 : index
    %c0_6 = arith.constant 0 : index
    %14 = vector.load %arg3[%c0_5, %c0_6] : memref<1x16xf32, #tpu.memory_space<vmem>>, vector<1x16xf32>
    %15 = vector.broadcast %14 : vector<1x16xf32> to vector<32x16xf32>
    %16 = arith.addf %13, %15 : vector<32x16xf32>
    %cst_7 = arith.constant 0.000000e+00 : f32
    %17 = vector.broadcast %cst_7 : f32 to vector<32x16xf32>
    %18 = arith.cmpf oge, %16, %17 : vector<32x16xf32>
    %cst_8 = arith.constant 1.000000e-01 : f32
    %19 = vector.broadcast %cst_8 : f32 to vector<32x16xf32>
    %20 = arith.mulf %19, %16 : vector<32x16xf32>
    %21 = arith.select %18, %16, %20 : vector<32x16xi1>, vector<32x16xf32>
    %22 = arith.truncf %21 : vector<32x16xf32> to vector<32x16xbf16>
    %c0_9 = arith.constant 0 : index
    %c0_10 = arith.constant 0 : index
    %c0_11 = arith.constant 0 : index
    %23 = vector.load %arg9[%c0_9, %c0_10, %c0_11] : memref<1x32x16xbf16, #tpu.memory_space<vmem>>, vector<1x32x16xbf16>
    %24 = vector.shape_cast %23 : vector<1x32x16xbf16> to vector<32x16xbf16>
    %25 = vector.shape_cast %22 : vector<32x16xbf16> to vector<1x32x16xbf16>
    tpu.vector_store %arg9[%c0_9, %c0_10, %c0_11], %25 {strides = array<i32>} : memref<1x32x16xbf16, #tpu.memory_space<vmem>>, vector<1x32x16xbf16>,
    %cst_12 = arith.constant 0.000000e+00 : f32
    %26 = vector.broadcast %cst_12 : f32 to vector<2x16xf32>
    %27 = tpu.concatenate %26, %21, %26 in 0 : vector<2x16xf32>, vector<32x16xf32>, vector<2x16xf32> -> vector<36x16xf32>
    %28 = vector.extract_strided_slice %27 {offsets = [0, 0], sizes = [32, 16], strides = [1, 1]} : vector<36x16xf32> to vector<32x16xf32>
    %29 = vector.extract_strided_slice %27 {offsets = [1, 0], sizes = [32, 16], strides = [1, 1]} : vector<36x16xf32> to vector<32x16xf32>
    %30 = vector.extract_strided_slice %27 {offsets = [2, 0], sizes = [32, 16], strides = [1, 1]} : vector<36x16xf32> to vector<32x16xf32>
    %31 = vector.extract_strided_slice %27 {offsets = [3, 0], sizes = [32, 16], strides = [1, 1]} : vector<36x16xf32> to vector<32x16xf32>
    %32 = vector.extract_strided_slice %27 {offsets = [4, 0], sizes = [32, 16], strides = [1, 1]} : vector<36x16xf32> to vector<32x16xf32>
    %33 = tpu.concatenate %28, %29, %30, %31, %32 in 1 : vector<32x16xf32>, vector<32x16xf32>, vector<32x16xf32>, vector<32x16xf32>, vector<32x16xf32> -> vector<32x80xf32>
    %34 = arith.truncf %33 : vector<32x80xf32> to vector<32x80xbf16>
    %c0_13 = arith.constant 0 : index
    %c0_14 = arith.constant 0 : index
    %35 = vector.load %arg4[%c0_13, %c0_14] : memref<80x32xbf16, #tpu.memory_space<vmem>>, vector<80x32xbf16>
    %cst_15 = arith.constant dense<0.000000e+00> : vector<32x32xf32>
    %36 = tpu.matmul %34, %35, %cst_15 {dimension_numbers = #tpu.dot_dimension_numbers<[1], [0], [0], [1], [0, 0, 1, 1], [], []>} : vector<32x80xbf16>, vector<80x32xbf16>, vector<32x32xf32> -> vector<32x32xf32>
    %c0_16 = arith.constant 0 : index
    %c0_17 = arith.constant 0 : index
    %37 = vector.load %arg5[%c0_16, %c0_17] : memref<1x32xf32, #tpu.memory_space<vmem>>, vector<1x32xf32>
    %38 = vector.broadcast %37 : vector<1x32xf32> to vector<32x32xf32>
    %39 = arith.addf %36, %38 : vector<32x32xf32>
    %cst_18 = arith.constant 0.000000e+00 : f32
    %40 = vector.broadcast %cst_18 : f32 to vector<32x32xf32>
    %41 = arith.cmpf oge, %39, %40 : vector<32x32xf32>
    %cst_19 = arith.constant 1.000000e-01 : f32
    %42 = vector.broadcast %cst_19 : f32 to vector<32x32xf32>
    %43 = arith.mulf %42, %39 : vector<32x32xf32>
    %44 = arith.select %41, %39, %43 : vector<32x32xi1>, vector<32x32xf32>
    %cst_20 = arith.constant 0.000000e+00 : f32
    %45 = vector.broadcast %cst_20 : f32 to vector<2x32xf32>
    %c0_21 = arith.constant 0 : index
    %c0_22 = arith.constant 0 : index
    %46 = vector.load %arg10[%c0_21, %c0_22] : memref<36x32xf32, #tpu.memory_space<vmem>>, vector<2x32xf32>
    tpu.vector_store %arg10[%c0_21, %c0_22], %45 {strides = array<i32>} : memref<36x32xf32, #tpu.memory_space<vmem>>, vector<2x32xf32>,
    %c34 = arith.constant 34 : index
    %c0_23 = arith.constant 0 : index
    %47 = vector.load %arg10[%c34, %c0_23] : memref<36x32xf32, #tpu.memory_space<vmem>>, vector<2x32xf32>
    tpu.vector_store %arg10[%c34, %c0_23], %45 {strides = array<i32>} : memref<36x32xf32, #tpu.memory_space<vmem>>, vector<2x32xf32>,
    %c2 = arith.constant 2 : index
    %c0_24 = arith.constant 0 : index
    %48 = vector.load %arg10[%c2, %c0_24] : memref<36x32xf32, #tpu.memory_space<vmem>>, vector<32x32xf32>
    tpu.vector_store %arg10[%c2, %c0_24], %44 {strides = array<i32>} : memref<36x32xf32, #tpu.memory_space<vmem>>, vector<32x32xf32>,
    %c0_25 = arith.constant 0 : index
    %c0_26 = arith.constant 0 : index
    %49 = tpu.strided_load %arg10[%c0_25, %c0_26] {strides = array<i32: 2, 1>} : memref<36x32xf32, #tpu.memory_space<vmem>>, vector<16x32xf32>
    %c1 = arith.constant 1 : index
    %c0_27 = arith.constant 0 : index
    %50 = tpu.strided_load %arg10[%c1, %c0_27] {strides = array<i32: 2, 1>} : memref<36x32xf32, #tpu.memory_space<vmem>>, vector<16x32xf32>
    %c2_28 = arith.constant 2 : index
    %c0_29 = arith.constant 0 : index
    %51 = tpu.strided_load %arg10[%c2_28, %c0_29] {strides = array<i32: 2, 1>} : memref<36x32xf32, #tpu.memory_space<vmem>>, vector<16x32xf32>
    %c3 = arith.constant 3 : index
    %c0_30 = arith.constant 0 : index
    %52 = tpu.strided_load %arg10[%c3, %c0_30] {strides = array<i32: 2, 1>} : memref<36x32xf32, #tpu.memory_space<vmem>>, vector<16x32xf32>
    %c4 = arith.constant 4 : index
    %c0_31 = arith.constant 0 : index
    %53 = tpu.strided_load %arg10[%c4, %c0_31] {strides = array<i32: 2, 1>} : memref<36x32xf32, #tpu.memory_space<vmem>>, vector<16x32xf32>
    %54 = tpu.concatenate %49, %50, %51, %52, %53 in 1 : vector<16x32xf32>, vector<16x32xf32>, vector<16x32xf32>, vector<16x32xf32>, vector<16x32xf32> -> vector<16x160xf32>
    %55 = arith.truncf %54 : vector<16x160xf32> to vector<16x160xbf16>
    %c0_32 = arith.constant 0 : index
    %c0_33 = arith.constant 0 : index
    %56 = vector.load %arg6[%c0_32, %c0_33] : memref<160x32xbf16, #tpu.memory_space<vmem>>, vector<160x32xbf16>
    %cst_34 = arith.constant dense<0.000000e+00> : vector<16x32xf32>
    %57 = tpu.matmul %55, %56, %cst_34 {dimension_numbers = #tpu.dot_dimension_numbers<[1], [0], [0], [1], [0, 0, 1, 1], [], []>} : vector<16x160xbf16>, vector<160x32xbf16>, vector<16x32xf32> -> vector<16x32xf32>
    %c0_35 = arith.constant 0 : index
    %c0_36 = arith.constant 0 : index
    %58 = vector.load %arg7[%c0_35, %c0_36] : memref<1x32xf32, #tpu.memory_space<vmem>>, vector<1x32xf32>
    %59 = vector.broadcast %58 : vector<1x32xf32> to vector<16x32xf32>
    %60 = arith.addf %57, %59 : vector<16x32xf32>
    %cst_37 = arith.constant 0.000000e+00 : f32
    %61 = vector.broadcast %cst_37 : f32 to vector<16x32xf32>
    %62 = arith.cmpf oge, %60, %61 : vector<16x32xf32>
    %cst_38 = arith.constant 1.000000e-01 : f32
    %63 = vector.broadcast %cst_38 : f32 to vector<16x32xf32>
    %64 = arith.mulf %63, %60 : vector<16x32xf32>
    %65 = arith.select %62, %60, %64 : vector<16x32xi1>, vector<16x32xf32>
    %66 = arith.truncf %65 : vector<16x32xf32> to vector<16x32xbf16>
    %c0_39 = arith.constant 0 : index
    %c0_40 = arith.constant 0 : index
    %c0_41 = arith.constant 0 : index
    %67 = vector.load %arg8[%c0_39, %c0_40, %c0_41] : memref<1x16x32xbf16, #tpu.memory_space<vmem>>, vector<1x16x32xbf16>
    %68 = vector.shape_cast %67 : vector<1x16x32xbf16> to vector<16x32xbf16>
    %69 = vector.shape_cast %66 : vector<16x32xbf16> to vector<1x16x32xbf16>
    tpu.vector_store %arg8[%c0_39, %c0_40, %c0_41], %69 {strides = array<i32>} : memref<1x16x32xbf16, #tpu.memory_space<vmem>>, vector<1x16x32xbf16>,
    return
  }
  func.func @transform_0(%arg0: i32) -> (i32, i32, i32) {
    %c0_i32 = arith.constant 0 : i32
    %c0_i32_0 = arith.constant 0 : i32
    %c0_i32_1 = arith.constant 0 : i32
    return %arg0, %c0_i32, %c0_i32_0 : i32, i32, i32
  }
  func.func @transform_1(%arg0: i32) -> (i32, i32) {
    %c0_i32 = arith.constant 0 : i32
    %c0_i32_0 = arith.constant 0 : i32
    %c0_i32_1 = arith.constant 0 : i32
    return %c0_i32, %c0_i32_0 : i32, i32
  }
  func.func @transform_2(%arg0: i32) -> (i32, i32) {
    %c0_i32 = arith.constant 0 : i32
    %c0_i32_0 = arith.constant 0 : i32
    %c0_i32_1 = arith.constant 0 : i32
    return %c0_i32, %c0_i32_0 : i32, i32
  }
  func.func @transform_3(%arg0: i32) -> (i32, i32) {
    %c0_i32 = arith.constant 0 : i32
    %c0_i32_0 = arith.constant 0 : i32
    %c0_i32_1 = arith.constant 0 : i32
    return %c0_i32, %c0_i32_0 : i32, i32
  }
  func.func @transform_4(%arg0: i32) -> (i32, i32) {
    %c0_i32 = arith.constant 0 : i32
    %c0_i32_0 = arith.constant 0 : i32
    %c0_i32_1 = arith.constant 0 : i32
    return %c0_i32, %c0_i32_0 : i32, i32
  }
  func.func @transform_5(%arg0: i32) -> (i32, i32) {
    %c0_i32 = arith.constant 0 : i32
    %c0_i32_0 = arith.constant 0 : i32
    %c0_i32_1 = arith.constant 0 : i32
    return %c0_i32, %c0_i32_0 : i32, i32
  }
  func.func @transform_6(%arg0: i32) -> (i32, i32) {
    %c0_i32 = arith.constant 0 : i32
    %c0_i32_0 = arith.constant 0 : i32
    %c0_i32_1 = arith.constant 0 : i32
    return %c0_i32, %c0_i32_0 : i32, i32
  }
  func.func @transform_7(%arg0: i32) -> (i32, i32, i32) {
    %c0_i32 = arith.constant 0 : i32
    %c0_i32_0 = arith.constant 0 : i32
    %c0_i32_1 = arith.constant 0 : i32
    return %arg0, %c0_i32, %c0_i32_0 : i32, i32, i32
  }
  func.func @transform_8(%arg0: i32) -> (i32, i32, i32) {
    %c0_i32 = arith.constant 0 : i32
    %c0_i32_0 = arith.constant 0 : i32
    %c0_i32_1 = arith.constant 0 : i32
    return %arg0, %c0_i32, %c0_i32_0 : i32, i32, i32
  }
}

module attributes {stable_mosaic.version = 11 : i64} {
  func.func @kernel(%arg0: i32, %arg1: memref<1x16x32xbf16, #tpu.memory_space<vmem>>, %arg2: memref<1x32x16xbf16, #tpu.memory_space<vmem>>, %arg3: memref<160x32xbf16, #tpu.memory_space<vmem>>, %arg4: memref<1x32xf32, #tpu.memory_space<vmem>>, %arg5: memref<160x16xbf16, #tpu.memory_space<vmem>>, %arg6: memref<1x16xf32, #tpu.memory_space<vmem>>, %arg7: memref<80x16xbf16, #tpu.memory_space<vmem>>, %arg8: memref<80x16xbf16, #tpu.memory_space<vmem>>, %arg9: memref<1x16xf32, #tpu.memory_space<vmem>>, %arg10: memref<1x31x16xbf16, #tpu.memory_space<vmem>>) attributes {dimension_semantics = [#tpu.dimension_semantics<parallel>], iteration_bounds = array<i64: 2>, scalar_prefetch = 0 : i64, scratch_operands = 0 : i64, tpu.core_type = #tpu.core_type<tc>, window_params = [{transform_indices = @transform_0, window_bounds = array<i64: 1, 16, 32>}, {transform_indices = @transform_1, window_bounds = array<i64: 1, 32, 16>}, {pipeline_mode = #tpu.pipeline_mode<synchronous>, transform_indices = @transform_2, window_bounds = array<i64: 160, 32>}, {pipeline_mode = #tpu.pipeline_mode<synchronous>, transform_indices = @transform_3, window_bounds = array<i64: 1, 32>}, {pipeline_mode = #tpu.pipeline_mode<synchronous>, transform_indices = @transform_4, window_bounds = array<i64: 160, 16>}, {pipeline_mode = #tpu.pipeline_mode<synchronous>, transform_indices = @transform_5, window_bounds = array<i64: 1, 16>}, {pipeline_mode = #tpu.pipeline_mode<synchronous>, transform_indices = @transform_6, window_bounds = array<i64: 80, 16>}, {pipeline_mode = #tpu.pipeline_mode<synchronous>, transform_indices = @transform_7, window_bounds = array<i64: 80, 16>}, {pipeline_mode = #tpu.pipeline_mode<synchronous>, transform_indices = @transform_8, window_bounds = array<i64: 1, 16>}, {transform_indices = @transform_9, window_bounds = array<i64: 1, 31, 16>}]} {
    %c0 = arith.constant 0 : index
    %c0_0 = arith.constant 0 : index
    %c0_1 = arith.constant 0 : index
    %0 = vector.load %arg1[%c0, %c0_0, %c0_1] : memref<1x16x32xbf16, #tpu.memory_space<vmem>>, vector<1x16x32xbf16>
    %1 = vector.shape_cast %0 : vector<1x16x32xbf16> to vector<16x32xbf16>
    %2 = arith.extf %1 : vector<16x32xbf16> to vector<16x32xf32>
    %3 = vector.shape_cast %2 : vector<16x32xf32> to vector<16x1x32xf32>
    %cst = arith.constant 0.000000e+00 : f32
    %4 = vector.broadcast %cst : f32 to vector<16x1x32xf32>
    %5 = tpu.concatenate %3, %4 in 1 : vector<16x1x32xf32>, vector<16x1x32xf32> -> vector<16x2x32xf32>
    %6 = vector.shape_cast %5 : vector<16x2x32xf32> to vector<32x32xf32>
    %7 = vector.extract_strided_slice %6 {offsets = [0, 0], sizes = [31, 32], strides = [1, 1]} : vector<32x32xf32> to vector<31x32xf32>
    %cst_2 = arith.constant 0.000000e+00 : f32
    %8 = vector.broadcast %cst_2 : f32 to vector<2x32xf32>
    %9 = tpu.concatenate %8, %7, %8 in 0 : vector<2x32xf32>, vector<31x32xf32>, vector<2x32xf32> -> vector<35x32xf32>
    %10 = vector.extract_strided_slice %9 {offsets = [0, 0], sizes = [31, 32], strides = [1, 1]} : vector<35x32xf32> to vector<31x32xf32>
    %11 = vector.extract_strided_slice %9 {offsets = [1, 0], sizes = [31, 32], strides = [1, 1]} : vector<35x32xf32> to vector<31x32xf32>
    %12 = vector.extract_strided_slice %9 {offsets = [2, 0], sizes = [31, 32], strides = [1, 1]} : vector<35x32xf32> to vector<31x32xf32>
    %13 = vector.extract_strided_slice %9 {offsets = [3, 0], sizes = [31, 32], strides = [1, 1]} : vector<35x32xf32> to vector<31x32xf32>
    %14 = vector.extract_strided_slice %9 {offsets = [4, 0], sizes = [31, 32], strides = [1, 1]} : vector<35x32xf32> to vector<31x32xf32>
    %15 = tpu.concatenate %10, %11, %12, %13, %14 in 1 : vector<31x32xf32>, vector<31x32xf32>, vector<31x32xf32>, vector<31x32xf32>, vector<31x32xf32> -> vector<31x160xf32>
    %16 = arith.truncf %15 : vector<31x160xf32> to vector<31x160xbf16>
    %c0_3 = arith.constant 0 : index
    %c0_4 = arith.constant 0 : index
    %17 = vector.load %arg3[%c0_3, %c0_4] : memref<160x32xbf16, #tpu.memory_space<vmem>>, vector<160x32xbf16>
    %cst_5 = arith.constant dense<0.000000e+00> : vector<31x32xf32>
    %18 = tpu.matmul %16, %17, %cst_5 {dimension_numbers = #tpu.dot_dimension_numbers<[1], [0], [0], [1], [0, 0, 1, 1], [], []>} : vector<31x160xbf16>, vector<160x32xbf16>, vector<31x32xf32> -> vector<31x32xf32>
    %c0_6 = arith.constant 0 : index
    %c0_7 = arith.constant 0 : index
    %19 = vector.load %arg4[%c0_6, %c0_7] : memref<1x32xf32, #tpu.memory_space<vmem>>, vector<1x32xf32>
    %20 = vector.broadcast %19 : vector<1x32xf32> to vector<31x32xf32>
    %21 = arith.addf %18, %20 : vector<31x32xf32>
    %cst_8 = arith.constant 0.000000e+00 : f32
    %22 = vector.broadcast %cst_8 : f32 to vector<31x32xf32>
    %23 = arith.cmpf oge, %21, %22 : vector<31x32xf32>
    %cst_9 = arith.constant 1.000000e-01 : f32
    %24 = vector.broadcast %cst_9 : f32 to vector<31x32xf32>
    %25 = arith.mulf %24, %21 : vector<31x32xf32>
    %26 = arith.select %23, %21, %25 : vector<31x32xi1>, vector<31x32xf32>
    %cst_10 = arith.constant 0.000000e+00 : f32
    %27 = vector.broadcast %cst_10 : f32 to vector<2x32xf32>
    %28 = tpu.concatenate %27, %26, %27 in 0 : vector<2x32xf32>, vector<31x32xf32>, vector<2x32xf32> -> vector<35x32xf32>
    %29 = vector.extract_strided_slice %28 {offsets = [0, 0], sizes = [31, 32], strides = [1, 1]} : vector<35x32xf32> to vector<31x32xf32>
    %30 = vector.extract_strided_slice %28 {offsets = [1, 0], sizes = [31, 32], strides = [1, 1]} : vector<35x32xf32> to vector<31x32xf32>
    %31 = vector.extract_strided_slice %28 {offsets = [2, 0], sizes = [31, 32], strides = [1, 1]} : vector<35x32xf32> to vector<31x32xf32>
    %32 = vector.extract_strided_slice %28 {offsets = [3, 0], sizes = [31, 32], strides = [1, 1]} : vector<35x32xf32> to vector<31x32xf32>
    %33 = vector.extract_strided_slice %28 {offsets = [4, 0], sizes = [31, 32], strides = [1, 1]} : vector<35x32xf32> to vector<31x32xf32>
    %34 = tpu.concatenate %29, %30, %31, %32, %33 in 1 : vector<31x32xf32>, vector<31x32xf32>, vector<31x32xf32>, vector<31x32xf32>, vector<31x32xf32> -> vector<31x160xf32>
    %35 = arith.truncf %34 : vector<31x160xf32> to vector<31x160xbf16>
    %c0_11 = arith.constant 0 : index
    %c0_12 = arith.constant 0 : index
    %36 = vector.load %arg5[%c0_11, %c0_12] : memref<160x16xbf16, #tpu.memory_space<vmem>>, vector<160x16xbf16>
    %cst_13 = arith.constant dense<0.000000e+00> : vector<31x16xf32>
    %37 = tpu.matmul %35, %36, %cst_13 {dimension_numbers = #tpu.dot_dimension_numbers<[1], [0], [0], [1], [0, 0, 1, 1], [], []>} : vector<31x160xbf16>, vector<160x16xbf16>, vector<31x16xf32> -> vector<31x16xf32>
    %c0_14 = arith.constant 0 : index
    %c0_15 = arith.constant 0 : index
    %38 = vector.load %arg6[%c0_14, %c0_15] : memref<1x16xf32, #tpu.memory_space<vmem>>, vector<1x16xf32>
    %39 = vector.broadcast %38 : vector<1x16xf32> to vector<31x16xf32>
    %40 = arith.addf %37, %39 : vector<31x16xf32>
    %cst_16 = arith.constant 0.000000e+00 : f32
    %41 = vector.broadcast %cst_16 : f32 to vector<31x16xf32>
    %42 = arith.cmpf oge, %40, %41 : vector<31x16xf32>
    %cst_17 = arith.constant 1.000000e-01 : f32
    %43 = vector.broadcast %cst_17 : f32 to vector<31x16xf32>
    %44 = arith.mulf %43, %40 : vector<31x16xf32>
    %45 = arith.select %42, %40, %44 : vector<31x16xi1>, vector<31x16xf32>
    %c0_18 = arith.constant 0 : index
    %c0_19 = arith.constant 0 : index
    %c0_20 = arith.constant 0 : index
    %46 = vector.load %arg2[%c0_18, %c0_19, %c0_20] : memref<1x32x16xbf16, #tpu.memory_space<vmem>>, vector<1x31x16xbf16>
    %47 = vector.shape_cast %46 : vector<1x31x16xbf16> to vector<31x16xbf16>
    %48 = arith.extf %47 : vector<31x16xbf16> to vector<31x16xf32>
    %cst_21 = arith.constant 0.000000e+00 : f32
    %49 = vector.broadcast %cst_21 : f32 to vector<2x16xf32>
    %50 = tpu.concatenate %49, %48, %49 in 0 : vector<2x16xf32>, vector<31x16xf32>, vector<2x16xf32> -> vector<35x16xf32>
    %51 = vector.extract_strided_slice %50 {offsets = [0, 0], sizes = [31, 16], strides = [1, 1]} : vector<35x16xf32> to vector<31x16xf32>
    %52 = vector.extract_strided_slice %50 {offsets = [1, 0], sizes = [31, 16], strides = [1, 1]} : vector<35x16xf32> to vector<31x16xf32>
    %53 = vector.extract_strided_slice %50 {offsets = [2, 0], sizes = [31, 16], strides = [1, 1]} : vector<35x16xf32> to vector<31x16xf32>
    %54 = vector.extract_strided_slice %50 {offsets = [3, 0], sizes = [31, 16], strides = [1, 1]} : vector<35x16xf32> to vector<31x16xf32>
    %55 = vector.extract_strided_slice %50 {offsets = [4, 0], sizes = [31, 16], strides = [1, 1]} : vector<35x16xf32> to vector<31x16xf32>
    %56 = tpu.concatenate %51, %52, %53, %54, %55 in 1 : vector<31x16xf32>, vector<31x16xf32>, vector<31x16xf32>, vector<31x16xf32>, vector<31x16xf32> -> vector<31x80xf32>
    %cst_22 = arith.constant 0.000000e+00 : f32
    %57 = vector.broadcast %cst_22 : f32 to vector<2x16xf32>
    %58 = tpu.concatenate %57, %45, %57 in 0 : vector<2x16xf32>, vector<31x16xf32>, vector<2x16xf32> -> vector<35x16xf32>
    %59 = vector.extract_strided_slice %58 {offsets = [0, 0], sizes = [31, 16], strides = [1, 1]} : vector<35x16xf32> to vector<31x16xf32>
    %60 = vector.extract_strided_slice %58 {offsets = [1, 0], sizes = [31, 16], strides = [1, 1]} : vector<35x16xf32> to vector<31x16xf32>
    %61 = vector.extract_strided_slice %58 {offsets = [2, 0], sizes = [31, 16], strides = [1, 1]} : vector<35x16xf32> to vector<31x16xf32>
    %62 = vector.extract_strided_slice %58 {offsets = [3, 0], sizes = [31, 16], strides = [1, 1]} : vector<35x16xf32> to vector<31x16xf32>
    %63 = vector.extract_strided_slice %58 {offsets = [4, 0], sizes = [31, 16], strides = [1, 1]} : vector<35x16xf32> to vector<31x16xf32>
    %64 = tpu.concatenate %59, %60, %61, %62, %63 in 1 : vector<31x16xf32>, vector<31x16xf32>, vector<31x16xf32>, vector<31x16xf32>, vector<31x16xf32> -> vector<31x80xf32>
    %65 = arith.truncf %56 : vector<31x80xf32> to vector<31x80xbf16>
    %c0_23 = arith.constant 0 : index
    %c0_24 = arith.constant 0 : index
    %66 = vector.load %arg7[%c0_23, %c0_24] : memref<80x16xbf16, #tpu.memory_space<vmem>>, vector<80x16xbf16>
    %cst_25 = arith.constant dense<0.000000e+00> : vector<31x16xf32>
    %67 = tpu.matmul %65, %66, %cst_25 {dimension_numbers = #tpu.dot_dimension_numbers<[1], [0], [0], [1], [0, 0, 1, 1], [], []>} : vector<31x80xbf16>, vector<80x16xbf16>, vector<31x16xf32> -> vector<31x16xf32>
    %68 = arith.truncf %64 : vector<31x80xf32> to vector<31x80xbf16>
    %c0_26 = arith.constant 0 : index
    %c0_27 = arith.constant 0 : index
    %69 = vector.load %arg8[%c0_26, %c0_27] : memref<80x16xbf16, #tpu.memory_space<vmem>>, vector<80x16xbf16>
    %cst_28 = arith.constant dense<0.000000e+00> : vector<31x16xf32>
    %70 = tpu.matmul %68, %69, %cst_28 {dimension_numbers = #tpu.dot_dimension_numbers<[1], [0], [0], [1], [0, 0, 1, 1], [], []>} : vector<31x80xbf16>, vector<80x16xbf16>, vector<31x16xf32> -> vector<31x16xf32>
    %71 = arith.addf %67, %70 : vector<31x16xf32>
    %c0_29 = arith.constant 0 : index
    %c0_30 = arith.constant 0 : index
    %72 = vector.load %arg9[%c0_29, %c0_30] : memref<1x16xf32, #tpu.memory_space<vmem>>, vector<1x16xf32>
    %73 = vector.broadcast %72 : vector<1x16xf32> to vector<31x16xf32>
    %74 = arith.addf %71, %73 : vector<31x16xf32>
    %cst_31 = arith.constant 0.000000e+00 : f32
    %75 = vector.broadcast %cst_31 : f32 to vector<31x16xf32>
    %76 = arith.cmpf oge, %74, %75 : vector<31x16xf32>
    %cst_32 = arith.constant 1.000000e-01 : f32
    %77 = vector.broadcast %cst_32 : f32 to vector<31x16xf32>
    %78 = arith.mulf %77, %74 : vector<31x16xf32>
    %79 = arith.select %76, %74, %78 : vector<31x16xi1>, vector<31x16xf32>
    %80 = arith.truncf %79 : vector<31x16xf32> to vector<31x16xbf16>
    %c0_33 = arith.constant 0 : index
    %c0_34 = arith.constant 0 : index
    %c0_35 = arith.constant 0 : index
    %81 = vector.load %arg10[%c0_33, %c0_34, %c0_35] : memref<1x31x16xbf16, #tpu.memory_space<vmem>>, vector<1x31x16xbf16>
    %82 = vector.shape_cast %81 : vector<1x31x16xbf16> to vector<31x16xbf16>
    %83 = vector.shape_cast %80 : vector<31x16xbf16> to vector<1x31x16xbf16>
    tpu.vector_store %arg10[%c0_33, %c0_34, %c0_35], %83 {strides = array<i32>} : memref<1x31x16xbf16, #tpu.memory_space<vmem>>, vector<1x31x16xbf16>,
    return
  }
  func.func @transform_0(%arg0: i32) -> (i32, i32, i32) {
    %c0_i32 = arith.constant 0 : i32
    %c0_i32_0 = arith.constant 0 : i32
    %c0_i32_1 = arith.constant 0 : i32
    return %arg0, %c0_i32, %c0_i32_0 : i32, i32, i32
  }
  func.func @transform_1(%arg0: i32) -> (i32, i32, i32) {
    %c0_i32 = arith.constant 0 : i32
    %c0_i32_0 = arith.constant 0 : i32
    %c0_i32_1 = arith.constant 0 : i32
    return %arg0, %c0_i32, %c0_i32_0 : i32, i32, i32
  }
  func.func @transform_2(%arg0: i32) -> (i32, i32) {
    %c0_i32 = arith.constant 0 : i32
    %c0_i32_0 = arith.constant 0 : i32
    %c0_i32_1 = arith.constant 0 : i32
    return %c0_i32, %c0_i32_0 : i32, i32
  }
  func.func @transform_3(%arg0: i32) -> (i32, i32) {
    %c0_i32 = arith.constant 0 : i32
    %c0_i32_0 = arith.constant 0 : i32
    %c0_i32_1 = arith.constant 0 : i32
    return %c0_i32, %c0_i32_0 : i32, i32
  }
  func.func @transform_4(%arg0: i32) -> (i32, i32) {
    %c0_i32 = arith.constant 0 : i32
    %c0_i32_0 = arith.constant 0 : i32
    %c0_i32_1 = arith.constant 0 : i32
    return %c0_i32, %c0_i32_0 : i32, i32
  }
  func.func @transform_5(%arg0: i32) -> (i32, i32) {
    %c0_i32 = arith.constant 0 : i32
    %c0_i32_0 = arith.constant 0 : i32
    %c0_i32_1 = arith.constant 0 : i32
    return %c0_i32, %c0_i32_0 : i32, i32
  }
  func.func @transform_6(%arg0: i32) -> (i32, i32) {
    %c0_i32 = arith.constant 0 : i32
    %c0_i32_0 = arith.constant 0 : i32
    %c0_i32_1 = arith.constant 0 : i32
    return %c0_i32, %c0_i32_0 : i32, i32
  }
  func.func @transform_7(%arg0: i32) -> (i32, i32) {
    %c0_i32 = arith.constant 0 : i32
    %c0_i32_0 = arith.constant 0 : i32
    %c0_i32_1 = arith.constant 0 : i32
    return %c0_i32, %c0_i32_0 : i32, i32
  }
  func.func @transform_8(%arg0: i32) -> (i32, i32) {
    %c0_i32 = arith.constant 0 : i32
    %c0_i32_0 = arith.constant 0 : i32
    %c0_i32_1 = arith.constant 0 : i32
    return %c0_i32, %c0_i32_0 : i32, i32
  }
  func.func @transform_9(%arg0: i32) -> (i32, i32, i32) {
    %c0_i32 = arith.constant 0 : i32
    %c0_i32_0 = arith.constant 0 : i32
    %c0_i32_1 = arith.constant 0 : i32
    return %arg0, %c0_i32, %c0_i32_0 : i32, i32, i32
  }
}

module attributes {stable_mosaic.version = 11 : i64} {
  func.func @kernel(%arg0: i32, %arg1: memref<1x31x16xbf16, #tpu.memory_space<vmem>>, %arg2: memref<1x64x8xbf16, #tpu.memory_space<vmem>>, %arg3: memref<80x16xbf16, #tpu.memory_space<vmem>>, %arg4: memref<1x16xf32, #tpu.memory_space<vmem>>, %arg5: memref<80x8xbf16, #tpu.memory_space<vmem>>, %arg6: memref<1x8xf32, #tpu.memory_space<vmem>>, %arg7: memref<40x8xbf16, #tpu.memory_space<vmem>>, %arg8: memref<40x8xbf16, #tpu.memory_space<vmem>>, %arg9: memref<1x8xf32, #tpu.memory_space<vmem>>, %arg10: memref<1x61x8xbf16, #tpu.memory_space<vmem>>) attributes {dimension_semantics = [#tpu.dimension_semantics<parallel>], iteration_bounds = array<i64: 2>, scalar_prefetch = 0 : i64, scratch_operands = 0 : i64, tpu.core_type = #tpu.core_type<tc>, window_params = [{transform_indices = @transform_0, window_bounds = array<i64: 1, 31, 16>}, {transform_indices = @transform_1, window_bounds = array<i64: 1, 64, 8>}, {pipeline_mode = #tpu.pipeline_mode<synchronous>, transform_indices = @transform_2, window_bounds = array<i64: 80, 16>}, {pipeline_mode = #tpu.pipeline_mode<synchronous>, transform_indices = @transform_3, window_bounds = array<i64: 1, 16>}, {pipeline_mode = #tpu.pipeline_mode<synchronous>, transform_indices = @transform_4, window_bounds = array<i64: 80, 8>}, {pipeline_mode = #tpu.pipeline_mode<synchronous>, transform_indices = @transform_5, window_bounds = array<i64: 1, 8>}, {pipeline_mode = #tpu.pipeline_mode<synchronous>, transform_indices = @transform_6, window_bounds = array<i64: 40, 8>}, {pipeline_mode = #tpu.pipeline_mode<synchronous>, transform_indices = @transform_7, window_bounds = array<i64: 40, 8>}, {pipeline_mode = #tpu.pipeline_mode<synchronous>, transform_indices = @transform_8, window_bounds = array<i64: 1, 8>}, {transform_indices = @transform_9, window_bounds = array<i64: 1, 61, 8>}]} {
    %c0 = arith.constant 0 : index
    %c0_0 = arith.constant 0 : index
    %c0_1 = arith.constant 0 : index
    %0 = vector.load %arg1[%c0, %c0_0, %c0_1] : memref<1x31x16xbf16, #tpu.memory_space<vmem>>, vector<1x31x16xbf16>
    %1 = vector.shape_cast %0 : vector<1x31x16xbf16> to vector<31x16xbf16>
    %2 = arith.extf %1 : vector<31x16xbf16> to vector<31x16xf32>
    %3 = vector.shape_cast %2 : vector<31x16xf32> to vector<31x1x16xf32>
    %cst = arith.constant 0.000000e+00 : f32
    %4 = vector.broadcast %cst : f32 to vector<31x1x16xf32>
    %5 = tpu.concatenate %3, %4 in 1 : vector<31x1x16xf32>, vector<31x1x16xf32> -> vector<31x2x16xf32>
    %6 = vector.shape_cast %5 : vector<31x2x16xf32> to vector<62x16xf32>
    %7 = vector.extract_strided_slice %6 {offsets = [0, 0], sizes = [61, 16], strides = [1, 1]} : vector<62x16xf32> to vector<61x16xf32>
    %cst_2 = arith.constant 0.000000e+00 : f32
    %8 = vector.broadcast %cst_2 : f32 to vector<2x16xf32>
    %9 = tpu.concatenate %8, %7, %8 in 0 : vector<2x16xf32>, vector<61x16xf32>, vector<2x16xf32> -> vector<65x16xf32>
    %10 = vector.extract_strided_slice %9 {offsets = [0, 0], sizes = [61, 16], strides = [1, 1]} : vector<65x16xf32> to vector<61x16xf32>
    %11 = vector.extract_strided_slice %9 {offsets = [1, 0], sizes = [61, 16], strides = [1, 1]} : vector<65x16xf32> to vector<61x16xf32>
    %12 = vector.extract_strided_slice %9 {offsets = [2, 0], sizes = [61, 16], strides = [1, 1]} : vector<65x16xf32> to vector<61x16xf32>
    %13 = vector.extract_strided_slice %9 {offsets = [3, 0], sizes = [61, 16], strides = [1, 1]} : vector<65x16xf32> to vector<61x16xf32>
    %14 = vector.extract_strided_slice %9 {offsets = [4, 0], sizes = [61, 16], strides = [1, 1]} : vector<65x16xf32> to vector<61x16xf32>
    %15 = tpu.concatenate %10, %11, %12, %13, %14 in 1 : vector<61x16xf32>, vector<61x16xf32>, vector<61x16xf32>, vector<61x16xf32>, vector<61x16xf32> -> vector<61x80xf32>
    %16 = arith.truncf %15 : vector<61x80xf32> to vector<61x80xbf16>
    %c0_3 = arith.constant 0 : index
    %c0_4 = arith.constant 0 : index
    %17 = vector.load %arg3[%c0_3, %c0_4] : memref<80x16xbf16, #tpu.memory_space<vmem>>, vector<80x16xbf16>
    %cst_5 = arith.constant dense<0.000000e+00> : vector<61x16xf32>
    %18 = tpu.matmul %16, %17, %cst_5 {dimension_numbers = #tpu.dot_dimension_numbers<[1], [0], [0], [1], [0, 0, 1, 1], [], []>} : vector<61x80xbf16>, vector<80x16xbf16>, vector<61x16xf32> -> vector<61x16xf32>
    %c0_6 = arith.constant 0 : index
    %c0_7 = arith.constant 0 : index
    %19 = vector.load %arg4[%c0_6, %c0_7] : memref<1x16xf32, #tpu.memory_space<vmem>>, vector<1x16xf32>
    %20 = vector.broadcast %19 : vector<1x16xf32> to vector<61x16xf32>
    %21 = arith.addf %18, %20 : vector<61x16xf32>
    %cst_8 = arith.constant 0.000000e+00 : f32
    %22 = vector.broadcast %cst_8 : f32 to vector<61x16xf32>
    %23 = arith.cmpf oge, %21, %22 : vector<61x16xf32>
    %cst_9 = arith.constant 1.000000e-01 : f32
    %24 = vector.broadcast %cst_9 : f32 to vector<61x16xf32>
    %25 = arith.mulf %24, %21 : vector<61x16xf32>
    %26 = arith.select %23, %21, %25 : vector<61x16xi1>, vector<61x16xf32>
    %cst_10 = arith.constant 0.000000e+00 : f32
    %27 = vector.broadcast %cst_10 : f32 to vector<2x16xf32>
    %28 = tpu.concatenate %27, %26, %27 in 0 : vector<2x16xf32>, vector<61x16xf32>, vector<2x16xf32> -> vector<65x16xf32>
    %29 = vector.extract_strided_slice %28 {offsets = [0, 0], sizes = [61, 16], strides = [1, 1]} : vector<65x16xf32> to vector<61x16xf32>
    %30 = vector.extract_strided_slice %28 {offsets = [1, 0], sizes = [61, 16], strides = [1, 1]} : vector<65x16xf32> to vector<61x16xf32>
    %31 = vector.extract_strided_slice %28 {offsets = [2, 0], sizes = [61, 16], strides = [1, 1]} : vector<65x16xf32> to vector<61x16xf32>
    %32 = vector.extract_strided_slice %28 {offsets = [3, 0], sizes = [61, 16], strides = [1, 1]} : vector<65x16xf32> to vector<61x16xf32>
    %33 = vector.extract_strided_slice %28 {offsets = [4, 0], sizes = [61, 16], strides = [1, 1]} : vector<65x16xf32> to vector<61x16xf32>
    %34 = tpu.concatenate %29, %30, %31, %32, %33 in 1 : vector<61x16xf32>, vector<61x16xf32>, vector<61x16xf32>, vector<61x16xf32>, vector<61x16xf32> -> vector<61x80xf32>
    %35 = arith.truncf %34 : vector<61x80xf32> to vector<61x80xbf16>
    %c0_11 = arith.constant 0 : index
    %c0_12 = arith.constant 0 : index
    %36 = vector.load %arg5[%c0_11, %c0_12] : memref<80x8xbf16, #tpu.memory_space<vmem>>, vector<80x8xbf16>
    %cst_13 = arith.constant dense<0.000000e+00> : vector<61x8xf32>
    %37 = tpu.matmul %35, %36, %cst_13 {dimension_numbers = #tpu.dot_dimension_numbers<[1], [0], [0], [1], [0, 0, 1, 1], [], []>} : vector<61x80xbf16>, vector<80x8xbf16>, vector<61x8xf32> -> vector<61x8xf32>
    %c0_14 = arith.constant 0 : index
    %c0_15 = arith.constant 0 : index
    %38 = vector.load %arg6[%c0_14, %c0_15] : memref<1x8xf32, #tpu.memory_space<vmem>>, vector<1x8xf32>
    %39 = vector.broadcast %38 : vector<1x8xf32> to vector<61x8xf32>
    %40 = arith.addf %37, %39 : vector<61x8xf32>
    %cst_16 = arith.constant 0.000000e+00 : f32
    %41 = vector.broadcast %cst_16 : f32 to vector<61x8xf32>
    %42 = arith.cmpf oge, %40, %41 : vector<61x8xf32>
    %cst_17 = arith.constant 1.000000e-01 : f32
    %43 = vector.broadcast %cst_17 : f32 to vector<61x8xf32>
    %44 = arith.mulf %43, %40 : vector<61x8xf32>
    %45 = arith.select %42, %40, %44 : vector<61x8xi1>, vector<61x8xf32>
    %c0_18 = arith.constant 0 : index
    %c1 = arith.constant 1 : index
    %c0_19 = arith.constant 0 : index
    %46 = vector.load %arg2[%c0_18, %c1, %c0_19] : memref<1x64x8xbf16, #tpu.memory_space<vmem>>, vector<1x61x8xbf16>
    %47 = vector.shape_cast %46 : vector<1x61x8xbf16> to vector<61x8xbf16>
    %48 = arith.extf %47 : vector<61x8xbf16> to vector<61x8xf32>
    %cst_20 = arith.constant 0.000000e+00 : f32
    %49 = vector.broadcast %cst_20 : f32 to vector<2x8xf32>
    %50 = tpu.concatenate %49, %48, %49 in 0 : vector<2x8xf32>, vector<61x8xf32>, vector<2x8xf32> -> vector<65x8xf32>
    %51 = vector.extract_strided_slice %50 {offsets = [0, 0], sizes = [61, 8], strides = [1, 1]} : vector<65x8xf32> to vector<61x8xf32>
    %52 = vector.extract_strided_slice %50 {offsets = [1, 0], sizes = [61, 8], strides = [1, 1]} : vector<65x8xf32> to vector<61x8xf32>
    %53 = vector.extract_strided_slice %50 {offsets = [2, 0], sizes = [61, 8], strides = [1, 1]} : vector<65x8xf32> to vector<61x8xf32>
    %54 = vector.extract_strided_slice %50 {offsets = [3, 0], sizes = [61, 8], strides = [1, 1]} : vector<65x8xf32> to vector<61x8xf32>
    %55 = vector.extract_strided_slice %50 {offsets = [4, 0], sizes = [61, 8], strides = [1, 1]} : vector<65x8xf32> to vector<61x8xf32>
    %56 = tpu.concatenate %51, %52, %53, %54, %55 in 1 : vector<61x8xf32>, vector<61x8xf32>, vector<61x8xf32>, vector<61x8xf32>, vector<61x8xf32> -> vector<61x40xf32>
    %cst_21 = arith.constant 0.000000e+00 : f32
    %57 = vector.broadcast %cst_21 : f32 to vector<2x8xf32>
    %58 = tpu.concatenate %57, %45, %57 in 0 : vector<2x8xf32>, vector<61x8xf32>, vector<2x8xf32> -> vector<65x8xf32>
    %59 = vector.extract_strided_slice %58 {offsets = [0, 0], sizes = [61, 8], strides = [1, 1]} : vector<65x8xf32> to vector<61x8xf32>
    %60 = vector.extract_strided_slice %58 {offsets = [1, 0], sizes = [61, 8], strides = [1, 1]} : vector<65x8xf32> to vector<61x8xf32>
    %61 = vector.extract_strided_slice %58 {offsets = [2, 0], sizes = [61, 8], strides = [1, 1]} : vector<65x8xf32> to vector<61x8xf32>
    %62 = vector.extract_strided_slice %58 {offsets = [3, 0], sizes = [61, 8], strides = [1, 1]} : vector<65x8xf32> to vector<61x8xf32>
    %63 = vector.extract_strided_slice %58 {offsets = [4, 0], sizes = [61, 8], strides = [1, 1]} : vector<65x8xf32> to vector<61x8xf32>
    %64 = tpu.concatenate %59, %60, %61, %62, %63 in 1 : vector<61x8xf32>, vector<61x8xf32>, vector<61x8xf32>, vector<61x8xf32>, vector<61x8xf32> -> vector<61x40xf32>
    %65 = arith.truncf %56 : vector<61x40xf32> to vector<61x40xbf16>
    %c0_22 = arith.constant 0 : index
    %c0_23 = arith.constant 0 : index
    %66 = vector.load %arg7[%c0_22, %c0_23] : memref<40x8xbf16, #tpu.memory_space<vmem>>, vector<40x8xbf16>
    %cst_24 = arith.constant dense<0.000000e+00> : vector<61x8xf32>
    %67 = tpu.matmul %65, %66, %cst_24 {dimension_numbers = #tpu.dot_dimension_numbers<[1], [0], [0], [1], [0, 0, 1, 1], [], []>} : vector<61x40xbf16>, vector<40x8xbf16>, vector<61x8xf32> -> vector<61x8xf32>
    %68 = arith.truncf %64 : vector<61x40xf32> to vector<61x40xbf16>
    %c0_25 = arith.constant 0 : index
    %c0_26 = arith.constant 0 : index
    %69 = vector.load %arg8[%c0_25, %c0_26] : memref<40x8xbf16, #tpu.memory_space<vmem>>, vector<40x8xbf16>
    %cst_27 = arith.constant dense<0.000000e+00> : vector<61x8xf32>
    %70 = tpu.matmul %68, %69, %cst_27 {dimension_numbers = #tpu.dot_dimension_numbers<[1], [0], [0], [1], [0, 0, 1, 1], [], []>} : vector<61x40xbf16>, vector<40x8xbf16>, vector<61x8xf32> -> vector<61x8xf32>
    %71 = arith.addf %67, %70 : vector<61x8xf32>
    %c0_28 = arith.constant 0 : index
    %c0_29 = arith.constant 0 : index
    %72 = vector.load %arg9[%c0_28, %c0_29] : memref<1x8xf32, #tpu.memory_space<vmem>>, vector<1x8xf32>
    %73 = vector.broadcast %72 : vector<1x8xf32> to vector<61x8xf32>
    %74 = arith.addf %71, %73 : vector<61x8xf32>
    %cst_30 = arith.constant 0.000000e+00 : f32
    %75 = vector.broadcast %cst_30 : f32 to vector<61x8xf32>
    %76 = arith.cmpf oge, %74, %75 : vector<61x8xf32>
    %cst_31 = arith.constant 1.000000e-01 : f32
    %77 = vector.broadcast %cst_31 : f32 to vector<61x8xf32>
    %78 = arith.mulf %77, %74 : vector<61x8xf32>
    %79 = arith.select %76, %74, %78 : vector<61x8xi1>, vector<61x8xf32>
    %80 = arith.truncf %79 : vector<61x8xf32> to vector<61x8xbf16>
    %c0_32 = arith.constant 0 : index
    %c0_33 = arith.constant 0 : index
    %c0_34 = arith.constant 0 : index
    %81 = vector.load %arg10[%c0_32, %c0_33, %c0_34] : memref<1x61x8xbf16, #tpu.memory_space<vmem>>, vector<1x61x8xbf16>
    %82 = vector.shape_cast %81 : vector<1x61x8xbf16> to vector<61x8xbf16>
    %83 = vector.shape_cast %80 : vector<61x8xbf16> to vector<1x61x8xbf16>
    tpu.vector_store %arg10[%c0_32, %c0_33, %c0_34], %83 {strides = array<i32>} : memref<1x61x8xbf16, #tpu.memory_space<vmem>>, vector<1x61x8xbf16>,
    return
  }
  func.func @transform_0(%arg0: i32) -> (i32, i32, i32) {
    %c0_i32 = arith.constant 0 : i32
    %c0_i32_0 = arith.constant 0 : i32
    %c0_i32_1 = arith.constant 0 : i32
    return %arg0, %c0_i32, %c0_i32_0 : i32, i32, i32
  }
  func.func @transform_1(%arg0: i32) -> (i32, i32, i32) {
    %c0_i32 = arith.constant 0 : i32
    %c0_i32_0 = arith.constant 0 : i32
    %c0_i32_1 = arith.constant 0 : i32
    return %arg0, %c0_i32, %c0_i32_0 : i32, i32, i32
  }
  func.func @transform_2(%arg0: i32) -> (i32, i32) {
    %c0_i32 = arith.constant 0 : i32
    %c0_i32_0 = arith.constant 0 : i32
    %c0_i32_1 = arith.constant 0 : i32
    return %c0_i32, %c0_i32_0 : i32, i32
  }
  func.func @transform_3(%arg0: i32) -> (i32, i32) {
    %c0_i32 = arith.constant 0 : i32
    %c0_i32_0 = arith.constant 0 : i32
    %c0_i32_1 = arith.constant 0 : i32
    return %c0_i32, %c0_i32_0 : i32, i32
  }
  func.func @transform_4(%arg0: i32) -> (i32, i32) {
    %c0_i32 = arith.constant 0 : i32
    %c0_i32_0 = arith.constant 0 : i32
    %c0_i32_1 = arith.constant 0 : i32
    return %c0_i32, %c0_i32_0 : i32, i32
  }
  func.func @transform_5(%arg0: i32) -> (i32, i32) {
    %c0_i32 = arith.constant 0 : i32
    %c0_i32_0 = arith.constant 0 : i32
    %c0_i32_1 = arith.constant 0 : i32
    return %c0_i32, %c0_i32_0 : i32, i32
  }
  func.func @transform_6(%arg0: i32) -> (i32, i32) {
    %c0_i32 = arith.constant 0 : i32
    %c0_i32_0 = arith.constant 0 : i32
    %c0_i32_1 = arith.constant 0 : i32
    return %c0_i32, %c0_i32_0 : i32, i32
  }
  func.func @transform_7(%arg0: i32) -> (i32, i32) {
    %c0_i32 = arith.constant 0 : i32
    %c0_i32_0 = arith.constant 0 : i32
    %c0_i32_1 = arith.constant 0 : i32
    return %c0_i32, %c0_i32_0 : i32, i32
  }
  func.func @transform_8(%arg0: i32) -> (i32, i32) {
    %c0_i32 = arith.constant 0 : i32
    %c0_i32_0 = arith.constant 0 : i32
    %c0_i32_1 = arith.constant 0 : i32
    return %c0_i32, %c0_i32_0 : i32, i32
  }
  func.func @transform_9(%arg0: i32) -> (i32, i32, i32) {
    %c0_i32 = arith.constant 0 : i32
    %c0_i32_0 = arith.constant 0 : i32
    %c0_i32_1 = arith.constant 0 : i32
    return %arg0, %c0_i32, %c0_i32_0 : i32, i32, i32
  }
}

module attributes {stable_mosaic.version = 11 : i64} {
  func.func @kernel(%arg0: i32, %arg1: memref<1x61x8xbf16, #tpu.memory_space<vmem>>, %arg2: memref<8x1xbf16, #tpu.memory_space<vmem>>, %arg3: memref<1x1xf32, #tpu.memory_space<vmem>>, %arg4: memref<1x61x1xf32, #tpu.memory_space<vmem>>) attributes {dimension_semantics = [#tpu.dimension_semantics<parallel>], iteration_bounds = array<i64: 2>, scalar_prefetch = 0 : i64, scratch_operands = 0 : i64, tpu.core_type = #tpu.core_type<tc>, window_params = [{transform_indices = @transform_0, window_bounds = array<i64: 1, 61, 8>}, {pipeline_mode = #tpu.pipeline_mode<synchronous>, transform_indices = @transform_1, window_bounds = array<i64: 8, 1>}, {pipeline_mode = #tpu.pipeline_mode<synchronous>, transform_indices = @transform_2, window_bounds = array<i64: 1, 1>}, {transform_indices = @transform_3, window_bounds = array<i64: 1, 61, 1>}]} {
    %c0 = arith.constant 0 : index
    %c0_0 = arith.constant 0 : index
    %c0_1 = arith.constant 0 : index
    %0 = vector.load %arg1[%c0, %c0_0, %c0_1] : memref<1x61x8xbf16, #tpu.memory_space<vmem>>, vector<1x61x8xbf16>
    %1 = vector.shape_cast %0 : vector<1x61x8xbf16> to vector<61x8xbf16>
    %2 = arith.extf %1 : vector<61x8xbf16> to vector<61x8xf32>
    %3 = arith.truncf %2 : vector<61x8xf32> to vector<61x8xbf16>
    %c0_2 = arith.constant 0 : index
    %c0_3 = arith.constant 0 : index
    %4 = vector.load %arg2[%c0_2, %c0_3] : memref<8x1xbf16, #tpu.memory_space<vmem>>, vector<8x1xbf16>
    %cst = arith.constant dense<0.000000e+00> : vector<61x1xf32>
    %5 = tpu.matmul %3, %4, %cst {dimension_numbers = #tpu.dot_dimension_numbers<[1], [0], [0], [1], [0, 0, 1, 1], [], []>} : vector<61x8xbf16>, vector<8x1xbf16>, vector<61x1xf32> -> vector<61x1xf32>
    %c0_4 = arith.constant 0 : index
    %c0_5 = arith.constant 0 : index
    %6 = vector.load %arg3[%c0_4, %c0_5] : memref<1x1xf32, #tpu.memory_space<vmem>>, vector<1x1xf32>
    %7 = vector.broadcast %6 : vector<1x1xf32> to vector<61x1xf32>
    %8 = arith.addf %5, %7 : vector<61x1xf32>
    %9 = math.tanh %8 : vector<61x1xf32>
    %c0_6 = arith.constant 0 : index
    %c0_7 = arith.constant 0 : index
    %c0_8 = arith.constant 0 : index
    %10 = vector.load %arg4[%c0_6, %c0_7, %c0_8] : memref<1x61x1xf32, #tpu.memory_space<vmem>>, vector<1x61x1xf32>
    %11 = vector.shape_cast %10 : vector<1x61x1xf32> to vector<61x1xf32>
    %12 = vector.shape_cast %9 : vector<61x1xf32> to vector<1x61x1xf32>
    tpu.vector_store %arg4[%c0_6, %c0_7, %c0_8], %12 {strides = array<i32>} : memref<1x61x1xf32, #tpu.memory_space<vmem>>, vector<1x61x1xf32>,
    return
  }
  func.func @transform_0(%arg0: i32) -> (i32, i32, i32) {
    %c0_i32 = arith.constant 0 : i32
    %c0_i32_0 = arith.constant 0 : i32
    %c0_i32_1 = arith.constant 0 : i32
    return %arg0, %c0_i32, %c0_i32_0 : i32, i32, i32
  }
  func.func @transform_1(%arg0: i32) -> (i32, i32) {
    %c0_i32 = arith.constant 0 : i32
    %c0_i32_0 = arith.constant 0 : i32
    %c0_i32_1 = arith.constant 0 : i32
    return %c0_i32, %c0_i32_0 : i32, i32
  }
  func.func @transform_2(%arg0: i32) -> (i32, i32) {
    %c0_i32 = arith.constant 0 : i32
    %c0_i32_0 = arith.constant 0 : i32
    %c0_i32_1 = arith.constant 0 : i32
    return %c0_i32, %c0_i32_0 : i32, i32
  }
  func.func @transform_3(%arg0: i32) -> (i32, i32, i32) {
    %c0_i32 = arith.constant 0 : i32
    %c0_i32_0 = arith.constant 0 : i32
    %c0_i32_1 = arith.constant 0 : i32
    return %arg0, %c0_i32, %c0_i32_0 : i32, i32, i32
  }
}

</mosaic_0001>

<llo_original>
// kernel: wave_unet_forward.8
$region0: #{wave_unet_forward.8}
  #allocation0 [shape = 'u32[]', space=smem, size = 0x4, offset = 0x4, fixed_abs, tag = 'smem constant byte address 0x4 - core index']
  #allocation1 [shape = 'u32[72,128]{1,0:T(1,128)}', space=vmem, size = 0x9000, scoped, tag = 'internal scratch']
  %s0 = inlined_call_operand.vmem [shape: bf16[2,16,32], index: 0, kind: input, shape index: {}]
  %s1 = inlined_call_operand.vmem [shape: bf16[160,32], index: 1, kind: input, shape index: {}]
  %s2 = inlined_call_operand.vmem [shape: f32[1,32], index: 2, kind: input, shape index: {}]
  %s3 = inlined_call_operand.vmem [shape: bf16[2,16,32], index: 3, kind: output, shape index: {}]
  %s4 = sld [smem:[#allocation0]]
  $region45: #{wave_unet_forward.8} parent=0
    _
  %s6 = ssub.s32 1, %s4
  %s7 = scalar_select 0, %s6, %s4
  loop: start=0, step=1, limit=4
  $region2: #{wave_unet_forward.8} parent=0 // loop_pre_header
    _
  $region3: #{wave_unet_forward.8} parent=0 // loop_header
    %s9 = sphi 0, %s13
    %p10 = scmp.ge.s32.totalorder %s9, 4
    %s19 = sphi 0, %s21
    %s22 = sphi 0, %s19
    %s23 = sphi 0, %s22
    %s39 = sphi 0, %s23
    %s43 = sphi 0, %s43
    %s45 = sphi 0, %s43
    %s46 = sphi 0, %s45
    %s60 = sphi 0, %s46
    %s64 = sphi 0, %s64
    %s66 = sphi 0, %s64
    %s67 = sphi 0, %s66
    %s81 = sphi 0, %s67
    %s87 = sphi 0, %s89
    %s90 = sphi 0, %s87
    %s91 = sphi 0, %s90
    %s107 = sphi 0, %s91
  $region4: #{wave_unet_forward.8} parent=0 // loop_header_branch
    %12 = sbr.rel (%p10) target = $region8
  $region5: #{wave_unet_forward.8} parent=0 // loop_body
    %s14 = ssub.s32 %s9, 1
    %s15 = ssub.s32 %s9, 2
    %s16 = sadd.s32 %s9, 1
    %s17 = ssub.s32 %s9, %s16
    %p18 = scmp.eq.s32.totalorder %s17, 0
    %s20 = sadd.s32 %s19, 1
    %s21 = scalar_select %p18, %s19, %s20
    %p24 = pneg %p18
    %p25 = scmp.eq.s32.totalorder %s9, 1
    %p26 = por %p24, %p25
    %p27 = scmp.ne.s32.totalorder %s19, %s22
    %p28 = scmp.eq.s32.totalorder %s9, 0
    %p29 = por %p27, %p28
    %p30 = scmp.ne.s32.totalorder %s19, %s22
    %p31 = scmp.eq.s32.totalorder %s14, 1
    %p32 = por %p30, %p31
    %p33 = scmp.ne.s32.totalorder %s22, %s23
    %p34 = scmp.eq.s32.totalorder %s14, 0
    %p35 = por %p33, %p34
    %p36 = scmp.ne.s32.totalorder %s22, %s23
    %p37 = scmp.eq.s32.totalorder %s15, 1
    %p38 = por %p36, %p37
    %p40 = scmp.ne.s32.totalorder %s23, %s39
    %p41 = scmp.eq.s32.totalorder %s15, 0
    %p42 = por %p40, %p41
    %s44 = sadd.s32 %s43, 1
    %p47 = scmp.eq.s32.totalorder %s9, 1
    %p48 = scmp.ne.s32.totalorder %s43, %s45
    %p49 = scmp.eq.s32.totalorder %s9, 0
    %p50 = por %p48, %p49
    %p51 = scmp.ne.s32.totalorder %s43, %s45
    %p52 = scmp.eq.s32.totalorder %s14, 1
    %p53 = por %p51, %p52
    %p54 = scmp.ne.s32.totalorder %s45, %s46
    %p55 = scmp.eq.s32.totalorder %s14, 0
    %p56 = por %p54, %p55
    %p57 = scmp.ne.s32.totalorder %s45, %s46
    %p58 = scmp.eq.s32.totalorder %s15, 1
    %p59 = por %p57, %p58
    %p61 = scmp.ne.s32.totalorder %s46, %s60
    %p62 = scmp.eq.s32.totalorder %s15, 0
    %p63 = por %p61, %p62
    %s65 = sadd.s32 %s64, 1
    %p68 = scmp.eq.s32.totalorder %s9, 1
    %p69 = scmp.ne.s32.totalorder %s64, %s66
    %p70 = scmp.eq.s32.totalorder %s9, 0
    %p71 = por %p69, %p70
    %p72 = scmp.ne.s32.totalorder %s64, %s66
    %p73 = scmp.eq.s32.totalorder %s14, 1
    %p74 = por %p72, %p73
    %p75 = scmp.ne.s32.totalorder %s66, %s67
    %p76 = scmp.eq.s32.totalorder %s14, 0
    %p77 = por %p75, %p76
    %p78 = scmp.ne.s32.totalorder %s66, %s67
    %p79 = scmp.eq.s32.totalorder %s15, 1
    %p80 = por %p78, %p79
    %p82 = scmp.ne.s32.totalorder %s67, %s81
    %p83 = scmp.eq.s32.totalorder %s15, 0
    %p84 = por %p82, %p83
    %s85 = ssub.s32 %s9, %s16
    %p86 = scmp.eq.s32.totalorder %s85, 0
    %s88 = sadd.s32 %s87, 1
    %s89 = scalar_select %p86, %s87, %s88
    %p92 = pneg %p86
    %p93 = scmp.eq.s32.totalorder %s9, 1
    %p94 = por %p92, %p93
    %p95 = scmp.ne.s32.totalorder %s87, %s90
    %p96 = scmp.eq.s32.totalorder %s9, 0
    %p97 = por %p95, %p96
    %p98 = scmp.ne.s32.totalorder %s87, %s90
    %p99 = scmp.eq.s32.totalorder %s14, 1
    %p100 = por %p98, %p99
    %p101 = scmp.ne.s32.totalorder %s90, %s91
    %p102 = scmp.eq.s32.totalorder %s14, 0
    %p103 = por %p101, %p102
    %p104 = scmp.ne.s32.totalorder %s90, %s91
    %p105 = scmp.eq.s32.totalorder %s15, 1
    %p106 = por %p104, %p105
    %p108 = scmp.ne.s32.totalorder %s91, %s107
    %p109 = scmp.eq.s32.totalorder %s15, 0
    %p110 = por %p108, %p109
    %p111 = scmp.le.s32.totalorder 1, %s9
    %p112 = scmp.lt.s32.totalorder %s9, 3
    %p113 = pnand %p111, %p112
    %p114 = pneg %p113
    // Predicated region
    $region9: #{wave_unet_forward.8} parent=5 // pred_check
      _
    $region10: #{wave_unet_forward.8} parent=5 // pred_check_branch
      %116 = sbr.rel (%p113) target = $region12
    $region11: #{wave_unet_forward.8} parent=5 // pred_region
      %s117 = ssub.s32 %s9, 1
      // Predicated region
      $region13: #{wave_unet_forward.8} parent=11 // pred_check
        %p118 = pneg %p56
      $region14: #{wave_unet_forward.8} parent=11 // pred_check_branch
        %120 = sbr.rel (%p118) target = $region16
      $region15: #{wave_unet_forward.8} parent=11 // pred_region
        _
      $region16: #{wave_unet_forward.8} parent=11 // pred_fallthru
        _
      // Predicated region
      $region17: #{wave_unet_forward.8} parent=11 // pred_check
        %p121 = pneg %p77
      $region18: #{wave_unet_forward.8} parent=11 // pred_check_branch
        %123 = sbr.rel (%p121) target = $region20
      $region19: #{wave_unet_forward.8} parent=11 // pred_region
        _
      $region20: #{wave_unet_forward.8} parent=11 // pred_fallthru
        _
    $region12: #{wave_unet_forward.8} parent=5 // pred_fallthru
      _
    %p124 = scmp.lt.s32.totalorder %s9, 2
    // Predicated region
    $region21: #{wave_unet_forward.8} parent=5 // pred_check
      %p125 = pneg %p124
    $region22: #{wave_unet_forward.8} parent=5 // pred_check_branch
      %127 = sbr.rel (%p125) target = $region24
    $region23: #{wave_unet_forward.8} parent=5 // pred_region
      // Predicated region
      $region25: #{wave_unet_forward.8} parent=23 // pred_check
        %p128 = pneg %p29
      $region26: #{wave_unet_forward.8} parent=23 // pred_check_branch
        %130 = sbr.rel (%p128) target = $region28
      $region27: #{wave_unet_forward.8} parent=23 // pred_region
        %p131 = scmp.lt.s32.totalorder %s9, 1
        %s132 = scalar_select %p131, %s9, 1
        %s133 = smul.addr %s132, 2
        %s134 = smul.addr %s133, 4
        %s135 = scalar_lea.vmem %s0, %s134
      $region28: #{wave_unet_forward.8} parent=23 // pred_fallthru
        _
    $region24: #{wave_unet_forward.8} parent=5 // pred_fallthru
      _
    %p136 = scmp.le.s32.totalorder 1, %s9
    %p137 = scmp.lt.s32.totalorder %s9, 3
    %p138 = pnand %p136, %p137
    %p139 = pneg %p138
    // Predicated region
    $region29: #{wave_unet_forward.8} parent=5 // pred_check
      _
    $region30: #{wave_unet_forward.8} parent=5 // pred_check_branch
      %141 = sbr.rel (%p138) target = $region32
    $region31: #{wave_unet_forward.8} parent=5 // pred_region
      %s142 = ssub.s32 %s9, 1
      %p143 = scmp.lt.s32.totalorder %s14, 1
      %s144 = scalar_select %p143, %s14, 1
      %s145 = smul.addr %s144, 2
      %s146 = smul.addr %s145, 4
      %s147 = scalar_lea.vmem %s0, %s146
      %p148 = pneg %p35
      %p149 = pneg %p32
      %p150 = pneg %p56
      %p151 = pneg %p53
      %p152 = pneg %p77
      %p153 = pneg %p74
      %p154 = pneg %p103
      %p155 = pneg %p100
      %p156 = scmp.lt.s32.totalorder %s14, 1
      %s157 = scalar_select %p156, %s14, 1
      %s158 = smul.addr %s157, 2
      %s159 = smul.addr %s158, 4
      %s160 = scalar_lea.vmem %s3, %s159
      %p161 = scmp.lt.s32.totalorder %s14, 1
      %s162 = scalar_select %p161, %s14, 1
      %s163 = smul.addr %s162, 2
      %s164 = smul.addr %s163, 4
      %s165 = scalar_lea.vmem %s0, %s164
      %p166 = scmp.lt.s32.totalorder %s14, 1
      %s167 = scalar_select %p166, %s14, 1
      %s168 = smul.addr %s167, 2
      %s169 = smul.addr %s168, 4
      %s170 = scalar_lea.vmem %s3, %s169
      %v172 = vld [vmem:[%s165] sm:$0xf]
      %v173 = vld [vmem:[%s165 + $0x4] sm:$0xf]
      %v174 = vunpack.c.l.bf16 %v172
      %v175 = vunpack.c.l.bf16 %v173
      %vm178 = vcmask 1041408
      %v179 = vrot.slane %v174, 6
      %v180 = vrot.slane %v175, 6
      %v181 = vsel %vm178, %v179, %v180
      %v185 = vsel %vm178, 0.0, %v179
      %v186 = vsel %vm178, %v180, 0.0
      %vm189 = vcmask 1046528
      %v190 = vrot.slane %v185, 1
      %v191 = vrot.slane %v181, 1
      %v192 = vsel %vm189, %v190, %v191
      %v193 = vrot.slane %v186, 1
      %v194 = vsel %vm189, %v191, %v193
      %195 = vrot.lane.b32.xlu0 %v192, 32
      %v196 = vpop.permute.xlu0 %195
      %197 = vrot.lane.b32.xlu0 %v194, 32
      %v198 = vpop.permute.xlu0 %197
      %vm201 = vcmask 1045504
      %v202 = vrot.slane %v185, 2
      %v203 = vrot.slane %v181, 2
      %v204 = vsel %vm201, %v202, %v203
      %v205 = vrot.slane %v186, 2
      %v206 = vsel %vm201, %v203, %v205
      %207 = vrot.lane.b32.xlu0 %v204, 64
      %v208 = vpop.permute.xlu0 %207
      %209 = vrot.lane.b32.xlu0 %v206, 64
      %v210 = vpop.permute.xlu0 %209
      %vm213 = vcmask 1044480
      %v214 = vrot.slane %v185, 3
      %v215 = vrot.slane %v181, 3
      %v216 = vsel %vm213, %v214, %v215
      %v217 = vrot.slane %v186, 3
      %v218 = vsel %vm213, %v215, %v217
      %219 = vrot.lane.b32.xlu0 %v216, 96
      %v220 = vpop.permute.xlu0 %219
      %221 = vrot.lane.b32.xlu0 %v218, 96
      %v222 = vpop.permute.xlu0 %221
      %vm225 = vcmask 1043456
      %v226 = vrot.slane %v185, 4
      %v227 = vrot.slane %v181, 4
      %v228 = vsel %vm225, %v226, %v227
      %v229 = vrot.slane %v186, 4
      %v230 = vsel %vm225, %v227, %v229
      %vm233 = vcmask 261120
      %v234 = vsel %vm233, %v185, %v196
      %v235 = vsel %vm233, %v181, %v198
      %vm236 = vcmask 523264
      %v237 = vsel %vm236, %v234, %v208
      %v238 = vsel %vm236, %v235, %v210
      %vm239 = vcmask 785408
      %v240 = vsel %vm239, %v237, %v220
      %v241 = vsel %vm239, %v238, %v222
      %v242 = vpack.c.bf16 %v241, %v240
      %v243 = vpack.c.bf16 %v230, %v228
      %v244 = vld [vmem:[%s1] sm:$0xf]
      %v245 = vld [vmem:[%s1 + $0x4] sm:$0xf]
      %v246 = vld [vmem:[%s1 + $0x8] sm:$0xf]
      %v247 = vld [vmem:[%s1 + $0xc] sm:$0xf]
      %v248 = vld [vmem:[%s1 + $0x10] sm:$0xf]
      %v249 = vld [vmem:[%s1 + $0x14] sm:$0xf]
      %v250 = vld [vmem:[%s1 + $0x18] sm:$0xf]
      %v251 = vld [vmem:[%s1 + $0x1c] sm:$0xf]
      %v252 = vld [vmem:[%s1 + $0x20] sm:$0xf]
      %v253 = vld [vmem:[%s1 + $0x24] sm:$0xf]
      %v254 = vld [vmem:[%s1 + $0x28] sm:$0xf]
      %v255 = vld [vmem:[%s1 + $0x2c] sm:$0xf]
      %v256 = vld [vmem:[%s1 + $0x30] sm:$0xf]
      %v257 = vld [vmem:[%s1 + $0x34] sm:$0xf]
      %v258 = vld [vmem:[%s1 + $0x38] sm:$0xf]
      %v259 = vld [vmem:[%s1 + $0x3c] sm:$0xf]
      %v260 = vld [vmem:[%s1 + $0x40] sm:$0xf]
      %v261 = vld [vmem:[%s1 + $0x44] sm:$0xf]
      %v262 = vld [vmem:[%s1 + $0x48] sm:$0xf]
      %v263 = vld [vmem:[%s1 + $0x4c] sm:$0xf]
      %v264 = vld [vmem:[%s2] sm:$0x1]
      %v266 = vperm.slane %v264, 0
      %v288 = vunpack.c.l.b16 %v244
      %v289 = vunpack.c.l.b16 %v245
      %v290 = vunpack.c.l.b16 %v246
      %v291 = vunpack.c.l.b16 %v247
      %v292 = vunpack.c.l.b16 %v248
      %v293 = vunpack.c.l.b16 %v249
      %v294 = vunpack.c.l.b16 %v250
      %v295 = vunpack.c.l.b16 %v251
      %v296 = vunpack.c.l.b16 %v252
      %v297 = vunpack.c.l.b16 %v253
      %v298 = vunpack.c.l.b16 %v254
      %v299 = vunpack.c.l.b16 %v255
      %v300 = vunpack.c.l.b16 %v256
      %v301 = vunpack.c.l.b16 %v257
      %v302 = vunpack.c.l.b16 %v258
      %v303 = vunpack.c.l.b16 %v259
      %v304 = vunpack.c.l.b16 %v260
      %v305 = vunpack.c.l.b16 %v261
      %v306 = vunpack.c.l.b16 %v262
      %v307 = vunpack.c.l.b16 %v263
      %v308 = vpack.c.b16 %v289, %v288
      %v309 = vpack.c.b16 %v291, %v290
      %v310 = vpack.c.b16 %v293, %v292
      %v311 = vpack.c.b16 %v295, %v294
      %v312 = vpack.c.b16 %v297, %v296
      %v313 = vpack.c.b16 %v299, %v298
      %v314 = vpack.c.b16 %v301, %v300
      %v315 = vpack.c.b16 %v303, %v302
      %v316 = vpack.c.b16 %v305, %v304
      %v317 = vpack.c.b16 %v307, %v306
      %v329 = vsel %vm233, %v243, 0
      %331 = vmatpush.bf16.msra.mxu0 %v315
      %332 = vmatpush.bf16.msra.mxu0 %v314
      %333 = vmatpush.bf16.msra.mxu0 %v313
      %334 = vmatpush.bf16.msra.mxu0 %v312
      %335 = vmatpush.bf16.msra.mxu0 %v311
      %336 = vmatpush.bf16.msra.mxu0 %v310
      %337 = vmatpush.bf16.msra.mxu0 %v309
      %338 = vmatpush.bf16.msra.mxu0 %v308
      %339 = vmatmul.bf16.gmra.mxu0 %v242
      %v340 = vpop.f32.mrf.mxu0
      %v341 = vadd.f32 %v266, %v340
      %v342 = vpop.f32.mrf.mxu0
      %v343 = vadd.f32 %v266, %v342
      %344 = vdwg.mxu0
      %345 = vmatpush.bf16.msra.mxu0 0
      %346 = vmatpush.bf16.msra.mxu0 0
      %347 = vmatpush.bf16.msra.mxu0 0
      %348 = vmatpush.bf16.msra.mxu0 0
      %349 = vmatpush.bf16.msra.mxu0 0
      %350 = vmatpush.bf16.msra.mxu0 0
      %351 = vmatpush.bf16.msra.mxu0 %v317
      %352 = vmatpush.bf16.msra.mxu0 %v316
      %353 = vmatmul.bf16.gmra.mxu0 %v329
      %v354 = vpop.f32.mrf.mxu0
      %v355 = vadd.f32 %v341, %v354
      %v356 = vpop.f32.mrf.mxu0
      %v357 = vadd.f32 %v343, %v356
      %358 = vdwg.mxu0
      %vm359 = vcmp.ge.f32.partialorder %v355, 0.0
      %vm360 = vcmp.ge.f32.partialorder %v357, 0.0
      %v361 = vmul.f32 %v355, 0.1
      %v362 = vmul.f32 %v357, 0.1
      %v363 = vsel %vm359, %v355, %v361
      %v364 = vsel %vm360, %v357, %v362
      %v365 = vpack.c.bf16 %v363, %v363
      %v366 = vpack.c.bf16 %v364, %v364
      %vm367 = vcmask 257024
      %368 = vst.msk [vmem:[%s170] sm:$0xf] %vm367, %v365
      %369 = vst.msk [vmem:[%s170 + $0x4] sm:$0xf] %vm367, %v366
      %p370 = scmp.lt.s32.totalorder %s14, 1
      %s371 = scalar_select %p370, %s14, 1
      %s372 = smul.addr %s371, 2
      %s373 = smul.addr %s372, 4
      %s374 = scalar_lea.vmem %s3, %s373
      // Predicated region
      $region33: #{wave_unet_forward.8} parent=31 // pred_check
        %p375 = pneg %p100
      $region34: #{wave_unet_forward.8} parent=31 // pred_check_branch
        %377 = sbr.rel (%p375) target = $region36
      $region35: #{wave_unet_forward.8} parent=31 // pred_region
        _
      $region36: #{wave_unet_forward.8} parent=31 // pred_fallthru
        _
    $region32: #{wave_unet_forward.8} parent=5 // pred_fallthru
      _
    %p378 = scmp.le.s32.totalorder 2, %s9
    // Predicated region
    $region37: #{wave_unet_forward.8} parent=5 // pred_check
      %p379 = pneg %p378
    $region38: #{wave_unet_forward.8} parent=5 // pred_check_branch
      %381 = sbr.rel (%p379) target = $region40
    $region39: #{wave_unet_forward.8} parent=5 // pred_region
      %s382 = ssub.s32 %s9, 2
      // Predicated region
      $region41: #{wave_unet_forward.8} parent=39 // pred_check
        %p383 = pneg %p106
      $region42: #{wave_unet_forward.8} parent=39 // pred_check_branch
        %385 = sbr.rel (%p383) target = $region44
      $region43: #{wave_unet_forward.8} parent=39 // pred_region
        %p386 = scmp.lt.s32.totalorder %s15, 1
        %s387 = scalar_select %p386, %s15, 1
        %s388 = smul.addr %s387, 2
        %s389 = smul.addr %s388, 4
        %s390 = scalar_lea.vmem %s3, %s389
      $region44: #{wave_unet_forward.8} parent=39 // pred_fallthru
        _
    $region40: #{wave_unet_forward.8} parent=5 // pred_fallthru
      _
  $region6: #{wave_unet_forward.8} parent=0 // loop_footer
    %s13 = sadd.s32 1, %s9
  $region7: #{wave_unet_forward.8} parent=0 // loop_footer_branch
    %8 = sbr.rel target = $region3
  $region8: #{wave_unet_forward.8} parent=0 // loop_exit
    _

// kernel: wave_unet_forward.7
$region0: #{wave_unet_forward.7}
  #allocation0 [shape = 'u32[]', space=smem, size = 0x4, offset = 0x4, fixed_abs, tag = 'smem constant byte address 0x4 - core index']
  #allocation1 [shape = 'u32[72,128]{1,0:T(1,128)}', space=vmem, size = 0x9000, scoped, tag = 'internal scratch']
  #allocation2 [shape = 'f32[36,32]{1,0:T(8,128)}', space=vmem, size = 0x5000, scoped, tag = 'scratch operand']
  %s0 = inlined_call_operand.vmem [shape: bf16[2,32,16], index: 0, kind: input, shape index: {}]
  %s1 = inlined_call_operand.vmem [shape: bf16[80,16], index: 1, kind: input, shape index: {}]
  %s2 = inlined_call_operand.vmem [shape: f32[1,16], index: 2, kind: input, shape index: {}]
  %s3 = inlined_call_operand.vmem [shape: bf16[80,32], index: 3, kind: input, shape index: {}]
  %s4 = inlined_call_operand.vmem [shape: f32[1,32], index: 4, kind: input, shape index: {}]
  %s5 = inlined_call_operand.vmem [shape: bf16[160,32], index: 5, kind: input, shape index: {}]
  %s6 = inlined_call_operand.vmem [shape: f32[1,32], index: 6, kind: input, shape index: {}]
  %s7 = inlined_call_operand.vmem [shape: bf16[2,16,32], index: 7, kind: output, shape index: {0}]
  %s8 = inlined_call_operand.vmem [shape: bf16[2,32,16], index: 8, kind: output, shape index: {1}]
  %9 = xla_tuple %s7, %s8
  %s10 = sld [smem:[#allocation0]]
  $region69: #{wave_unet_forward.7} parent=0
    _
  %s12 = ssub.s32 1, %s10
  %s13 = scalar_select 0, %s12, %s10
  loop: start=0, step=1, limit=4
  $region2: #{wave_unet_forward.7} parent=0 // loop_pre_header
    _
  $region3: #{wave_unet_forward.7} parent=0 // loop_header
    %s15 = sphi 0, %s19
    %p16 = scmp.ge.s32.totalorder %s15, 4
    %s25 = sphi 0, %s27
    %s28 = sphi 0, %s25
    %s29 = sphi 0, %s28
    %s45 = sphi 0, %s29
    %s49 = sphi 0, %s49
    %s51 = sphi 0, %s49
    %s52 = sphi 0, %s51
    %s66 = sphi 0, %s52
    %s70 = sphi 0, %s70
    %s72 = sphi 0, %s70
    %s73 = sphi 0, %s72
    %s87 = sphi 0, %s73
    %s91 = sphi 0, %s91
    %s93 = sphi 0, %s91
    %s94 = sphi 0, %s93
    %s108 = sphi 0, %s94
    %s112 = sphi 0, %s112
    %s114 = sphi 0, %s112
    %s115 = sphi 0, %s114
    %s129 = sphi 0, %s115
    %s133 = sphi 0, %s133
    %s135 = sphi 0, %s133
    %s136 = sphi 0, %s135
    %s150 = sphi 0, %s136
    %s154 = sphi 0, %s154
    %s156 = sphi 0, %s154
    %s157 = sphi 0, %s156
    %s171 = sphi 0, %s157
    %s177 = sphi 0, %s179
    %s180 = sphi 0, %s177
    %s181 = sphi 0, %s180
    %s197 = sphi 0, %s181
    %s203 = sphi 0, %s205
    %s206 = sphi 0, %s203
    %s207 = sphi 0, %s206
    %s223 = sphi 0, %s207
  $region4: #{wave_unet_forward.7} parent=0 // loop_header_branch
    %18 = sbr.rel (%p16) target = $region8
  $region5: #{wave_unet_forward.7} parent=0 // loop_body
    %s20 = ssub.s32 %s15, 1
    %s21 = ssub.s32 %s15, 2
    %s22 = sadd.s32 %s15, 1
    %s23 = ssub.s32 %s15, %s22
    %p24 = scmp.eq.s32.totalorder %s23, 0
    %s26 = sadd.s32 %s25, 1
    %s27 = scalar_select %p24, %s25, %s26
    %p30 = pneg %p24
    %p31 = scmp.eq.s32.totalorder %s15, 1
    %p32 = por %p30, %p31
    %p33 = scmp.ne.s32.totalorder %s25, %s28
    %p34 = scmp.eq.s32.totalorder %s15, 0
    %p35 = por %p33, %p34
    %p36 = scmp.ne.s32.totalorder %s25, %s28
    %p37 = scmp.eq.s32.totalorder %s20, 1
    %p38 = por %p36, %p37
    %p39 = scmp.ne.s32.totalorder %s28, %s29
    %p40 = scmp.eq.s32.totalorder %s20, 0
    %p41 = por %p39, %p40
    %p42 = scmp.ne.s32.totalorder %s28, %s29
    %p43 = scmp.eq.s32.totalorder %s21, 1
    %p44 = por %p42, %p43
    %p46 = scmp.ne.s32.totalorder %s29, %s45
    %p47 = scmp.eq.s32.totalorder %s21, 0
    %p48 = por %p46, %p47
    %s50 = sadd.s32 %s49, 1
    %p53 = scmp.eq.s32.totalorder %s15, 1
    %p54 = scmp.ne.s32.totalorder %s49, %s51
    %p55 = scmp.eq.s32.totalorder %s15, 0
    %p56 = por %p54, %p55
    %p57 = scmp.ne.s32.totalorder %s49, %s51
    %p58 = scmp.eq.s32.totalorder %s20, 1
    %p59 = por %p57, %p58
    %p60 = scmp.ne.s32.totalorder %s51, %s52
    %p61 = scmp.eq.s32.totalorder %s20, 0
    %p62 = por %p60, %p61
    %p63 = scmp.ne.s32.totalorder %s51, %s52
    %p64 = scmp.eq.s32.totalorder %s21, 1
    %p65 = por %p63, %p64
    %p67 = scmp.ne.s32.totalorder %s52, %s66
    %p68 = scmp.eq.s32.totalorder %s21, 0
    %p69 = por %p67, %p68
    %s71 = sadd.s32 %s70, 1
    %p74 = scmp.eq.s32.totalorder %s15, 1
    %p75 = scmp.ne.s32.totalorder %s70, %s72
    %p76 = scmp.eq.s32.totalorder %s15, 0
    %p77 = por %p75, %p76
    %p78 = scmp.ne.s32.totalorder %s70, %s72
    %p79 = scmp.eq.s32.totalorder %s20, 1
    %p80 = por %p78, %p79
    %p81 = scmp.ne.s32.totalorder %s72, %s73
    %p82 = scmp.eq.s32.totalorder %s20, 0
    %p83 = por %p81, %p82
    %p84 = scmp.ne.s32.totalorder %s72, %s73
    %p85 = scmp.eq.s32.totalorder %s21, 1
    %p86 = por %p84, %p85
    %p88 = scmp.ne.s32.totalorder %s73, %s87
    %p89 = scmp.eq.s32.totalorder %s21, 0
    %p90 = por %p88, %p89
    %s92 = sadd.s32 %s91, 1
    %p95 = scmp.eq.s32.totalorder %s15, 1
    %p96 = scmp.ne.s32.totalorder %s91, %s93
    %p97 = scmp.eq.s32.totalorder %s15, 0
    %p98 = por %p96, %p97
    %p99 = scmp.ne.s32.totalorder %s91, %s93
    %p100 = scmp.eq.s32.totalorder %s20, 1
    %p101 = por %p99, %p100
    %p102 = scmp.ne.s32.totalorder %s93, %s94
    %p103 = scmp.eq.s32.totalorder %s20, 0
    %p104 = por %p102, %p103
    %p105 = scmp.ne.s32.totalorder %s93, %s94
    %p106 = scmp.eq.s32.totalorder %s21, 1
    %p107 = por %p105, %p106
    %p109 = scmp.ne.s32.totalorder %s94, %s108
    %p110 = scmp.eq.s32.totalorder %s21, 0
    %p111 = por %p109, %p110
    %s113 = sadd.s32 %s112, 1
    %p116 = scmp.eq.s32.totalorder %s15, 1
    %p117 = scmp.ne.s32.totalorder %s112, %s114
    %p118 = scmp.eq.s32.totalorder %s15, 0
    %p119 = por %p117, %p118
    %p120 = scmp.ne.s32.totalorder %s112, %s114
    %p121 = scmp.eq.s32.totalorder %s20, 1
    %p122 = por %p120, %p121
    %p123 = scmp.ne.s32.totalorder %s114, %s115
    %p124 = scmp.eq.s32.totalorder %s20, 0
    %p125 = por %p123, %p124
    %p126 = scmp.ne.s32.totalorder %s114, %s115
    %p127 = scmp.eq.s32.totalorder %s21, 1
    %p128 = por %p126, %p127
    %p130 = scmp.ne.s32.totalorder %s115, %s129
    %p131 = scmp.eq.s32.totalorder %s21, 0
    %p132 = por %p130, %p131
    %s134 = sadd.s32 %s133, 1
    %p137 = scmp.eq.s32.totalorder %s15, 1
    %p138 = scmp.ne.s32.totalorder %s133, %s135
    %p139 = scmp.eq.s32.totalorder %s15, 0
    %p140 = por %p138, %p139
    %p141 = scmp.ne.s32.totalorder %s133, %s135
    %p142 = scmp.eq.s32.totalorder %s20, 1
    %p143 = por %p141, %p142
    %p144 = scmp.ne.s32.totalorder %s135, %s136
    %p145 = scmp.eq.s32.totalorder %s20, 0
    %p146 = por %p144, %p145
    %p147 = scmp.ne.s32.totalorder %s135, %s136
    %p148 = scmp.eq.s32.totalorder %s21, 1
    %p149 = por %p147, %p148
    %p151 = scmp.ne.s32.totalorder %s136, %s150
    %p152 = scmp.eq.s32.totalorder %s21, 0
    %p153 = por %p151, %p152
    %s155 = sadd.s32 %s154, 1
    %p158 = scmp.eq.s32.totalorder %s15, 1
    %p159 = scmp.ne.s32.totalorder %s154, %s156
    %p160 = scmp.eq.s32.totalorder %s15, 0
    %p161 = por %p159, %p160
    %p162 = scmp.ne.s32.totalorder %s154, %s156
    %p163 = scmp.eq.s32.totalorder %s20, 1
    %p164 = por %p162, %p163
    %p165 = scmp.ne.s32.totalorder %s156, %s157
    %p166 = scmp.eq.s32.totalorder %s20, 0
    %p167 = por %p165, %p166
    %p168 = scmp.ne.s32.totalorder %s156, %s157
    %p169 = scmp.eq.s32.totalorder %s21, 1
    %p170 = por %p168, %p169
    %p172 = scmp.ne.s32.totalorder %s157, %s171
    %p173 = scmp.eq.s32.totalorder %s21, 0
    %p174 = por %p172, %p173
    %s175 = ssub.s32 %s15, %s22
    %p176 = scmp.eq.s32.totalorder %s175, 0
    %s178 = sadd.s32 %s177, 1
    %s179 = scalar_select %p176, %s177, %s178
    %p182 = pneg %p176
    %p183 = scmp.eq.s32.totalorder %s15, 1
    %p184 = por %p182, %p183
    %p185 = scmp.ne.s32.totalorder %s177, %s180
    %p186 = scmp.eq.s32.totalorder %s15, 0
    %p187 = por %p185, %p186
    %p188 = scmp.ne.s32.totalorder %s177, %s180
    %p189 = scmp.eq.s32.totalorder %s20, 1
    %p190 = por %p188, %p189
    %p191 = scmp.ne.s32.totalorder %s180, %s181
    %p192 = scmp.eq.s32.totalorder %s20, 0
    %p193 = por %p191, %p192
    %p194 = scmp.ne.s32.totalorder %s180, %s181
    %p195 = scmp.eq.s32.totalorder %s21, 1
    %p196 = por %p194, %p195
    %p198 = scmp.ne.s32.totalorder %s181, %s197
    %p199 = scmp.eq.s32.totalorder %s21, 0
    %p200 = por %p198, %p199
    %s201 = ssub.s32 %s15, %s22
    %p202 = scmp.eq.s32.totalorder %s201, 0
    %s204 = sadd.s32 %s203, 1
    %s205 = scalar_select %p202, %s203, %s204
    %p208 = pneg %p202
    %p209 = scmp.eq.s32.totalorder %s15, 1
    %p210 = por %p208, %p209
    %p211 = scmp.ne.s32.totalorder %s203, %s206
    %p212 = scmp.eq.s32.totalorder %s15, 0
    %p213 = por %p211, %p212
    %p214 = scmp.ne.s32.totalorder %s203, %s206
    %p215 = scmp.eq.s32.totalorder %s20, 1
    %p216 = por %p214, %p215
    %p217 = scmp.ne.s32.totalorder %s206, %s207
    %p218 = scmp.eq.s32.totalorder %s20, 0
    %p219 = por %p217, %p218
    %p220 = scmp.ne.s32.totalorder %s206, %s207
    %p221 = scmp.eq.s32.totalorder %s21, 1
    %p222 = por %p220, %p221
    %p224 = scmp.ne.s32.totalorder %s207, %s223
    %p225 = scmp.eq.s32.totalorder %s21, 0
    %p226 = por %p224, %p225
    %p227 = scmp.le.s32.totalorder 1, %s15
    %p228 = scmp.lt.s32.totalorder %s15, 3
    %p229 = pnand %p227, %p228
    %p230 = pneg %p229
    // Predicated region
    $region9: #{wave_unet_forward.7} parent=5 // pred_check
      _
    $region10: #{wave_unet_forward.7} parent=5 // pred_check_branch
      %232 = sbr.rel (%p229) target = $region12
    $region11: #{wave_unet_forward.7} parent=5 // pred_region
      %s233 = ssub.s32 %s15, 1
      // Predicated region
      $region13: #{wave_unet_forward.7} parent=11 // pred_check
        %p234 = pneg %p62
      $region14: #{wave_unet_forward.7} parent=11 // pred_check_branch
        %236 = sbr.rel (%p234) target = $region16
      $region15: #{wave_unet_forward.7} parent=11 // pred_region
        _
      $region16: #{wave_unet_forward.7} parent=11 // pred_fallthru
        _
      // Predicated region
      $region17: #{wave_unet_forward.7} parent=11 // pred_check
        %p237 = pneg %p83
      $region18: #{wave_unet_forward.7} parent=11 // pred_check_branch
        %239 = sbr.rel (%p237) target = $region20
      $region19: #{wave_unet_forward.7} parent=11 // pred_region
        _
      $region20: #{wave_unet_forward.7} parent=11 // pred_fallthru
        _
      // Predicated region
      $region21: #{wave_unet_forward.7} parent=11 // pred_check
        %p240 = pneg %p104
      $region22: #{wave_unet_forward.7} parent=11 // pred_check_branch
        %242 = sbr.rel (%p240) target = $region24
      $region23: #{wave_unet_forward.7} parent=11 // pred_region
        _
      $region24: #{wave_unet_forward.7} parent=11 // pred_fallthru
        _
      // Predicated region
      $region25: #{wave_unet_forward.7} parent=11 // pred_check
        %p243 = pneg %p125
      $region26: #{wave_unet_forward.7} parent=11 // pred_check_branch
        %245 = sbr.rel (%p243) target = $region28
      $region27: #{wave_unet_forward.7} parent=11 // pred_region
        _
      $region28: #{wave_unet_forward.7} parent=11 // pred_fallthru
        _
      // Predicated region
      $region29: #{wave_unet_forward.7} parent=11 // pred_check
        %p246 = pneg %p146
      $region30: #{wave_unet_forward.7} parent=11 // pred_check_branch
        %248 = sbr.rel (%p246) target = $region32
      $region31: #{wave_unet_forward.7} parent=11 // pred_region
        _
      $region32: #{wave_unet_forward.7} parent=11 // pred_fallthru
        _
      // Predicated region
      $region33: #{wave_unet_forward.7} parent=11 // pred_check
        %p249 = pneg %p167
      $region34: #{wave_unet_forward.7} parent=11 // pred_check_branch
        %251 = sbr.rel (%p249) target = $region36
      $region35: #{wave_unet_forward.7} parent=11 // pred_region
        _
      $region36: #{wave_unet_forward.7} parent=11 // pred_fallthru
        _
    $region12: #{wave_unet_forward.7} parent=5 // pred_fallthru
      _
    %p252 = scmp.lt.s32.totalorder %s15, 2
    // Predicated region
    $region37: #{wave_unet_forward.7} parent=5 // pred_check
      %p253 = pneg %p252
    $region38: #{wave_unet_forward.7} parent=5 // pred_check_branch
      %255 = sbr.rel (%p253) target = $region40
    $region39: #{wave_unet_forward.7} parent=5 // pred_region
      // Predicated region
      $region41: #{wave_unet_forward.7} parent=39 // pred_check
        %p256 = pneg %p35
      $region42: #{wave_unet_forward.7} parent=39 // pred_check_branch
        %258 = sbr.rel (%p256) target = $region44
      $region43: #{wave_unet_forward.7} parent=39 // pred_region
        %p259 = scmp.lt.s32.totalorder %s15, 1
        %s260 = scalar_select %p259, %s15, 1
        %s261 = smul.addr %s260, 4
        %s262 = smul.addr %s261, 4
        %s263 = scalar_lea.vmem %s0, %s262
      $region44: #{wave_unet_forward.7} parent=39 // pred_fallthru
        _
    $region40: #{wave_unet_forward.7} parent=5 // pred_fallthru
      _
    %p264 = scmp.le.s32.totalorder 1, %s15
    %p265 = scmp.lt.s32.totalorder %s15, 3
    %p266 = pnand %p264, %p265
    %p267 = pneg %p266
    // Predicated region
    $region45: #{wave_unet_forward.7} parent=5 // pred_check
      _
    $region46: #{wave_unet_forward.7} parent=5 // pred_check_branch
      %269 = sbr.rel (%p266) target = $region48
    $region47: #{wave_unet_forward.7} parent=5 // pred_region
      %s270 = ssub.s32 %s15, 1
      %p271 = scmp.lt.s32.totalorder %s20, 1
      %s272 = scalar_select %p271, %s20, 1
      %s273 = smul.addr %s272, 4
      %s274 = smul.addr %s273, 4
      %s275 = scalar_lea.vmem %s0, %s274
      %p276 = pneg %p41
      %p277 = pneg %p38
      %p278 = pneg %p62
      %p279 = pneg %p59
      %p280 = pneg %p83
      %p281 = pneg %p80
      %p282 = pneg %p104
      %p283 = pneg %p101
      %p284 = pneg %p125
      %p285 = pneg %p122
      %p286 = pneg %p146
      %p287 = pneg %p143
      %p288 = pneg %p167
      %p289 = pneg %p164
      %p290 = pneg %p193
      %p291 = pneg %p190
      %p292 = scmp.lt.s32.totalorder %s20, 1
      %s293 = scalar_select %p292, %s20, 1
      %s294 = smul.addr %s293, 2
      %s295 = smul.addr %s294, 4
      %s296 = scalar_lea.vmem %s7, %s295
      %p297 = pneg %p219
      %p298 = pneg %p216
      %p299 = scmp.lt.s32.totalorder %s20, 1
      %s300 = scalar_select %p299, %s20, 1
      %s301 = smul.addr %s300, 4
      %s302 = smul.addr %s301, 4
      %s303 = scalar_lea.vmem %s8, %s302
      %p304 = scmp.lt.s32.totalorder %s20, 1
      %s305 = scalar_select %p304, %s20, 1
      %s306 = smul.addr %s305, 4
      %s307 = smul.addr %s306, 4
      %s308 = scalar_lea.vmem %s0, %s307
      %p309 = scmp.lt.s32.totalorder %s20, 1
      %s310 = scalar_select %p309, %s20, 1
      %s311 = smul.addr %s310, 2
      %s312 = smul.addr %s311, 4
      %s313 = scalar_lea.vmem %s7, %s312
      %p314 = scmp.lt.s32.totalorder %s20, 1
      %s315 = scalar_select %p314, %s20, 1
      %s316 = smul.addr %s315, 4
      %s317 = smul.addr %s316, 4
      %s318 = scalar_lea.vmem %s8, %s317
      %v320 = vld [vmem:[%s308] sm:$0xf]
      %v321 = vld [vmem:[%s308 + $0x4] sm:$0xf]
      %v322 = vld [vmem:[%s308 + $0x8] sm:$0xf]
      %v323 = vld [vmem:[%s308 + $0xc] sm:$0xf]
      %v324 = vunpack.c.l.bf16 %v320
      %v325 = vunpack.c.l.bf16 %v321
      %v326 = vunpack.c.l.bf16 %v322
      %v327 = vunpack.c.l.bf16 %v323
      %vm332 = vcmask 1041408
      %v333 = vrot.slane %v324, 6
      %v334 = vrot.slane %v325, 6
      %v335 = vsel %vm332, %v333, %v334
      %v336 = vrot.slane %v326, 6
      %v337 = vsel %vm332, %v334, %v336
      %v338 = vrot.slane %v327, 6
      %v339 = vsel %vm332, %v336, %v338
      %v345 = vsel %vm332, 0.0, %v333
      %v346 = vsel %vm332, %v338, 0.0
      %vm349 = vcmask 1046528
      %v350 = vrot.slane %v345, 1
      %v351 = vrot.slane %v335, 1
      %v352 = vsel %vm349, %v350, %v351
      %v353 = vrot.slane %v337, 1
      %v354 = vsel %vm349, %v351, %v353
      %v355 = vrot.slane %v339, 1
      %v356 = vsel %vm349, %v353, %v355
      %v357 = vrot.slane %v346, 1
      %v358 = vsel %vm349, %v355, %v357
      %359 = vrot.lane.b32.xlu0 %v352, 16
      %v360 = vpop.permute.xlu0 %359
      %361 = vrot.lane.b32.xlu0 %v354, 16
      %v362 = vpop.permute.xlu0 %361
      %363 = vrot.lane.b32.xlu0 %v356, 16
      %v364 = vpop.permute.xlu0 %363
      %365 = vrot.lane.b32.xlu0 %v358, 16
      %v366 = vpop.permute.xlu0 %365
      %vm371 = vcmask 1045504
      %v372 = vrot.slane %v345, 2
      %v373 = vrot.slane %v335, 2
      %v374 = vsel %vm371, %v372, %v373
      %v375 = vrot.slane %v337, 2
      %v376 = vsel %vm371, %v373, %v375
      %v377 = vrot.slane %v339, 2
      %v378 = vsel %vm371, %v375, %v377
      %v379 = vrot.slane %v346, 2
      %v380 = vsel %vm371, %v377, %v379
      %381 = vrot.lane.b32.xlu0 %v374, 32
      %v382 = vpop.permute.xlu0 %381
      %383 = vrot.lane.b32.xlu0 %v376, 32
      %v384 = vpop.permute.xlu0 %383
      %385 = vrot.lane.b32.xlu0 %v378, 32
      %v386 = vpop.permute.xlu0 %385
      %387 = vrot.lane.b32.xlu0 %v380, 32
      %v388 = vpop.permute.xlu0 %387
      %vm393 = vcmask 1044480
      %v394 = vrot.slane %v345, 3
      %v395 = vrot.slane %v335, 3
      %v396 = vsel %vm393, %v394, %v395
      %v397 = vrot.slane %v337, 3
      %v398 = vsel %vm393, %v395, %v397
      %v399 = vrot.slane %v339, 3
      %v400 = vsel %vm393, %v397, %v399
      %v401 = vrot.slane %v346, 3
      %v402 = vsel %vm393, %v399, %v401
      %403 = vrot.lane.b32.xlu0 %v396, 48
      %v404 = vpop.permute.xlu0 %403
      %405 = vrot.lane.b32.xlu0 %v398, 48
      %v406 = vpop.permute.xlu0 %405
      %407 = vrot.lane.b32.xlu0 %v400, 48
      %v408 = vpop.permute.xlu0 %407
      %409 = vrot.lane.b32.xlu0 %v402, 48
      %v410 = vpop.permute.xlu0 %409
      %vm415 = vcmask 1043456
      %v416 = vrot.slane %v345, 4
      %v417 = vrot.slane %v335, 4
      %v418 = vsel %vm415, %v416, %v417
      %v419 = vrot.slane %v337, 4
      %v420 = vsel %vm415, %v417, %v419
      %v421 = vrot.slane %v339, 4
      %v422 = vsel %vm415, %v419, %v421
      %v423 = vrot.slane %v346, 4
      %v424 = vsel %vm415, %v421, %v423
      %425 = vrot.lane.b32.xlu0 %v418, 64
      %v426 = vpop.permute.xlu0 %425
      %427 = vrot.lane.b32.xlu0 %v420, 64
      %v428 = vpop.permute.xlu0 %427
      %429 = vrot.lane.b32.xlu0 %v422, 64
      %v430 = vpop.permute.xlu0 %429
      %431 = vrot.lane.b32.xlu0 %v424, 64
      %v432 = vpop.permute.xlu0 %431
      %vm437 = vcmask 130048
      %v438 = vsel %vm437, %v345, %v360
      %v439 = vsel %vm437, %v335, %v362
      %v440 = vsel %vm437, %v337, %v364
      %v441 = vsel %vm437, %v339, %v366
      %vm442 = vcmask 261120
      %v443 = vsel %vm442, %v438, %v382
      %v444 = vsel %vm442, %v439, %v384
      %v445 = vsel %vm442, %v440, %v386
      %v446 = vsel %vm442, %v441, %v388
      %vm447 = vcmask 392192
      %v448 = vsel %vm447, %v443, %v404
      %v449 = vsel %vm447, %v444, %v406
      %v450 = vsel %vm447, %v445, %v408
      %v451 = vsel %vm447, %v446, %v410
      %vm452 = vcmask 523264
      %v453 = vsel %vm452, %v448, %v426
      %v454 = vsel %vm452, %v449, %v428
      %v455 = vsel %vm452, %v450, %v430
      %v456 = vsel %vm452, %v451, %v432
      %v457 = vpack.c.bf16 %v454, %v453
      %v458 = vpack.c.bf16 %v456, %v455
      %v459 = vld [vmem:[%s1] sm:$0xf]
      %v460 = vld [vmem:[%s1 + $0x4] sm:$0xf]
      %v461 = vld [vmem:[%s1 + $0x8] sm:$0xf]
      %v462 = vld [vmem:[%s1 + $0xc] sm:$0xf]
      %v463 = vld [vmem:[%s1 + $0x10] sm:$0xf]
      %v464 = vld [vmem:[%s1 + $0x14] sm:$0xf]
      %v465 = vld [vmem:[%s1 + $0x18] sm:$0xf]
      %v466 = vld [vmem:[%s1 + $0x1c] sm:$0xf]
      %v467 = vld [vmem:[%s1 + $0x20] sm:$0xf]
      %v468 = vld [vmem:[%s1 + $0x24] sm:$0xf]
      %v469 = vld [vmem:[%s2] sm:$0x1]
      %v471 = vperm.slane %v469, 0
      %v483 = vunpack.c.l.b16 %v459
      %v484 = vunpack.c.l.b16 %v460
      %v485 = vunpack.c.l.b16 %v461
      %v486 = vunpack.c.l.b16 %v462
      %v487 = vunpack.c.l.b16 %v463
      %v488 = vunpack.c.l.b16 %v464
      %v489 = vunpack.c.l.b16 %v465
      %v490 = vunpack.c.l.b16 %v466
      %v491 = vunpack.c.l.b16 %v467
      %v492 = vunpack.c.l.b16 %v468
      %v493 = vpack.c.b16 %v484, %v483
      %v494 = vpack.c.b16 %v486, %v485
      %v495 = vpack.c.b16 %v488, %v487
      %v496 = vpack.c.b16 %v490, %v489
      %v497 = vpack.c.b16 %v492, %v491
      %vm503 = vcmask 654336
      %v505 = vsel %vm503, %v457, 0
      %v508 = vsel %vm503, %v458, 0
      %510 = vmatpush.bf16.msra.mxu0 0
      %511 = vmatpush.bf16.msra.mxu0 0
      %512 = vmatpush.bf16.msra.mxu0 0
      %513 = vmatpush.bf16.msra.mxu0 %v497
      %514 = vmatpush.bf16.msra.mxu0 %v496
      %515 = vmatpush.bf16.msra.mxu0 %v495
      %516 = vmatpush.bf16.msra.mxu0 %v494
      %517 = vmatpush.bf16.msra.mxu0 %v493
      %518 = vmatmul.bf16.gmra.mxu0 %v505
      %v519 = vpop.f32.mrf.mxu0
      %v520 = vadd.f32 %v471, %v519
      %v521 = vpop.f32.mrf.mxu0
      %v522 = vadd.f32 %v471, %v521
      %523 = vmatmul.bf16.gmra.mxu0 %v508
      %v524 = vpop.f32.mrf.mxu0
      %v525 = vadd.f32 %v471, %v524
      %v526 = vpop.f32.mrf.mxu0
      %v527 = vadd.f32 %v471, %v526
      %528 = vdwg.mxu0
      %vm529 = vcmp.ge.f32.partialorder %v520, 0.0
      %vm530 = vcmp.ge.f32.partialorder %v522, 0.0
      %vm531 = vcmp.ge.f32.partialorder %v525, 0.0
      %vm532 = vcmp.ge.f32.partialorder %v527, 0.0
      %v533 = vmul.f32 %v520, 0.1
      %v534 = vmul.f32 %v522, 0.1
      %v535 = vmul.f32 %v525, 0.1
      %v536 = vmul.f32 %v527, 0.1
      %v537 = vsel %vm529, %v520, %v533
      %v538 = vsel %vm530, %v522, %v534
      %v539 = vsel %vm531, %v525, %v535
      %v540 = vsel %vm532, %v527, %v536
      %v541 = vpack.c.bf16 %v537, %v537
      %v542 = vpack.c.bf16 %v538, %v538
      %v543 = vpack.c.bf16 %v539, %v539
      %v544 = vpack.c.bf16 %v540, %v540
      %vm545 = vcmask 125952
      %546 = vst.msk [vmem:[%s318] sm:$0xf] %vm545, %v541
      %547 = vst.msk [vmem:[%s318 + $0x4] sm:$0xf] %vm545, %v542
      %548 = vst.msk [vmem:[%s318 + $0x8] sm:$0xf] %vm545, %v543
      %549 = vst.msk [vmem:[%s318 + $0xc] sm:$0xf] %vm545, %v544
      %v554 = vrot.slane %v537, 6
      %v555 = vrot.slane %v538, 6
      %v556 = vsel %vm332, %v554, %v555
      %v557 = vrot.slane %v539, 6
      %v558 = vsel %vm332, %v555, %v557
      %v559 = vrot.slane %v540, 6
      %v560 = vsel %vm332, %v557, %v559
      %v566 = vsel %vm332, 0.0, %v554
      %v567 = vsel %vm332, %v559, 0.0
      %v570 = vrot.slane %v566, 1
      %v571 = vrot.slane %v556, 1
      %v572 = vsel %vm349, %v570, %v571
      %v573 = vrot.slane %v558, 1
      %v574 = vsel %vm349, %v571, %v573
      %v575 = vrot.slane %v560, 1
      %v576 = vsel %vm349, %v573, %v575
      %v577 = vrot.slane %v567, 1
      %v578 = vsel %vm349, %v575, %v577
      %579 = vrot.lane.b32.xlu0 %v572, 16
      %v580 = vpop.permute.xlu0 %579
      %581 = vrot.lane.b32.xlu0 %v574, 16
      %v582 = vpop.permute.xlu0 %581
      %583 = vrot.lane.b32.xlu0 %v576, 16
      %v584 = vpop.permute.xlu0 %583
      %585 = vrot.lane.b32.xlu0 %v578, 16
      %v586 = vpop.permute.xlu0 %585
      %v591 = vrot.slane %v566, 2
      %v592 = vrot.slane %v556, 2
      %v593 = vsel %vm371, %v591, %v592
      %v594 = vrot.slane %v558, 2
      %v595 = vsel %vm371, %v592, %v594
      %v596 = vrot.slane %v560, 2
      %v597 = vsel %vm371, %v594, %v596
      %v598 = vrot.slane %v567, 2
      %v599 = vsel %vm371, %v596, %v598
      %600 = vrot.lane.b32.xlu0 %v593, 32
      %v601 = vpop.permute.xlu0 %600
      %602 = vrot.lane.b32.xlu0 %v595, 32
      %v603 = vpop.permute.xlu0 %602
      %604 = vrot.lane.b32.xlu0 %v597, 32
      %v605 = vpop.permute.xlu0 %604
      %606 = vrot.lane.b32.xlu0 %v599, 32
      %v607 = vpop.permute.xlu0 %606
      %v612 = vrot.slane %v566, 3
      %v613 = vrot.slane %v556, 3
      %v614 = vsel %vm393, %v612, %v613
      %v615 = vrot.slane %v558, 3
      %v616 = vsel %vm393, %v613, %v615
      %v617 = vrot.slane %v560, 3
      %v618 = vsel %vm393, %v615, %v617
      %v619 = vrot.slane %v567, 3
      %v620 = vsel %vm393, %v617, %v619
      %621 = vrot.lane.b32.xlu0 %v614, 48
      %v622 = vpop.permute.xlu0 %621
      %623 = vrot.lane.b32.xlu0 %v616, 48
      %v624 = vpop.permute.xlu0 %623
      %625 = vrot.lane.b32.xlu0 %v618, 48
      %v626 = vpop.permute.xlu0 %625
      %627 = vrot.lane.b32.xlu0 %v620, 48
      %v628 = vpop.permute.xlu0 %627
      %v633 = vrot.slane %v566, 4
      %v634 = vrot.slane %v556, 4
      %v635 = vsel %vm415, %v633, %v634
      %v636 = vrot.slane %v558, 4
      %v637 = vsel %vm415, %v634, %v636
      %v638 = vrot.slane %v560, 4
      %v639 = vsel %vm415, %v636, %v638
      %v640 = vrot.slane %v567, 4
      %v641 = vsel %vm415, %v638, %v640
      %642 = vrot.lane.b32.xlu0 %v635, 64
      %v643 = vpop.permute.xlu0 %642
      %644 = vrot.lane.b32.xlu0 %v637, 64
      %v645 = vpop.permute.xlu0 %644
      %646 = vrot.lane.b32.xlu0 %v639, 64
      %v647 = vpop.permute.xlu0 %646
      %648 = vrot.lane.b32.xlu0 %v641, 64
      %v649 = vpop.permute.xlu0 %648
      %v654 = vsel %vm437, %v566, %v580
      %v655 = vsel %vm437, %v556, %v582
      %v656 = vsel %vm437, %v558, %v584
      %v657 = vsel %vm437, %v560, %v586
      %v658 = vsel %vm442, %v654, %v601
      %v659 = vsel %vm442, %v655, %v603
      %v660 = vsel %vm442, %v656, %v605
      %v661 = vsel %vm442, %v657, %v607
      %v662 = vsel %vm447, %v658, %v622
      %v663 = vsel %vm447, %v659, %v624
      %v664 = vsel %vm447, %v660, %v626
      %v665 = vsel %vm447, %v661, %v628
      %v666 = vsel %vm452, %v662, %v643
      %v667 = vsel %vm452, %v663, %v645
      %v668 = vsel %vm452, %v664, %v647
      %v669 = vsel %vm452, %v665, %v649
      %v670 = vpack.c.bf16 %v667, %v666
      %v671 = vpack.c.bf16 %v669, %v668
      %v672 = vld [vmem:[%s3] sm:$0xf]
      %v673 = vld [vmem:[%s3 + $0x4] sm:$0xf]
      %v674 = vld [vmem:[%s3 + $0x8] sm:$0xf]
      %v675 = vld [vmem:[%s3 + $0xc] sm:$0xf]
      %v676 = vld [vmem:[%s3 + $0x10] sm:$0xf]
      %v677 = vld [vmem:[%s3 + $0x14] sm:$0xf]
      %v678 = vld [vmem:[%s3 + $0x18] sm:$0xf]
      %v679 = vld [vmem:[%s3 + $0x1c] sm:$0xf]
      %v680 = vld [vmem:[%s3 + $0x20] sm:$0xf]
      %v681 = vld [vmem:[%s3 + $0x24] sm:$0xf]
      %v682 = vld [vmem:[%s4] sm:$0x1]
      %v684 = vperm.slane %v682, 0
      %v696 = vunpack.c.l.b16 %v672
      %v697 = vunpack.c.l.b16 %v673
      %v698 = vunpack.c.l.b16 %v674
      %v699 = vunpack.c.l.b16 %v675
      %v700 = vunpack.c.l.b16 %v676
      %v701 = vunpack.c.l.b16 %v677
      %v702 = vunpack.c.l.b16 %v678
      %v703 = vunpack.c.l.b16 %v679
      %v704 = vunpack.c.l.b16 %v680
      %v705 = vunpack.c.l.b16 %v681
      %v706 = vpack.c.b16 %v697, %v696
      %v707 = vpack.c.b16 %v699, %v698
      %v708 = vpack.c.b16 %v701, %v700
      %v709 = vpack.c.b16 %v703, %v702
      %v710 = vpack.c.b16 %v705, %v704
      %v717 = vsel %vm503, %v670, 0
      %v720 = vsel %vm503, %v671, 0
      %722 = vmatpush.bf16.msra.mxu0 0
      %723 = vmatpush.bf16.msra.mxu0 0
      %724 = vmatpush.bf16.msra.mxu0 0
      %725 = vmatpush.bf16.msra.mxu0 %v710
      %726 = vmatpush.bf16.msra.mxu0 %v709
      %727 = vmatpush.bf16.msra.mxu0 %v708
      %728 = vmatpush.bf16.msra.mxu0 %v707
      %729 = vmatpush.bf16.msra.mxu0 %v706
      %730 = vmatmul.bf16.gmra.mxu0 %v717
      %v731 = vpop.f32.mrf.mxu0
      %v732 = vadd.f32 %v684, %v731
      %v733 = vpop.f32.mrf.mxu0
      %v734 = vadd.f32 %v684, %v733
      %735 = vmatmul.bf16.gmra.mxu0 %v720
      %v736 = vpop.f32.mrf.mxu0
      %v737 = vadd.f32 %v684, %v736
      %v738 = vpop.f32.mrf.mxu0
      %v739 = vadd.f32 %v684, %v738
      %740 = vdwg.mxu0
      %vm741 = vcmp.ge.f32.partialorder %v732, 0.0
      %vm742 = vcmp.ge.f32.partialorder %v734, 0.0
      %vm743 = vcmp.ge.f32.partialorder %v737, 0.0
      %vm744 = vcmp.ge.f32.partialorder %v739, 0.0
      %v745 = vmul.f32 %v732, 0.1
      %v746 = vmul.f32 %v734, 0.1
      %v747 = vmul.f32 %v737, 0.1
      %v748 = vmul.f32 %v739, 0.1
      %v749 = vsel %vm741, %v732, %v745
      %v750 = vsel %vm742, %v734, %v746
      %v751 = vsel %vm743, %v737, %v747
      %v752 = vsel %vm744, %v739, %v748
      %vm753 = vcmask 254976
      %754 = vst.msk [vmem:[#allocation2] sm:$0x3] %vm753, 0.0
      %755 = vst.msk [vmem:[#allocation2 + $0x22] sm:$0x3] %vm753, 0.0
      %756 = vst.msk [vmem:[#allocation2 + $0x2] sm:$0xff] %vm442, %v749
      %757 = vst.msk [vmem:[#allocation2 + $0xa] sm:$0xff] %vm442, %v750
      %758 = vst.msk [vmem:[#allocation2 + $0x12] sm:$0xff] %vm442, %v751
      %759 = vst.msk [vmem:[#allocation2 + $0x1a] sm:$0xff] %vm442, %v752
      %v760 = vld [vmem:[#allocation2] ss:$2 sm:$0xff]
      %s761 = scalar_lea.vmem [#allocation2], 16
      %v762 = vld [vmem:[%s761] ss:$2 sm:$0xff]
      %s763 = scalar_lea.vmem [#allocation2], 1
      %v764 = vld [vmem:[%s763] ss:$2 sm:$0xff]
      %s765 = scalar_lea.vmem [#allocation2], 17
      %v766 = vld [vmem:[%s765] ss:$2 sm:$0xff]
      %s767 = scalar_lea.vmem [#allocation2], 2
      %v768 = vld [vmem:[%s767] ss:$2 sm:$0xff]
      %s769 = scalar_lea.vmem [#allocation2], 18
      %v770 = vld [vmem:[%s769] ss:$2 sm:$0xff]
      %s771 = scalar_lea.vmem [#allocation2], 3
      %v772 = vld [vmem:[%s771] ss:$2 sm:$0xff]
      %s773 = scalar_lea.vmem [#allocation2], 19
      %v774 = vld [vmem:[%s773] ss:$2 sm:$0xff]
      %s775 = scalar_lea.vmem [#allocation2], 4
      %v776 = vld [vmem:[%s775] ss:$2 sm:$0xff]
      %s777 = scalar_lea.vmem [#allocation2], 20
      %v778 = vld [vmem:[%s777] ss:$2 sm:$0xff]
      %781 = vrot.lane.b32.xlu0 %v764, 32
      %v782 = vpop.permute.xlu0 %781
      %783 = vrot.lane.b32.xlu0 %v766, 32
      %v784 = vpop.permute.xlu0 %783
      %789 = vrot.lane.b32.xlu0 %v768, 64
      %v790 = vpop.permute.xlu0 %789
      %791 = vrot.lane.b32.xlu0 %v770, 64
      %v792 = vpop.permute.xlu0 %791
      %797 = vrot.lane.b32.xlu0 %v772, 96
      %v798 = vpop.permute.xlu0 %797
      %799 = vrot.lane.b32.xlu0 %v774, 96
      %v800 = vpop.permute.xlu0 %799
      %v803 = vsel %vm442, %v760, %v782
      %v804 = vsel %vm442, %v762, %v784
      %v805 = vsel %vm452, %v803, %v790
      %v806 = vsel %vm452, %v804, %v792
      %vm807 = vcmask 785408
      %v808 = vsel %vm807, %v805, %v798
      %v809 = vsel %vm807, %v806, %v800
      %v810 = vpack.c.bf16 %v809, %v808
      %v811 = vpack.c.bf16 %v778, %v776
      %v812 = vld [vmem:[%s5] sm:$0xf]
      %v813 = vld [vmem:[%s5 + $0x4] sm:$0xf]
      %v814 = vld [vmem:[%s5 + $0x8] sm:$0xf]
      %v815 = vld [vmem:[%s5 + $0xc] sm:$0xf]
      %v816 = vld [vmem:[%s5 + $0x10] sm:$0xf]
      %v817 = vld [vmem:[%s5 + $0x14] sm:$0xf]
      %v818 = vld [vmem:[%s5 + $0x18] sm:$0xf]
      %v819 = vld [vmem:[%s5 + $0x1c] sm:$0xf]
      %v820 = vld [vmem:[%s5 + $0x20] sm:$0xf]
      %v821 = vld [vmem:[%s5 + $0x24] sm:$0xf]
      %v822 = vld [vmem:[%s5 + $0x28] sm:$0xf]
      %v823 = vld [vmem:[%s5 + $0x2c] sm:$0xf]
      %v824 = vld [vmem:[%s5 + $0x30] sm:$0xf]
      %v825 = vld [vmem:[%s5 + $0x34] sm:$0xf]
      %v826 = vld [vmem:[%s5 + $0x38] sm:$0xf]
      %v827 = vld [vmem:[%s5 + $0x3c] sm:$0xf]
      %v828 = vld [vmem:[%s5 + $0x40] sm:$0xf]
      %v829 = vld [vmem:[%s5 + $0x44] sm:$0xf]
      %v830 = vld [vmem:[%s5 + $0x48] sm:$0xf]
      %v831 = vld [vmem:[%s5 + $0x4c] sm:$0xf]
      %v832 = vld [vmem:[%s6] sm:$0x1]
      %v834 = vperm.slane %v832, 0
      %v856 = vunpack.c.l.b16 %v812
      %v857 = vunpack.c.l.b16 %v813
      %v858 = vunpack.c.l.b16 %v814
      %v859 = vunpack.c.l.b16 %v815
      %v860 = vunpack.c.l.b16 %v816
      %v861 = vunpack.c.l.b16 %v817
      %v862 = vunpack.c.l.b16 %v818
      %v863 = vunpack.c.l.b16 %v819
      %v864 = vunpack.c.l.b16 %v820
      %v865 = vunpack.c.l.b16 %v821
      %v866 = vunpack.c.l.b16 %v822
      %v867 = vunpack.c.l.b16 %v823
      %v868 = vunpack.c.l.b16 %v824
      %v869 = vunpack.c.l.b16 %v825
      %v870 = vunpack.c.l.b16 %v826
      %v871 = vunpack.c.l.b16 %v827
      %v872 = vunpack.c.l.b16 %v828
      %v873 = vunpack.c.l.b16 %v829
      %v874 = vunpack.c.l.b16 %v830
      %v875 = vunpack.c.l.b16 %v831
      %v876 = vpack.c.b16 %v857, %v856
      %v877 = vpack.c.b16 %v859, %v858
      %v878 = vpack.c.b16 %v861, %v860
      %v879 = vpack.c.b16 %v863, %v862
      %v880 = vpack.c.b16 %v865, %v864
      %v881 = vpack.c.b16 %v867, %v866
      %v882 = vpack.c.b16 %v869, %v868
      %v883 = vpack.c.b16 %v871, %v870
      %v884 = vpack.c.b16 %v873, %v872
      %v885 = vpack.c.b16 %v875, %v874
      %v897 = vsel %vm442, %v811, 0
      %899 = vmatpush.bf16.msra.mxu0 %v883
      %900 = vmatpush.bf16.msra.mxu0 %v882
      %901 = vmatpush.bf16.msra.mxu0 %v881
      %902 = vmatpush.bf16.msra.mxu0 %v880
      %903 = vmatpush.bf16.msra.mxu0 %v879
      %904 = vmatpush.bf16.msra.mxu0 %v878
      %905 = vmatpush.bf16.msra.mxu0 %v877
      %906 = vmatpush.bf16.msra.mxu0 %v876
      %907 = vmatmul.bf16.gmra.mxu0 %v810
      %v908 = vpop.f32.mrf.mxu0
      %v909 = vadd.f32 %v834, %v908
      %v910 = vpop.f32.mrf.mxu0
      %v911 = vadd.f32 %v834, %v910
      %912 = vdwg.mxu0
      %913 = vmatpush.bf16.msra.mxu0 0
      %914 = vmatpush.bf16.msra.mxu0 0
      %915 = vmatpush.bf16.msra.mxu0 0
      %916 = vmatpush.bf16.msra.mxu0 0
      %917 = vmatpush.bf16.msra.mxu0 0
      %918 = vmatpush.bf16.msra.mxu0 0
      %919 = vmatpush.bf16.msra.mxu0 %v885
      %920 = vmatpush.bf16.msra.mxu0 %v884
      %921 = vmatmul.bf16.gmra.mxu0 %v897
      %v922 = vpop.f32.mrf.mxu0
      %v923 = vadd.f32 %v909, %v922
      %v924 = vpop.f32.mrf.mxu0
      %v925 = vadd.f32 %v911, %v924
      %926 = vdwg.mxu0
      %vm927 = vcmp.ge.f32.partialorder %v923, 0.0
      %vm928 = vcmp.ge.f32.partialorder %v925, 0.0
      %v929 = vmul.f32 %v923, 0.1
      %v930 = vmul.f32 %v925, 0.1
      %v931 = vsel %vm927, %v923, %v929
      %v932 = vsel %vm928, %v925, %v930
      %v933 = vpack.c.bf16 %v931, %v931
      %v934 = vpack.c.bf16 %v932, %v932
      %vm935 = vcmask 257024
      %936 = vst.msk [vmem:[%s313] sm:$0xf] %vm935, %v933
      %937 = vst.msk [vmem:[%s313 + $0x4] sm:$0xf] %vm935, %v934
      %p938 = scmp.lt.s32.totalorder %s20, 1
      %s939 = scalar_select %p938, %s20, 1
      %s940 = smul.addr %s939, 2
      %s941 = smul.addr %s940, 4
      %s942 = scalar_lea.vmem %s7, %s941
      %p943 = scmp.lt.s32.totalorder %s20, 1
      %s944 = scalar_select %p943, %s20, 1
      %s945 = smul.addr %s944, 4
      %s946 = smul.addr %s945, 4
      %s947 = scalar_lea.vmem %s8, %s946
      // Predicated region
      $region49: #{wave_unet_forward.7} parent=47 // pred_check
        %p948 = pneg %p190
      $region50: #{wave_unet_forward.7} parent=47 // pred_check_branch
        %950 = sbr.rel (%p948) target = $region52
      $region51: #{wave_unet_forward.7} parent=47 // pred_region
        _
      $region52: #{wave_unet_forward.7} parent=47 // pred_fallthru
        _
      // Predicated region
      $region53: #{wave_unet_forward.7} parent=47 // pred_check
        %p951 = pneg %p216
      $region54: #{wave_unet_forward.7} parent=47 // pred_check_branch
        %953 = sbr.rel (%p951) target = $region56
      $region55: #{wave_unet_forward.7} parent=47 // pred_region
        _
      $region56: #{wave_unet_forward.7} parent=47 // pred_fallthru
        _
    $region48: #{wave_unet_forward.7} parent=5 // pred_fallthru
      _
    %p954 = scmp.le.s32.totalorder 2, %s15
    // Predicated region
    $region57: #{wave_unet_forward.7} parent=5 // pred_check
      %p955 = pneg %p954
    $region58: #{wave_unet_forward.7} parent=5 // pred_check_branch
      %957 = sbr.rel (%p955) target = $region60
    $region59: #{wave_unet_forward.7} parent=5 // pred_region
      %s958 = ssub.s32 %s15, 2
      // Predicated region
      $region61: #{wave_unet_forward.7} parent=59 // pred_check
        %p959 = pneg %p196
      $region62: #{wave_unet_forward.7} parent=59 // pred_check_branch
        %961 = sbr.rel (%p959) target = $region64
      $region63: #{wave_unet_forward.7} parent=59 // pred_region
        %p962 = scmp.lt.s32.totalorder %s21, 1
        %s963 = scalar_select %p962, %s21, 1
        %s964 = smul.addr %s963, 2
        %s965 = smul.addr %s964, 4
        %s966 = scalar_lea.vmem %s7, %s965
      $region64: #{wave_unet_forward.7} parent=59 // pred_fallthru
        _
      // Predicated region
      $region65: #{wave_unet_forward.7} parent=59 // pred_check
        %p967 = pneg %p222
      $region66: #{wave_unet_forward.7} parent=59 // pred_check_branch
        %969 = sbr.rel (%p967) target = $region68
      $region67: #{wave_unet_forward.7} parent=59 // pred_region
        %p970 = scmp.lt.s32.totalorder %s21, 1
        %s971 = scalar_select %p970, %s21, 1
        %s972 = smul.addr %s971, 4
        %s973 = smul.addr %s972, 4
        %s974 = scalar_lea.vmem %s8, %s973
      $region68: #{wave_unet_forward.7} parent=59 // pred_fallthru
        _
    $region60: #{wave_unet_forward.7} parent=5 // pred_fallthru
      _
  $region6: #{wave_unet_forward.7} parent=0 // loop_footer
    %s19 = sadd.s32 1, %s15
  $region7: #{wave_unet_forward.7} parent=0 // loop_footer_branch
    %14 = sbr.rel target = $region3
  $region8: #{wave_unet_forward.7} parent=0 // loop_exit
    _

// kernel: wave_unet_forward.6
$region0: #{wave_unet_forward.6}
  #allocation0 [shape = 'u32[]', space=smem, size = 0x4, offset = 0x4, fixed_abs, tag = 'smem constant byte address 0x4 - core index']
  #allocation1 [shape = 'u32[72,128]{1,0:T(1,128)}', space=vmem, size = 0x9000, scoped, tag = 'internal scratch']
  #allocation2 [shape = 'f32[68,16]{1,0:T(8,128)}', space=vmem, size = 0x9000, scoped, tag = 'scratch operand']
  %s0 = inlined_call_operand.vmem [shape: bf16[2,64,1], index: 0, kind: input, shape index: {}]
  %s1 = inlined_call_operand.vmem [shape: bf16[5,8], index: 1, kind: input, shape index: {}]
  %s2 = inlined_call_operand.vmem [shape: f32[1,8], index: 2, kind: input, shape index: {}]
  %s3 = inlined_call_operand.vmem [shape: bf16[40,16], index: 3, kind: input, shape index: {}]
  %s4 = inlined_call_operand.vmem [shape: f32[1,16], index: 4, kind: input, shape index: {}]
  %s5 = inlined_call_operand.vmem [shape: bf16[80,16], index: 5, kind: input, shape index: {}]
  %s6 = inlined_call_operand.vmem [shape: f32[1,16], index: 6, kind: input, shape index: {}]
  %s7 = inlined_call_operand.vmem [shape: bf16[2,32,16], index: 7, kind: output, shape index: {0}]
  %s8 = inlined_call_operand.vmem [shape: bf16[2,64,8], index: 8, kind: output, shape index: {1}]
  %9 = xla_tuple %s7, %s8
  %s10 = sld [smem:[#allocation0]]
  $region69: #{wave_unet_forward.6} parent=0
    _
  %s12 = ssub.s32 1, %s10
  %s13 = scalar_select 0, %s12, %s10
  loop: start=0, step=1, limit=4
  $region2: #{wave_unet_forward.6} parent=0 // loop_pre_header
    _
  $region3: #{wave_unet_forward.6} parent=0 // loop_header
    %s15 = sphi 0, %s19
    %p16 = scmp.ge.s32.totalorder %s15, 4
    %s25 = sphi 0, %s27
    %s28 = sphi 0, %s25
    %s29 = sphi 0, %s28
    %s45 = sphi 0, %s29
    %s49 = sphi 0, %s49
    %s51 = sphi 0, %s49
    %s52 = sphi 0, %s51
    %s66 = sphi 0, %s52
    %s70 = sphi 0, %s70
    %s72 = sphi 0, %s70
    %s73 = sphi 0, %s72
    %s87 = sphi 0, %s73
    %s91 = sphi 0, %s91
    %s93 = sphi 0, %s91
    %s94 = sphi 0, %s93
    %s108 = sphi 0, %s94
    %s112 = sphi 0, %s112
    %s114 = sphi 0, %s112
    %s115 = sphi 0, %s114
    %s129 = sphi 0, %s115
    %s133 = sphi 0, %s133
    %s135 = sphi 0, %s133
    %s136 = sphi 0, %s135
    %s150 = sphi 0, %s136
    %s154 = sphi 0, %s154
    %s156 = sphi 0, %s154
    %s157 = sphi 0, %s156
    %s171 = sphi 0, %s157
    %s177 = sphi 0, %s179
    %s180 = sphi 0, %s177
    %s181 = sphi 0, %s180
    %s197 = sphi 0, %s181
    %s203 = sphi 0, %s205
    %s206 = sphi 0, %s203
    %s207 = sphi 0, %s206
    %s223 = sphi 0, %s207
  $region4: #{wave_unet_forward.6} parent=0 // loop_header_branch
    %18 = sbr.rel (%p16) target = $region8
  $region5: #{wave_unet_forward.6} parent=0 // loop_body
    %s20 = ssub.s32 %s15, 1
    %s21 = ssub.s32 %s15, 2
    %s22 = sadd.s32 %s15, 1
    %s23 = ssub.s32 %s15, %s22
    %p24 = scmp.eq.s32.totalorder %s23, 0
    %s26 = sadd.s32 %s25, 1
    %s27 = scalar_select %p24, %s25, %s26
    %p30 = pneg %p24
    %p31 = scmp.eq.s32.totalorder %s15, 1
    %p32 = por %p30, %p31
    %p33 = scmp.ne.s32.totalorder %s25, %s28
    %p34 = scmp.eq.s32.totalorder %s15, 0
    %p35 = por %p33, %p34
    %p36 = scmp.ne.s32.totalorder %s25, %s28
    %p37 = scmp.eq.s32.totalorder %s20, 1
    %p38 = por %p36, %p37
    %p39 = scmp.ne.s32.totalorder %s28, %s29
    %p40 = scmp.eq.s32.totalorder %s20, 0
    %p41 = por %p39, %p40
    %p42 = scmp.ne.s32.totalorder %s28, %s29
    %p43 = scmp.eq.s32.totalorder %s21, 1
    %p44 = por %p42, %p43
    %p46 = scmp.ne.s32.totalorder %s29, %s45
    %p47 = scmp.eq.s32.totalorder %s21, 0
    %p48 = por %p46, %p47
    %s50 = sadd.s32 %s49, 1
    %p53 = scmp.eq.s32.totalorder %s15, 1
    %p54 = scmp.ne.s32.totalorder %s49, %s51
    %p55 = scmp.eq.s32.totalorder %s15, 0
    %p56 = por %p54, %p55
    %p57 = scmp.ne.s32.totalorder %s49, %s51
    %p58 = scmp.eq.s32.totalorder %s20, 1
    %p59 = por %p57, %p58
    %p60 = scmp.ne.s32.totalorder %s51, %s52
    %p61 = scmp.eq.s32.totalorder %s20, 0
    %p62 = por %p60, %p61
    %p63 = scmp.ne.s32.totalorder %s51, %s52
    %p64 = scmp.eq.s32.totalorder %s21, 1
    %p65 = por %p63, %p64
    %p67 = scmp.ne.s32.totalorder %s52, %s66
    %p68 = scmp.eq.s32.totalorder %s21, 0
    %p69 = por %p67, %p68
    %s71 = sadd.s32 %s70, 1
    %p74 = scmp.eq.s32.totalorder %s15, 1
    %p75 = scmp.ne.s32.totalorder %s70, %s72
    %p76 = scmp.eq.s32.totalorder %s15, 0
    %p77 = por %p75, %p76
    %p78 = scmp.ne.s32.totalorder %s70, %s72
    %p79 = scmp.eq.s32.totalorder %s20, 1
    %p80 = por %p78, %p79
    %p81 = scmp.ne.s32.totalorder %s72, %s73
    %p82 = scmp.eq.s32.totalorder %s20, 0
    %p83 = por %p81, %p82
    %p84 = scmp.ne.s32.totalorder %s72, %s73
    %p85 = scmp.eq.s32.totalorder %s21, 1
    %p86 = por %p84, %p85
    %p88 = scmp.ne.s32.totalorder %s73, %s87
    %p89 = scmp.eq.s32.totalorder %s21, 0
    %p90 = por %p88, %p89
    %s92 = sadd.s32 %s91, 1
    %p95 = scmp.eq.s32.totalorder %s15, 1
    %p96 = scmp.ne.s32.totalorder %s91, %s93
    %p97 = scmp.eq.s32.totalorder %s15, 0
    %p98 = por %p96, %p97
    %p99 = scmp.ne.s32.totalorder %s91, %s93
    %p100 = scmp.eq.s32.totalorder %s20, 1
    %p101 = por %p99, %p100
    %p102 = scmp.ne.s32.totalorder %s93, %s94
    %p103 = scmp.eq.s32.totalorder %s20, 0
    %p104 = por %p102, %p103
    %p105 = scmp.ne.s32.totalorder %s93, %s94
    %p106 = scmp.eq.s32.totalorder %s21, 1
    %p107 = por %p105, %p106
    %p109 = scmp.ne.s32.totalorder %s94, %s108
    %p110 = scmp.eq.s32.totalorder %s21, 0
    %p111 = por %p109, %p110
    %s113 = sadd.s32 %s112, 1
    %p116 = scmp.eq.s32.totalorder %s15, 1
    %p117 = scmp.ne.s32.totalorder %s112, %s114
    %p118 = scmp.eq.s32.totalorder %s15, 0
    %p119 = por %p117, %p118
    %p120 = scmp.ne.s32.totalorder %s112, %s114
    %p121 = scmp.eq.s32.totalorder %s20, 1
    %p122 = por %p120, %p121
    %p123 = scmp.ne.s32.totalorder %s114, %s115
    %p124 = scmp.eq.s32.totalorder %s20, 0
    %p125 = por %p123, %p124
    %p126 = scmp.ne.s32.totalorder %s114, %s115
    %p127 = scmp.eq.s32.totalorder %s21, 1
    %p128 = por %p126, %p127
    %p130 = scmp.ne.s32.totalorder %s115, %s129
    %p131 = scmp.eq.s32.totalorder %s21, 0
    %p132 = por %p130, %p131
    %s134 = sadd.s32 %s133, 1
    %p137 = scmp.eq.s32.totalorder %s15, 1
    %p138 = scmp.ne.s32.totalorder %s133, %s135
    %p139 = scmp.eq.s32.totalorder %s15, 0
    %p140 = por %p138, %p139
    %p141 = scmp.ne.s32.totalorder %s133, %s135
    %p142 = scmp.eq.s32.totalorder %s20, 1
    %p143 = por %p141, %p142
    %p144 = scmp.ne.s32.totalorder %s135, %s136
    %p145 = scmp.eq.s32.totalorder %s20, 0
    %p146 = por %p144, %p145
    %p147 = scmp.ne.s32.totalorder %s135, %s136
    %p148 = scmp.eq.s32.totalorder %s21, 1
    %p149 = por %p147, %p148
    %p151 = scmp.ne.s32.totalorder %s136, %s150
    %p152 = scmp.eq.s32.totalorder %s21, 0
    %p153 = por %p151, %p152
    %s155 = sadd.s32 %s154, 1
    %p158 = scmp.eq.s32.totalorder %s15, 1
    %p159 = scmp.ne.s32.totalorder %s154, %s156
    %p160 = scmp.eq.s32.totalorder %s15, 0
    %p161 = por %p159, %p160
    %p162 = scmp.ne.s32.totalorder %s154, %s156
    %p163 = scmp.eq.s32.totalorder %s20, 1
    %p164 = por %p162, %p163
    %p165 = scmp.ne.s32.totalorder %s156, %s157
    %p166 = scmp.eq.s32.totalorder %s20, 0
    %p167 = por %p165, %p166
    %p168 = scmp.ne.s32.totalorder %s156, %s157
    %p169 = scmp.eq.s32.totalorder %s21, 1
    %p170 = por %p168, %p169
    %p172 = scmp.ne.s32.totalorder %s157, %s171
    %p173 = scmp.eq.s32.totalorder %s21, 0
    %p174 = por %p172, %p173
    %s175 = ssub.s32 %s15, %s22
    %p176 = scmp.eq.s32.totalorder %s175, 0
    %s178 = sadd.s32 %s177, 1
    %s179 = scalar_select %p176, %s177, %s178
    %p182 = pneg %p176
    %p183 = scmp.eq.s32.totalorder %s15, 1
    %p184 = por %p182, %p183
    %p185 = scmp.ne.s32.totalorder %s177, %s180
    %p186 = scmp.eq.s32.totalorder %s15, 0
    %p187 = por %p185, %p186
    %p188 = scmp.ne.s32.totalorder %s177, %s180
    %p189 = scmp.eq.s32.totalorder %s20, 1
    %p190 = por %p188, %p189
    %p191 = scmp.ne.s32.totalorder %s180, %s181
    %p192 = scmp.eq.s32.totalorder %s20, 0
    %p193 = por %p191, %p192
    %p194 = scmp.ne.s32.totalorder %s180, %s181
    %p195 = scmp.eq.s32.totalorder %s21, 1
    %p196 = por %p194, %p195
    %p198 = scmp.ne.s32.totalorder %s181, %s197
    %p199 = scmp.eq.s32.totalorder %s21, 0
    %p200 = por %p198, %p199
    %s201 = ssub.s32 %s15, %s22
    %p202 = scmp.eq.s32.totalorder %s201, 0
    %s204 = sadd.s32 %s203, 1
    %s205 = scalar_select %p202, %s203, %s204
    %p208 = pneg %p202
    %p209 = scmp.eq.s32.totalorder %s15, 1
    %p210 = por %p208, %p209
    %p211 = scmp.ne.s32.totalorder %s203, %s206
    %p212 = scmp.eq.s32.totalorder %s15, 0
    %p213 = por %p211, %p212
    %p214 = scmp.ne.s32.totalorder %s203, %s206
    %p215 = scmp.eq.s32.totalorder %s20, 1
    %p216 = por %p214, %p215
    %p217 = scmp.ne.s32.totalorder %s206, %s207
    %p218 = scmp.eq.s32.totalorder %s20, 0
    %p219 = por %p217, %p218
    %p220 = scmp.ne.s32.totalorder %s206, %s207
    %p221 = scmp.eq.s32.totalorder %s21, 1
    %p222 = por %p220, %p221
    %p224 = scmp.ne.s32.totalorder %s207, %s223
    %p225 = scmp.eq.s32.totalorder %s21, 0
    %p226 = por %p224, %p225
    %p227 = scmp.le.s32.totalorder 1, %s15
    %p228 = scmp.lt.s32.totalorder %s15, 3
    %p229 = pnand %p227, %p228
    %p230 = pneg %p229
    // Predicated region
    $region9: #{wave_unet_forward.6} parent=5 // pred_check
      _
    $region10: #{wave_unet_forward.6} parent=5 // pred_check_branch
      %232 = sbr.rel (%p229) target = $region12
    $region11: #{wave_unet_forward.6} parent=5 // pred_region
      %s233 = ssub.s32 %s15, 1
      // Predicated region
      $region13: #{wave_unet_forward.6} parent=11 // pred_check
        %p234 = pneg %p62
      $region14: #{wave_unet_forward.6} parent=11 // pred_check_branch
        %236 = sbr.rel (%p234) target = $region16
      $region15: #{wave_unet_forward.6} parent=11 // pred_region
        _
      $region16: #{wave_unet_forward.6} parent=11 // pred_fallthru
        _
      // Predicated region
      $region17: #{wave_unet_forward.6} parent=11 // pred_check
        %p237 = pneg %p83
      $region18: #{wave_unet_forward.6} parent=11 // pred_check_branch
        %239 = sbr.rel (%p237) target = $region20
      $region19: #{wave_unet_forward.6} parent=11 // pred_region
        _
      $region20: #{wave_unet_forward.6} parent=11 // pred_fallthru
        _
      // Predicated region
      $region21: #{wave_unet_forward.6} parent=11 // pred_check
        %p240 = pneg %p104
      $region22: #{wave_unet_forward.6} parent=11 // pred_check_branch
        %242 = sbr.rel (%p240) target = $region24
      $region23: #{wave_unet_forward.6} parent=11 // pred_region
        _
      $region24: #{wave_unet_forward.6} parent=11 // pred_fallthru
        _
      // Predicated region
      $region25: #{wave_unet_forward.6} parent=11 // pred_check
        %p243 = pneg %p125
      $region26: #{wave_unet_forward.6} parent=11 // pred_check_branch
        %245 = sbr.rel (%p243) target = $region28
      $region27: #{wave_unet_forward.6} parent=11 // pred_region
        _
      $region28: #{wave_unet_forward.6} parent=11 // pred_fallthru
        _
      // Predicated region
      $region29: #{wave_unet_forward.6} parent=11 // pred_check
        %p246 = pneg %p146
      $region30: #{wave_unet_forward.6} parent=11 // pred_check_branch
        %248 = sbr.rel (%p246) target = $region32
      $region31: #{wave_unet_forward.6} parent=11 // pred_region
        _
      $region32: #{wave_unet_forward.6} parent=11 // pred_fallthru
        _
      // Predicated region
      $region33: #{wave_unet_forward.6} parent=11 // pred_check
        %p249 = pneg %p167
      $region34: #{wave_unet_forward.6} parent=11 // pred_check_branch
        %251 = sbr.rel (%p249) target = $region36
      $region35: #{wave_unet_forward.6} parent=11 // pred_region
        _
      $region36: #{wave_unet_forward.6} parent=11 // pred_fallthru
        _
    $region12: #{wave_unet_forward.6} parent=5 // pred_fallthru
      _
    %p252 = scmp.lt.s32.totalorder %s15, 2
    // Predicated region
    $region37: #{wave_unet_forward.6} parent=5 // pred_check
      %p253 = pneg %p252
    $region38: #{wave_unet_forward.6} parent=5 // pred_check_branch
      %255 = sbr.rel (%p253) target = $region40
    $region39: #{wave_unet_forward.6} parent=5 // pred_region
      // Predicated region
      $region41: #{wave_unet_forward.6} parent=39 // pred_check
        %p256 = pneg %p35
      $region42: #{wave_unet_forward.6} parent=39 // pred_check_branch
        %258 = sbr.rel (%p256) target = $region44
      $region43: #{wave_unet_forward.6} parent=39 // pred_region
        %p259 = scmp.lt.s32.totalorder %s15, 1
        %s260 = scalar_select %p259, %s15, 1
        %s261 = smul.addr %s260, 8
        %s262 = smul.addr %s261, 4
        %s263 = scalar_lea.vmem %s0, %s262
      $region44: #{wave_unet_forward.6} parent=39 // pred_fallthru
        _
    $region40: #{wave_unet_forward.6} parent=5 // pred_fallthru
      _
    %p264 = scmp.le.s32.totalorder 1, %s15
    %p265 = scmp.lt.s32.totalorder %s15, 3
    %p266 = pnand %p264, %p265
    %p267 = pneg %p266
    // Predicated region
    $region45: #{wave_unet_forward.6} parent=5 // pred_check
      _
    $region46: #{wave_unet_forward.6} parent=5 // pred_check_branch
      %269 = sbr.rel (%p266) target = $region48
    $region47: #{wave_unet_forward.6} parent=5 // pred_region
      %s270 = ssub.s32 %s15, 1
      %p271 = scmp.lt.s32.totalorder %s20, 1
      %s272 = scalar_select %p271, %s20, 1
      %s273 = smul.addr %s272, 8
      %s274 = smul.addr %s273, 4
      %s275 = scalar_lea.vmem %s0, %s274
      %p276 = pneg %p41
      %p277 = pneg %p38
      %p278 = pneg %p62
      %p279 = pneg %p59
      %p280 = pneg %p83
      %p281 = pneg %p80
      %p282 = pneg %p104
      %p283 = pneg %p101
      %p284 = pneg %p125
      %p285 = pneg %p122
      %p286 = pneg %p146
      %p287 = pneg %p143
      %p288 = pneg %p167
      %p289 = pneg %p164
      %p290 = pneg %p193
      %p291 = pneg %p190
      %p292 = scmp.lt.s32.totalorder %s20, 1
      %s293 = scalar_select %p292, %s20, 1
      %s294 = smul.addr %s293, 4
      %s295 = smul.addr %s294, 4
      %s296 = scalar_lea.vmem %s7, %s295
      %p297 = pneg %p219
      %p298 = pneg %p216
      %p299 = scmp.lt.s32.totalorder %s20, 1
      %s300 = scalar_select %p299, %s20, 1
      %s301 = smul.addr %s300, 8
      %s302 = smul.addr %s301, 4
      %s303 = scalar_lea.vmem %s8, %s302
      %p304 = scmp.lt.s32.totalorder %s20, 1
      %s305 = scalar_select %p304, %s20, 1
      %s306 = smul.addr %s305, 8
      %s307 = smul.addr %s306, 4
      %s308 = scalar_lea.vmem %s0, %s307
      %p309 = scmp.lt.s32.totalorder %s20, 1
      %s310 = scalar_select %p309, %s20, 1
      %s311 = smul.addr %s310, 4
      %s312 = smul.addr %s311, 4
      %s313 = scalar_lea.vmem %s7, %s312
      %p314 = scmp.lt.s32.totalorder %s20, 1
      %s315 = scalar_select %p314, %s20, 1
      %s316 = smul.addr %s315, 8
      %s317 = smul.addr %s316, 4
      %s318 = scalar_lea.vmem %s8, %s317
      %v320 = vld [vmem:[%s308] sm:$0xf]
      %v321 = vld [vmem:[%s308 + $0x4] sm:$0xf]
      %v322 = vld [vmem:[%s308 + $0x8] sm:$0xf]
      %v323 = vld [vmem:[%s308 + $0xc] sm:$0xf]
      %v324 = vld [vmem:[%s308 + $0x10] sm:$0xf]
      %v325 = vld [vmem:[%s308 + $0x14] sm:$0xf]
      %v326 = vld [vmem:[%s308 + $0x18] sm:$0xf]
      %v327 = vld [vmem:[%s308 + $0x1c] sm:$0xf]
      %v328 = vunpack.c.l.bf16 %v320
      %v329 = vunpack.c.l.bf16 %v321
      %v330 = vunpack.c.l.bf16 %v322
      %v331 = vunpack.c.l.bf16 %v323
      %v332 = vunpack.c.l.bf16 %v324
      %v333 = vunpack.c.l.bf16 %v325
      %v334 = vunpack.c.l.bf16 %v326
      %v335 = vunpack.c.l.bf16 %v327
      %vm344 = vcmask 1041408
      %v345 = vrot.slane %v328, 6
      %v346 = vrot.slane %v329, 6
      %v347 = vsel %vm344, %v345, %v346
      %v348 = vrot.slane %v330, 6
      %v349 = vsel %vm344, %v346, %v348
      %v350 = vrot.slane %v331, 6
      %v351 = vsel %vm344, %v348, %v350
      %v352 = vrot.slane %v332, 6
      %v353 = vsel %vm344, %v350, %v352
      %v354 = vrot.slane %v333, 6
      %v355 = vsel %vm344, %v352, %v354
      %v356 = vrot.slane %v334, 6
      %v357 = vsel %vm344, %v354, %v356
      %v358 = vrot.slane %v335, 6
      %v359 = vsel %vm344, %v356, %v358
      %v369 = vsel %vm344, 0.0, %v345
      %v370 = vsel %vm344, %v358, 0.0
      %vm373 = vcmask 1046528
      %v374 = vrot.slane %v369, 1
      %v375 = vrot.slane %v347, 1
      %v376 = vsel %vm373, %v374, %v375
      %v377 = vrot.slane %v349, 1
      %v378 = vsel %vm373, %v375, %v377
      %v379 = vrot.slane %v351, 1
      %v380 = vsel %vm373, %v377, %v379
      %v381 = vrot.slane %v353, 1
      %v382 = vsel %vm373, %v379, %v381
      %v383 = vrot.slane %v355, 1
      %v384 = vsel %vm373, %v381, %v383
      %v385 = vrot.slane %v357, 1
      %v386 = vsel %vm373, %v383, %v385
      %v387 = vrot.slane %v359, 1
      %v388 = vsel %vm373, %v385, %v387
      %v389 = vrot.slane %v370, 1
      %v390 = vsel %vm373, %v387, %v389
      %391 = vrot.lane.b32.xlu0 %v376, 1
      %v392 = vpop.permute.xlu0 %391
      %393 = vrot.lane.b32.xlu0 %v378, 1
      %v394 = vpop.permute.xlu0 %393
      %395 = vrot.lane.b32.xlu0 %v380, 1
      %v396 = vpop.permute.xlu0 %395
      %397 = vrot.lane.b32.xlu0 %v382, 1
      %v398 = vpop.permute.xlu0 %397
      %399 = vrot.lane.b32.xlu0 %v384, 1
      %v400 = vpop.permute.xlu0 %399
      %401 = vrot.lane.b32.xlu0 %v386, 1
      %v402 = vpop.permute.xlu0 %401
      %403 = vrot.lane.b32.xlu0 %v388, 1
      %v404 = vpop.permute.xlu0 %403
      %405 = vrot.lane.b32.xlu0 %v390, 1
      %v406 = vpop.permute.xlu0 %405
      %vm415 = vcmask 1045504
      %v416 = vrot.slane %v369, 2
      %v417 = vrot.slane %v347, 2
      %v418 = vsel %vm415, %v416, %v417
      %v419 = vrot.slane %v349, 2
      %v420 = vsel %vm415, %v417, %v419
      %v421 = vrot.slane %v351, 2
      %v422 = vsel %vm415, %v419, %v421
      %v423 = vrot.slane %v353, 2
      %v424 = vsel %vm415, %v421, %v423
      %v425 = vrot.slane %v355, 2
      %v426 = vsel %vm415, %v423, %v425
      %v427 = vrot.slane %v357, 2
      %v428 = vsel %vm415, %v425, %v427
      %v429 = vrot.slane %v359, 2
      %v430 = vsel %vm415, %v427, %v429
      %v431 = vrot.slane %v370, 2
      %v432 = vsel %vm415, %v429, %v431
      %433 = vrot.lane.b32.xlu0 %v418, 2
      %v434 = vpop.permute.xlu0 %433
      %435 = vrot.lane.b32.xlu0 %v420, 2
      %v436 = vpop.permute.xlu0 %435
      %437 = vrot.lane.b32.xlu0 %v422, 2
      %v438 = vpop.permute.xlu0 %437
      %439 = vrot.lane.b32.xlu0 %v424, 2
      %v440 = vpop.permute.xlu0 %439
      %441 = vrot.lane.b32.xlu0 %v426, 2
      %v442 = vpop.permute.xlu0 %441
      %443 = vrot.lane.b32.xlu0 %v428, 2
      %v444 = vpop.permute.xlu0 %443
      %445 = vrot.lane.b32.xlu0 %v430, 2
      %v446 = vpop.permute.xlu0 %445
      %447 = vrot.lane.b32.xlu0 %v432, 2
      %v448 = vpop.permute.xlu0 %447
      %vm457 = vcmask 1044480
      %v458 = vrot.slane %v369, 3
      %v459 = vrot.slane %v347, 3
      %v460 = vsel %vm457, %v458, %v459
      %v461 = vrot.slane %v349, 3
      %v462 = vsel %vm457, %v459, %v461
      %v463 = vrot.slane %v351, 3
      %v464 = vsel %vm457, %v461, %v463
      %v465 = vrot.slane %v353, 3
      %v466 = vsel %vm457, %v463, %v465
      %v467 = vrot.slane %v355, 3
      %v468 = vsel %vm457, %v465, %v467
      %v469 = vrot.slane %v357, 3
      %v470 = vsel %vm457, %v467, %v469
      %v471 = vrot.slane %v359, 3
      %v472 = vsel %vm457, %v469, %v471
      %v473 = vrot.slane %v370, 3
      %v474 = vsel %vm457, %v471, %v473
      %475 = vrot.lane.b32.xlu0 %v460, 3
      %v476 = vpop.permute.xlu0 %475
      %477 = vrot.lane.b32.xlu0 %v462, 3
      %v478 = vpop.permute.xlu0 %477
      %479 = vrot.lane.b32.xlu0 %v464, 3
      %v480 = vpop.permute.xlu0 %479
      %481 = vrot.lane.b32.xlu0 %v466, 3
      %v482 = vpop.permute.xlu0 %481
      %483 = vrot.lane.b32.xlu0 %v468, 3
      %v484 = vpop.permute.xlu0 %483
      %485 = vrot.lane.b32.xlu0 %v470, 3
      %v486 = vpop.permute.xlu0 %485
      %487 = vrot.lane.b32.xlu0 %v472, 3
      %v488 = vpop.permute.xlu0 %487
      %489 = vrot.lane.b32.xlu0 %v474, 3
      %v490 = vpop.permute.xlu0 %489
      %vm499 = vcmask 1043456
      %v500 = vrot.slane %v369, 4
      %v501 = vrot.slane %v347, 4
      %v502 = vsel %vm499, %v500, %v501
      %v503 = vrot.slane %v349, 4
      %v504 = vsel %vm499, %v501, %v503
      %v505 = vrot.slane %v351, 4
      %v506 = vsel %vm499, %v503, %v505
      %v507 = vrot.slane %v353, 4
      %v508 = vsel %vm499, %v505, %v507
      %v509 = vrot.slane %v355, 4
      %v510 = vsel %vm499, %v507, %v509
      %v511 = vrot.slane %v357, 4
      %v512 = vsel %vm499, %v509, %v511
      %v513 = vrot.slane %v359, 4
      %v514 = vsel %vm499, %v511, %v513
      %v515 = vrot.slane %v370, 4
      %v516 = vsel %vm499, %v513, %v515
      %517 = vrot.lane.b32.xlu0 %v502, 4
      %v518 = vpop.permute.xlu0 %517
      %519 = vrot.lane.b32.xlu0 %v504, 4
      %v520 = vpop.permute.xlu0 %519
      %521 = vrot.lane.b32.xlu0 %v506, 4
      %v522 = vpop.permute.xlu0 %521
      %523 = vrot.lane.b32.xlu0 %v508, 4
      %v524 = vpop.permute.xlu0 %523
      %525 = vrot.lane.b32.xlu0 %v510, 4
      %v526 = vpop.permute.xlu0 %525
      %527 = vrot.lane.b32.xlu0 %v512, 4
      %v528 = vpop.permute.xlu0 %527
      %529 = vrot.lane.b32.xlu0 %v514, 4
      %v530 = vpop.permute.xlu0 %529
      %531 = vrot.lane.b32.xlu0 %v516, 4
      %v532 = vpop.permute.xlu0 %531
      %vm541 = vcmask 7168
      %v542 = vsel %vm541, %v369, %v392
      %v543 = vsel %vm541, %v347, %v394
      %v544 = vsel %vm541, %v349, %v396
      %v545 = vsel %vm541, %v351, %v398
      %v546 = vsel %vm541, %v353, %v400
      %v547 = vsel %vm541, %v355, %v402
      %v548 = vsel %vm541, %v357, %v404
      %v549 = vsel %vm541, %v359, %v406
      %vm550 = vcmask 15360
      %v551 = vsel %vm550, %v542, %v434
      %v552 = vsel %vm550, %v543, %v436
      %v553 = vsel %vm550, %v544, %v438
      %v554 = vsel %vm550, %v545, %v440
      %v555 = vsel %vm550, %v546, %v442
      %v556 = vsel %vm550, %v547, %v444
      %v557 = vsel %vm550, %v548, %v446
      %v558 = vsel %vm550, %v549, %v448
      %vm559 = vcmask 23552
      %v560 = vsel %vm559, %v551, %v476
      %v561 = vsel %vm559, %v552, %v478
      %v562 = vsel %vm559, %v553, %v480
      %v563 = vsel %vm559, %v554, %v482
      %v564 = vsel %vm559, %v555, %v484
      %v565 = vsel %vm559, %v556, %v486
      %v566 = vsel %vm559, %v557, %v488
      %v567 = vsel %vm559, %v558, %v490
      %vm568 = vcmask 31744
      %v569 = vsel %vm568, %v560, %v518
      %v570 = vsel %vm568, %v561, %v520
      %v571 = vsel %vm568, %v562, %v522
      %v572 = vsel %vm568, %v563, %v524
      %v573 = vsel %vm568, %v564, %v526
      %v574 = vsel %vm568, %v565, %v528
      %v575 = vsel %vm568, %v566, %v530
      %v576 = vsel %vm568, %v567, %v532
      %v577 = vpack.c.bf16 %v570, %v569
      %v578 = vpack.c.bf16 %v572, %v571
      %v579 = vpack.c.bf16 %v574, %v573
      %v580 = vpack.c.bf16 %v576, %v575
      %v581 = vld [vmem:[%s1] sm:$0x7]
      %v582 = vld [vmem:[%s2] sm:$0x1]
      %v584 = vperm.slane %v582, 0
      %vm586 = vcmask 39936
      %v588 = vsel %vm586, %v577, 0
      %v591 = vsel %vm586, %v578, 0
      %v594 = vsel %vm586, %v579, 0
      %v597 = vsel %vm586, %v580, 0
      %vm599 = vcmask 1042432
      %v600 = vsel %vm344, 4294967295, 65535
      %v601 = vsel %vm599, %v600, 0
      %v603 = vand.u32 %v581, %v601
      %605 = vmatpush.bf16.msra.mxu0 0
      %606 = vmatpush.bf16.msra.mxu0 0
      %607 = vmatpush.bf16.msra.mxu0 0
      %608 = vmatpush.bf16.msra.mxu0 0
      %609 = vmatpush.bf16.msra.mxu0 0
      %610 = vmatpush.bf16.msra.mxu0 0
      %611 = vmatpush.bf16.msra.mxu0 0
      %612 = vmatpush.bf16.msra.mxu0 %v603
      %613 = vmatmul.bf16.gmra.mxu0 %v588
      %v614 = vpop.f32.mrf.mxu0
      %v615 = vadd.f32 %v584, %v614
      %v616 = vpop.f32.mrf.mxu0
      %v617 = vadd.f32 %v584, %v616
      %618 = vmatmul.bf16.gmra.mxu0 %v591
      %v619 = vpop.f32.mrf.mxu0
      %v620 = vadd.f32 %v584, %v619
      %v621 = vpop.f32.mrf.mxu0
      %v622 = vadd.f32 %v584, %v621
      %623 = vmatmul.bf16.gmra.mxu0 %v594
      %v624 = vpop.f32.mrf.mxu0
      %v625 = vadd.f32 %v584, %v624
      %v626 = vpop.f32.mrf.mxu0
      %v627 = vadd.f32 %v584, %v626
      %628 = vmatmul.bf16.gmra.mxu0 %v597
      %v629 = vpop.f32.mrf.mxu0
      %v630 = vadd.f32 %v584, %v629
      %v631 = vpop.f32.mrf.mxu0
      %v632 = vadd.f32 %v584, %v631
      %633 = vdwg.mxu0
      %vm634 = vcmp.ge.f32.partialorder %v615, 0.0
      %vm635 = vcmp.ge.f32.partialorder %v617, 0.0
      %vm636 = vcmp.ge.f32.partialorder %v620, 0.0
      %vm637 = vcmp.ge.f32.partialorder %v622, 0.0
      %vm638 = vcmp.ge.f32.partialorder %v625, 0.0
      %vm639 = vcmp.ge.f32.partialorder %v627, 0.0
      %vm640 = vcmp.ge.f32.partialorder %v630, 0.0
      %vm641 = vcmp.ge.f32.partialorder %v632, 0.0
      %v642 = vmul.f32 %v615, 0.1
      %v643 = vmul.f32 %v617, 0.1
      %v644 = vmul.f32 %v620, 0.1
      %v645 = vmul.f32 %v622, 0.1
      %v646 = vmul.f32 %v625, 0.1
      %v647 = vmul.f32 %v627, 0.1
      %v648 = vmul.f32 %v630, 0.1
      %v649 = vmul.f32 %v632, 0.1
      %v650 = vsel %vm634, %v615, %v642
      %v651 = vsel %vm635, %v617, %v643
      %v652 = vsel %vm636, %v620, %v644
      %v653 = vsel %vm637, %v622, %v645
      %v654 = vsel %vm638, %v625, %v646
      %v655 = vsel %vm639, %v627, %v647
      %v656 = vsel %vm640, %v630, %v648
      %v657 = vsel %vm641, %v632, %v649
      %v658 = vpack.c.bf16 %v650, %v650
      %v659 = vpack.c.bf16 %v651, %v651
      %v660 = vpack.c.bf16 %v652, %v652
      %v661 = vpack.c.bf16 %v653, %v653
      %v662 = vpack.c.bf16 %v654, %v654
      %v663 = vpack.c.bf16 %v655, %v655
      %v664 = vpack.c.bf16 %v656, %v656
      %v665 = vpack.c.bf16 %v657, %v657
      %vm666 = vcmask 60416
      %667 = vst.msk [vmem:[%s318] sm:$0xf] %vm666, %v658
      %668 = vst.msk [vmem:[%s318 + $0x4] sm:$0xf] %vm666, %v659
      %669 = vst.msk [vmem:[%s318 + $0x8] sm:$0xf] %vm666, %v660
      %670 = vst.msk [vmem:[%s318 + $0xc] sm:$0xf] %vm666, %v661
      %671 = vst.msk [vmem:[%s318 + $0x10] sm:$0xf] %vm666, %v662
      %672 = vst.msk [vmem:[%s318 + $0x14] sm:$0xf] %vm666, %v663
      %673 = vst.msk [vmem:[%s318 + $0x18] sm:$0xf] %vm666, %v664
      %674 = vst.msk [vmem:[%s318 + $0x1c] sm:$0xf] %vm666, %v665
      %v683 = vrot.slane %v650, 6
      %v684 = vrot.slane %v651, 6
      %v685 = vsel %vm344, %v683, %v684
      %v686 = vrot.slane %v652, 6
      %v687 = vsel %vm344, %v684, %v686
      %v688 = vrot.slane %v653, 6
      %v689 = vsel %vm344, %v686, %v688
      %v690 = vrot.slane %v654, 6
      %v691 = vsel %vm344, %v688, %v690
      %v692 = vrot.slane %v655, 6
      %v693 = vsel %vm344, %v690, %v692
      %v694 = vrot.slane %v656, 6
      %v695 = vsel %vm344, %v692, %v694
      %v696 = vrot.slane %v657, 6
      %v697 = vsel %vm344, %v694, %v696
      %v707 = vsel %vm344, 0.0, %v683
      %v708 = vsel %vm344, %v696, 0.0
      %v711 = vrot.slane %v707, 1
      %v712 = vrot.slane %v685, 1
      %v713 = vsel %vm373, %v711, %v712
      %v714 = vrot.slane %v687, 1
      %v715 = vsel %vm373, %v712, %v714
      %v716 = vrot.slane %v689, 1
      %v717 = vsel %vm373, %v714, %v716
      %v718 = vrot.slane %v691, 1
      %v719 = vsel %vm373, %v716, %v718
      %v720 = vrot.slane %v693, 1
      %v721 = vsel %vm373, %v718, %v720
      %v722 = vrot.slane %v695, 1
      %v723 = vsel %vm373, %v720, %v722
      %v724 = vrot.slane %v697, 1
      %v725 = vsel %vm373, %v722, %v724
      %v726 = vrot.slane %v708, 1
      %v727 = vsel %vm373, %v724, %v726
      %728 = vrot.lane.b32.xlu0 %v713, 8
      %v729 = vpop.permute.xlu0 %728
      %730 = vrot.lane.b32.xlu0 %v715, 8
      %v731 = vpop.permute.xlu0 %730
      %732 = vrot.lane.b32.xlu0 %v717, 8
      %v733 = vpop.permute.xlu0 %732
      %734 = vrot.lane.b32.xlu0 %v719, 8
      %v735 = vpop.permute.xlu0 %734
      %736 = vrot.lane.b32.xlu0 %v721, 8
      %v737 = vpop.permute.xlu0 %736
      %738 = vrot.lane.b32.xlu0 %v723, 8
      %v739 = vpop.permute.xlu0 %738
      %740 = vrot.lane.b32.xlu0 %v725, 8
      %v741 = vpop.permute.xlu0 %740
      %742 = vrot.lane.b32.xlu0 %v727, 8
      %v743 = vpop.permute.xlu0 %742
      %v752 = vrot.slane %v707, 2
      %v753 = vrot.slane %v685, 2
      %v754 = vsel %vm415, %v752, %v753
      %v755 = vrot.slane %v687, 2
      %v756 = vsel %vm415, %v753, %v755
      %v757 = vrot.slane %v689, 2
      %v758 = vsel %vm415, %v755, %v757
      %v759 = vrot.slane %v691, 2
      %v760 = vsel %vm415, %v757, %v759
      %v761 = vrot.slane %v693, 2
      %v762 = vsel %vm415, %v759, %v761
      %v763 = vrot.slane %v695, 2
      %v764 = vsel %vm415, %v761, %v763
      %v765 = vrot.slane %v697, 2
      %v766 = vsel %vm415, %v763, %v765
      %v767 = vrot.slane %v708, 2
      %v768 = vsel %vm415, %v765, %v767
      %769 = vrot.lane.b32.xlu0 %v754, 16
      %v770 = vpop.permute.xlu0 %769
      %771 = vrot.lane.b32.xlu0 %v756, 16
      %v772 = vpop.permute.xlu0 %771
      %773 = vrot.lane.b32.xlu0 %v758, 16
      %v774 = vpop.permute.xlu0 %773
      %775 = vrot.lane.b32.xlu0 %v760, 16
      %v776 = vpop.permute.xlu0 %775
      %777 = vrot.lane.b32.xlu0 %v762, 16
      %v778 = vpop.permute.xlu0 %777
      %779 = vrot.lane.b32.xlu0 %v764, 16
      %v780 = vpop.permute.xlu0 %779
      %781 = vrot.lane.b32.xlu0 %v766, 16
      %v782 = vpop.permute.xlu0 %781
      %783 = vrot.lane.b32.xlu0 %v768, 16
      %v784 = vpop.permute.xlu0 %783
      %v793 = vrot.slane %v707, 3
      %v794 = vrot.slane %v685, 3
      %v795 = vsel %vm457, %v793, %v794
      %v796 = vrot.slane %v687, 3
      %v797 = vsel %vm457, %v794, %v796
      %v798 = vrot.slane %v689, 3
      %v799 = vsel %vm457, %v796, %v798
      %v800 = vrot.slane %v691, 3
      %v801 = vsel %vm457, %v798, %v800
      %v802 = vrot.slane %v693, 3
      %v803 = vsel %vm457, %v800, %v802
      %v804 = vrot.slane %v695, 3
      %v805 = vsel %vm457, %v802, %v804
      %v806 = vrot.slane %v697, 3
      %v807 = vsel %vm457, %v804, %v806
      %v808 = vrot.slane %v708, 3
      %v809 = vsel %vm457, %v806, %v808
      %810 = vrot.lane.b32.xlu0 %v795, 24
      %v811 = vpop.permute.xlu0 %810
      %812 = vrot.lane.b32.xlu0 %v797, 24
      %v813 = vpop.permute.xlu0 %812
      %814 = vrot.lane.b32.xlu0 %v799, 24
      %v815 = vpop.permute.xlu0 %814
      %816 = vrot.lane.b32.xlu0 %v801, 24
      %v817 = vpop.permute.xlu0 %816
      %818 = vrot.lane.b32.xlu0 %v803, 24
      %v819 = vpop.permute.xlu0 %818
      %820 = vrot.lane.b32.xlu0 %v805, 24
      %v821 = vpop.permute.xlu0 %820
      %822 = vrot.lane.b32.xlu0 %v807, 24
      %v823 = vpop.permute.xlu0 %822
      %824 = vrot.lane.b32.xlu0 %v809, 24
      %v825 = vpop.permute.xlu0 %824
      %v834 = vrot.slane %v707, 4
      %v835 = vrot.slane %v685, 4
      %v836 = vsel %vm499, %v834, %v835
      %v837 = vrot.slane %v687, 4
      %v838 = vsel %vm499, %v835, %v837
      %v839 = vrot.slane %v689, 4
      %v840 = vsel %vm499, %v837, %v839
      %v841 = vrot.slane %v691, 4
      %v842 = vsel %vm499, %v839, %v841
      %v843 = vrot.slane %v693, 4
      %v844 = vsel %vm499, %v841, %v843
      %v845 = vrot.slane %v695, 4
      %v846 = vsel %vm499, %v843, %v845
      %v847 = vrot.slane %v697, 4
      %v848 = vsel %vm499, %v845, %v847
      %v849 = vrot.slane %v708, 4
      %v850 = vsel %vm499, %v847, %v849
      %851 = vrot.lane.b32.xlu0 %v836, 32
      %v852 = vpop.permute.xlu0 %851
      %853 = vrot.lane.b32.xlu0 %v838, 32
      %v854 = vpop.permute.xlu0 %853
      %855 = vrot.lane.b32.xlu0 %v840, 32
      %v856 = vpop.permute.xlu0 %855
      %857 = vrot.lane.b32.xlu0 %v842, 32
      %v858 = vpop.permute.xlu0 %857
      %859 = vrot.lane.b32.xlu0 %v844, 32
      %v860 = vpop.permute.xlu0 %859
      %861 = vrot.lane.b32.xlu0 %v846, 32
      %v862 = vpop.permute.xlu0 %861
      %863 = vrot.lane.b32.xlu0 %v848, 32
      %v864 = vpop.permute.xlu0 %863
      %865 = vrot.lane.b32.xlu0 %v850, 32
      %v866 = vpop.permute.xlu0 %865
      %vm875 = vcmask 64512
      %v876 = vsel %vm875, %v707, %v729
      %v877 = vsel %vm875, %v685, %v731
      %v878 = vsel %vm875, %v687, %v733
      %v879 = vsel %vm875, %v689, %v735
      %v880 = vsel %vm875, %v691, %v737
      %v881 = vsel %vm875, %v693, %v739
      %v882 = vsel %vm875, %v695, %v741
      %v883 = vsel %vm875, %v697, %v743
      %vm884 = vcmask 130048
      %v885 = vsel %vm884, %v876, %v770
      %v886 = vsel %vm884, %v877, %v772
      %v887 = vsel %vm884, %v878, %v774
      %v888 = vsel %vm884, %v879, %v776
      %v889 = vsel %vm884, %v880, %v778
      %v890 = vsel %vm884, %v881, %v780
      %v891 = vsel %vm884, %v882, %v782
      %v892 = vsel %vm884, %v883, %v784
      %vm893 = vcmask 195584
      %v894 = vsel %vm893, %v885, %v811
      %v895 = vsel %vm893, %v886, %v813
      %v896 = vsel %vm893, %v887, %v815
      %v897 = vsel %vm893, %v888, %v817
      %v898 = vsel %vm893, %v889, %v819
      %v899 = vsel %vm893, %v890, %v821
      %v900 = vsel %vm893, %v891, %v823
      %v901 = vsel %vm893, %v892, %v825
      %vm902 = vcmask 261120
      %v903 = vsel %vm902, %v894, %v852
      %v904 = vsel %vm902, %v895, %v854
      %v905 = vsel %vm902, %v896, %v856
      %v906 = vsel %vm902, %v897, %v858
      %v907 = vsel %vm902, %v898, %v860
      %v908 = vsel %vm902, %v899, %v862
      %v909 = vsel %vm902, %v900, %v864
      %v910 = vsel %vm902, %v901, %v866
      %v911 = vpack.c.bf16 %v904, %v903
      %v912 = vpack.c.bf16 %v906, %v905
      %v913 = vpack.c.bf16 %v908, %v907
      %v914 = vpack.c.bf16 %v910, %v909
      %v915 = vld [vmem:[%s3] sm:$0xf]
      %v916 = vld [vmem:[%s3 + $0x4] sm:$0xf]
      %v917 = vld [vmem:[%s3 + $0x8] sm:$0xf]
      %v918 = vld [vmem:[%s3 + $0xc] sm:$0xf]
      %v919 = vld [vmem:[%s3 + $0x10] sm:$0xf]
      %v920 = vld [vmem:[%s4] sm:$0x1]
      %v922 = vperm.slane %v920, 0
      %v929 = vunpack.c.l.b16 %v915
      %v930 = vunpack.c.l.b16 %v916
      %v931 = vunpack.c.l.b16 %v917
      %v932 = vunpack.c.l.b16 %v918
      %v933 = vunpack.c.l.b16 %v919
      %v934 = vpack.c.b16 %v930, %v929
      %v935 = vpack.c.b16 %v932, %v931
      %v936 = vpack.c.b16 %v933, %v933
      %vm939 = vcmask 326656
      %v941 = vsel %vm939, %v911, 0
      %v944 = vsel %vm939, %v912, 0
      %v947 = vsel %vm939, %v913, 0
      %v950 = vsel %vm939, %v914, 0
      %v953 = vsel %vm499, %v936, 0
      %955 = vmatpush.bf16.msra.mxu0 0
      %956 = vmatpush.bf16.msra.mxu0 0
      %957 = vmatpush.bf16.msra.mxu0 0
      %958 = vmatpush.bf16.msra.mxu0 0
      %959 = vmatpush.bf16.msra.mxu0 0
      %960 = vmatpush.bf16.msra.mxu0 %v953
      %961 = vmatpush.bf16.msra.mxu0 %v935
      %962 = vmatpush.bf16.msra.mxu0 %v934
      %963 = vmatmul.bf16.gmra.mxu0 %v941
      %v964 = vpop.f32.mrf.mxu0
      %v965 = vadd.f32 %v922, %v964
      %v966 = vpop.f32.mrf.mxu0
      %v967 = vadd.f32 %v922, %v966
      %968 = vmatmul.bf16.gmra.mxu0 %v944
      %v969 = vpop.f32.mrf.mxu0
      %v970 = vadd.f32 %v922, %v969
      %v971 = vpop.f32.mrf.mxu0
      %v972 = vadd.f32 %v922, %v971
      %973 = vmatmul.bf16.gmra.mxu0 %v947
      %v974 = vpop.f32.mrf.mxu0
      %v975 = vadd.f32 %v922, %v974
      %v976 = vpop.f32.mrf.mxu0
      %v977 = vadd.f32 %v922, %v976
      %978 = vmatmul.bf16.gmra.mxu0 %v950
      %v979 = vpop.f32.mrf.mxu0
      %v980 = vadd.f32 %v922, %v979
      %v981 = vpop.f32.mrf.mxu0
      %v982 = vadd.f32 %v922, %v981
      %983 = vdwg.mxu0
      %vm984 = vcmp.ge.f32.partialorder %v965, 0.0
      %vm985 = vcmp.ge.f32.partialorder %v967, 0.0
      %vm986 = vcmp.ge.f32.partialorder %v970, 0.0
      %vm987 = vcmp.ge.f32.partialorder %v972, 0.0
      %vm988 = vcmp.ge.f32.partialorder %v975, 0.0
      %vm989 = vcmp.ge.f32.partialorder %v977, 0.0
      %vm990 = vcmp.ge.f32.partialorder %v980, 0.0
      %vm991 = vcmp.ge.f32.partialorder %v982, 0.0
      %v992 = vmul.f32 %v965, 0.1
      %v993 = vmul.f32 %v967, 0.1
      %v994 = vmul.f32 %v970, 0.1
      %v995 = vmul.f32 %v972, 0.1
      %v996 = vmul.f32 %v975, 0.1
      %v997 = vmul.f32 %v977, 0.1
      %v998 = vmul.f32 %v980, 0.1
      %v999 = vmul.f32 %v982, 0.1
      %v1000 = vsel %vm984, %v965, %v992
      %v1001 = vsel %vm985, %v967, %v993
      %v1002 = vsel %vm986, %v970, %v994
      %v1003 = vsel %vm987, %v972, %v995
      %v1004 = vsel %vm988, %v975, %v996
      %v1005 = vsel %vm989, %v977, %v997
      %v1006 = vsel %vm990, %v980, %v998
      %v1007 = vsel %vm991, %v982, %v999
      %vm1008 = vcmask 123904
      %1009 = vst.msk [vmem:[#allocation2] sm:$0x3] %vm1008, 0.0
      %1010 = vst.msk [vmem:[#allocation2 + $0x42] sm:$0x3] %vm1008, 0.0
      %1011 = vst.msk [vmem:[#allocation2 + $0x2] sm:$0xff] %vm884, %v1000
      %1012 = vst.msk [vmem:[#allocation2 + $0xa] sm:$0xff] %vm884, %v1001
      %1013 = vst.msk [vmem:[#allocation2 + $0x12] sm:$0xff] %vm884, %v1002
      %1014 = vst.msk [vmem:[#allocation2 + $0x1a] sm:$0xff] %vm884, %v1003
      %1015 = vst.msk [vmem:[#allocation2 + $0x22] sm:$0xff] %vm884, %v1004
      %1016 = vst.msk [vmem:[#allocation2 + $0x2a] sm:$0xff] %vm884, %v1005
      %1017 = vst.msk [vmem:[#allocation2 + $0x32] sm:$0xff] %vm884, %v1006
      %1018 = vst.msk [vmem:[#allocation2 + $0x3a] sm:$0xff] %vm884, %v1007
      %v1019 = vld [vmem:[#allocation2] ss:$2 sm:$0xff]
      %s1020 = scalar_lea.vmem [#allocation2], 16
      %v1021 = vld [vmem:[%s1020] ss:$2 sm:$0xff]
      %s1022 = scalar_lea.vmem [#allocation2], 32
      %v1023 = vld [vmem:[%s1022] ss:$2 sm:$0xff]
      %s1024 = scalar_lea.vmem [#allocation2], 48
      %v1025 = vld [vmem:[%s1024] ss:$2 sm:$0xff]
      %s1026 = scalar_lea.vmem [#allocation2], 1
      %v1027 = vld [vmem:[%s1026] ss:$2 sm:$0xff]
      %s1028 = scalar_lea.vmem [#allocation2], 17
      %v1029 = vld [vmem:[%s1028] ss:$2 sm:$0xff]
      %s1030 = scalar_lea.vmem [#allocation2], 33
      %v1031 = vld [vmem:[%s1030] ss:$2 sm:$0xff]
      %s1032 = scalar_lea.vmem [#allocation2], 49
      %v1033 = vld [vmem:[%s1032] ss:$2 sm:$0xff]
      %s1034 = scalar_lea.vmem [#allocation2], 2
      %v1035 = vld [vmem:[%s1034] ss:$2 sm:$0xff]
      %s1036 = scalar_lea.vmem [#allocation2], 18
      %v1037 = vld [vmem:[%s1036] ss:$2 sm:$0xff]
      %s1038 = scalar_lea.vmem [#allocation2], 34
      %v1039 = vld [vmem:[%s1038] ss:$2 sm:$0xff]
      %s1040 = scalar_lea.vmem [#allocation2], 50
      %v1041 = vld [vmem:[%s1040] ss:$2 sm:$0xff]
      %s1042 = scalar_lea.vmem [#allocation2], 3
      %v1043 = vld [vmem:[%s1042] ss:$2 sm:$0xff]
      %s1044 = scalar_lea.vmem [#allocation2], 19
      %v1045 = vld [vmem:[%s1044] ss:$2 sm:$0xff]
      %s1046 = scalar_lea.vmem [#allocation2], 35
      %v1047 = vld [vmem:[%s1046] ss:$2 sm:$0xff]
      %s1048 = scalar_lea.vmem [#allocation2], 51
      %v1049 = vld [vmem:[%s1048] ss:$2 sm:$0xff]
      %s1050 = scalar_lea.vmem [#allocation2], 4
      %v1051 = vld [vmem:[%s1050] ss:$2 sm:$0xff]
      %s1052 = scalar_lea.vmem [#allocation2], 20
      %v1053 = vld [vmem:[%s1052] ss:$2 sm:$0xff]
      %s1054 = scalar_lea.vmem [#allocation2], 36
      %v1055 = vld [vmem:[%s1054] ss:$2 sm:$0xff]
      %s1056 = scalar_lea.vmem [#allocation2], 52
      %v1057 = vld [vmem:[%s1056] ss:$2 sm:$0xff]
      %1062 = vrot.lane.b32.xlu0 %v1027, 16
      %v1063 = vpop.permute.xlu0 %1062
      %1064 = vrot.lane.b32.xlu0 %v1029, 16
      %v1065 = vpop.permute.xlu0 %1064
      %1066 = vrot.lane.b32.xlu0 %v1031, 16
      %v1067 = vpop.permute.xlu0 %1066
      %1068 = vrot.lane.b32.xlu0 %v1033, 16
      %v1069 = vpop.permute.xlu0 %1068
      %1078 = vrot.lane.b32.xlu0 %v1035, 32
      %v1079 = vpop.permute.xlu0 %1078
      %1080 = vrot.lane.b32.xlu0 %v1037, 32
      %v1081 = vpop.permute.xlu0 %1080
      %1082 = vrot.lane.b32.xlu0 %v1039, 32
      %v1083 = vpop.permute.xlu0 %1082
      %1084 = vrot.lane.b32.xlu0 %v1041, 32
      %v1085 = vpop.permute.xlu0 %1084
      %1094 = vrot.lane.b32.xlu0 %v1043, 48
      %v1095 = vpop.permute.xlu0 %1094
      %1096 = vrot.lane.b32.xlu0 %v1045, 48
      %v1097 = vpop.permute.xlu0 %1096
      %1098 = vrot.lane.b32.xlu0 %v1047, 48
      %v1099 = vpop.permute.xlu0 %1098
      %1100 = vrot.lane.b32.xlu0 %v1049, 48
      %v1101 = vpop.permute.xlu0 %1100
      %1110 = vrot.lane.b32.xlu0 %v1051, 64
      %v1111 = vpop.permute.xlu0 %1110
      %1112 = vrot.lane.b32.xlu0 %v1053, 64
      %v1113 = vpop.permute.xlu0 %1112
      %1114 = vrot.lane.b32.xlu0 %v1055, 64
      %v1115 = vpop.permute.xlu0 %1114
      %1116 = vrot.lane.b32.xlu0 %v1057, 64
      %v1117 = vpop.permute.xlu0 %1116
      %v1122 = vsel %vm884, %v1019, %v1063
      %v1123 = vsel %vm884, %v1021, %v1065
      %v1124 = vsel %vm884, %v1023, %v1067
      %v1125 = vsel %vm884, %v1025, %v1069
      %v1126 = vsel %vm902, %v1122, %v1079
      %v1127 = vsel %vm902, %v1123, %v1081
      %v1128 = vsel %vm902, %v1124, %v1083
      %v1129 = vsel %vm902, %v1125, %v1085
      %vm1130 = vcmask 392192
      %v1131 = vsel %vm1130, %v1126, %v1095
      %v1132 = vsel %vm1130, %v1127, %v1097
      %v1133 = vsel %vm1130, %v1128, %v1099
      %v1134 = vsel %vm1130, %v1129, %v1101
      %vm1135 = vcmask 523264
      %v1136 = vsel %vm1135, %v1131, %v1111
      %v1137 = vsel %vm1135, %v1132, %v1113
      %v1138 = vsel %vm1135, %v1133, %v1115
      %v1139 = vsel %vm1135, %v1134, %v1117
      %v1140 = vpack.c.bf16 %v1137, %v1136
      %v1141 = vpack.c.bf16 %v1139, %v1138
      %v1142 = vld [vmem:[%s5] sm:$0xf]
      %v1143 = vld [vmem:[%s5 + $0x4] sm:$0xf]
      %v1144 = vld [vmem:[%s5 + $0x8] sm:$0xf]
      %v1145 = vld [vmem:[%s5 + $0xc] sm:$0xf]
      %v1146 = vld [vmem:[%s5 + $0x10] sm:$0xf]
      %v1147 = vld [vmem:[%s5 + $0x14] sm:$0xf]
      %v1148 = vld [vmem:[%s5 + $0x18] sm:$0xf]
      %v1149 = vld [vmem:[%s5 + $0x1c] sm:$0xf]
      %v1150 = vld [vmem:[%s5 + $0x20] sm:$0xf]
      %v1151 = vld [vmem:[%s5 + $0x24] sm:$0xf]
      %v1152 = vld [vmem:[%s6] sm:$0x1]
      %v1154 = vperm.slane %v1152, 0
      %v1166 = vunpack.c.l.b16 %v1142
      %v1167 = vunpack.c.l.b16 %v1143
      %v1168 = vunpack.c.l.b16 %v1144
      %v1169 = vunpack.c.l.b16 %v1145
      %v1170 = vunpack.c.l.b16 %v1146
      %v1171 = vunpack.c.l.b16 %v1147
      %v1172 = vunpack.c.l.b16 %v1148
      %v1173 = vunpack.c.l.b16 %v1149
      %v1174 = vunpack.c.l.b16 %v1150
      %v1175 = vunpack.c.l.b16 %v1151
      %v1176 = vpack.c.b16 %v1167, %v1166
      %v1177 = vpack.c.b16 %v1169, %v1168
      %v1178 = vpack.c.b16 %v1171, %v1170
      %v1179 = vpack.c.b16 %v1173, %v1172
      %v1180 = vpack.c.b16 %v1175, %v1174
      %vm1186 = vcmask 654336
      %v1188 = vsel %vm1186, %v1140, 0
      %v1191 = vsel %vm1186, %v1141, 0
      %1193 = vmatpush.bf16.msra.mxu0 0
      %1194 = vmatpush.bf16.msra.mxu0 0
      %1195 = vmatpush.bf16.msra.mxu0 0
      %1196 = vmatpush.bf16.msra.mxu0 %v1180
      %1197 = vmatpush.bf16.msra.mxu0 %v1179
      %1198 = vmatpush.bf16.msra.mxu0 %v1178
      %1199 = vmatpush.bf16.msra.mxu0 %v1177
      %1200 = vmatpush.bf16.msra.mxu0 %v1176
      %1201 = vmatmul.bf16.gmra.mxu0 %v1188
      %v1202 = vpop.f32.mrf.mxu0
      %v1203 = vadd.f32 %v1154, %v1202
      %v1204 = vpop.f32.mrf.mxu0
      %v1205 = vadd.f32 %v1154, %v1204
      %1206 = vmatmul.bf16.gmra.mxu0 %v1191
      %v1207 = vpop.f32.mrf.mxu0
      %v1208 = vadd.f32 %v1154, %v1207
      %v1209 = vpop.f32.mrf.mxu0
      %v1210 = vadd.f32 %v1154, %v1209
      %1211 = vdwg.mxu0
      %vm1212 = vcmp.ge.f32.partialorder %v1203, 0.0
      %vm1213 = vcmp.ge.f32.partialorder %v1205, 0.0
      %vm1214 = vcmp.ge.f32.partialorder %v1208, 0.0
      %vm1215 = vcmp.ge.f32.partialorder %v1210, 0.0
      %v1216 = vmul.f32 %v1203, 0.1
      %v1217 = vmul.f32 %v1205, 0.1
      %v1218 = vmul.f32 %v1208, 0.1
      %v1219 = vmul.f32 %v1210, 0.1
      %v1220 = vsel %vm1212, %v1203, %v1216
      %v1221 = vsel %vm1213, %v1205, %v1217
      %v1222 = vsel %vm1214, %v1208, %v1218
      %v1223 = vsel %vm1215, %v1210, %v1219
      %v1224 = vpack.c.bf16 %v1220, %v1220
      %v1225 = vpack.c.bf16 %v1221, %v1221
      %v1226 = vpack.c.bf16 %v1222, %v1222
      %v1227 = vpack.c.bf16 %v1223, %v1223
      %vm1228 = vcmask 125952
      %1229 = vst.msk [vmem:[%s313] sm:$0xf] %vm1228, %v1224
      %1230 = vst.msk [vmem:[%s313 + $0x4] sm:$0xf] %vm1228, %v1225
      %1231 = vst.msk [vmem:[%s313 + $0x8] sm:$0xf] %vm1228, %v1226
      %1232 = vst.msk [vmem:[%s313 + $0xc] sm:$0xf] %vm1228, %v1227
      %p1233 = scmp.lt.s32.totalorder %s20, 1
      %s1234 = scalar_select %p1233, %s20, 1
      %s1235 = smul.addr %s1234, 4
      %s1236 = smul.addr %s1235, 4
      %s1237 = scalar_lea.vmem %s7, %s1236
      %p1238 = scmp.lt.s32.totalorder %s20, 1
      %s1239 = scalar_select %p1238, %s20, 1
      %s1240 = smul.addr %s1239, 8
      %s1241 = smul.addr %s1240, 4
      %s1242 = scalar_lea.vmem %s8, %s1241
      // Predicated region
      $region49: #{wave_unet_forward.6} parent=47 // pred_check
        %p1243 = pneg %p190
      $region50: #{wave_unet_forward.6} parent=47 // pred_check_branch
        %1245 = sbr.rel (%p1243) target = $region52
      $region51: #{wave_unet_forward.6} parent=47 // pred_region
        _
      $region52: #{wave_unet_forward.6} parent=47 // pred_fallthru
        _
      // Predicated region
      $region53: #{wave_unet_forward.6} parent=47 // pred_check
        %p1246 = pneg %p216
      $region54: #{wave_unet_forward.6} parent=47 // pred_check_branch
        %1248 = sbr.rel (%p1246) target = $region56
      $region55: #{wave_unet_forward.6} parent=47 // pred_region
        _
      $region56: #{wave_unet_forward.6} parent=47 // pred_fallthru
        _
    $region48: #{wave_unet_forward.6} parent=5 // pred_fallthru
      _
    %p1249 = scmp.le.s32.totalorder 2, %s15
    // Predicated region
    $region57: #{wave_unet_forward.6} parent=5 // pred_check
      %p1250 = pneg %p1249
    $region58: #{wave_unet_forward.6} parent=5 // pred_check_branch
      %1252 = sbr.rel (%p1250) target = $region60
    $region59: #{wave_unet_forward.6} parent=5 // pred_region
      %s1253 = ssub.s32 %s15, 2
      // Predicated region
      $region61: #{wave_unet_forward.6} parent=59 // pred_check
        %p1254 = pneg %p196
      $region62: #{wave_unet_forward.6} parent=59 // pred_check_branch
        %1256 = sbr.rel (%p1254) target = $region64
      $region63: #{wave_unet_forward.6} parent=59 // pred_region
        %p1257 = scmp.lt.s32.totalorder %s21, 1
        %s1258 = scalar_select %p1257, %s21, 1
        %s1259 = smul.addr %s1258, 4
        %s1260 = smul.addr %s1259, 4
        %s1261 = scalar_lea.vmem %s7, %s1260
      $region64: #{wave_unet_forward.6} parent=59 // pred_fallthru
        _
      // Predicated region
      $region65: #{wave_unet_forward.6} parent=59 // pred_check
        %p1262 = pneg %p222
      $region66: #{wave_unet_forward.6} parent=59 // pred_check_branch
        %1264 = sbr.rel (%p1262) target = $region68
      $region67: #{wave_unet_forward.6} parent=59 // pred_region
        %p1265 = scmp.lt.s32.totalorder %s21, 1
        %s1266 = scalar_select %p1265, %s21, 1
        %s1267 = smul.addr %s1266, 8
        %s1268 = smul.addr %s1267, 4
        %s1269 = scalar_lea.vmem %s8, %s1268
      $region68: #{wave_unet_forward.6} parent=59 // pred_fallthru
        _
    $region60: #{wave_unet_forward.6} parent=5 // pred_fallthru
      _
  $region6: #{wave_unet_forward.6} parent=0 // loop_footer
    %s19 = sadd.s32 1, %s15
  $region7: #{wave_unet_forward.6} parent=0 // loop_footer_branch
    %14 = sbr.rel target = $region3
  $region8: #{wave_unet_forward.6} parent=0 // loop_exit
    _

// kernel: wave_unet_forward.9
$region0: #{wave_unet_forward.9}
  #allocation0 [shape = 'u32[]', space=smem, size = 0x4, offset = 0x4, fixed_abs, tag = 'smem constant byte address 0x4 - core index']
  #allocation1 [shape = 'u32[72,128]{1,0:T(1,128)}', space=vmem, size = 0x9000, scoped, tag = 'internal scratch']
  %s0 = inlined_call_operand.vmem [shape: bf16[2,16,32], index: 0, kind: input, shape index: {}]
  %s1 = inlined_call_operand.vmem [shape: bf16[2,32,16], index: 1, kind: input, shape index: {}]
  %s2 = inlined_call_operand.vmem [shape: bf16[160,32], index: 2, kind: input, shape index: {}]
  %s3 = inlined_call_operand.vmem [shape: f32[1,32], index: 3, kind: input, shape index: {}]
  %s4 = inlined_call_operand.vmem [shape: bf16[160,16], index: 4, kind: input, shape index: {}]
  %s5 = inlined_call_operand.vmem [shape: f32[1,16], index: 5, kind: input, shape index: {}]
  %s6 = inlined_call_operand.vmem [shape: bf16[80,16], index: 6, kind: input, shape index: {}]
  %s7 = inlined_call_operand.vmem [shape: bf16[80,16], index: 7, kind: input, shape index: {}]
  %s8 = inlined_call_operand.vmem [shape: f32[1,16], index: 8, kind: input, shape index: {}]
  %s9 = inlined_call_operand.vmem [shape: bf16[2,31,16], index: 9, kind: output, shape index: {}]
  %s10 = sld [smem:[#allocation0]]
  $region69: #{wave_unet_forward.9} parent=0
    _
  %s12 = ssub.s32 1, %s10
  %s13 = scalar_select 0, %s12, %s10
  loop: start=0, step=1, limit=4
  $region2: #{wave_unet_forward.9} parent=0 // loop_pre_header
    _
  $region3: #{wave_unet_forward.9} parent=0 // loop_header
    %s15 = sphi 0, %s19
    %p16 = scmp.ge.s32.totalorder %s15, 4
    %s25 = sphi 0, %s27
    %s28 = sphi 0, %s25
    %s29 = sphi 0, %s28
    %s45 = sphi 0, %s29
    %s51 = sphi 0, %s53
    %s54 = sphi 0, %s51
    %s55 = sphi 0, %s54
    %s71 = sphi 0, %s55
    %s75 = sphi 0, %s75
    %s77 = sphi 0, %s75
    %s78 = sphi 0, %s77
    %s92 = sphi 0, %s78
    %s96 = sphi 0, %s96
    %s98 = sphi 0, %s96
    %s99 = sphi 0, %s98
    %s113 = sphi 0, %s99
    %s117 = sphi 0, %s117
    %s119 = sphi 0, %s117
    %s120 = sphi 0, %s119
    %s134 = sphi 0, %s120
    %s138 = sphi 0, %s138
    %s140 = sphi 0, %s138
    %s141 = sphi 0, %s140
    %s155 = sphi 0, %s141
    %s159 = sphi 0, %s159
    %s161 = sphi 0, %s159
    %s162 = sphi 0, %s161
    %s176 = sphi 0, %s162
    %s180 = sphi 0, %s180
    %s182 = sphi 0, %s180
    %s183 = sphi 0, %s182
    %s197 = sphi 0, %s183
    %s201 = sphi 0, %s201
    %s203 = sphi 0, %s201
    %s204 = sphi 0, %s203
    %s218 = sphi 0, %s204
    %s224 = sphi 0, %s226
    %s227 = sphi 0, %s224
    %s228 = sphi 0, %s227
    %s244 = sphi 0, %s228
  $region4: #{wave_unet_forward.9} parent=0 // loop_header_branch
    %18 = sbr.rel (%p16) target = $region8
  $region5: #{wave_unet_forward.9} parent=0 // loop_body
    %s20 = ssub.s32 %s15, 1
    %s21 = ssub.s32 %s15, 2
    %s22 = sadd.s32 %s15, 1
    %s23 = ssub.s32 %s15, %s22
    %p24 = scmp.eq.s32.totalorder %s23, 0
    %s26 = sadd.s32 %s25, 1
    %s27 = scalar_select %p24, %s25, %s26
    %p30 = pneg %p24
    %p31 = scmp.eq.s32.totalorder %s15, 1
    %p32 = por %p30, %p31
    %p33 = scmp.ne.s32.totalorder %s25, %s28
    %p34 = scmp.eq.s32.totalorder %s15, 0
    %p35 = por %p33, %p34
    %p36 = scmp.ne.s32.totalorder %s25, %s28
    %p37 = scmp.eq.s32.totalorder %s20, 1
    %p38 = por %p36, %p37
    %p39 = scmp.ne.s32.totalorder %s28, %s29
    %p40 = scmp.eq.s32.totalorder %s20, 0
    %p41 = por %p39, %p40
    %p42 = scmp.ne.s32.totalorder %s28, %s29
    %p43 = scmp.eq.s32.totalorder %s21, 1
    %p44 = por %p42, %p43
    %p46 = scmp.ne.s32.totalorder %s29, %s45
    %p47 = scmp.eq.s32.totalorder %s21, 0
    %p48 = por %p46, %p47
    %s49 = ssub.s32 %s15, %s22
    %p50 = scmp.eq.s32.totalorder %s49, 0
    %s52 = sadd.s32 %s51, 1
    %s53 = scalar_select %p50, %s51, %s52
    %p56 = pneg %p50
    %p57 = scmp.eq.s32.totalorder %s15, 1
    %p58 = por %p56, %p57
    %p59 = scmp.ne.s32.totalorder %s51, %s54
    %p60 = scmp.eq.s32.totalorder %s15, 0
    %p61 = por %p59, %p60
    %p62 = scmp.ne.s32.totalorder %s51, %s54
    %p63 = scmp.eq.s32.totalorder %s20, 1
    %p64 = por %p62, %p63
    %p65 = scmp.ne.s32.totalorder %s54, %s55
    %p66 = scmp.eq.s32.totalorder %s20, 0
    %p67 = por %p65, %p66
    %p68 = scmp.ne.s32.totalorder %s54, %s55
    %p69 = scmp.eq.s32.totalorder %s21, 1
    %p70 = por %p68, %p69
    %p72 = scmp.ne.s32.totalorder %s55, %s71
    %p73 = scmp.eq.s32.totalorder %s21, 0
    %p74 = por %p72, %p73
    %s76 = sadd.s32 %s75, 1
    %p79 = scmp.eq.s32.totalorder %s15, 1
    %p80 = scmp.ne.s32.totalorder %s75, %s77
    %p81 = scmp.eq.s32.totalorder %s15, 0
    %p82 = por %p80, %p81
    %p83 = scmp.ne.s32.totalorder %s75, %s77
    %p84 = scmp.eq.s32.totalorder %s20, 1
    %p85 = por %p83, %p84
    %p86 = scmp.ne.s32.totalorder %s77, %s78
    %p87 = scmp.eq.s32.totalorder %s20, 0
    %p88 = por %p86, %p87
    %p89 = scmp.ne.s32.totalorder %s77, %s78
    %p90 = scmp.eq.s32.totalorder %s21, 1
    %p91 = por %p89, %p90
    %p93 = scmp.ne.s32.totalorder %s78, %s92
    %p94 = scmp.eq.s32.totalorder %s21, 0
    %p95 = por %p93, %p94
    %s97 = sadd.s32 %s96, 1
    %p100 = scmp.eq.s32.totalorder %s15, 1
    %p101 = scmp.ne.s32.totalorder %s96, %s98
    %p102 = scmp.eq.s32.totalorder %s15, 0
    %p103 = por %p101, %p102
    %p104 = scmp.ne.s32.totalorder %s96, %s98
    %p105 = scmp.eq.s32.totalorder %s20, 1
    %p106 = por %p104, %p105
    %p107 = scmp.ne.s32.totalorder %s98, %s99
    %p108 = scmp.eq.s32.totalorder %s20, 0
    %p109 = por %p107, %p108
    %p110 = scmp.ne.s32.totalorder %s98, %s99
    %p111 = scmp.eq.s32.totalorder %s21, 1
    %p112 = por %p110, %p111
    %p114 = scmp.ne.s32.totalorder %s99, %s113
    %p115 = scmp.eq.s32.totalorder %s21, 0
    %p116 = por %p114, %p115
    %s118 = sadd.s32 %s117, 1
    %p121 = scmp.eq.s32.totalorder %s15, 1
    %p122 = scmp.ne.s32.totalorder %s117, %s119
    %p123 = scmp.eq.s32.totalorder %s15, 0
    %p124 = por %p122, %p123
    %p125 = scmp.ne.s32.totalorder %s117, %s119
    %p126 = scmp.eq.s32.totalorder %s20, 1
    %p127 = por %p125, %p126
    %p128 = scmp.ne.s32.totalorder %s119, %s120
    %p129 = scmp.eq.s32.totalorder %s20, 0
    %p130 = por %p128, %p129
    %p131 = scmp.ne.s32.totalorder %s119, %s120
    %p132 = scmp.eq.s32.totalorder %s21, 1
    %p133 = por %p131, %p132
    %p135 = scmp.ne.s32.totalorder %s120, %s134
    %p136 = scmp.eq.s32.totalorder %s21, 0
    %p137 = por %p135, %p136
    %s139 = sadd.s32 %s138, 1
    %p142 = scmp.eq.s32.totalorder %s15, 1
    %p143 = scmp.ne.s32.totalorder %s138, %s140
    %p144 = scmp.eq.s32.totalorder %s15, 0
    %p145 = por %p143, %p144
    %p146 = scmp.ne.s32.totalorder %s138, %s140
    %p147 = scmp.eq.s32.totalorder %s20, 1
    %p148 = por %p146, %p147
    %p149 = scmp.ne.s32.totalorder %s140, %s141
    %p150 = scmp.eq.s32.totalorder %s20, 0
    %p151 = por %p149, %p150
    %p152 = scmp.ne.s32.totalorder %s140, %s141
    %p153 = scmp.eq.s32.totalorder %s21, 1
    %p154 = por %p152, %p153
    %p156 = scmp.ne.s32.totalorder %s141, %s155
    %p157 = scmp.eq.s32.totalorder %s21, 0
    %p158 = por %p156, %p157
    %s160 = sadd.s32 %s159, 1
    %p163 = scmp.eq.s32.totalorder %s15, 1
    %p164 = scmp.ne.s32.totalorder %s159, %s161
    %p165 = scmp.eq.s32.totalorder %s15, 0
    %p166 = por %p164, %p165
    %p167 = scmp.ne.s32.totalorder %s159, %s161
    %p168 = scmp.eq.s32.totalorder %s20, 1
    %p169 = por %p167, %p168
    %p170 = scmp.ne.s32.totalorder %s161, %s162
    %p171 = scmp.eq.s32.totalorder %s20, 0
    %p172 = por %p170, %p171
    %p173 = scmp.ne.s32.totalorder %s161, %s162
    %p174 = scmp.eq.s32.totalorder %s21, 1
    %p175 = por %p173, %p174
    %p177 = scmp.ne.s32.totalorder %s162, %s176
    %p178 = scmp.eq.s32.totalorder %s21, 0
    %p179 = por %p177, %p178
    %s181 = sadd.s32 %s180, 1
    %p184 = scmp.eq.s32.totalorder %s15, 1
    %p185 = scmp.ne.s32.totalorder %s180, %s182
    %p186 = scmp.eq.s32.totalorder %s15, 0
    %p187 = por %p185, %p186
    %p188 = scmp.ne.s32.totalorder %s180, %s182
    %p189 = scmp.eq.s32.totalorder %s20, 1
    %p190 = por %p188, %p189
    %p191 = scmp.ne.s32.totalorder %s182, %s183
    %p192 = scmp.eq.s32.totalorder %s20, 0
    %p193 = por %p191, %p192
    %p194 = scmp.ne.s32.totalorder %s182, %s183
    %p195 = scmp.eq.s32.totalorder %s21, 1
    %p196 = por %p194, %p195
    %p198 = scmp.ne.s32.totalorder %s183, %s197
    %p199 = scmp.eq.s32.totalorder %s21, 0
    %p200 = por %p198, %p199
    %s202 = sadd.s32 %s201, 1
    %p205 = scmp.eq.s32.totalorder %s15, 1
    %p206 = scmp.ne.s32.totalorder %s201, %s203
    %p207 = scmp.eq.s32.totalorder %s15, 0
    %p208 = por %p206, %p207
    %p209 = scmp.ne.s32.totalorder %s201, %s203
    %p210 = scmp.eq.s32.totalorder %s20, 1
    %p211 = por %p209, %p210
    %p212 = scmp.ne.s32.totalorder %s203, %s204
    %p213 = scmp.eq.s32.totalorder %s20, 0
    %p214 = por %p212, %p213
    %p215 = scmp.ne.s32.totalorder %s203, %s204
    %p216 = scmp.eq.s32.totalorder %s21, 1
    %p217 = por %p215, %p216
    %p219 = scmp.ne.s32.totalorder %s204, %s218
    %p220 = scmp.eq.s32.totalorder %s21, 0
    %p221 = por %p219, %p220
    %s222 = ssub.s32 %s15, %s22
    %p223 = scmp.eq.s32.totalorder %s222, 0
    %s225 = sadd.s32 %s224, 1
    %s226 = scalar_select %p223, %s224, %s225
    %p229 = pneg %p223
    %p230 = scmp.eq.s32.totalorder %s15, 1
    %p231 = por %p229, %p230
    %p232 = scmp.ne.s32.totalorder %s224, %s227
    %p233 = scmp.eq.s32.totalorder %s15, 0
    %p234 = por %p232, %p233
    %p235 = scmp.ne.s32.totalorder %s224, %s227
    %p236 = scmp.eq.s32.totalorder %s20, 1
    %p237 = por %p235, %p236
    %p238 = scmp.ne.s32.totalorder %s227, %s228
    %p239 = scmp.eq.s32.totalorder %s20, 0
    %p240 = por %p238, %p239
    %p241 = scmp.ne.s32.totalorder %s227, %s228
    %p242 = scmp.eq.s32.totalorder %s21, 1
    %p243 = por %p241, %p242
    %p245 = scmp.ne.s32.totalorder %s228, %s244
    %p246 = scmp.eq.s32.totalorder %s21, 0
    %p247 = por %p245, %p246
    %p248 = scmp.le.s32.totalorder 1, %s15
    %p249 = scmp.lt.s32.totalorder %s15, 3
    %p250 = pnand %p248, %p249
    %p251 = pneg %p250
    // Predicated region
    $region9: #{wave_unet_forward.9} parent=5 // pred_check
      _
    $region10: #{wave_unet_forward.9} parent=5 // pred_check_branch
      %253 = sbr.rel (%p250) target = $region12
    $region11: #{wave_unet_forward.9} parent=5 // pred_region
      %s254 = ssub.s32 %s15, 1
      // Predicated region
      $region13: #{wave_unet_forward.9} parent=11 // pred_check
        %p255 = pneg %p88
      $region14: #{wave_unet_forward.9} parent=11 // pred_check_branch
        %257 = sbr.rel (%p255) target = $region16
      $region15: #{wave_unet_forward.9} parent=11 // pred_region
        _
      $region16: #{wave_unet_forward.9} parent=11 // pred_fallthru
        _
      // Predicated region
      $region17: #{wave_unet_forward.9} parent=11 // pred_check
        %p258 = pneg %p109
      $region18: #{wave_unet_forward.9} parent=11 // pred_check_branch
        %260 = sbr.rel (%p258) target = $region20
      $region19: #{wave_unet_forward.9} parent=11 // pred_region
        _
      $region20: #{wave_unet_forward.9} parent=11 // pred_fallthru
        _
      // Predicated region
      $region21: #{wave_unet_forward.9} parent=11 // pred_check
        %p261 = pneg %p130
      $region22: #{wave_unet_forward.9} parent=11 // pred_check_branch
        %263 = sbr.rel (%p261) target = $region24
      $region23: #{wave_unet_forward.9} parent=11 // pred_region
        _
      $region24: #{wave_unet_forward.9} parent=11 // pred_fallthru
        _
      // Predicated region
      $region25: #{wave_unet_forward.9} parent=11 // pred_check
        %p264 = pneg %p151
      $region26: #{wave_unet_forward.9} parent=11 // pred_check_branch
        %266 = sbr.rel (%p264) target = $region28
      $region27: #{wave_unet_forward.9} parent=11 // pred_region
        _
      $region28: #{wave_unet_forward.9} parent=11 // pred_fallthru
        _
      // Predicated region
      $region29: #{wave_unet_forward.9} parent=11 // pred_check
        %p267 = pneg %p172
      $region30: #{wave_unet_forward.9} parent=11 // pred_check_branch
        %269 = sbr.rel (%p267) target = $region32
      $region31: #{wave_unet_forward.9} parent=11 // pred_region
        _
      $region32: #{wave_unet_forward.9} parent=11 // pred_fallthru
        _
      // Predicated region
      $region33: #{wave_unet_forward.9} parent=11 // pred_check
        %p270 = pneg %p193
      $region34: #{wave_unet_forward.9} parent=11 // pred_check_branch
        %272 = sbr.rel (%p270) target = $region36
      $region35: #{wave_unet_forward.9} parent=11 // pred_region
        _
      $region36: #{wave_unet_forward.9} parent=11 // pred_fallthru
        _
      // Predicated region
      $region37: #{wave_unet_forward.9} parent=11 // pred_check
        %p273 = pneg %p214
      $region38: #{wave_unet_forward.9} parent=11 // pred_check_branch
        %275 = sbr.rel (%p273) target = $region40
      $region39: #{wave_unet_forward.9} parent=11 // pred_region
        _
      $region40: #{wave_unet_forward.9} parent=11 // pred_fallthru
        _
    $region12: #{wave_unet_forward.9} parent=5 // pred_fallthru
      _
    %p276 = scmp.lt.s32.totalorder %s15, 2
    // Predicated region
    $region41: #{wave_unet_forward.9} parent=5 // pred_check
      %p277 = pneg %p276
    $region42: #{wave_unet_forward.9} parent=5 // pred_check_branch
      %279 = sbr.rel (%p277) target = $region44
    $region43: #{wave_unet_forward.9} parent=5 // pred_region
      // Predicated region
      $region45: #{wave_unet_forward.9} parent=43 // pred_check
        %p280 = pneg %p35
      $region46: #{wave_unet_forward.9} parent=43 // pred_check_branch
        %282 = sbr.rel (%p280) target = $region48
      $region47: #{wave_unet_forward.9} parent=43 // pred_region
        %p283 = scmp.lt.s32.totalorder %s15, 1
        %s284 = scalar_select %p283, %s15, 1
        %s285 = smul.addr %s284, 2
        %s286 = smul.addr %s285, 4
        %s287 = scalar_lea.vmem %s0, %s286
      $region48: #{wave_unet_forward.9} parent=43 // pred_fallthru
        _
      // Predicated region
      $region49: #{wave_unet_forward.9} parent=43 // pred_check
        %p288 = pneg %p61
      $region50: #{wave_unet_forward.9} parent=43 // pred_check_branch
        %290 = sbr.rel (%p288) target = $region52
      $region51: #{wave_unet_forward.9} parent=43 // pred_region
        %p291 = scmp.lt.s32.totalorder %s15, 1
        %s292 = scalar_select %p291, %s15, 1
        %s293 = smul.addr %s292, 4
        %s294 = smul.addr %s293, 4
        %s295 = scalar_lea.vmem %s1, %s294
      $region52: #{wave_unet_forward.9} parent=43 // pred_fallthru
        _
    $region44: #{wave_unet_forward.9} parent=5 // pred_fallthru
      _
    %p296 = scmp.le.s32.totalorder 1, %s15
    %p297 = scmp.lt.s32.totalorder %s15, 3
    %p298 = pnand %p296, %p297
    %p299 = pneg %p298
    // Predicated region
    $region53: #{wave_unet_forward.9} parent=5 // pred_check
      _
    $region54: #{wave_unet_forward.9} parent=5 // pred_check_branch
      %301 = sbr.rel (%p298) target = $region56
    $region55: #{wave_unet_forward.9} parent=5 // pred_region
      %s302 = ssub.s32 %s15, 1
      %p303 = scmp.lt.s32.totalorder %s20, 1
      %s304 = scalar_select %p303, %s20, 1
      %s305 = smul.addr %s304, 2
      %s306 = smul.addr %s305, 4
      %s307 = scalar_lea.vmem %s0, %s306
      %p308 = pneg %p41
      %p309 = pneg %p38
      %p310 = scmp.lt.s32.totalorder %s20, 1
      %s311 = scalar_select %p310, %s20, 1
      %s312 = smul.addr %s311, 4
      %s313 = smul.addr %s312, 4
      %s314 = scalar_lea.vmem %s1, %s313
      %p315 = pneg %p67
      %p316 = pneg %p64
      %p317 = pneg %p88
      %p318 = pneg %p85
      %p319 = pneg %p109
      %p320 = pneg %p106
      %p321 = pneg %p130
      %p322 = pneg %p127
      %p323 = pneg %p151
      %p324 = pneg %p148
      %p325 = pneg %p172
      %p326 = pneg %p169
      %p327 = pneg %p193
      %p328 = pneg %p190
      %p329 = pneg %p214
      %p330 = pneg %p211
      %p331 = pneg %p240
      %p332 = pneg %p237
      %p333 = scmp.lt.s32.totalorder %s20, 1
      %s334 = scalar_select %p333, %s20, 1
      %s335 = smul.addr %s334, 4
      %s336 = smul.addr %s335, 4
      %s337 = scalar_lea.vmem %s9, %s336
      %p338 = scmp.lt.s32.totalorder %s20, 1
      %s339 = scalar_select %p338, %s20, 1
      %s340 = smul.addr %s339, 2
      %s341 = smul.addr %s340, 4
      %s342 = scalar_lea.vmem %s0, %s341
      %p343 = scmp.lt.s32.totalorder %s20, 1
      %s344 = scalar_select %p343, %s20, 1
      %s345 = smul.addr %s344, 4
      %s346 = smul.addr %s345, 4
      %s347 = scalar_lea.vmem %s1, %s346
      %p348 = scmp.lt.s32.totalorder %s20, 1
      %s349 = scalar_select %p348, %s20, 1
      %s350 = smul.addr %s349, 4
      %s351 = smul.addr %s350, 4
      %s352 = scalar_lea.vmem %s9, %s351
      %v354 = vld [vmem:[%s342] sm:$0xf]
      %v355 = vld [vmem:[%s342 + $0x4] sm:$0xf]
      %v356 = vunpack.c.l.bf16 %v354
      %v357 = vunpack.c.l.bf16 %v355
      %v360 = vrot.slane %v356, 1
      %v361 = vrot.slane %v356, 2
      %v362 = vrot.slane %v356, 3
      %v363 = vrot.slane %v356, 4
      %v364 = vrot.slane %v356, 5
      %v365 = vrot.slane %v356, 6
      %v366 = vrot.slane %v356, 7
      %v367 = vrot.slane %v357, 1
      %v368 = vrot.slane %v357, 2
      %v369 = vrot.slane %v357, 3
      %v370 = vrot.slane %v357, 4
      %v371 = vrot.slane %v357, 5
      %v372 = vrot.slane %v357, 6
      %v373 = vrot.slane %v357, 7
      %vm388 = vcmask 1040384
      %v389 = vsel %vm388, %v356, 0.0
      %v390 = vsel %vm388, %v360, 0.0
      %v391 = vsel %vm388, %v361, 0.0
      %v392 = vsel %vm388, %v362, 0.0
      %v393 = vsel %vm388, %v363, 0.0
      %v394 = vsel %vm388, %v364, 0.0
      %v395 = vsel %vm388, %v365, 0.0
      %v396 = vsel %vm388, %v366, 0.0
      %v397 = vsel %vm388, %v357, 0.0
      %v398 = vsel %vm388, %v367, 0.0
      %v399 = vsel %vm388, %v368, 0.0
      %v400 = vsel %vm388, %v369, 0.0
      %v401 = vsel %vm388, %v370, 0.0
      %v402 = vsel %vm388, %v371, 0.0
      %v403 = vsel %vm388, %v372, 0.0
      %v404 = vsel %vm388, %v373, 0.0
      %s421 = scalar_lea.vmem [#allocation1], 1
      %422 = vst [vmem:[%s421] ss:$4 sm:$0xff] %v389
      %s423 = scalar_lea.vmem [#allocation1], 2
      %424 = vst [vmem:[%s423] ss:$4 sm:$0xff] %v390
      %s425 = scalar_lea.vmem [#allocation1], 3
      %426 = vst [vmem:[%s425] ss:$4 sm:$0xff] %v391
      %s427 = scalar_lea.vmem [#allocation1], 32
      %428 = vst [vmem:[%s427] ss:$4 sm:$0xff] %v392
      %s429 = scalar_lea.vmem [#allocation1], 33
      %430 = vst [vmem:[%s429] ss:$4 sm:$0xff] %v393
      %s431 = scalar_lea.vmem [#allocation1], 34
      %432 = vst [vmem:[%s431] ss:$4 sm:$0xff] %v394
      %s433 = scalar_lea.vmem [#allocation1], 35
      %434 = vst [vmem:[%s433] ss:$4 sm:$0xff] %v395
      %v435 = vld.sshfl [vmem:[#allocation1] sm:$0xff pattern:$0x73625140]
      %v436 = vld.sshfl [vmem:[#allocation1 + $0x20] sm:$0xff pattern:$0x73625140]
      %437 = vst [vmem:[#allocation1] ss:$4 sm:$0xff] %v396
      %438 = vst [vmem:[%s421] ss:$4 sm:$0xff] %v397
      %439 = vst [vmem:[%s423] ss:$4 sm:$0xff] %v398
      %440 = vst [vmem:[%s425] ss:$4 sm:$0xff] %v399
      %441 = vst [vmem:[%s427] ss:$4 sm:$0xff] %v400
      %442 = vst [vmem:[%s429] ss:$4 sm:$0xff] %v401
      %443 = vst [vmem:[%s431] ss:$4 sm:$0xff] %v402
      %444 = vst [vmem:[%s433] ss:$4 sm:$0xff] %v403
      %v445 = vld.sshfl [vmem:[#allocation1] sm:$0xff pattern:$0x73625140]
      %v446 = vld.sshfl [vmem:[#allocation1 + $0x20] sm:$0xff pattern:$0x73625140]
      %447 = vst [vmem:[#allocation1] ss:$4 sm:$0xff] %v404
      %v448 = vld.sshfl [vmem:[#allocation1] sm:$0xff pattern:$0x73625140]
      %vm454 = vcmask 1041408
      %v455 = vsel %vm454, 0.0, %v435
      %v456 = vsel %vm388, %v448, 0.0
      %vm458 = vcmask 1046528
      %v459 = vrot.slane %v455, 1
      %v460 = vrot.slane %v436, 1
      %v461 = vsel %vm458, %v459, %v460
      %v462 = vrot.slane %v445, 1
      %v463 = vsel %vm458, %v460, %v462
      %v464 = vrot.slane %v446, 1
      %v465 = vsel %vm458, %v462, %v464
      %466 = vrot.lane.b32.xlu0 %v461, 32
      %v467 = vpop.permute.xlu0 %466
      %468 = vrot.lane.b32.xlu0 %v463, 32
      %v469 = vpop.permute.xlu0 %468
      %470 = vrot.lane.b32.xlu0 %v465, 32
      %v471 = vpop.permute.xlu0 %470
      %472 = vrot.lane.b32.xlu0 %v464, 32
      %v473 = vpop.permute.xlu0 %472
      %vm479 = vcmask 1045504
      %v480 = vrot.slane %v455, 2
      %v481 = vrot.slane %v436, 2
      %v482 = vsel %vm479, %v480, %v481
      %v483 = vrot.slane %v445, 2
      %v484 = vsel %vm479, %v481, %v483
      %v485 = vrot.slane %v446, 2
      %v486 = vsel %vm479, %v483, %v485
      %v487 = vrot.slane %v456, 2
      %v488 = vsel %vm479, %v485, %v487
      %489 = vrot.lane.b32.xlu0 %v482, 64
      %v490 = vpop.permute.xlu0 %489
      %491 = vrot.lane.b32.xlu0 %v484, 64
      %v492 = vpop.permute.xlu0 %491
      %493 = vrot.lane.b32.xlu0 %v486, 64
      %v494 = vpop.permute.xlu0 %493
      %495 = vrot.lane.b32.xlu0 %v488, 64
      %v496 = vpop.permute.xlu0 %495
      %vm501 = vcmask 1044480
      %v502 = vrot.slane %v455, 3
      %v503 = vrot.slane %v436, 3
      %v504 = vsel %vm501, %v502, %v503
      %v505 = vrot.slane %v445, 3
      %v506 = vsel %vm501, %v503, %v505
      %v507 = vrot.slane %v446, 3
      %v508 = vsel %vm501, %v505, %v507
      %v509 = vrot.slane %v456, 3
      %v510 = vsel %vm501, %v507, %v509
      %511 = vrot.lane.b32.xlu0 %v504, 96
      %v512 = vpop.permute.xlu0 %511
      %513 = vrot.lane.b32.xlu0 %v506, 96
      %v514 = vpop.permute.xlu0 %513
      %515 = vrot.lane.b32.xlu0 %v508, 96
      %v516 = vpop.permute.xlu0 %515
      %517 = vrot.lane.b32.xlu0 %v510, 96
      %v518 = vpop.permute.xlu0 %517
      %vm523 = vcmask 1043456
      %v524 = vrot.slane %v455, 4
      %v525 = vrot.slane %v436, 4
      %v526 = vsel %vm523, %v524, %v525
      %v527 = vrot.slane %v445, 4
      %v528 = vsel %vm523, %v525, %v527
      %v529 = vrot.slane %v446, 4
      %v530 = vsel %vm523, %v527, %v529
      %v531 = vrot.slane %v456, 4
      %v532 = vsel %vm523, %v529, %v531
      %vm537 = vcmask 261120
      %v538 = vsel %vm537, %v455, %v467
      %v539 = vsel %vm537, %v436, %v469
      %v540 = vsel %vm537, %v445, %v471
      %v541 = vsel %vm537, %v446, %v473
      %vm542 = vcmask 523264
      %v543 = vsel %vm542, %v538, %v490
      %v544 = vsel %vm542, %v539, %v492
      %v545 = vsel %vm542, %v540, %v494
      %v546 = vsel %vm542, %v541, %v496
      %vm547 = vcmask 785408
      %v548 = vsel %vm547, %v543, %v512
      %v549 = vsel %vm547, %v544, %v514
      %v550 = vsel %vm547, %v545, %v516
      %v551 = vsel %vm547, %v546, %v518
      %v552 = vpack.c.bf16 %v549, %v548
      %v553 = vpack.c.bf16 %v528, %v526
      %v554 = vpack.c.bf16 %v551, %v550
      %v555 = vpack.c.bf16 %v532, %v530
      %v556 = vld [vmem:[%s2] sm:$0xf]
      %v557 = vld [vmem:[%s2 + $0x4] sm:$0xf]
      %v558 = vld [vmem:[%s2 + $0x8] sm:$0xf]
      %v559 = vld [vmem:[%s2 + $0xc] sm:$0xf]
      %v560 = vld [vmem:[%s2 + $0x10] sm:$0xf]
      %v561 = vld [vmem:[%s2 + $0x14] sm:$0xf]
      %v562 = vld [vmem:[%s2 + $0x18] sm:$0xf]
      %v563 = vld [vmem:[%s2 + $0x1c] sm:$0xf]
      %v564 = vld [vmem:[%s2 + $0x20] sm:$0xf]
      %v565 = vld [vmem:[%s2 + $0x24] sm:$0xf]
      %v566 = vld [vmem:[%s2 + $0x28] sm:$0xf]
      %v567 = vld [vmem:[%s2 + $0x2c] sm:$0xf]
      %v568 = vld [vmem:[%s2 + $0x30] sm:$0xf]
      %v569 = vld [vmem:[%s2 + $0x34] sm:$0xf]
      %v570 = vld [vmem:[%s2 + $0x38] sm:$0xf]
      %v571 = vld [vmem:[%s2 + $0x3c] sm:$0xf]
      %v572 = vld [vmem:[%s2 + $0x40] sm:$0xf]
      %v573 = vld [vmem:[%s2 + $0x44] sm:$0xf]
      %v574 = vld [vmem:[%s2 + $0x48] sm:$0xf]
      %v575 = vld [vmem:[%s2 + $0x4c] sm:$0xf]
      %v576 = vld [vmem:[%s3] sm:$0x1]
      %v578 = vperm.slane %v576, 0
      %v600 = vunpack.c.l.b16 %v556
      %v601 = vunpack.c.l.b16 %v557
      %v602 = vunpack.c.l.b16 %v558
      %v603 = vunpack.c.l.b16 %v559
      %v604 = vunpack.c.l.b16 %v560
      %v605 = vunpack.c.l.b16 %v561
      %v606 = vunpack.c.l.b16 %v562
      %v607 = vunpack.c.l.b16 %v563
      %v608 = vunpack.c.l.b16 %v564
      %v609 = vunpack.c.l.b16 %v565
      %v610 = vunpack.c.l.b16 %v566
      %v611 = vunpack.c.l.b16 %v567
      %v612 = vunpack.c.l.b16 %v568
      %v613 = vunpack.c.l.b16 %v569
      %v614 = vunpack.c.l.b16 %v570
      %v615 = vunpack.c.l.b16 %v571
      %v616 = vunpack.c.l.b16 %v572
      %v617 = vunpack.c.l.b16 %v573
      %v618 = vunpack.c.l.b16 %v574
      %v619 = vunpack.c.l.b16 %v575
      %v620 = vpack.c.b16 %v601, %v600
      %v621 = vpack.c.b16 %v603, %v602
      %v622 = vpack.c.b16 %v605, %v604
      %v623 = vpack.c.b16 %v607, %v606
      %v624 = vpack.c.b16 %v609, %v608
      %v625 = vpack.c.b16 %v611, %v610
      %v626 = vpack.c.b16 %v613, %v612
      %v627 = vpack.c.b16 %v615, %v614
      %v628 = vpack.c.b16 %v617, %v616
      %v629 = vpack.c.b16 %v619, %v618
      %v641 = vsel %vm537, %v553, 0
      %v644 = vsel %vm537, %v555, 0
      %646 = vmatpush.bf16.msra.mxu0 %v627
      %647 = vmatpush.bf16.msra.mxu0 %v626
      %648 = vmatpush.bf16.msra.mxu0 %v625
      %649 = vmatpush.bf16.msra.mxu0 %v624
      %650 = vmatpush.bf16.msra.mxu0 %v623
      %651 = vmatpush.bf16.msra.mxu0 %v622
      %652 = vmatpush.bf16.msra.mxu0 %v621
      %653 = vmatpush.bf16.msra.mxu0 %v620
      %654 = vmatmul.bf16.gmra.mxu0 %v552
      %v655 = vpop.f32.mrf.mxu0
      %v656 = vadd.f32 %v578, %v655
      %v657 = vpop.f32.mrf.mxu0
      %v658 = vadd.f32 %v578, %v657
      %659 = vmatmul.bf16.gmra.mxu0 %v554
      %v660 = vpop.f32.mrf.mxu0
      %v661 = vadd.f32 %v578, %v660
      %v662 = vpop.f32.mrf.mxu0
      %v663 = vadd.f32 %v578, %v662
      %664 = vdwg.mxu0
      %665 = vmatpush.bf16.msra.mxu0 0
      %666 = vmatpush.bf16.msra.mxu0 0
      %667 = vmatpush.bf16.msra.mxu0 0
      %668 = vmatpush.bf16.msra.mxu0 0
      %669 = vmatpush.bf16.msra.mxu0 0
      %670 = vmatpush.bf16.msra.mxu0 0
      %671 = vmatpush.bf16.msra.mxu0 %v629
      %672 = vmatpush.bf16.msra.mxu0 %v628
      %673 = vmatmul.bf16.gmra.mxu0 %v641
      %v674 = vpop.f32.mrf.mxu0
      %v675 = vadd.f32 %v656, %v674
      %v676 = vpop.f32.mrf.mxu0
      %v677 = vadd.f32 %v658, %v676
      %678 = vmatmul.bf16.gmra.mxu0 %v644
      %v679 = vpop.f32.mrf.mxu0
      %v680 = vadd.f32 %v661, %v679
      %v681 = vpop.f32.mrf.mxu0
      %v682 = vadd.f32 %v663, %v681
      %683 = vdwg.mxu0
      %vm684 = vcmp.ge.f32.partialorder %v675, 0.0
      %vm685 = vcmp.ge.f32.partialorder %v677, 0.0
      %vm686 = vcmp.ge.f32.partialorder %v680, 0.0
      %vm687 = vcmp.ge.f32.partialorder %v682, 0.0
      %v688 = vmul.f32 %v675, 0.1
      %v689 = vmul.f32 %v677, 0.1
      %v690 = vmul.f32 %v680, 0.1
      %v691 = vmul.f32 %v682, 0.1
      %v692 = vsel %vm684, %v675, %v688
      %v693 = vsel %vm685, %v677, %v689
      %v694 = vsel %vm686, %v680, %v690
      %v695 = vsel %vm687, %v682, %v691
      %v700 = vrot.slane %v692, 6
      %v701 = vrot.slane %v693, 6
      %v702 = vsel %vm454, %v700, %v701
      %v703 = vrot.slane %v694, 6
      %v704 = vsel %vm454, %v701, %v703
      %v705 = vrot.slane %v695, 6
      %v706 = vsel %vm454, %v703, %v705
      %v712 = vsel %vm454, 0.0, %v700
      %v713 = vsel %vm388, %v705, 0.0
      %v715 = vrot.slane %v712, 1
      %v716 = vrot.slane %v702, 1
      %v717 = vsel %vm458, %v715, %v716
      %v718 = vrot.slane %v704, 1
      %v719 = vsel %vm458, %v716, %v718
      %v720 = vrot.slane %v706, 1
      %v721 = vsel %vm458, %v718, %v720
      %722 = vrot.lane.b32.xlu0 %v717, 32
      %v723 = vpop.permute.xlu0 %722
      %724 = vrot.lane.b32.xlu0 %v719, 32
      %v725 = vpop.permute.xlu0 %724
      %726 = vrot.lane.b32.xlu0 %v721, 32
      %v727 = vpop.permute.xlu0 %726
      %728 = vrot.lane.b32.xlu0 %v720, 32
      %v729 = vpop.permute.xlu0 %728
      %v735 = vrot.slane %v712, 2
      %v736 = vrot.slane %v702, 2
      %v737 = vsel %vm479, %v735, %v736
      %v738 = vrot.slane %v704, 2
      %v739 = vsel %vm479, %v736, %v738
      %v740 = vrot.slane %v706, 2
      %v741 = vsel %vm479, %v738, %v740
      %v742 = vrot.slane %v713, 2
      %v743 = vsel %vm479, %v740, %v742
      %744 = vrot.lane.b32.xlu0 %v737, 64
      %v745 = vpop.permute.xlu0 %744
      %746 = vrot.lane.b32.xlu0 %v739, 64
      %v747 = vpop.permute.xlu0 %746
      %748 = vrot.lane.b32.xlu0 %v741, 64
      %v749 = vpop.permute.xlu0 %748
      %750 = vrot.lane.b32.xlu0 %v743, 64
      %v751 = vpop.permute.xlu0 %750
      %v756 = vrot.slane %v712, 3
      %v757 = vrot.slane %v702, 3
      %v758 = vsel %vm501, %v756, %v757
      %v759 = vrot.slane %v704, 3
      %v760 = vsel %vm501, %v757, %v759
      %v761 = vrot.slane %v706, 3
      %v762 = vsel %vm501, %v759, %v761
      %v763 = vrot.slane %v713, 3
      %v764 = vsel %vm501, %v761, %v763
      %765 = vrot.lane.b32.xlu0 %v758, 96
      %v766 = vpop.permute.xlu0 %765
      %767 = vrot.lane.b32.xlu0 %v760, 96
      %v768 = vpop.permute.xlu0 %767
      %769 = vrot.lane.b32.xlu0 %v762, 96
      %v770 = vpop.permute.xlu0 %769
      %771 = vrot.lane.b32.xlu0 %v764, 96
      %v772 = vpop.permute.xlu0 %771
      %v777 = vrot.slane %v712, 4
      %v778 = vrot.slane %v702, 4
      %v779 = vsel %vm523, %v777, %v778
      %v780 = vrot.slane %v704, 4
      %v781 = vsel %vm523, %v778, %v780
      %v782 = vrot.slane %v706, 4
      %v783 = vsel %vm523, %v780, %v782
      %v784 = vrot.slane %v713, 4
      %v785 = vsel %vm523, %v782, %v784
      %v790 = vsel %vm537, %v712, %v723
      %v791 = vsel %vm537, %v702, %v725
      %v792 = vsel %vm537, %v704, %v727
      %v793 = vsel %vm537, %v706, %v729
      %v794 = vsel %vm542, %v790, %v745
      %v795 = vsel %vm542, %v791, %v747
      %v796 = vsel %vm542, %v792, %v749
      %v797 = vsel %vm542, %v793, %v751
      %v798 = vsel %vm547, %v794, %v766
      %v799 = vsel %vm547, %v795, %v768
      %v800 = vsel %vm547, %v796, %v770
      %v801 = vsel %vm547, %v797, %v772
      %v802 = vpack.c.bf16 %v799, %v798
      %v803 = vpack.c.bf16 %v781, %v779
      %v804 = vpack.c.bf16 %v801, %v800
      %v805 = vpack.c.bf16 %v785, %v783
      %v806 = vld [vmem:[%s4] sm:$0xf]
      %v807 = vld [vmem:[%s4 + $0x4] sm:$0xf]
      %v808 = vld [vmem:[%s4 + $0x8] sm:$0xf]
      %v809 = vld [vmem:[%s4 + $0xc] sm:$0xf]
      %v810 = vld [vmem:[%s4 + $0x10] sm:$0xf]
      %v811 = vld [vmem:[%s4 + $0x14] sm:$0xf]
      %v812 = vld [vmem:[%s4 + $0x18] sm:$0xf]
      %v813 = vld [vmem:[%s4 + $0x1c] sm:$0xf]
      %v814 = vld [vmem:[%s4 + $0x20] sm:$0xf]
      %v815 = vld [vmem:[%s4 + $0x24] sm:$0xf]
      %v816 = vld [vmem:[%s4 + $0x28] sm:$0xf]
      %v817 = vld [vmem:[%s4 + $0x2c] sm:$0xf]
      %v818 = vld [vmem:[%s4 + $0x30] sm:$0xf]
      %v819 = vld [vmem:[%s4 + $0x34] sm:$0xf]
      %v820 = vld [vmem:[%s4 + $0x38] sm:$0xf]
      %v821 = vld [vmem:[%s4 + $0x3c] sm:$0xf]
      %v822 = vld [vmem:[%s4 + $0x40] sm:$0xf]
      %v823 = vld [vmem:[%s4 + $0x44] sm:$0xf]
      %v824 = vld [vmem:[%s4 + $0x48] sm:$0xf]
      %v825 = vld [vmem:[%s4 + $0x4c] sm:$0xf]
      %v826 = vld [vmem:[%s5] sm:$0x1]
      %v828 = vperm.slane %v826, 0
      %v850 = vunpack.c.l.b16 %v806
      %v851 = vunpack.c.l.b16 %v807
      %v852 = vunpack.c.l.b16 %v808
      %v853 = vunpack.c.l.b16 %v809
      %v854 = vunpack.c.l.b16 %v810
      %v855 = vunpack.c.l.b16 %v811
      %v856 = vunpack.c.l.b16 %v812
      %v857 = vunpack.c.l.b16 %v813
      %v858 = vunpack.c.l.b16 %v814
      %v859 = vunpack.c.l.b16 %v815
      %v860 = vunpack.c.l.b16 %v816
      %v861 = vunpack.c.l.b16 %v817
      %v862 = vunpack.c.l.b16 %v818
      %v863 = vunpack.c.l.b16 %v819
      %v864 = vunpack.c.l.b16 %v820
      %v865 = vunpack.c.l.b16 %v821
      %v866 = vunpack.c.l.b16 %v822
      %v867 = vunpack.c.l.b16 %v823
      %v868 = vunpack.c.l.b16 %v824
      %v869 = vunpack.c.l.b16 %v825
      %v870 = vpack.c.b16 %v851, %v850
      %v871 = vpack.c.b16 %v853, %v852
      %v872 = vpack.c.b16 %v855, %v854
      %v873 = vpack.c.b16 %v857, %v856
      %v874 = vpack.c.b16 %v859, %v858
      %v875 = vpack.c.b16 %v861, %v860
      %v876 = vpack.c.b16 %v863, %v862
      %v877 = vpack.c.b16 %v865, %v864
      %v878 = vpack.c.b16 %v867, %v866
      %v879 = vpack.c.b16 %v869, %v868
      %v891 = vsel %vm537, %v803, 0
      %v894 = vsel %vm537, %v805, 0
      %896 = vmatpush.bf16.msra.mxu0 %v877
      %897 = vmatpush.bf16.msra.mxu0 %v876
      %898 = vmatpush.bf16.msra.mxu0 %v875
      %899 = vmatpush.bf16.msra.mxu0 %v874
      %900 = vmatpush.bf16.msra.mxu0 %v873
      %901 = vmatpush.bf16.msra.mxu0 %v872
      %902 = vmatpush.bf16.msra.mxu0 %v871
      %903 = vmatpush.bf16.msra.mxu0 %v870
      %904 = vmatmul.bf16.gmra.mxu0 %v802
      %v905 = vpop.f32.mrf.mxu0
      %v906 = vadd.f32 %v828, %v905
      %v907 = vpop.f32.mrf.mxu0
      %v908 = vadd.f32 %v828, %v907
      %909 = vmatmul.bf16.gmra.mxu0 %v804
      %v910 = vpop.f32.mrf.mxu0
      %v911 = vadd.f32 %v828, %v910
      %v912 = vpop.f32.mrf.mxu0
      %v913 = vadd.f32 %v828, %v912
      %914 = vdwg.mxu0
      %915 = vmatpush.bf16.msra.mxu0 0
      %916 = vmatpush.bf16.msra.mxu0 0
      %917 = vmatpush.bf16.msra.mxu0 0
      %918 = vmatpush.bf16.msra.mxu0 0
      %919 = vmatpush.bf16.msra.mxu0 0
      %920 = vmatpush.bf16.msra.mxu0 0
      %921 = vmatpush.bf16.msra.mxu0 %v879
      %922 = vmatpush.bf16.msra.mxu0 %v878
      %923 = vmatmul.bf16.gmra.mxu0 %v891
      %v924 = vpop.f32.mrf.mxu0
      %v925 = vadd.f32 %v906, %v924
      %v926 = vpop.f32.mrf.mxu0
      %v927 = vadd.f32 %v908, %v926
      %928 = vmatmul.bf16.gmra.mxu0 %v894
      %v929 = vpop.f32.mrf.mxu0
      %v930 = vadd.f32 %v911, %v929
      %v931 = vpop.f32.mrf.mxu0
      %v932 = vadd.f32 %v913, %v931
      %933 = vdwg.mxu0
      %vm934 = vcmp.ge.f32.partialorder %v925, 0.0
      %vm935 = vcmp.ge.f32.partialorder %v927, 0.0
      %vm936 = vcmp.ge.f32.partialorder %v930, 0.0
      %vm937 = vcmp.ge.f32.partialorder %v932, 0.0
      %v938 = vmul.f32 %v925, 0.1
      %v939 = vmul.f32 %v927, 0.1
      %v940 = vmul.f32 %v930, 0.1
      %v941 = vmul.f32 %v932, 0.1
      %v942 = vsel %vm934, %v925, %v938
      %v943 = vsel %vm935, %v927, %v939
      %v944 = vsel %vm936, %v930, %v940
      %v945 = vsel %vm937, %v932, %v941
      %v946 = vld [vmem:[%s347] sm:$0xf]
      %v947 = vld [vmem:[%s347 + $0x4] sm:$0xf]
      %v948 = vld [vmem:[%s347 + $0x8] sm:$0xf]
      %v949 = vld [vmem:[%s347 + $0xc] sm:$0xf]
      %v950 = vunpack.c.l.bf16 %v946
      %v951 = vunpack.c.l.bf16 %v947
      %v952 = vunpack.c.l.bf16 %v948
      %v953 = vunpack.c.l.bf16 %v949
      %v958 = vrot.slane %v950, 6
      %v959 = vrot.slane %v951, 6
      %v960 = vsel %vm454, %v958, %v959
      %v961 = vrot.slane %v952, 6
      %v962 = vsel %vm454, %v959, %v961
      %v963 = vrot.slane %v953, 6
      %v964 = vsel %vm454, %v961, %v963
      %v970 = vsel %vm454, 0.0, %v958
      %v971 = vsel %vm388, %v963, 0.0
      %v973 = vrot.slane %v970, 1
      %v974 = vrot.slane %v960, 1
      %v975 = vsel %vm458, %v973, %v974
      %v976 = vrot.slane %v962, 1
      %v977 = vsel %vm458, %v974, %v976
      %v978 = vrot.slane %v964, 1
      %v979 = vsel %vm458, %v976, %v978
      %980 = vrot.lane.b32.xlu0 %v975, 16
      %v981 = vpop.permute.xlu0 %980
      %982 = vrot.lane.b32.xlu0 %v977, 16
      %v983 = vpop.permute.xlu0 %982
      %984 = vrot.lane.b32.xlu0 %v979, 16
      %v985 = vpop.permute.xlu0 %984
      %986 = vrot.lane.b32.xlu0 %v978, 16
      %v987 = vpop.permute.xlu0 %986
      %v993 = vrot.slane %v970, 2
      %v994 = vrot.slane %v960, 2
      %v995 = vsel %vm479, %v993, %v994
      %v996 = vrot.slane %v962, 2
      %v997 = vsel %vm479, %v994, %v996
      %v998 = vrot.slane %v964, 2
      %v999 = vsel %vm479, %v996, %v998
      %v1000 = vrot.slane %v971, 2
      %v1001 = vsel %vm479, %v998, %v1000
      %1002 = vrot.lane.b32.xlu0 %v995, 32
      %v1003 = vpop.permute.xlu0 %1002
      %1004 = vrot.lane.b32.xlu0 %v997, 32
      %v1005 = vpop.permute.xlu0 %1004
      %1006 = vrot.lane.b32.xlu0 %v999, 32
      %v1007 = vpop.permute.xlu0 %1006
      %1008 = vrot.lane.b32.xlu0 %v1001, 32
      %v1009 = vpop.permute.xlu0 %1008
      %v1014 = vrot.slane %v970, 3
      %v1015 = vrot.slane %v960, 3
      %v1016 = vsel %vm501, %v1014, %v1015
      %v1017 = vrot.slane %v962, 3
      %v1018 = vsel %vm501, %v1015, %v1017
      %v1019 = vrot.slane %v964, 3
      %v1020 = vsel %vm501, %v1017, %v1019
      %v1021 = vrot.slane %v971, 3
      %v1022 = vsel %vm501, %v1019, %v1021
      %1023 = vrot.lane.b32.xlu0 %v1016, 48
      %v1024 = vpop.permute.xlu0 %1023
      %1025 = vrot.lane.b32.xlu0 %v1018, 48
      %v1026 = vpop.permute.xlu0 %1025
      %1027 = vrot.lane.b32.xlu0 %v1020, 48
      %v1028 = vpop.permute.xlu0 %1027
      %1029 = vrot.lane.b32.xlu0 %v1022, 48
      %v1030 = vpop.permute.xlu0 %1029
      %v1035 = vrot.slane %v970, 4
      %v1036 = vrot.slane %v960, 4
      %v1037 = vsel %vm523, %v1035, %v1036
      %v1038 = vrot.slane %v962, 4
      %v1039 = vsel %vm523, %v1036, %v1038
      %v1040 = vrot.slane %v964, 4
      %v1041 = vsel %vm523, %v1038, %v1040
      %v1042 = vrot.slane %v971, 4
      %v1043 = vsel %vm523, %v1040, %v1042
      %1044 = vrot.lane.b32.xlu0 %v1037, 64
      %v1045 = vpop.permute.xlu0 %1044
      %1046 = vrot.lane.b32.xlu0 %v1039, 64
      %v1047 = vpop.permute.xlu0 %1046
      %1048 = vrot.lane.b32.xlu0 %v1041, 64
      %v1049 = vpop.permute.xlu0 %1048
      %1050 = vrot.lane.b32.xlu0 %v1043, 64
      %v1051 = vpop.permute.xlu0 %1050
      %vm1056 = vcmask 130048
      %v1057 = vsel %vm1056, %v970, %v981
      %v1058 = vsel %vm1056, %v960, %v983
      %v1059 = vsel %vm1056, %v962, %v985
      %v1060 = vsel %vm1056, %v964, %v987
      %v1061 = vsel %vm537, %v1057, %v1003
      %v1062 = vsel %vm537, %v1058, %v1005
      %v1063 = vsel %vm537, %v1059, %v1007
      %v1064 = vsel %vm537, %v1060, %v1009
      %vm1065 = vcmask 392192
      %v1066 = vsel %vm1065, %v1061, %v1024
      %v1067 = vsel %vm1065, %v1062, %v1026
      %v1068 = vsel %vm1065, %v1063, %v1028
      %v1069 = vsel %vm1065, %v1064, %v1030
      %v1070 = vsel %vm542, %v1066, %v1045
      %v1071 = vsel %vm542, %v1067, %v1047
      %v1072 = vsel %vm542, %v1068, %v1049
      %v1073 = vsel %vm542, %v1069, %v1051
      %v1078 = vrot.slane %v942, 6
      %v1079 = vrot.slane %v943, 6
      %v1080 = vsel %vm454, %v1078, %v1079
      %v1081 = vrot.slane %v944, 6
      %v1082 = vsel %vm454, %v1079, %v1081
      %v1083 = vrot.slane %v945, 6
      %v1084 = vsel %vm454, %v1081, %v1083
      %v1090 = vsel %vm454, 0.0, %v1078
      %v1091 = vsel %vm388, %v1083, 0.0
      %v1093 = vrot.slane %v1090, 1
      %v1094 = vrot.slane %v1080, 1
      %v1095 = vsel %vm458, %v1093, %v1094
      %v1096 = vrot.slane %v1082, 1
      %v1097 = vsel %vm458, %v1094, %v1096
      %v1098 = vrot.slane %v1084, 1
      %v1099 = vsel %vm458, %v1096, %v1098
      %1100 = vrot.lane.b32.xlu0 %v1095, 16
      %v1101 = vpop.permute.xlu0 %1100
      %1102 = vrot.lane.b32.xlu0 %v1097, 16
      %v1103 = vpop.permute.xlu0 %1102
      %1104 = vrot.lane.b32.xlu0 %v1099, 16
      %v1105 = vpop.permute.xlu0 %1104
      %1106 = vrot.lane.b32.xlu0 %v1098, 16
      %v1107 = vpop.permute.xlu0 %1106
      %v1113 = vrot.slane %v1090, 2
      %v1114 = vrot.slane %v1080, 2
      %v1115 = vsel %vm479, %v1113, %v1114
      %v1116 = vrot.slane %v1082, 2
      %v1117 = vsel %vm479, %v1114, %v1116
      %v1118 = vrot.slane %v1084, 2
      %v1119 = vsel %vm479, %v1116, %v1118
      %v1120 = vrot.slane %v1091, 2
      %v1121 = vsel %vm479, %v1118, %v1120
      %1122 = vrot.lane.b32.xlu0 %v1115, 32
      %v1123 = vpop.permute.xlu0 %1122
      %1124 = vrot.lane.b32.xlu0 %v1117, 32
      %v1125 = vpop.permute.xlu0 %1124
      %1126 = vrot.lane.b32.xlu0 %v1119, 32
      %v1127 = vpop.permute.xlu0 %1126
      %1128 = vrot.lane.b32.xlu0 %v1121, 32
      %v1129 = vpop.permute.xlu0 %1128
      %v1134 = vrot.slane %v1090, 3
      %v1135 = vrot.slane %v1080, 3
      %v1136 = vsel %vm501, %v1134, %v1135
      %v1137 = vrot.slane %v1082, 3
      %v1138 = vsel %vm501, %v1135, %v1137
      %v1139 = vrot.slane %v1084, 3
      %v1140 = vsel %vm501, %v1137, %v1139
      %v1141 = vrot.slane %v1091, 3
      %v1142 = vsel %vm501, %v1139, %v1141
      %1143 = vrot.lane.b32.xlu0 %v1136, 48
      %v1144 = vpop.permute.xlu0 %1143
      %1145 = vrot.lane.b32.xlu0 %v1138, 48
      %v1146 = vpop.permute.xlu0 %1145
      %1147 = vrot.lane.b32.xlu0 %v1140, 48
      %v1148 = vpop.permute.xlu0 %1147
      %1149 = vrot.lane.b32.xlu0 %v1142, 48
      %v1150 = vpop.permute.xlu0 %1149
      %v1155 = vrot.slane %v1090, 4
      %v1156 = vrot.slane %v1080, 4
      %v1157 = vsel %vm523, %v1155, %v1156
      %v1158 = vrot.slane %v1082, 4
      %v1159 = vsel %vm523, %v1156, %v1158
      %v1160 = vrot.slane %v1084, 4
      %v1161 = vsel %vm523, %v1158, %v1160
      %v1162 = vrot.slane %v1091, 4
      %v1163 = vsel %vm523, %v1160, %v1162
      %1164 = vrot.lane.b32.xlu0 %v1157, 64
      %v1165 = vpop.permute.xlu0 %1164
      %1166 = vrot.lane.b32.xlu0 %v1159, 64
      %v1167 = vpop.permute.xlu0 %1166
      %1168 = vrot.lane.b32.xlu0 %v1161, 64
      %v1169 = vpop.permute.xlu0 %1168
      %1170 = vrot.lane.b32.xlu0 %v1163, 64
      %v1171 = vpop.permute.xlu0 %1170
      %v1176 = vsel %vm1056, %v1090, %v1101
      %v1177 = vsel %vm1056, %v1080, %v1103
      %v1178 = vsel %vm1056, %v1082, %v1105
      %v1179 = vsel %vm1056, %v1084, %v1107
      %v1180 = vsel %vm537, %v1176, %v1123
      %v1181 = vsel %vm537, %v1177, %v1125
      %v1182 = vsel %vm537, %v1178, %v1127
      %v1183 = vsel %vm537, %v1179, %v1129
      %v1184 = vsel %vm1065, %v1180, %v1144
      %v1185 = vsel %vm1065, %v1181, %v1146
      %v1186 = vsel %vm1065, %v1182, %v1148
      %v1187 = vsel %vm1065, %v1183, %v1150
      %v1188 = vsel %vm542, %v1184, %v1165
      %v1189 = vsel %vm542, %v1185, %v1167
      %v1190 = vsel %vm542, %v1186, %v1169
      %v1191 = vsel %vm542, %v1187, %v1171
      %v1192 = vpack.c.bf16 %v1071, %v1070
      %v1193 = vpack.c.bf16 %v1073, %v1072
      %v1194 = vld [vmem:[%s6] sm:$0xf]
      %v1195 = vld [vmem:[%s6 + $0x4] sm:$0xf]
      %v1196 = vld [vmem:[%s6 + $0x8] sm:$0xf]
      %v1197 = vld [vmem:[%s6 + $0xc] sm:$0xf]
      %v1198 = vld [vmem:[%s6 + $0x10] sm:$0xf]
      %v1199 = vld [vmem:[%s6 + $0x14] sm:$0xf]
      %v1200 = vld [vmem:[%s6 + $0x18] sm:$0xf]
      %v1201 = vld [vmem:[%s6 + $0x1c] sm:$0xf]
      %v1202 = vld [vmem:[%s6 + $0x20] sm:$0xf]
      %v1203 = vld [vmem:[%s6 + $0x24] sm:$0xf]
      %v1204 = vpack.c.bf16 %v1189, %v1188
      %v1205 = vpack.c.bf16 %v1191, %v1190
      %v1206 = vld [vmem:[%s7] sm:$0xf]
      %v1207 = vld [vmem:[%s7 + $0x4] sm:$0xf]
      %v1208 = vld [vmem:[%s7 + $0x8] sm:$0xf]
      %v1209 = vld [vmem:[%s7 + $0xc] sm:$0xf]
      %v1210 = vld [vmem:[%s7 + $0x10] sm:$0xf]
      %v1211 = vld [vmem:[%s7 + $0x14] sm:$0xf]
      %v1212 = vld [vmem:[%s7 + $0x18] sm:$0xf]
      %v1213 = vld [vmem:[%s7 + $0x1c] sm:$0xf]
      %v1214 = vld [vmem:[%s7 + $0x20] sm:$0xf]
      %v1215 = vld [vmem:[%s7 + $0x24] sm:$0xf]
      %v1226 = vunpack.c.l.b16 %v1206
      %v1227 = vunpack.c.l.b16 %v1207
      %v1228 = vunpack.c.l.b16 %v1208
      %v1229 = vunpack.c.l.b16 %v1209
      %v1230 = vunpack.c.l.b16 %v1210
      %v1231 = vunpack.c.l.b16 %v1211
      %v1232 = vunpack.c.l.b16 %v1212
      %v1233 = vunpack.c.l.b16 %v1213
      %v1234 = vunpack.c.l.b16 %v1214
      %v1235 = vunpack.c.l.b16 %v1215
      %v1236 = vpack.c.b16 %v1227, %v1226
      %v1237 = vpack.c.b16 %v1229, %v1228
      %v1238 = vpack.c.b16 %v1231, %v1230
      %v1239 = vpack.c.b16 %v1233, %v1232
      %v1240 = vpack.c.b16 %v1235, %v1234
      %vm1246 = vcmask 654336
      %v1248 = vsel %vm1246, %v1204, 0
      %v1251 = vsel %vm1246, %v1205, 0
      %1253 = vmatpush.bf16.msra.mxu0 0
      %1254 = vmatpush.bf16.msra.mxu0 0
      %1255 = vmatpush.bf16.msra.mxu0 0
      %1256 = vmatpush.bf16.msra.mxu0 %v1240
      %1257 = vmatpush.bf16.msra.mxu0 %v1239
      %1258 = vmatpush.bf16.msra.mxu0 %v1238
      %1259 = vmatpush.bf16.msra.mxu0 %v1237
      %1260 = vmatpush.bf16.msra.mxu0 %v1236
      %1261 = vmatmul.bf16.gmra.mxu0 %v1248
      %v1262 = vpop.f32.mrf.mxu0
      %v1263 = vadd.f32 0.0, %v1262
      %v1264 = vpop.f32.mrf.mxu0
      %v1265 = vadd.f32 0.0, %v1264
      %1266 = vmatmul.bf16.gmra.mxu0 %v1251
      %v1267 = vpop.f32.mrf.mxu0
      %v1268 = vadd.f32 0.0, %v1267
      %v1269 = vpop.f32.mrf.mxu0
      %v1270 = vadd.f32 0.0, %v1269
      %1271 = vdwg.mxu0
      %v1282 = vunpack.c.l.b16 %v1194
      %v1283 = vunpack.c.l.b16 %v1195
      %v1284 = vunpack.c.l.b16 %v1196
      %v1285 = vunpack.c.l.b16 %v1197
      %v1286 = vunpack.c.l.b16 %v1198
      %v1287 = vunpack.c.l.b16 %v1199
      %v1288 = vunpack.c.l.b16 %v1200
      %v1289 = vunpack.c.l.b16 %v1201
      %v1290 = vunpack.c.l.b16 %v1202
      %v1291 = vunpack.c.l.b16 %v1203
      %v1292 = vpack.c.b16 %v1283, %v1282
      %v1293 = vpack.c.b16 %v1285, %v1284
      %v1294 = vpack.c.b16 %v1287, %v1286
      %v1295 = vpack.c.b16 %v1289, %v1288
      %v1296 = vpack.c.b16 %v1291, %v1290
      %v1303 = vsel %vm1246, %v1192, 0
      %v1306 = vsel %vm1246, %v1193, 0
      %1308 = vmatpush.bf16.msra.mxu0 0
      %1309 = vmatpush.bf16.msra.mxu0 0
      %1310 = vmatpush.bf16.msra.mxu0 0
      %1311 = vmatpush.bf16.msra.mxu0 %v1296
      %1312 = vmatpush.bf16.msra.mxu0 %v1295
      %1313 = vmatpush.bf16.msra.mxu0 %v1294
      %1314 = vmatpush.bf16.msra.mxu0 %v1293
      %1315 = vmatpush.bf16.msra.mxu0 %v1292
      %1316 = vmatmul.bf16.gmra.mxu0 %v1303
      %v1317 = vpop.f32.mrf.mxu0
      %v1318 = vadd.f32 %v1263, %v1317
      %v1319 = vpop.f32.mrf.mxu0
      %v1320 = vadd.f32 %v1265, %v1319
      %1321 = vmatmul.bf16.gmra.mxu0 %v1306
      %v1322 = vpop.f32.mrf.mxu0
      %v1323 = vadd.f32 %v1268, %v1322
      %v1324 = vpop.f32.mrf.mxu0
      %v1325 = vadd.f32 %v1270, %v1324
      %1326 = vdwg.mxu0
      %v1327 = vld [vmem:[%s8] sm:$0x1]
      %v1329 = vperm.slane %v1327, 0
      %v1331 = vadd.f32 %v1318, %v1329
      %v1332 = vadd.f32 %v1320, %v1329
      %v1333 = vadd.f32 %v1323, %v1329
      %v1334 = vadd.f32 %v1325, %v1329
      %vm1335 = vcmp.ge.f32.partialorder %v1331, 0.0
      %vm1336 = vcmp.ge.f32.partialorder %v1332, 0.0
      %vm1337 = vcmp.ge.f32.partialorder %v1333, 0.0
      %vm1338 = vcmp.ge.f32.partialorder %v1334, 0.0
      %v1339 = vmul.f32 %v1331, 0.1
      %v1340 = vmul.f32 %v1332, 0.1
      %v1341 = vmul.f32 %v1333, 0.1
      %v1342 = vmul.f32 %v1334, 0.1
      %v1343 = vsel %vm1335, %v1331, %v1339
      %v1344 = vsel %vm1336, %v1332, %v1340
      %v1345 = vsel %vm1337, %v1333, %v1341
      %v1346 = vsel %vm1338, %v1334, %v1342
      %v1347 = vpack.c.bf16 %v1343, %v1343
      %v1348 = vpack.c.bf16 %v1344, %v1344
      %v1349 = vpack.c.bf16 %v1345, %v1345
      %v1350 = vpack.c.bf16 %v1346, %v1346
      %vm1351 = vcmask 125952
      %1352 = vst.msk [vmem:[%s352] sm:$0xf] %vm1351, %v1347
      %1353 = vst.msk [vmem:[%s352 + $0x4] sm:$0xf] %vm1351, %v1348
      %1354 = vst.msk [vmem:[%s352 + $0x8] sm:$0xf] %vm1351, %v1349
      %vm1355 = vcmask 125952
      %vm1356 = vsmask.f32 3328
      %vm1357 = vmand %vm1355, %vm1356
      %v1358 = vld [vmem:[%s352 + $0xc] sm:$0xf]
      %v1359 = vsel %vm1357, %v1350, %v1358
      %1360 = vst [vmem:[%s352 + $0xc] sm:$0xf] %v1359
      %p1361 = scmp.lt.s32.totalorder %s20, 1
      %s1362 = scalar_select %p1361, %s20, 1
      %s1363 = smul.addr %s1362, 4
      %s1364 = smul.addr %s1363, 4
      %s1365 = scalar_lea.vmem %s9, %s1364
      // Predicated region
      $region57: #{wave_unet_forward.9} parent=55 // pred_check
        %p1366 = pneg %p237
      $region58: #{wave_unet_forward.9} parent=55 // pred_check_branch
        %1368 = sbr.rel (%p1366) target = $region60
      $region59: #{wave_unet_forward.9} parent=55 // pred_region
        _
      $region60: #{wave_unet_forward.9} parent=55 // pred_fallthru
        _
    $region56: #{wave_unet_forward.9} parent=5 // pred_fallthru
      _
    %p1369 = scmp.le.s32.totalorder 2, %s15
    // Predicated region
    $region61: #{wave_unet_forward.9} parent=5 // pred_check
      %p1370 = pneg %p1369
    $region62: #{wave_unet_forward.9} parent=5 // pred_check_branch
      %1372 = sbr.rel (%p1370) target = $region64
    $region63: #{wave_unet_forward.9} parent=5 // pred_region
      %s1373 = ssub.s32 %s15, 2
      // Predicated region
      $region65: #{wave_unet_forward.9} parent=63 // pred_check
        %p1374 = pneg %p243
      $region66: #{wave_unet_forward.9} parent=63 // pred_check_branch
        %1376 = sbr.rel (%p1374) target = $region68
      $region67: #{wave_unet_forward.9} parent=63 // pred_region
        %p1377 = scmp.lt.s32.totalorder %s21, 1
        %s1378 = scalar_select %p1377, %s21, 1
        %s1379 = smul.addr %s1378, 4
        %s1380 = smul.addr %s1379, 4
        %s1381 = scalar_lea.vmem %s9, %s1380
      $region68: #{wave_unet_forward.9} parent=63 // pred_fallthru
        _
    $region64: #{wave_unet_forward.9} parent=5 // pred_fallthru
      _
  $region6: #{wave_unet_forward.9} parent=0 // loop_footer
    %s19 = sadd.s32 1, %s15
  $region7: #{wave_unet_forward.9} parent=0 // loop_footer_branch
    %14 = sbr.rel target = $region3
  $region8: #{wave_unet_forward.9} parent=0 // loop_exit
    _

// kernel: wave_unet_forward.11
$region0: #{wave_unet_forward.11}
  #allocation0 [shape = 'u32[]', space=smem, size = 0x4, offset = 0x4, fixed_abs, tag = 'smem constant byte address 0x4 - core index']
  #allocation1 [shape = 'u32[72,128]{1,0:T(1,128)}', space=vmem, size = 0x9000, scoped, tag = 'internal scratch']
  #allocation2 [shape = 'f32[1,1]{1,0:T(1,128)S(1)}', space=vmem, size = 0x200, scoped, tag = 'scoped memory for wave_unet_forward.11']
  %s0 = inlined_call_operand.vmem [shape: bf16[2,61,8], index: 0, kind: input, shape index: {}]
  %s1 = inlined_call_operand.vmem [shape: bf16[8,1], index: 1, kind: input, shape index: {}]
  %s2 = inlined_call_operand.<no memory space> [shape: f32[1,1], index: 2, kind: input, shape index: {}]
  %s3 = inlined_call_operand.vmem [shape: f32[2,61,1], index: 3, kind: output, shape index: {}]
  %s4 = sld [smem:[#allocation0]]
  $region45: #{wave_unet_forward.11} parent=0
    _
  %s6 = ssub.s32 1, %s4
  %s7 = scalar_select 0, %s6, %s4
  %v8 = vstv %s2
  %9 = vst [vmem:[#allocation2] sm:$0x1] %v8
  loop: start=0, step=1, limit=4
  $region2: #{wave_unet_forward.11} parent=0 // loop_pre_header
    _
  $region3: #{wave_unet_forward.11} parent=0 // loop_header
    %s11 = sphi 0, %s15
    %p12 = scmp.ge.s32.totalorder %s11, 4
    %s21 = sphi 0, %s23
    %s24 = sphi 0, %s21
    %s25 = sphi 0, %s24
    %s41 = sphi 0, %s25
    %s45 = sphi 0, %s45
    %s47 = sphi 0, %s45
    %s48 = sphi 0, %s47
    %s62 = sphi 0, %s48
    %s66 = sphi 0, %s66
    %s68 = sphi 0, %s66
    %s69 = sphi 0, %s68
    %s83 = sphi 0, %s69
    %s89 = sphi 0, %s91
    %s92 = sphi 0, %s89
    %s93 = sphi 0, %s92
    %s109 = sphi 0, %s93
  $region4: #{wave_unet_forward.11} parent=0 // loop_header_branch
    %14 = sbr.rel (%p12) target = $region8
  $region5: #{wave_unet_forward.11} parent=0 // loop_body
    %s16 = ssub.s32 %s11, 1
    %s17 = ssub.s32 %s11, 2
    %s18 = sadd.s32 %s11, 1
    %s19 = ssub.s32 %s11, %s18
    %p20 = scmp.eq.s32.totalorder %s19, 0
    %s22 = sadd.s32 %s21, 1
    %s23 = scalar_select %p20, %s21, %s22
    %p26 = pneg %p20
    %p27 = scmp.eq.s32.totalorder %s11, 1
    %p28 = por %p26, %p27
    %p29 = scmp.ne.s32.totalorder %s21, %s24
    %p30 = scmp.eq.s32.totalorder %s11, 0
    %p31 = por %p29, %p30
    %p32 = scmp.ne.s32.totalorder %s21, %s24
    %p33 = scmp.eq.s32.totalorder %s16, 1
    %p34 = por %p32, %p33
    %p35 = scmp.ne.s32.totalorder %s24, %s25
    %p36 = scmp.eq.s32.totalorder %s16, 0
    %p37 = por %p35, %p36
    %p38 = scmp.ne.s32.totalorder %s24, %s25
    %p39 = scmp.eq.s32.totalorder %s17, 1
    %p40 = por %p38, %p39
    %p42 = scmp.ne.s32.totalorder %s25, %s41
    %p43 = scmp.eq.s32.totalorder %s17, 0
    %p44 = por %p42, %p43
    %s46 = sadd.s32 %s45, 1
    %p49 = scmp.eq.s32.totalorder %s11, 1
    %p50 = scmp.ne.s32.totalorder %s45, %s47
    %p51 = scmp.eq.s32.totalorder %s11, 0
    %p52 = por %p50, %p51
    %p53 = scmp.ne.s32.totalorder %s45, %s47
    %p54 = scmp.eq.s32.totalorder %s16, 1
    %p55 = por %p53, %p54
    %p56 = scmp.ne.s32.totalorder %s47, %s48
    %p57 = scmp.eq.s32.totalorder %s16, 0
    %p58 = por %p56, %p57
    %p59 = scmp.ne.s32.totalorder %s47, %s48
    %p60 = scmp.eq.s32.totalorder %s17, 1
    %p61 = por %p59, %p60
    %p63 = scmp.ne.s32.totalorder %s48, %s62
    %p64 = scmp.eq.s32.totalorder %s17, 0
    %p65 = por %p63, %p64
    %s67 = sadd.s32 %s66, 1
    %p70 = scmp.eq.s32.totalorder %s11, 1
    %p71 = scmp.ne.s32.totalorder %s66, %s68
    %p72 = scmp.eq.s32.totalorder %s11, 0
    %p73 = por %p71, %p72
    %p74 = scmp.ne.s32.totalorder %s66, %s68
    %p75 = scmp.eq.s32.totalorder %s16, 1
    %p76 = por %p74, %p75
    %p77 = scmp.ne.s32.totalorder %s68, %s69
    %p78 = scmp.eq.s32.totalorder %s16, 0
    %p79 = por %p77, %p78
    %p80 = scmp.ne.s32.totalorder %s68, %s69
    %p81 = scmp.eq.s32.totalorder %s17, 1
    %p82 = por %p80, %p81
    %p84 = scmp.ne.s32.totalorder %s69, %s83
    %p85 = scmp.eq.s32.totalorder %s17, 0
    %p86 = por %p84, %p85
    %s87 = ssub.s32 %s11, %s18
    %p88 = scmp.eq.s32.totalorder %s87, 0
    %s90 = sadd.s32 %s89, 1
    %s91 = scalar_select %p88, %s89, %s90
    %p94 = pneg %p88
    %p95 = scmp.eq.s32.totalorder %s11, 1
    %p96 = por %p94, %p95
    %p97 = scmp.ne.s32.totalorder %s89, %s92
    %p98 = scmp.eq.s32.totalorder %s11, 0
    %p99 = por %p97, %p98
    %p100 = scmp.ne.s32.totalorder %s89, %s92
    %p101 = scmp.eq.s32.totalorder %s16, 1
    %p102 = por %p100, %p101
    %p103 = scmp.ne.s32.totalorder %s92, %s93
    %p104 = scmp.eq.s32.totalorder %s16, 0
    %p105 = por %p103, %p104
    %p106 = scmp.ne.s32.totalorder %s92, %s93
    %p107 = scmp.eq.s32.totalorder %s17, 1
    %p108 = por %p106, %p107
    %p110 = scmp.ne.s32.totalorder %s93, %s109
    %p111 = scmp.eq.s32.totalorder %s17, 0
    %p112 = por %p110, %p111
    %p113 = scmp.le.s32.totalorder 1, %s11
    %p114 = scmp.lt.s32.totalorder %s11, 3
    %p115 = pnand %p113, %p114
    %p116 = pneg %p115
    // Predicated region
    $region9: #{wave_unet_forward.11} parent=5 // pred_check
      _
    $region10: #{wave_unet_forward.11} parent=5 // pred_check_branch
      %118 = sbr.rel (%p115) target = $region12
    $region11: #{wave_unet_forward.11} parent=5 // pred_region
      %s119 = ssub.s32 %s11, 1
      // Predicated region
      $region13: #{wave_unet_forward.11} parent=11 // pred_check
        %p120 = pneg %p58
      $region14: #{wave_unet_forward.11} parent=11 // pred_check_branch
        %122 = sbr.rel (%p120) target = $region16
      $region15: #{wave_unet_forward.11} parent=11 // pred_region
        _
      $region16: #{wave_unet_forward.11} parent=11 // pred_fallthru
        _
      // Predicated region
      $region17: #{wave_unet_forward.11} parent=11 // pred_check
        %p123 = pneg %p79
      $region18: #{wave_unet_forward.11} parent=11 // pred_check_branch
        %125 = sbr.rel (%p123) target = $region20
      $region19: #{wave_unet_forward.11} parent=11 // pred_region
        _
      $region20: #{wave_unet_forward.11} parent=11 // pred_fallthru
        _
    $region12: #{wave_unet_forward.11} parent=5 // pred_fallthru
      _
    %p126 = scmp.lt.s32.totalorder %s11, 2
    // Predicated region
    $region21: #{wave_unet_forward.11} parent=5 // pred_check
      %p127 = pneg %p126
    $region22: #{wave_unet_forward.11} parent=5 // pred_check_branch
      %129 = sbr.rel (%p127) target = $region24
    $region23: #{wave_unet_forward.11} parent=5 // pred_region
      // Predicated region
      $region25: #{wave_unet_forward.11} parent=23 // pred_check
        %p130 = pneg %p31
      $region26: #{wave_unet_forward.11} parent=23 // pred_check_branch
        %132 = sbr.rel (%p130) target = $region28
      $region27: #{wave_unet_forward.11} parent=23 // pred_region
        %p133 = scmp.lt.s32.totalorder %s11, 1
        %s134 = scalar_select %p133, %s11, 1
        %s135 = smul.addr %s134, 8
        %s136 = smul.addr %s135, 4
        %s137 = scalar_lea.vmem %s0, %s136
      $region28: #{wave_unet_forward.11} parent=23 // pred_fallthru
        _
    $region24: #{wave_unet_forward.11} parent=5 // pred_fallthru
      _
    %p138 = scmp.le.s32.totalorder 1, %s11
    %p139 = scmp.lt.s32.totalorder %s11, 3
    %p140 = pnand %p138, %p139
    %p141 = pneg %p140
    // Predicated region
    $region29: #{wave_unet_forward.11} parent=5 // pred_check
      _
    $region30: #{wave_unet_forward.11} parent=5 // pred_check_branch
      %143 = sbr.rel (%p140) target = $region32
    $region31: #{wave_unet_forward.11} parent=5 // pred_region
      %s144 = ssub.s32 %s11, 1
      %p145 = scmp.lt.s32.totalorder %s16, 1
      %s146 = scalar_select %p145, %s16, 1
      %s147 = smul.addr %s146, 8
      %s148 = smul.addr %s147, 4
      %s149 = scalar_lea.vmem %s0, %s148
      %p150 = pneg %p37
      %p151 = pneg %p34
      %p152 = pneg %p58
      %p153 = pneg %p55
      %p154 = pneg %p79
      %p155 = pneg %p76
      %p156 = pneg %p105
      %p157 = pneg %p102
      %p158 = scmp.lt.s32.totalorder %s16, 1
      %s159 = scalar_select %p158, %s16, 1
      %s160 = smul.addr %s159, 8
      %s161 = smul.addr %s160, 8
      %s162 = scalar_lea.vmem %s3, %s161
      %p163 = scmp.lt.s32.totalorder %s16, 1
      %s164 = scalar_select %p163, %s16, 1
      %s165 = smul.addr %s164, 8
      %s166 = smul.addr %s165, 4
      %s167 = scalar_lea.vmem %s0, %s166
      %p168 = scmp.lt.s32.totalorder %s16, 1
      %s169 = scalar_select %p168, %s16, 1
      %s170 = smul.addr %s169, 8
      %s171 = smul.addr %s170, 8
      %s172 = scalar_lea.vmem %s3, %s171
      %v174 = vld [vmem:[%s167] sm:$0xf]
      %v175 = vld [vmem:[%s167 + $0x4] sm:$0xf]
      %v176 = vld [vmem:[%s167 + $0x8] sm:$0xf]
      %v177 = vld [vmem:[%s167 + $0xc] sm:$0xf]
      %v178 = vld [vmem:[%s167 + $0x10] sm:$0xf]
      %v179 = vld [vmem:[%s167 + $0x14] sm:$0xf]
      %v180 = vld [vmem:[%s167 + $0x18] sm:$0xf]
      %v181 = vld [vmem:[%s167 + $0x1c] sm:$0x7]
      %v182 = vld [vmem:[%s1] sm:$0xf]
      %v183 = vld [vmem:[#allocation2] sm:$0x1]
      %v185 = vperm.slane %v183, 0
      %v195 = vunpack.c.l.b16 %v174
      %v196 = vunpack.c.l.b16 %v175
      %v197 = vunpack.c.l.b16 %v176
      %v198 = vunpack.c.l.b16 %v177
      %v199 = vunpack.c.l.b16 %v178
      %v200 = vunpack.c.l.b16 %v179
      %v201 = vunpack.c.l.b16 %v180
      %v202 = vunpack.c.l.b16 %v181
      %v203 = vpack.c.b16 %v196, %v195
      %v204 = vpack.c.b16 %v198, %v197
      %v205 = vpack.c.b16 %v200, %v199
      %v206 = vpack.c.b16 %v202, %v201
      %vm207 = vcmask 64512
      %v209 = vsel %vm207, %v203, 0
      %v212 = vsel %vm207, %v204, 0
      %v215 = vsel %vm207, %v205, 0
      %v218 = vsel %vm207, %v206, 0
      %vm220 = vcmask 1043456
      %v222 = vsel %vm220, %v182, 0
      %224 = vmatpush.bf16.msra.mxu0 0
      %225 = vmatpush.bf16.msra.mxu0 0
      %226 = vmatpush.bf16.msra.mxu0 0
      %227 = vmatpush.bf16.msra.mxu0 0
      %228 = vmatpush.bf16.msra.mxu0 0
      %229 = vmatpush.bf16.msra.mxu0 0
      %230 = vmatpush.bf16.msra.mxu0 0
      %231 = vmatpush.bf16.msra.mxu0 %v222
      %232 = vmatmul.bf16.gmra.mxu0 %v209
      %v233 = vpop.f32.mrf.mxu0
      %v234 = vadd.f32 %v185, %v233
      %v235 = vpop.f32.mrf.mxu0
      %v236 = vadd.f32 %v185, %v235
      %237 = vmatmul.bf16.gmra.mxu0 %v212
      %v238 = vpop.f32.mrf.mxu0
      %v239 = vadd.f32 %v185, %v238
      %v240 = vpop.f32.mrf.mxu0
      %v241 = vadd.f32 %v185, %v240
      %242 = vmatmul.bf16.gmra.mxu0 %v215
      %v243 = vpop.f32.mrf.mxu0
      %v244 = vadd.f32 %v185, %v243
      %v245 = vpop.f32.mrf.mxu0
      %v246 = vadd.f32 %v185, %v245
      %247 = vmatmul.bf16.gmra.mxu0 %v218
      %v248 = vpop.f32.mrf.mxu0
      %v249 = vadd.f32 %v185, %v248
      %v250 = vpop.f32.mrf.mxu0
      %v251 = vadd.f32 %v185, %v250
      %252 = vdwg.mxu0
      %v253 = vtanh.pop %v234
      %v254 = vtanh.pop %v236
      %v255 = vtanh.pop %v239
      %v256 = vtanh.pop %v241
      %v257 = vtanh.pop %v244
      %v258 = vtanh.pop %v246
      %v259 = vtanh.pop %v249
      %v260 = vtanh.pop %v251
      %vm261 = vcmask 7168
      %262 = vst.msk [vmem:[%s172] sm:$0xff] %vm261, %v253
      %263 = vst.msk [vmem:[%s172 + $0x8] sm:$0xff] %vm261, %v254
      %264 = vst.msk [vmem:[%s172 + $0x10] sm:$0xff] %vm261, %v255
      %265 = vst.msk [vmem:[%s172 + $0x18] sm:$0xff] %vm261, %v256
      %266 = vst.msk [vmem:[%s172 + $0x20] sm:$0xff] %vm261, %v257
      %267 = vst.msk [vmem:[%s172 + $0x28] sm:$0xff] %vm261, %v258
      %268 = vst.msk [vmem:[%s172 + $0x30] sm:$0xff] %vm261, %v259
      %vm269 = vcmask 4096
      %270 = vst.msk [vmem:[%s172 + $0x38] sm:$0x1f] %vm269, %v260
      %p271 = scmp.lt.s32.totalorder %s16, 1
      %s272 = scalar_select %p271, %s16, 1
      %s273 = smul.addr %s272, 8
      %s274 = smul.addr %s273, 8
      %s275 = scalar_lea.vmem %s3, %s274
      // Predicated region
      $region33: #{wave_unet_forward.11} parent=31 // pred_check
        %p276 = pneg %p102
      $region34: #{wave_unet_forward.11} parent=31 // pred_check_branch
        %278 = sbr.rel (%p276) target = $region36
      $region35: #{wave_unet_forward.11} parent=31 // pred_region
        _
      $region36: #{wave_unet_forward.11} parent=31 // pred_fallthru
        _
    $region32: #{wave_unet_forward.11} parent=5 // pred_fallthru
      _
    %p279 = scmp.le.s32.totalorder 2, %s11
    // Predicated region
    $region37: #{wave_unet_forward.11} parent=5 // pred_check
      %p280 = pneg %p279
    $region38: #{wave_unet_forward.11} parent=5 // pred_check_branch
      %282 = sbr.rel (%p280) target = $region40
    $region39: #{wave_unet_forward.11} parent=5 // pred_region
      %s283 = ssub.s32 %s11, 2
      // Predicated region
      $region41: #{wave_unet_forward.11} parent=39 // pred_check
        %p284 = pneg %p108
      $region42: #{wave_unet_forward.11} parent=39 // pred_check_branch
        %286 = sbr.rel (%p284) target = $region44
      $region43: #{wave_unet_forward.11} parent=39 // pred_region
        %p287 = scmp.lt.s32.totalorder %s17, 1
        %s288 = scalar_select %p287, %s17, 1
        %s289 = smul.addr %s288, 8
        %s290 = smul.addr %s289, 8
        %s291 = scalar_lea.vmem %s3, %s290
      $region44: #{wave_unet_forward.11} parent=39 // pred_fallthru
        _
    $region40: #{wave_unet_forward.11} parent=5 // pred_fallthru
      _
  $region6: #{wave_unet_forward.11} parent=0 // loop_footer
    %s15 = sadd.s32 1, %s11
  $region7: #{wave_unet_forward.11} parent=0 // loop_footer_branch
    %10 = sbr.rel target = $region3
  $region8: #{wave_unet_forward.11} parent=0 // loop_exit
    _

// kernel: wave_unet_forward.10
$region0: #{wave_unet_forward.10}
  #allocation0 [shape = 'u32[]', space=smem, size = 0x4, offset = 0x4, fixed_abs, tag = 'smem constant byte address 0x4 - core index']
  #allocation1 [shape = 'u32[72,128]{1,0:T(1,128)}', space=vmem, size = 0x9000, scoped, tag = 'internal scratch']
  %s0 = inlined_call_operand.vmem [shape: bf16[2,31,16], index: 0, kind: input, shape index: {}]
  %s1 = inlined_call_operand.vmem [shape: bf16[2,64,8], index: 1, kind: input, shape index: {}]
  %s2 = inlined_call_operand.vmem [shape: bf16[80,16], index: 2, kind: input, shape index: {}]
  %s3 = inlined_call_operand.vmem [shape: f32[1,16], index: 3, kind: input, shape index: {}]
  %s4 = inlined_call_operand.vmem [shape: bf16[80,8], index: 4, kind: input, shape index: {}]
  %s5 = inlined_call_operand.vmem [shape: f32[1,8], index: 5, kind: input, shape index: {}]
  %s6 = inlined_call_operand.vmem [shape: bf16[40,8], index: 6, kind: input, shape index: {}]
  %s7 = inlined_call_operand.vmem [shape: bf16[40,8], index: 7, kind: input, shape index: {}]
  %s8 = inlined_call_operand.vmem [shape: f32[1,8], index: 8, kind: input, shape index: {}]
  %s9 = inlined_call_operand.vmem [shape: bf16[2,61,8], index: 9, kind: output, shape index: {}]
  %s10 = sld [smem:[#allocation0]]
  $region69: #{wave_unet_forward.10} parent=0
    _
  %s12 = ssub.s32 1, %s10
  %s13 = scalar_select 0, %s12, %s10
  loop: start=0, step=1, limit=4
  $region2: #{wave_unet_forward.10} parent=0 // loop_pre_header
    _
  $region3: #{wave_unet_forward.10} parent=0 // loop_header
    %s15 = sphi 0, %s19
    %p16 = scmp.ge.s32.totalorder %s15, 4
    %s25 = sphi 0, %s27
    %s28 = sphi 0, %s25
    %s29 = sphi 0, %s28
    %s45 = sphi 0, %s29
    %s51 = sphi 0, %s53
    %s54 = sphi 0, %s51
    %s55 = sphi 0, %s54
    %s71 = sphi 0, %s55
    %s75 = sphi 0, %s75
    %s77 = sphi 0, %s75
    %s78 = sphi 0, %s77
    %s92 = sphi 0, %s78
    %s96 = sphi 0, %s96
    %s98 = sphi 0, %s96
    %s99 = sphi 0, %s98
    %s113 = sphi 0, %s99
    %s117 = sphi 0, %s117
    %s119 = sphi 0, %s117
    %s120 = sphi 0, %s119
    %s134 = sphi 0, %s120
    %s138 = sphi 0, %s138
    %s140 = sphi 0, %s138
    %s141 = sphi 0, %s140
    %s155 = sphi 0, %s141
    %s159 = sphi 0, %s159
    %s161 = sphi 0, %s159
    %s162 = sphi 0, %s161
    %s176 = sphi 0, %s162
    %s180 = sphi 0, %s180
    %s182 = sphi 0, %s180
    %s183 = sphi 0, %s182
    %s197 = sphi 0, %s183
    %s201 = sphi 0, %s201
    %s203 = sphi 0, %s201
    %s204 = sphi 0, %s203
    %s218 = sphi 0, %s204
    %s224 = sphi 0, %s226
    %s227 = sphi 0, %s224
    %s228 = sphi 0, %s227
    %s244 = sphi 0, %s228
  $region4: #{wave_unet_forward.10} parent=0 // loop_header_branch
    %18 = sbr.rel (%p16) target = $region8
  $region5: #{wave_unet_forward.10} parent=0 // loop_body
    %s20 = ssub.s32 %s15, 1
    %s21 = ssub.s32 %s15, 2
    %s22 = sadd.s32 %s15, 1
    %s23 = ssub.s32 %s15, %s22
    %p24 = scmp.eq.s32.totalorder %s23, 0
    %s26 = sadd.s32 %s25, 1
    %s27 = scalar_select %p24, %s25, %s26
    %p30 = pneg %p24
    %p31 = scmp.eq.s32.totalorder %s15, 1
    %p32 = por %p30, %p31
    %p33 = scmp.ne.s32.totalorder %s25, %s28
    %p34 = scmp.eq.s32.totalorder %s15, 0
    %p35 = por %p33, %p34
    %p36 = scmp.ne.s32.totalorder %s25, %s28
    %p37 = scmp.eq.s32.totalorder %s20, 1
    %p38 = por %p36, %p37
    %p39 = scmp.ne.s32.totalorder %s28, %s29
    %p40 = scmp.eq.s32.totalorder %s20, 0
    %p41 = por %p39, %p40
    %p42 = scmp.ne.s32.totalorder %s28, %s29
    %p43 = scmp.eq.s32.totalorder %s21, 1
    %p44 = por %p42, %p43
    %p46 = scmp.ne.s32.totalorder %s29, %s45
    %p47 = scmp.eq.s32.totalorder %s21, 0
    %p48 = por %p46, %p47
    %s49 = ssub.s32 %s15, %s22
    %p50 = scmp.eq.s32.totalorder %s49, 0
    %s52 = sadd.s32 %s51, 1
    %s53 = scalar_select %p50, %s51, %s52
    %p56 = pneg %p50
    %p57 = scmp.eq.s32.totalorder %s15, 1
    %p58 = por %p56, %p57
    %p59 = scmp.ne.s32.totalorder %s51, %s54
    %p60 = scmp.eq.s32.totalorder %s15, 0
    %p61 = por %p59, %p60
    %p62 = scmp.ne.s32.totalorder %s51, %s54
    %p63 = scmp.eq.s32.totalorder %s20, 1
    %p64 = por %p62, %p63
    %p65 = scmp.ne.s32.totalorder %s54, %s55
    %p66 = scmp.eq.s32.totalorder %s20, 0
    %p67 = por %p65, %p66
    %p68 = scmp.ne.s32.totalorder %s54, %s55
    %p69 = scmp.eq.s32.totalorder %s21, 1
    %p70 = por %p68, %p69
    %p72 = scmp.ne.s32.totalorder %s55, %s71
    %p73 = scmp.eq.s32.totalorder %s21, 0
    %p74 = por %p72, %p73
    %s76 = sadd.s32 %s75, 1
    %p79 = scmp.eq.s32.totalorder %s15, 1
    %p80 = scmp.ne.s32.totalorder %s75, %s77
    %p81 = scmp.eq.s32.totalorder %s15, 0
    %p82 = por %p80, %p81
    %p83 = scmp.ne.s32.totalorder %s75, %s77
    %p84 = scmp.eq.s32.totalorder %s20, 1
    %p85 = por %p83, %p84
    %p86 = scmp.ne.s32.totalorder %s77, %s78
    %p87 = scmp.eq.s32.totalorder %s20, 0
    %p88 = por %p86, %p87
    %p89 = scmp.ne.s32.totalorder %s77, %s78
    %p90 = scmp.eq.s32.totalorder %s21, 1
    %p91 = por %p89, %p90
    %p93 = scmp.ne.s32.totalorder %s78, %s92
    %p94 = scmp.eq.s32.totalorder %s21, 0
    %p95 = por %p93, %p94
    %s97 = sadd.s32 %s96, 1
    %p100 = scmp.eq.s32.totalorder %s15, 1
    %p101 = scmp.ne.s32.totalorder %s96, %s98
    %p102 = scmp.eq.s32.totalorder %s15, 0
    %p103 = por %p101, %p102
    %p104 = scmp.ne.s32.totalorder %s96, %s98
    %p105 = scmp.eq.s32.totalorder %s20, 1
    %p106 = por %p104, %p105
    %p107 = scmp.ne.s32.totalorder %s98, %s99
    %p108 = scmp.eq.s32.totalorder %s20, 0
    %p109 = por %p107, %p108
    %p110 = scmp.ne.s32.totalorder %s98, %s99
    %p111 = scmp.eq.s32.totalorder %s21, 1
    %p112 = por %p110, %p111
    %p114 = scmp.ne.s32.totalorder %s99, %s113
    %p115 = scmp.eq.s32.totalorder %s21, 0
    %p116 = por %p114, %p115
    %s118 = sadd.s32 %s117, 1
    %p121 = scmp.eq.s32.totalorder %s15, 1
    %p122 = scmp.ne.s32.totalorder %s117, %s119
    %p123 = scmp.eq.s32.totalorder %s15, 0
    %p124 = por %p122, %p123
    %p125 = scmp.ne.s32.totalorder %s117, %s119
    %p126 = scmp.eq.s32.totalorder %s20, 1
    %p127 = por %p125, %p126
    %p128 = scmp.ne.s32.totalorder %s119, %s120
    %p129 = scmp.eq.s32.totalorder %s20, 0
    %p130 = por %p128, %p129
    %p131 = scmp.ne.s32.totalorder %s119, %s120
    %p132 = scmp.eq.s32.totalorder %s21, 1
    %p133 = por %p131, %p132
    %p135 = scmp.ne.s32.totalorder %s120, %s134
    %p136 = scmp.eq.s32.totalorder %s21, 0
    %p137 = por %p135, %p136
    %s139 = sadd.s32 %s138, 1
    %p142 = scmp.eq.s32.totalorder %s15, 1
    %p143 = scmp.ne.s32.totalorder %s138, %s140
    %p144 = scmp.eq.s32.totalorder %s15, 0
    %p145 = por %p143, %p144
    %p146 = scmp.ne.s32.totalorder %s138, %s140
    %p147 = scmp.eq.s32.totalorder %s20, 1
    %p148 = por %p146, %p147
    %p149 = scmp.ne.s32.totalorder %s140, %s141
    %p150 = scmp.eq.s32.totalorder %s20, 0
    %p151 = por %p149, %p150
    %p152 = scmp.ne.s32.totalorder %s140, %s141
    %p153 = scmp.eq.s32.totalorder %s21, 1
    %p154 = por %p152, %p153
    %p156 = scmp.ne.s32.totalorder %s141, %s155
    %p157 = scmp.eq.s32.totalorder %s21, 0
    %p158 = por %p156, %p157
    %s160 = sadd.s32 %s159, 1
    %p163 = scmp.eq.s32.totalorder %s15, 1
    %p164 = scmp.ne.s32.totalorder %s159, %s161
    %p165 = scmp.eq.s32.totalorder %s15, 0
    %p166 = por %p164, %p165
    %p167 = scmp.ne.s32.totalorder %s159, %s161
    %p168 = scmp.eq.s32.totalorder %s20, 1
    %p169 = por %p167, %p168
    %p170 = scmp.ne.s32.totalorder %s161, %s162
    %p171 = scmp.eq.s32.totalorder %s20, 0
    %p172 = por %p170, %p171
    %p173 = scmp.ne.s32.totalorder %s161, %s162
    %p174 = scmp.eq.s32.totalorder %s21, 1
    %p175 = por %p173, %p174
    %p177 = scmp.ne.s32.totalorder %s162, %s176
    %p178 = scmp.eq.s32.totalorder %s21, 0
    %p179 = por %p177, %p178
    %s181 = sadd.s32 %s180, 1
    %p184 = scmp.eq.s32.totalorder %s15, 1
    %p185 = scmp.ne.s32.totalorder %s180, %s182
    %p186 = scmp.eq.s32.totalorder %s15, 0
    %p187 = por %p185, %p186
    %p188 = scmp.ne.s32.totalorder %s180, %s182
    %p189 = scmp.eq.s32.totalorder %s20, 1
    %p190 = por %p188, %p189
    %p191 = scmp.ne.s32.totalorder %s182, %s183
    %p192 = scmp.eq.s32.totalorder %s20, 0
    %p193 = por %p191, %p192
    %p194 = scmp.ne.s32.totalorder %s182, %s183
    %p195 = scmp.eq.s32.totalorder %s21, 1
    %p196 = por %p194, %p195
    %p198 = scmp.ne.s32.totalorder %s183, %s197
    %p199 = scmp.eq.s32.totalorder %s21, 0
    %p200 = por %p198, %p199
    %s202 = sadd.s32 %s201, 1
    %p205 = scmp.eq.s32.totalorder %s15, 1
    %p206 = scmp.ne.s32.totalorder %s201, %s203
    %p207 = scmp.eq.s32.totalorder %s15, 0
    %p208 = por %p206, %p207
    %p209 = scmp.ne.s32.totalorder %s201, %s203
    %p210 = scmp.eq.s32.totalorder %s20, 1
    %p211 = por %p209, %p210
    %p212 = scmp.ne.s32.totalorder %s203, %s204
    %p213 = scmp.eq.s32.totalorder %s20, 0
    %p214 = por %p212, %p213
    %p215 = scmp.ne.s32.totalorder %s203, %s204
    %p216 = scmp.eq.s32.totalorder %s21, 1
    %p217 = por %p215, %p216
    %p219 = scmp.ne.s32.totalorder %s204, %s218
    %p220 = scmp.eq.s32.totalorder %s21, 0
    %p221 = por %p219, %p220
    %s222 = ssub.s32 %s15, %s22
    %p223 = scmp.eq.s32.totalorder %s222, 0
    %s225 = sadd.s32 %s224, 1
    %s226 = scalar_select %p223, %s224, %s225
    %p229 = pneg %p223
    %p230 = scmp.eq.s32.totalorder %s15, 1
    %p231 = por %p229, %p230
    %p232 = scmp.ne.s32.totalorder %s224, %s227
    %p233 = scmp.eq.s32.totalorder %s15, 0
    %p234 = por %p232, %p233
    %p235 = scmp.ne.s32.totalorder %s224, %s227
    %p236 = scmp.eq.s32.totalorder %s20, 1
    %p237 = por %p235, %p236
    %p238 = scmp.ne.s32.totalorder %s227, %s228
    %p239 = scmp.eq.s32.totalorder %s20, 0
    %p240 = por %p238, %p239
    %p241 = scmp.ne.s32.totalorder %s227, %s228
    %p242 = scmp.eq.s32.totalorder %s21, 1
    %p243 = por %p241, %p242
    %p245 = scmp.ne.s32.totalorder %s228, %s244
    %p246 = scmp.eq.s32.totalorder %s21, 0
    %p247 = por %p245, %p246
    %p248 = scmp.le.s32.totalorder 1, %s15
    %p249 = scmp.lt.s32.totalorder %s15, 3
    %p250 = pnand %p248, %p249
    %p251 = pneg %p250
    // Predicated region
    $region9: #{wave_unet_forward.10} parent=5 // pred_check
      _
    $region10: #{wave_unet_forward.10} parent=5 // pred_check_branch
      %253 = sbr.rel (%p250) target = $region12
    $region11: #{wave_unet_forward.10} parent=5 // pred_region
      %s254 = ssub.s32 %s15, 1
      // Predicated region
      $region13: #{wave_unet_forward.10} parent=11 // pred_check
        %p255 = pneg %p88
      $region14: #{wave_unet_forward.10} parent=11 // pred_check_branch
        %257 = sbr.rel (%p255) target = $region16
      $region15: #{wave_unet_forward.10} parent=11 // pred_region
        _
      $region16: #{wave_unet_forward.10} parent=11 // pred_fallthru
        _
      // Predicated region
      $region17: #{wave_unet_forward.10} parent=11 // pred_check
        %p258 = pneg %p109
      $region18: #{wave_unet_forward.10} parent=11 // pred_check_branch
        %260 = sbr.rel (%p258) target = $region20
      $region19: #{wave_unet_forward.10} parent=11 // pred_region
        _
      $region20: #{wave_unet_forward.10} parent=11 // pred_fallthru
        _
      // Predicated region
      $region21: #{wave_unet_forward.10} parent=11 // pred_check
        %p261 = pneg %p130
      $region22: #{wave_unet_forward.10} parent=11 // pred_check_branch
        %263 = sbr.rel (%p261) target = $region24
      $region23: #{wave_unet_forward.10} parent=11 // pred_region
        _
      $region24: #{wave_unet_forward.10} parent=11 // pred_fallthru
        _
      // Predicated region
      $region25: #{wave_unet_forward.10} parent=11 // pred_check
        %p264 = pneg %p151
      $region26: #{wave_unet_forward.10} parent=11 // pred_check_branch
        %266 = sbr.rel (%p264) target = $region28
      $region27: #{wave_unet_forward.10} parent=11 // pred_region
        _
      $region28: #{wave_unet_forward.10} parent=11 // pred_fallthru
        _
      // Predicated region
      $region29: #{wave_unet_forward.10} parent=11 // pred_check
        %p267 = pneg %p172
      $region30: #{wave_unet_forward.10} parent=11 // pred_check_branch
        %269 = sbr.rel (%p267) target = $region32
      $region31: #{wave_unet_forward.10} parent=11 // pred_region
        _
      $region32: #{wave_unet_forward.10} parent=11 // pred_fallthru
        _
      // Predicated region
      $region33: #{wave_unet_forward.10} parent=11 // pred_check
        %p270 = pneg %p193
      $region34: #{wave_unet_forward.10} parent=11 // pred_check_branch
        %272 = sbr.rel (%p270) target = $region36
      $region35: #{wave_unet_forward.10} parent=11 // pred_region
        _
      $region36: #{wave_unet_forward.10} parent=11 // pred_fallthru
        _
      // Predicated region
      $region37: #{wave_unet_forward.10} parent=11 // pred_check
        %p273 = pneg %p214
      $region38: #{wave_unet_forward.10} parent=11 // pred_check_branch
        %275 = sbr.rel (%p273) target = $region40
      $region39: #{wave_unet_forward.10} parent=11 // pred_region
        _
      $region40: #{wave_unet_forward.10} parent=11 // pred_fallthru
        _
    $region12: #{wave_unet_forward.10} parent=5 // pred_fallthru
      _
    %p276 = scmp.lt.s32.totalorder %s15, 2
    // Predicated region
    $region41: #{wave_unet_forward.10} parent=5 // pred_check
      %p277 = pneg %p276
    $region42: #{wave_unet_forward.10} parent=5 // pred_check_branch
      %279 = sbr.rel (%p277) target = $region44
    $region43: #{wave_unet_forward.10} parent=5 // pred_region
      // Predicated region
      $region45: #{wave_unet_forward.10} parent=43 // pred_check
        %p280 = pneg %p35
      $region46: #{wave_unet_forward.10} parent=43 // pred_check_branch
        %282 = sbr.rel (%p280) target = $region48
      $region47: #{wave_unet_forward.10} parent=43 // pred_region
        %p283 = scmp.lt.s32.totalorder %s15, 1
        %s284 = scalar_select %p283, %s15, 1
        %s285 = smul.addr %s284, 4
        %s286 = smul.addr %s285, 4
        %s287 = scalar_lea.vmem %s0, %s286
      $region48: #{wave_unet_forward.10} parent=43 // pred_fallthru
        _
      // Predicated region
      $region49: #{wave_unet_forward.10} parent=43 // pred_check
        %p288 = pneg %p61
      $region50: #{wave_unet_forward.10} parent=43 // pred_check_branch
        %290 = sbr.rel (%p288) target = $region52
      $region51: #{wave_unet_forward.10} parent=43 // pred_region
        %p291 = scmp.lt.s32.totalorder %s15, 1
        %s292 = scalar_select %p291, %s15, 1
        %s293 = smul.addr %s292, 8
        %s294 = smul.addr %s293, 4
        %s295 = scalar_lea.vmem %s1, %s294
      $region52: #{wave_unet_forward.10} parent=43 // pred_fallthru
        _
    $region44: #{wave_unet_forward.10} parent=5 // pred_fallthru
      _
    %p296 = scmp.le.s32.totalorder 1, %s15
    %p297 = scmp.lt.s32.totalorder %s15, 3
    %p298 = pnand %p296, %p297
    %p299 = pneg %p298
    // Predicated region
    $region53: #{wave_unet_forward.10} parent=5 // pred_check
      _
    $region54: #{wave_unet_forward.10} parent=5 // pred_check_branch
      %301 = sbr.rel (%p298) target = $region56
    $region55: #{wave_unet_forward.10} parent=5 // pred_region
      %s302 = ssub.s32 %s15, 1
      %p303 = scmp.lt.s32.totalorder %s20, 1
      %s304 = scalar_select %p303, %s20, 1
      %s305 = smul.addr %s304, 4
      %s306 = smul.addr %s305, 4
      %s307 = scalar_lea.vmem %s0, %s306
      %p308 = pneg %p41
      %p309 = pneg %p38
      %p310 = scmp.lt.s32.totalorder %s20, 1
      %s311 = scalar_select %p310, %s20, 1
      %s312 = smul.addr %s311, 8
      %s313 = smul.addr %s312, 4
      %s314 = scalar_lea.vmem %s1, %s313
      %p315 = pneg %p67
      %p316 = pneg %p64
      %p317 = pneg %p88
      %p318 = pneg %p85
      %p319 = pneg %p109
      %p320 = pneg %p106
      %p321 = pneg %p130
      %p322 = pneg %p127
      %p323 = pneg %p151
      %p324 = pneg %p148
      %p325 = pneg %p172
      %p326 = pneg %p169
      %p327 = pneg %p193
      %p328 = pneg %p190
      %p329 = pneg %p214
      %p330 = pneg %p211
      %p331 = pneg %p240
      %p332 = pneg %p237
      %p333 = scmp.lt.s32.totalorder %s20, 1
      %s334 = scalar_select %p333, %s20, 1
      %s335 = smul.addr %s334, 8
      %s336 = smul.addr %s335, 4
      %s337 = scalar_lea.vmem %s9, %s336
      %p338 = scmp.lt.s32.totalorder %s20, 1
      %s339 = scalar_select %p338, %s20, 1
      %s340 = smul.addr %s339, 4
      %s341 = smul.addr %s340, 4
      %s342 = scalar_lea.vmem %s0, %s341
      %p343 = scmp.lt.s32.totalorder %s20, 1
      %s344 = scalar_select %p343, %s20, 1
      %s345 = smul.addr %s344, 8
      %s346 = smul.addr %s345, 4
      %s347 = scalar_lea.vmem %s1, %s346
      %p348 = scmp.lt.s32.totalorder %s20, 1
      %s349 = scalar_select %p348, %s20, 1
      %s350 = smul.addr %s349, 8
      %s351 = smul.addr %s350, 4
      %s352 = scalar_lea.vmem %s9, %s351
      %v354 = vld [vmem:[%s342] sm:$0xf]
      %v355 = vld [vmem:[%s342 + $0x4] sm:$0xf]
      %v356 = vld [vmem:[%s342 + $0x8] sm:$0xf]
      %v357 = vld [vmem:[%s342 + $0xc] sm:$0xf]
      %v358 = vunpack.c.l.bf16 %v354
      %v359 = vunpack.c.l.bf16 %v355
      %v360 = vunpack.c.l.bf16 %v356
      %v361 = vunpack.c.l.bf16 %v357
      %v366 = vrot.slane %v358, 1
      %v367 = vrot.slane %v358, 2
      %v368 = vrot.slane %v358, 3
      %v369 = vrot.slane %v358, 4
      %v370 = vrot.slane %v358, 5
      %v371 = vrot.slane %v358, 6
      %v372 = vrot.slane %v358, 7
      %v373 = vrot.slane %v359, 1
      %v374 = vrot.slane %v359, 2
      %v375 = vrot.slane %v359, 3
      %v376 = vrot.slane %v359, 4
      %v377 = vrot.slane %v359, 5
      %v378 = vrot.slane %v359, 6
      %v379 = vrot.slane %v359, 7
      %v380 = vrot.slane %v360, 1
      %v381 = vrot.slane %v360, 2
      %v382 = vrot.slane %v360, 3
      %v383 = vrot.slane %v360, 4
      %v384 = vrot.slane %v360, 5
      %v385 = vrot.slane %v360, 6
      %v386 = vrot.slane %v360, 7
      %v387 = vrot.slane %v361, 1
      %v388 = vrot.slane %v361, 2
      %v389 = vrot.slane %v361, 3
      %v390 = vrot.slane %v361, 4
      %v391 = vrot.slane %v361, 5
      %v392 = vrot.slane %v361, 6
      %vm420 = vcmask 1040384
      %v421 = vsel %vm420, %v358, 0.0
      %v422 = vsel %vm420, %v366, 0.0
      %v423 = vsel %vm420, %v367, 0.0
      %v424 = vsel %vm420, %v368, 0.0
      %v425 = vsel %vm420, %v369, 0.0
      %v426 = vsel %vm420, %v370, 0.0
      %v427 = vsel %vm420, %v371, 0.0
      %v428 = vsel %vm420, %v372, 0.0
      %v429 = vsel %vm420, %v359, 0.0
      %v430 = vsel %vm420, %v373, 0.0
      %v431 = vsel %vm420, %v374, 0.0
      %v432 = vsel %vm420, %v375, 0.0
      %v433 = vsel %vm420, %v376, 0.0
      %v434 = vsel %vm420, %v377, 0.0
      %v435 = vsel %vm420, %v378, 0.0
      %v436 = vsel %vm420, %v379, 0.0
      %v437 = vsel %vm420, %v360, 0.0
      %v438 = vsel %vm420, %v380, 0.0
      %v439 = vsel %vm420, %v381, 0.0
      %v440 = vsel %vm420, %v382, 0.0
      %v441 = vsel %vm420, %v383, 0.0
      %v442 = vsel %vm420, %v384, 0.0
      %v443 = vsel %vm420, %v385, 0.0
      %v444 = vsel %vm420, %v386, 0.0
      %v445 = vsel %vm420, %v361, 0.0
      %v446 = vsel %vm420, %v387, 0.0
      %v447 = vsel %vm420, %v388, 0.0
      %v448 = vsel %vm420, %v389, 0.0
      %v449 = vsel %vm420, %v390, 0.0
      %v450 = vsel %vm420, %v391, 0.0
      %v451 = vsel %vm420, %v392, 0.0
      %s483 = scalar_lea.vmem [#allocation1], 1
      %484 = vst [vmem:[%s483] ss:$4 sm:$0xff] %v421
      %s485 = scalar_lea.vmem [#allocation1], 2
      %486 = vst [vmem:[%s485] ss:$4 sm:$0xff] %v422
      %s487 = scalar_lea.vmem [#allocation1], 3
      %488 = vst [vmem:[%s487] ss:$4 sm:$0xff] %v423
      %s489 = scalar_lea.vmem [#allocation1], 32
      %490 = vst [vmem:[%s489] ss:$4 sm:$0xff] %v424
      %s491 = scalar_lea.vmem [#allocation1], 33
      %492 = vst [vmem:[%s491] ss:$4 sm:$0xff] %v425
      %s493 = scalar_lea.vmem [#allocation1], 34
      %494 = vst [vmem:[%s493] ss:$4 sm:$0xff] %v426
      %s495 = scalar_lea.vmem [#allocation1], 35
      %496 = vst [vmem:[%s495] ss:$4 sm:$0xff] %v427
      %v497 = vld.sshfl [vmem:[#allocation1] sm:$0xff pattern:$0x73625140]
      %v498 = vld.sshfl [vmem:[#allocation1 + $0x20] sm:$0xff pattern:$0x73625140]
      %499 = vst [vmem:[#allocation1] ss:$4 sm:$0xff] %v428
      %500 = vst [vmem:[%s483] ss:$4 sm:$0xff] %v429
      %501 = vst [vmem:[%s485] ss:$4 sm:$0xff] %v430
      %502 = vst [vmem:[%s487] ss:$4 sm:$0xff] %v431
      %503 = vst [vmem:[%s489] ss:$4 sm:$0xff] %v432
      %504 = vst [vmem:[%s491] ss:$4 sm:$0xff] %v433
      %505 = vst [vmem:[%s493] ss:$4 sm:$0xff] %v434
      %506 = vst [vmem:[%s495] ss:$4 sm:$0xff] %v435
      %v507 = vld.sshfl [vmem:[#allocation1] sm:$0xff pattern:$0x73625140]
      %v508 = vld.sshfl [vmem:[#allocation1 + $0x20] sm:$0xff pattern:$0x73625140]
      %509 = vst [vmem:[#allocation1] ss:$4 sm:$0xff] %v436
      %510 = vst [vmem:[%s483] ss:$4 sm:$0xff] %v437
      %511 = vst [vmem:[%s485] ss:$4 sm:$0xff] %v438
      %512 = vst [vmem:[%s487] ss:$4 sm:$0xff] %v439
      %513 = vst [vmem:[%s489] ss:$4 sm:$0xff] %v440
      %514 = vst [vmem:[%s491] ss:$4 sm:$0xff] %v441
      %515 = vst [vmem:[%s493] ss:$4 sm:$0xff] %v442
      %516 = vst [vmem:[%s495] ss:$4 sm:$0xff] %v443
      %v517 = vld.sshfl [vmem:[#allocation1] sm:$0xff pattern:$0x73625140]
      %v518 = vld.sshfl [vmem:[#allocation1 + $0x20] sm:$0xff pattern:$0x73625140]
      %519 = vst [vmem:[#allocation1] ss:$4 sm:$0xff] %v444
      %520 = vst [vmem:[%s483] ss:$4 sm:$0xff] %v445
      %521 = vst [vmem:[%s485] ss:$4 sm:$0xff] %v446
      %522 = vst [vmem:[%s487] ss:$4 sm:$0xff] %v447
      %523 = vst [vmem:[%s489] ss:$4 sm:$0xff] %v448
      %524 = vst [vmem:[%s491] ss:$4 sm:$0xff] %v449
      %525 = vst [vmem:[%s493] ss:$4 sm:$0xff] %v450
      %526 = vst [vmem:[%s495] ss:$4 sm:$0xff] %v451
      %v527 = vld.sshfl [vmem:[#allocation1] sm:$0xff pattern:$0x73625140]
      %v528 = vld.sshfl [vmem:[#allocation1 + $0x20] sm:$0xff pattern:$0x73625140]
      %vm537 = vcmask 1041408
      %v538 = vsel %vm537, 0.0, %v497
      %vm539 = vcmask 1046528
      %v540 = vsel %vm539, %v528, 0.0
      %v543 = vrot.slane %v538, 1
      %v544 = vrot.slane %v498, 1
      %v545 = vsel %vm539, %v543, %v544
      %v546 = vrot.slane %v507, 1
      %v547 = vsel %vm539, %v544, %v546
      %v548 = vrot.slane %v508, 1
      %v549 = vsel %vm539, %v546, %v548
      %v550 = vrot.slane %v517, 1
      %v551 = vsel %vm539, %v548, %v550
      %v552 = vrot.slane %v518, 1
      %v553 = vsel %vm539, %v550, %v552
      %v554 = vrot.slane %v527, 1
      %v555 = vsel %vm539, %v552, %v554
      %v556 = vrot.slane %v540, 1
      %v557 = vsel %vm539, %v554, %v556
      %558 = vrot.lane.b32.xlu0 %v545, 16
      %v559 = vpop.permute.xlu0 %558
      %560 = vrot.lane.b32.xlu0 %v547, 16
      %v561 = vpop.permute.xlu0 %560
      %562 = vrot.lane.b32.xlu0 %v549, 16
      %v563 = vpop.permute.xlu0 %562
      %564 = vrot.lane.b32.xlu0 %v551, 16
      %v565 = vpop.permute.xlu0 %564
      %566 = vrot.lane.b32.xlu0 %v553, 16
      %v567 = vpop.permute.xlu0 %566
      %568 = vrot.lane.b32.xlu0 %v555, 16
      %v569 = vpop.permute.xlu0 %568
      %570 = vrot.lane.b32.xlu0 %v557, 16
      %v571 = vpop.permute.xlu0 %570
      %572 = vrot.lane.b32.xlu0 %v556, 16
      %v573 = vpop.permute.xlu0 %572
      %vm582 = vcmask 1045504
      %v583 = vrot.slane %v538, 2
      %v584 = vrot.slane %v498, 2
      %v585 = vsel %vm582, %v583, %v584
      %v586 = vrot.slane %v507, 2
      %v587 = vsel %vm582, %v584, %v586
      %v588 = vrot.slane %v508, 2
      %v589 = vsel %vm582, %v586, %v588
      %v590 = vrot.slane %v517, 2
      %v591 = vsel %vm582, %v588, %v590
      %v592 = vrot.slane %v518, 2
      %v593 = vsel %vm582, %v590, %v592
      %v594 = vrot.slane %v527, 2
      %v595 = vsel %vm582, %v592, %v594
      %v596 = vrot.slane %v540, 2
      %v597 = vsel %vm582, %v594, %v596
      %598 = vrot.lane.b32.xlu0 %v585, 32
      %v599 = vpop.permute.xlu0 %598
      %600 = vrot.lane.b32.xlu0 %v587, 32
      %v601 = vpop.permute.xlu0 %600
      %602 = vrot.lane.b32.xlu0 %v589, 32
      %v603 = vpop.permute.xlu0 %602
      %604 = vrot.lane.b32.xlu0 %v591, 32
      %v605 = vpop.permute.xlu0 %604
      %606 = vrot.lane.b32.xlu0 %v593, 32
      %v607 = vpop.permute.xlu0 %606
      %608 = vrot.lane.b32.xlu0 %v595, 32
      %v609 = vpop.permute.xlu0 %608
      %610 = vrot.lane.b32.xlu0 %v597, 32
      %v611 = vpop.permute.xlu0 %610
      %612 = vrot.lane.b32.xlu0 %v596, 32
      %v613 = vpop.permute.xlu0 %612
      %vm622 = vcmask 1044480
      %v623 = vrot.slane %v538, 3
      %v624 = vrot.slane %v498, 3
      %v625 = vsel %vm622, %v623, %v624
      %v626 = vrot.slane %v507, 3
      %v627 = vsel %vm622, %v624, %v626
      %v628 = vrot.slane %v508, 3
      %v629 = vsel %vm622, %v626, %v628
      %v630 = vrot.slane %v517, 3
      %v631 = vsel %vm622, %v628, %v630
      %v632 = vrot.slane %v518, 3
      %v633 = vsel %vm622, %v630, %v632
      %v634 = vrot.slane %v527, 3
      %v635 = vsel %vm622, %v632, %v634
      %v636 = vrot.slane %v540, 3
      %v637 = vsel %vm622, %v634, %v636
      %638 = vrot.lane.b32.xlu0 %v625, 48
      %v639 = vpop.permute.xlu0 %638
      %640 = vrot.lane.b32.xlu0 %v627, 48
      %v641 = vpop.permute.xlu0 %640
      %642 = vrot.lane.b32.xlu0 %v629, 48
      %v643 = vpop.permute.xlu0 %642
      %644 = vrot.lane.b32.xlu0 %v631, 48
      %v645 = vpop.permute.xlu0 %644
      %646 = vrot.lane.b32.xlu0 %v633, 48
      %v647 = vpop.permute.xlu0 %646
      %648 = vrot.lane.b32.xlu0 %v635, 48
      %v649 = vpop.permute.xlu0 %648
      %650 = vrot.lane.b32.xlu0 %v637, 48
      %v651 = vpop.permute.xlu0 %650
      %652 = vrot.lane.b32.xlu0 %v636, 48
      %v653 = vpop.permute.xlu0 %652
      %vm663 = vcmask 1043456
      %v664 = vrot.slane %v538, 4
      %v665 = vrot.slane %v498, 4
      %v666 = vsel %vm663, %v664, %v665
      %v667 = vrot.slane %v507, 4
      %v668 = vsel %vm663, %v665, %v667
      %v669 = vrot.slane %v508, 4
      %v670 = vsel %vm663, %v667, %v669
      %v671 = vrot.slane %v517, 4
      %v672 = vsel %vm663, %v669, %v671
      %v673 = vrot.slane %v518, 4
      %v674 = vsel %vm663, %v671, %v673
      %v675 = vrot.slane %v527, 4
      %v676 = vsel %vm663, %v673, %v675
      %v677 = vrot.slane %v540, 4
      %v678 = vsel %vm663, %v675, %v677
      %v679 = vrot.slane 0.0, 4
      %v680 = vsel %vm663, %v677, %v679
      %681 = vrot.lane.b32.xlu0 %v666, 64
      %v682 = vpop.permute.xlu0 %681
      %683 = vrot.lane.b32.xlu0 %v668, 64
      %v684 = vpop.permute.xlu0 %683
      %685 = vrot.lane.b32.xlu0 %v670, 64
      %v686 = vpop.permute.xlu0 %685
      %687 = vrot.lane.b32.xlu0 %v672, 64
      %v688 = vpop.permute.xlu0 %687
      %689 = vrot.lane.b32.xlu0 %v674, 64
      %v690 = vpop.permute.xlu0 %689
      %691 = vrot.lane.b32.xlu0 %v676, 64
      %v692 = vpop.permute.xlu0 %691
      %693 = vrot.lane.b32.xlu0 %v678, 64
      %v694 = vpop.permute.xlu0 %693
      %695 = vrot.lane.b32.xlu0 %v680, 64
      %v696 = vpop.permute.xlu0 %695
      %vm705 = vcmask 130048
      %v706 = vsel %vm705, %v538, %v559
      %v707 = vsel %vm705, %v498, %v561
      %v708 = vsel %vm705, %v507, %v563
      %v709 = vsel %vm705, %v508, %v565
      %v710 = vsel %vm705, %v517, %v567
      %v711 = vsel %vm705, %v518, %v569
      %v712 = vsel %vm705, %v527, %v571
      %v713 = vsel %vm705, %v540, %v573
      %vm714 = vcmask 261120
      %v715 = vsel %vm714, %v706, %v599
      %v716 = vsel %vm714, %v707, %v601
      %v717 = vsel %vm714, %v708, %v603
      %v718 = vsel %vm714, %v709, %v605
      %v719 = vsel %vm714, %v710, %v607
      %v720 = vsel %vm714, %v711, %v609
      %v721 = vsel %vm714, %v712, %v611
      %v722 = vsel %vm714, %v713, %v613
      %vm723 = vcmask 392192
      %v724 = vsel %vm723, %v715, %v639
      %v725 = vsel %vm723, %v716, %v641
      %v726 = vsel %vm723, %v717, %v643
      %v727 = vsel %vm723, %v718, %v645
      %v728 = vsel %vm723, %v719, %v647
      %v729 = vsel %vm723, %v720, %v649
      %v730 = vsel %vm723, %v721, %v651
      %v731 = vsel %vm723, %v722, %v653
      %vm732 = vcmask 523264
      %v733 = vsel %vm732, %v724, %v682
      %v734 = vsel %vm732, %v725, %v684
      %v735 = vsel %vm732, %v726, %v686
      %v736 = vsel %vm732, %v727, %v688
      %v737 = vsel %vm732, %v728, %v690
      %v738 = vsel %vm732, %v729, %v692
      %v739 = vsel %vm732, %v730, %v694
      %v740 = vsel %vm732, %v731, %v696
      %v741 = vpack.c.bf16 %v734, %v733
      %v742 = vpack.c.bf16 %v736, %v735
      %v743 = vpack.c.bf16 %v738, %v737
      %v744 = vpack.c.bf16 %v740, %v739
      %v745 = vld [vmem:[%s2] sm:$0xf]
      %v746 = vld [vmem:[%s2 + $0x4] sm:$0xf]
      %v747 = vld [vmem:[%s2 + $0x8] sm:$0xf]
      %v748 = vld [vmem:[%s2 + $0xc] sm:$0xf]
      %v749 = vld [vmem:[%s2 + $0x10] sm:$0xf]
      %v750 = vld [vmem:[%s2 + $0x14] sm:$0xf]
      %v751 = vld [vmem:[%s2 + $0x18] sm:$0xf]
      %v752 = vld [vmem:[%s2 + $0x1c] sm:$0xf]
      %v753 = vld [vmem:[%s2 + $0x20] sm:$0xf]
      %v754 = vld [vmem:[%s2 + $0x24] sm:$0xf]
      %v755 = vld [vmem:[%s3] sm:$0x1]
      %v757 = vperm.slane %v755, 0
      %v769 = vunpack.c.l.b16 %v745
      %v770 = vunpack.c.l.b16 %v746
      %v771 = vunpack.c.l.b16 %v747
      %v772 = vunpack.c.l.b16 %v748
      %v773 = vunpack.c.l.b16 %v749
      %v774 = vunpack.c.l.b16 %v750
      %v775 = vunpack.c.l.b16 %v751
      %v776 = vunpack.c.l.b16 %v752
      %v777 = vunpack.c.l.b16 %v753
      %v778 = vunpack.c.l.b16 %v754
      %v779 = vpack.c.b16 %v770, %v769
      %v780 = vpack.c.b16 %v772, %v771
      %v781 = vpack.c.b16 %v774, %v773
      %v782 = vpack.c.b16 %v776, %v775
      %v783 = vpack.c.b16 %v778, %v777
      %vm789 = vcmask 654336
      %v791 = vsel %vm789, %v741, 0
      %v794 = vsel %vm789, %v742, 0
      %v797 = vsel %vm789, %v743, 0
      %v800 = vsel %vm789, %v744, 0
      %802 = vmatpush.bf16.msra.mxu0 0
      %803 = vmatpush.bf16.msra.mxu0 0
      %804 = vmatpush.bf16.msra.mxu0 0
      %805 = vmatpush.bf16.msra.mxu0 %v783
      %806 = vmatpush.bf16.msra.mxu0 %v782
      %807 = vmatpush.bf16.msra.mxu0 %v781
      %808 = vmatpush.bf16.msra.mxu0 %v780
      %809 = vmatpush.bf16.msra.mxu0 %v779
      %810 = vmatmul.bf16.gmra.mxu0 %v791
      %v811 = vpop.f32.mrf.mxu0
      %v812 = vadd.f32 %v757, %v811
      %v813 = vpop.f32.mrf.mxu0
      %v814 = vadd.f32 %v757, %v813
      %815 = vmatmul.bf16.gmra.mxu0 %v794
      %v816 = vpop.f32.mrf.mxu0
      %v817 = vadd.f32 %v757, %v816
      %v818 = vpop.f32.mrf.mxu0
      %v819 = vadd.f32 %v757, %v818
      %820 = vmatmul.bf16.gmra.mxu0 %v797
      %v821 = vpop.f32.mrf.mxu0
      %v822 = vadd.f32 %v757, %v821
      %v823 = vpop.f32.mrf.mxu0
      %v824 = vadd.f32 %v757, %v823
      %825 = vmatmul.bf16.gmra.mxu0 %v800
      %v826 = vpop.f32.mrf.mxu0
      %v827 = vadd.f32 %v757, %v826
      %v828 = vpop.f32.mrf.mxu0
      %v829 = vadd.f32 %v757, %v828
      %830 = vdwg.mxu0
      %vm831 = vcmp.ge.f32.partialorder %v812, 0.0
      %vm832 = vcmp.ge.f32.partialorder %v814, 0.0
      %vm833 = vcmp.ge.f32.partialorder %v817, 0.0
      %vm834 = vcmp.ge.f32.partialorder %v819, 0.0
      %vm835 = vcmp.ge.f32.partialorder %v822, 0.0
      %vm836 = vcmp.ge.f32.partialorder %v824, 0.0
      %vm837 = vcmp.ge.f32.partialorder %v827, 0.0
      %vm838 = vcmp.ge.f32.partialorder %v829, 0.0
      %v839 = vmul.f32 %v812, 0.1
      %v840 = vmul.f32 %v814, 0.1
      %v841 = vmul.f32 %v817, 0.1
      %v842 = vmul.f32 %v819, 0.1
      %v843 = vmul.f32 %v822, 0.1
      %v844 = vmul.f32 %v824, 0.1
      %v845 = vmul.f32 %v827, 0.1
      %v846 = vmul.f32 %v829, 0.1
      %v847 = vsel %vm831, %v812, %v839
      %v848 = vsel %vm832, %v814, %v840
      %v849 = vsel %vm833, %v817, %v841
      %v850 = vsel %vm834, %v819, %v842
      %v851 = vsel %vm835, %v822, %v843
      %v852 = vsel %vm836, %v824, %v844
      %v853 = vsel %vm837, %v827, %v845
      %v854 = vsel %vm838, %v829, %v846
      %v863 = vrot.slane %v847, 6
      %v864 = vrot.slane %v848, 6
      %v865 = vsel %vm537, %v863, %v864
      %v866 = vrot.slane %v849, 6
      %v867 = vsel %vm537, %v864, %v866
      %v868 = vrot.slane %v850, 6
      %v869 = vsel %vm537, %v866, %v868
      %v870 = vrot.slane %v851, 6
      %v871 = vsel %vm537, %v868, %v870
      %v872 = vrot.slane %v852, 6
      %v873 = vsel %vm537, %v870, %v872
      %v874 = vrot.slane %v853, 6
      %v875 = vsel %vm537, %v872, %v874
      %v876 = vrot.slane %v854, 6
      %v877 = vsel %vm537, %v874, %v876
      %v886 = vsel %vm537, 0.0, %v863
      %v887 = vsel %vm539, %v877, 0.0
      %v890 = vrot.slane %v886, 1
      %v891 = vrot.slane %v865, 1
      %v892 = vsel %vm539, %v890, %v891
      %v893 = vrot.slane %v867, 1
      %v894 = vsel %vm539, %v891, %v893
      %v895 = vrot.slane %v869, 1
      %v896 = vsel %vm539, %v893, %v895
      %v897 = vrot.slane %v871, 1
      %v898 = vsel %vm539, %v895, %v897
      %v899 = vrot.slane %v873, 1
      %v900 = vsel %vm539, %v897, %v899
      %v901 = vrot.slane %v875, 1
      %v902 = vsel %vm539, %v899, %v901
      %v903 = vrot.slane %v887, 1
      %v904 = vsel %vm539, %v901, %v903
      %905 = vrot.lane.b32.xlu0 %v892, 16
      %v906 = vpop.permute.xlu0 %905
      %907 = vrot.lane.b32.xlu0 %v894, 16
      %v908 = vpop.permute.xlu0 %907
      %909 = vrot.lane.b32.xlu0 %v896, 16
      %v910 = vpop.permute.xlu0 %909
      %911 = vrot.lane.b32.xlu0 %v898, 16
      %v912 = vpop.permute.xlu0 %911
      %913 = vrot.lane.b32.xlu0 %v900, 16
      %v914 = vpop.permute.xlu0 %913
      %915 = vrot.lane.b32.xlu0 %v902, 16
      %v916 = vpop.permute.xlu0 %915
      %917 = vrot.lane.b32.xlu0 %v904, 16
      %v918 = vpop.permute.xlu0 %917
      %919 = vrot.lane.b32.xlu0 %v903, 16
      %v920 = vpop.permute.xlu0 %919
      %v929 = vrot.slane %v886, 2
      %v930 = vrot.slane %v865, 2
      %v931 = vsel %vm582, %v929, %v930
      %v932 = vrot.slane %v867, 2
      %v933 = vsel %vm582, %v930, %v932
      %v934 = vrot.slane %v869, 2
      %v935 = vsel %vm582, %v932, %v934
      %v936 = vrot.slane %v871, 2
      %v937 = vsel %vm582, %v934, %v936
      %v938 = vrot.slane %v873, 2
      %v939 = vsel %vm582, %v936, %v938
      %v940 = vrot.slane %v875, 2
      %v941 = vsel %vm582, %v938, %v940
      %v942 = vrot.slane %v887, 2
      %v943 = vsel %vm582, %v940, %v942
      %944 = vrot.lane.b32.xlu0 %v931, 32
      %v945 = vpop.permute.xlu0 %944
      %946 = vrot.lane.b32.xlu0 %v933, 32
      %v947 = vpop.permute.xlu0 %946
      %948 = vrot.lane.b32.xlu0 %v935, 32
      %v949 = vpop.permute.xlu0 %948
      %950 = vrot.lane.b32.xlu0 %v937, 32
      %v951 = vpop.permute.xlu0 %950
      %952 = vrot.lane.b32.xlu0 %v939, 32
      %v953 = vpop.permute.xlu0 %952
      %954 = vrot.lane.b32.xlu0 %v941, 32
      %v955 = vpop.permute.xlu0 %954
      %956 = vrot.lane.b32.xlu0 %v943, 32
      %v957 = vpop.permute.xlu0 %956
      %958 = vrot.lane.b32.xlu0 %v942, 32
      %v959 = vpop.permute.xlu0 %958
      %v968 = vrot.slane %v886, 3
      %v969 = vrot.slane %v865, 3
      %v970 = vsel %vm622, %v968, %v969
      %v971 = vrot.slane %v867, 3
      %v972 = vsel %vm622, %v969, %v971
      %v973 = vrot.slane %v869, 3
      %v974 = vsel %vm622, %v971, %v973
      %v975 = vrot.slane %v871, 3
      %v976 = vsel %vm622, %v973, %v975
      %v977 = vrot.slane %v873, 3
      %v978 = vsel %vm622, %v975, %v977
      %v979 = vrot.slane %v875, 3
      %v980 = vsel %vm622, %v977, %v979
      %v981 = vrot.slane %v887, 3
      %v982 = vsel %vm622, %v979, %v981
      %983 = vrot.lane.b32.xlu0 %v970, 48
      %v984 = vpop.permute.xlu0 %983
      %985 = vrot.lane.b32.xlu0 %v972, 48
      %v986 = vpop.permute.xlu0 %985
      %987 = vrot.lane.b32.xlu0 %v974, 48
      %v988 = vpop.permute.xlu0 %987
      %989 = vrot.lane.b32.xlu0 %v976, 48
      %v990 = vpop.permute.xlu0 %989
      %991 = vrot.lane.b32.xlu0 %v978, 48
      %v992 = vpop.permute.xlu0 %991
      %993 = vrot.lane.b32.xlu0 %v980, 48
      %v994 = vpop.permute.xlu0 %993
      %995 = vrot.lane.b32.xlu0 %v982, 48
      %v996 = vpop.permute.xlu0 %995
      %997 = vrot.lane.b32.xlu0 %v981, 48
      %v998 = vpop.permute.xlu0 %997
      %v1007 = vrot.slane %v886, 4
      %v1008 = vrot.slane %v865, 4
      %v1009 = vsel %vm663, %v1007, %v1008
      %v1010 = vrot.slane %v867, 4
      %v1011 = vsel %vm663, %v1008, %v1010
      %v1012 = vrot.slane %v869, 4
      %v1013 = vsel %vm663, %v1010, %v1012
      %v1014 = vrot.slane %v871, 4
      %v1015 = vsel %vm663, %v1012, %v1014
      %v1016 = vrot.slane %v873, 4
      %v1017 = vsel %vm663, %v1014, %v1016
      %v1018 = vrot.slane %v875, 4
      %v1019 = vsel %vm663, %v1016, %v1018
      %v1020 = vrot.slane %v887, 4
      %v1021 = vsel %vm663, %v1018, %v1020
      %v1022 = vsel %vm663, %v1020, %v679
      %1023 = vrot.lane.b32.xlu0 %v1009, 64
      %v1024 = vpop.permute.xlu0 %1023
      %1025 = vrot.lane.b32.xlu0 %v1011, 64
      %v1026 = vpop.permute.xlu0 %1025
      %1027 = vrot.lane.b32.xlu0 %v1013, 64
      %v1028 = vpop.permute.xlu0 %1027
      %1029 = vrot.lane.b32.xlu0 %v1015, 64
      %v1030 = vpop.permute.xlu0 %1029
      %1031 = vrot.lane.b32.xlu0 %v1017, 64
      %v1032 = vpop.permute.xlu0 %1031
      %1033 = vrot.lane.b32.xlu0 %v1019, 64
      %v1034 = vpop.permute.xlu0 %1033
      %1035 = vrot.lane.b32.xlu0 %v1021, 64
      %v1036 = vpop.permute.xlu0 %1035
      %1037 = vrot.lane.b32.xlu0 %v1022, 64
      %v1038 = vpop.permute.xlu0 %1037
      %v1047 = vsel %vm705, %v886, %v906
      %v1048 = vsel %vm705, %v865, %v908
      %v1049 = vsel %vm705, %v867, %v910
      %v1050 = vsel %vm705, %v869, %v912
      %v1051 = vsel %vm705, %v871, %v914
      %v1052 = vsel %vm705, %v873, %v916
      %v1053 = vsel %vm705, %v875, %v918
      %v1054 = vsel %vm705, %v887, %v920
      %v1055 = vsel %vm714, %v1047, %v945
      %v1056 = vsel %vm714, %v1048, %v947
      %v1057 = vsel %vm714, %v1049, %v949
      %v1058 = vsel %vm714, %v1050, %v951
      %v1059 = vsel %vm714, %v1051, %v953
      %v1060 = vsel %vm714, %v1052, %v955
      %v1061 = vsel %vm714, %v1053, %v957
      %v1062 = vsel %vm714, %v1054, %v959
      %v1063 = vsel %vm723, %v1055, %v984
      %v1064 = vsel %vm723, %v1056, %v986
      %v1065 = vsel %vm723, %v1057, %v988
      %v1066 = vsel %vm723, %v1058, %v990
      %v1067 = vsel %vm723, %v1059, %v992
      %v1068 = vsel %vm723, %v1060, %v994
      %v1069 = vsel %vm723, %v1061, %v996
      %v1070 = vsel %vm723, %v1062, %v998
      %v1071 = vsel %vm732, %v1063, %v1024
      %v1072 = vsel %vm732, %v1064, %v1026
      %v1073 = vsel %vm732, %v1065, %v1028
      %v1074 = vsel %vm732, %v1066, %v1030
      %v1075 = vsel %vm732, %v1067, %v1032
      %v1076 = vsel %vm732, %v1068, %v1034
      %v1077 = vsel %vm732, %v1069, %v1036
      %v1078 = vsel %vm732, %v1070, %v1038
      %v1079 = vpack.c.bf16 %v1072, %v1071
      %v1080 = vpack.c.bf16 %v1074, %v1073
      %v1081 = vpack.c.bf16 %v1076, %v1075
      %v1082 = vpack.c.bf16 %v1078, %v1077
      %v1083 = vld [vmem:[%s4] sm:$0xf]
      %v1084 = vld [vmem:[%s4 + $0x4] sm:$0xf]
      %v1085 = vld [vmem:[%s4 + $0x8] sm:$0xf]
      %v1086 = vld [vmem:[%s4 + $0xc] sm:$0xf]
      %v1087 = vld [vmem:[%s4 + $0x10] sm:$0xf]
      %v1088 = vld [vmem:[%s4 + $0x14] sm:$0xf]
      %v1089 = vld [vmem:[%s4 + $0x18] sm:$0xf]
      %v1090 = vld [vmem:[%s4 + $0x1c] sm:$0xf]
      %v1091 = vld [vmem:[%s4 + $0x20] sm:$0xf]
      %v1092 = vld [vmem:[%s4 + $0x24] sm:$0xf]
      %v1093 = vld [vmem:[%s5] sm:$0x1]
      %v1095 = vperm.slane %v1093, 0
      %v1107 = vunpack.c.l.b16 %v1083
      %v1108 = vunpack.c.l.b16 %v1084
      %v1109 = vunpack.c.l.b16 %v1085
      %v1110 = vunpack.c.l.b16 %v1086
      %v1111 = vunpack.c.l.b16 %v1087
      %v1112 = vunpack.c.l.b16 %v1088
      %v1113 = vunpack.c.l.b16 %v1089
      %v1114 = vunpack.c.l.b16 %v1090
      %v1115 = vunpack.c.l.b16 %v1091
      %v1116 = vunpack.c.l.b16 %v1092
      %v1117 = vpack.c.b16 %v1108, %v1107
      %v1118 = vpack.c.b16 %v1110, %v1109
      %v1119 = vpack.c.b16 %v1112, %v1111
      %v1120 = vpack.c.b16 %v1114, %v1113
      %v1121 = vpack.c.b16 %v1116, %v1115
      %v1128 = vsel %vm789, %v1079, 0
      %v1131 = vsel %vm789, %v1080, 0
      %v1134 = vsel %vm789, %v1081, 0
      %v1137 = vsel %vm789, %v1082, 0
      %1139 = vmatpush.bf16.msra.mxu0 0
      %1140 = vmatpush.bf16.msra.mxu0 0
      %1141 = vmatpush.bf16.msra.mxu0 0
      %1142 = vmatpush.bf16.msra.mxu0 %v1121
      %1143 = vmatpush.bf16.msra.mxu0 %v1120
      %1144 = vmatpush.bf16.msra.mxu0 %v1119
      %1145 = vmatpush.bf16.msra.mxu0 %v1118
      %1146 = vmatpush.bf16.msra.mxu0 %v1117
      %1147 = vmatmul.bf16.gmra.mxu0 %v1128
      %v1148 = vpop.f32.mrf.mxu0
      %v1149 = vadd.f32 %v1095, %v1148
      %v1150 = vpop.f32.mrf.mxu0
      %v1151 = vadd.f32 %v1095, %v1150
      %1152 = vmatmul.bf16.gmra.mxu0 %v1131
      %v1153 = vpop.f32.mrf.mxu0
      %v1154 = vadd.f32 %v1095, %v1153
      %v1155 = vpop.f32.mrf.mxu0
      %v1156 = vadd.f32 %v1095, %v1155
      %1157 = vmatmul.bf16.gmra.mxu0 %v1134
      %v1158 = vpop.f32.mrf.mxu0
      %v1159 = vadd.f32 %v1095, %v1158
      %v1160 = vpop.f32.mrf.mxu0
      %v1161 = vadd.f32 %v1095, %v1160
      %1162 = vmatmul.bf16.gmra.mxu0 %v1137
      %v1163 = vpop.f32.mrf.mxu0
      %v1164 = vadd.f32 %v1095, %v1163
      %v1165 = vpop.f32.mrf.mxu0
      %v1166 = vadd.f32 %v1095, %v1165
      %1167 = vdwg.mxu0
      %vm1168 = vcmp.ge.f32.partialorder %v1149, 0.0
      %vm1169 = vcmp.ge.f32.partialorder %v1151, 0.0
      %vm1170 = vcmp.ge.f32.partialorder %v1154, 0.0
      %vm1171 = vcmp.ge.f32.partialorder %v1156, 0.0
      %vm1172 = vcmp.ge.f32.partialorder %v1159, 0.0
      %vm1173 = vcmp.ge.f32.partialorder %v1161, 0.0
      %vm1174 = vcmp.ge.f32.partialorder %v1164, 0.0
      %vm1175 = vcmp.ge.f32.partialorder %v1166, 0.0
      %v1176 = vmul.f32 %v1149, 0.1
      %v1177 = vmul.f32 %v1151, 0.1
      %v1178 = vmul.f32 %v1154, 0.1
      %v1179 = vmul.f32 %v1156, 0.1
      %v1180 = vmul.f32 %v1159, 0.1
      %v1181 = vmul.f32 %v1161, 0.1
      %v1182 = vmul.f32 %v1164, 0.1
      %v1183 = vmul.f32 %v1166, 0.1
      %v1184 = vsel %vm1168, %v1149, %v1176
      %v1185 = vsel %vm1169, %v1151, %v1177
      %v1186 = vsel %vm1170, %v1154, %v1178
      %v1187 = vsel %vm1171, %v1156, %v1179
      %v1188 = vsel %vm1172, %v1159, %v1180
      %v1189 = vsel %vm1173, %v1161, %v1181
      %v1190 = vsel %vm1174, %v1164, %v1182
      %v1191 = vsel %vm1175, %v1166, %v1183
      %v1192 = vld [vmem:[%s347] sm:$0xf]
      %v1193 = vld [vmem:[%s347 + $0x4] sm:$0xf]
      %v1194 = vld [vmem:[%s347 + $0x8] sm:$0xf]
      %v1195 = vld [vmem:[%s347 + $0xc] sm:$0xf]
      %v1196 = vld [vmem:[%s347 + $0x10] sm:$0xf]
      %v1197 = vld [vmem:[%s347 + $0x14] sm:$0xf]
      %v1198 = vld [vmem:[%s347 + $0x18] sm:$0xf]
      %v1199 = vld [vmem:[%s347 + $0x1c] sm:$0x7]
      %v1200 = vunpack.c.l.bf16 %v1192
      %v1201 = vunpack.c.l.bf16 %v1193
      %v1202 = vunpack.c.l.bf16 %v1194
      %v1203 = vunpack.c.l.bf16 %v1195
      %v1204 = vunpack.c.l.bf16 %v1196
      %v1205 = vunpack.c.l.bf16 %v1197
      %v1206 = vunpack.c.l.bf16 %v1198
      %v1207 = vunpack.c.l.bf16 %v1199
      %v1216 = vrot.slane %v1200, 7
      %v1217 = vrot.slane %v1201, 7
      %v1218 = vsel %vm420, %v1216, %v1217
      %v1219 = vrot.slane %v1202, 7
      %v1220 = vsel %vm420, %v1217, %v1219
      %v1221 = vrot.slane %v1203, 7
      %v1222 = vsel %vm420, %v1219, %v1221
      %v1223 = vrot.slane %v1204, 7
      %v1224 = vsel %vm420, %v1221, %v1223
      %v1225 = vrot.slane %v1205, 7
      %v1226 = vsel %vm420, %v1223, %v1225
      %v1227 = vrot.slane %v1206, 7
      %v1228 = vsel %vm420, %v1225, %v1227
      %v1229 = vrot.slane %v1207, 7
      %v1230 = vsel %vm420, %v1227, %v1229
      %v1239 = vsel %vm537, 0.0, %v1216
      %v1240 = vsel %vm539, %v1230, 0.0
      %v1243 = vrot.slane %v1239, 1
      %v1244 = vrot.slane %v1218, 1
      %v1245 = vsel %vm539, %v1243, %v1244
      %v1246 = vrot.slane %v1220, 1
      %v1247 = vsel %vm539, %v1244, %v1246
      %v1248 = vrot.slane %v1222, 1
      %v1249 = vsel %vm539, %v1246, %v1248
      %v1250 = vrot.slane %v1224, 1
      %v1251 = vsel %vm539, %v1248, %v1250
      %v1252 = vrot.slane %v1226, 1
      %v1253 = vsel %vm539, %v1250, %v1252
      %v1254 = vrot.slane %v1228, 1
      %v1255 = vsel %vm539, %v1252, %v1254
      %v1256 = vrot.slane %v1240, 1
      %v1257 = vsel %vm539, %v1254, %v1256
      %1258 = vrot.lane.b32.xlu0 %v1245, 8
      %v1259 = vpop.permute.xlu0 %1258
      %1260 = vrot.lane.b32.xlu0 %v1247, 8
      %v1261 = vpop.permute.xlu0 %1260
      %1262 = vrot.lane.b32.xlu0 %v1249, 8
      %v1263 = vpop.permute.xlu0 %1262
      %1264 = vrot.lane.b32.xlu0 %v1251, 8
      %v1265 = vpop.permute.xlu0 %1264
      %1266 = vrot.lane.b32.xlu0 %v1253, 8
      %v1267 = vpop.permute.xlu0 %1266
      %1268 = vrot.lane.b32.xlu0 %v1255, 8
      %v1269 = vpop.permute.xlu0 %1268
      %1270 = vrot.lane.b32.xlu0 %v1257, 8
      %v1271 = vpop.permute.xlu0 %1270
      %1272 = vrot.lane.b32.xlu0 %v1256, 8
      %v1273 = vpop.permute.xlu0 %1272
      %v1282 = vrot.slane %v1239, 2
      %v1283 = vrot.slane %v1218, 2
      %v1284 = vsel %vm582, %v1282, %v1283
      %v1285 = vrot.slane %v1220, 2
      %v1286 = vsel %vm582, %v1283, %v1285
      %v1287 = vrot.slane %v1222, 2
      %v1288 = vsel %vm582, %v1285, %v1287
      %v1289 = vrot.slane %v1224, 2
      %v1290 = vsel %vm582, %v1287, %v1289
      %v1291 = vrot.slane %v1226, 2
      %v1292 = vsel %vm582, %v1289, %v1291
      %v1293 = vrot.slane %v1228, 2
      %v1294 = vsel %vm582, %v1291, %v1293
      %v1295 = vrot.slane %v1240, 2
      %v1296 = vsel %vm582, %v1293, %v1295
      %1297 = vrot.lane.b32.xlu0 %v1284, 16
      %v1298 = vpop.permute.xlu0 %1297
      %1299 = vrot.lane.b32.xlu0 %v1286, 16
      %v1300 = vpop.permute.xlu0 %1299
      %1301 = vrot.lane.b32.xlu0 %v1288, 16
      %v1302 = vpop.permute.xlu0 %1301
      %1303 = vrot.lane.b32.xlu0 %v1290, 16
      %v1304 = vpop.permute.xlu0 %1303
      %1305 = vrot.lane.b32.xlu0 %v1292, 16
      %v1306 = vpop.permute.xlu0 %1305
      %1307 = vrot.lane.b32.xlu0 %v1294, 16
      %v1308 = vpop.permute.xlu0 %1307
      %1309 = vrot.lane.b32.xlu0 %v1296, 16
      %v1310 = vpop.permute.xlu0 %1309
      %1311 = vrot.lane.b32.xlu0 %v1295, 16
      %v1312 = vpop.permute.xlu0 %1311
      %v1321 = vrot.slane %v1239, 3
      %v1322 = vrot.slane %v1218, 3
      %v1323 = vsel %vm622, %v1321, %v1322
      %v1324 = vrot.slane %v1220, 3
      %v1325 = vsel %vm622, %v1322, %v1324
      %v1326 = vrot.slane %v1222, 3
      %v1327 = vsel %vm622, %v1324, %v1326
      %v1328 = vrot.slane %v1224, 3
      %v1329 = vsel %vm622, %v1326, %v1328
      %v1330 = vrot.slane %v1226, 3
      %v1331 = vsel %vm622, %v1328, %v1330
      %v1332 = vrot.slane %v1228, 3
      %v1333 = vsel %vm622, %v1330, %v1332
      %v1334 = vrot.slane %v1240, 3
      %v1335 = vsel %vm622, %v1332, %v1334
      %1336 = vrot.lane.b32.xlu0 %v1323, 24
      %v1337 = vpop.permute.xlu0 %1336
      %1338 = vrot.lane.b32.xlu0 %v1325, 24
      %v1339 = vpop.permute.xlu0 %1338
      %1340 = vrot.lane.b32.xlu0 %v1327, 24
      %v1341 = vpop.permute.xlu0 %1340
      %1342 = vrot.lane.b32.xlu0 %v1329, 24
      %v1343 = vpop.permute.xlu0 %1342
      %1344 = vrot.lane.b32.xlu0 %v1331, 24
      %v1345 = vpop.permute.xlu0 %1344
      %1346 = vrot.lane.b32.xlu0 %v1333, 24
      %v1347 = vpop.permute.xlu0 %1346
      %1348 = vrot.lane.b32.xlu0 %v1335, 24
      %v1349 = vpop.permute.xlu0 %1348
      %1350 = vrot.lane.b32.xlu0 %v1334, 24
      %v1351 = vpop.permute.xlu0 %1350
      %v1360 = vrot.slane %v1239, 4
      %v1361 = vrot.slane %v1218, 4
      %v1362 = vsel %vm663, %v1360, %v1361
      %v1363 = vrot.slane %v1220, 4
      %v1364 = vsel %vm663, %v1361, %v1363
      %v1365 = vrot.slane %v1222, 4
      %v1366 = vsel %vm663, %v1363, %v1365
      %v1367 = vrot.slane %v1224, 4
      %v1368 = vsel %vm663, %v1365, %v1367
      %v1369 = vrot.slane %v1226, 4
      %v1370 = vsel %vm663, %v1367, %v1369
      %v1371 = vrot.slane %v1228, 4
      %v1372 = vsel %vm663, %v1369, %v1371
      %v1373 = vrot.slane %v1240, 4
      %v1374 = vsel %vm663, %v1371, %v1373
      %v1375 = vsel %vm663, %v1373, %v679
      %1376 = vrot.lane.b32.xlu0 %v1362, 32
      %v1377 = vpop.permute.xlu0 %1376
      %1378 = vrot.lane.b32.xlu0 %v1364, 32
      %v1379 = vpop.permute.xlu0 %1378
      %1380 = vrot.lane.b32.xlu0 %v1366, 32
      %v1381 = vpop.permute.xlu0 %1380
      %1382 = vrot.lane.b32.xlu0 %v1368, 32
      %v1383 = vpop.permute.xlu0 %1382
      %1384 = vrot.lane.b32.xlu0 %v1370, 32
      %v1385 = vpop.permute.xlu0 %1384
      %1386 = vrot.lane.b32.xlu0 %v1372, 32
      %v1387 = vpop.permute.xlu0 %1386
      %1388 = vrot.lane.b32.xlu0 %v1374, 32
      %v1389 = vpop.permute.xlu0 %1388
      %1390 = vrot.lane.b32.xlu0 %v1375, 32
      %v1391 = vpop.permute.xlu0 %1390
      %vm1400 = vcmask 64512
      %v1401 = vsel %vm1400, %v1239, %v1259
      %v1402 = vsel %vm1400, %v1218, %v1261
      %v1403 = vsel %vm1400, %v1220, %v1263
      %v1404 = vsel %vm1400, %v1222, %v1265
      %v1405 = vsel %vm1400, %v1224, %v1267
      %v1406 = vsel %vm1400, %v1226, %v1269
      %v1407 = vsel %vm1400, %v1228, %v1271
      %v1408 = vsel %vm1400, %v1240, %v1273
      %v1409 = vsel %vm705, %v1401, %v1298
      %v1410 = vsel %vm705, %v1402, %v1300
      %v1411 = vsel %vm705, %v1403, %v1302
      %v1412 = vsel %vm705, %v1404, %v1304
      %v1413 = vsel %vm705, %v1405, %v1306
      %v1414 = vsel %vm705, %v1406, %v1308
      %v1415 = vsel %vm705, %v1407, %v1310
      %v1416 = vsel %vm705, %v1408, %v1312
      %vm1417 = vcmask 195584
      %v1418 = vsel %vm1417, %v1409, %v1337
      %v1419 = vsel %vm1417, %v1410, %v1339
      %v1420 = vsel %vm1417, %v1411, %v1341
      %v1421 = vsel %vm1417, %v1412, %v1343
      %v1422 = vsel %vm1417, %v1413, %v1345
      %v1423 = vsel %vm1417, %v1414, %v1347
      %v1424 = vsel %vm1417, %v1415, %v1349
      %v1425 = vsel %vm1417, %v1416, %v1351
      %v1426 = vsel %vm714, %v1418, %v1377
      %v1427 = vsel %vm714, %v1419, %v1379
      %v1428 = vsel %vm714, %v1420, %v1381
      %v1429 = vsel %vm714, %v1421, %v1383
      %v1430 = vsel %vm714, %v1422, %v1385
      %v1431 = vsel %vm714, %v1423, %v1387
      %v1432 = vsel %vm714, %v1424, %v1389
      %v1433 = vsel %vm714, %v1425, %v1391
      %v1442 = vrot.slane %v1184, 6
      %v1443 = vrot.slane %v1185, 6
      %v1444 = vsel %vm537, %v1442, %v1443
      %v1445 = vrot.slane %v1186, 6
      %v1446 = vsel %vm537, %v1443, %v1445
      %v1447 = vrot.slane %v1187, 6
      %v1448 = vsel %vm537, %v1445, %v1447
      %v1449 = vrot.slane %v1188, 6
      %v1450 = vsel %vm537, %v1447, %v1449
      %v1451 = vrot.slane %v1189, 6
      %v1452 = vsel %vm537, %v1449, %v1451
      %v1453 = vrot.slane %v1190, 6
      %v1454 = vsel %vm537, %v1451, %v1453
      %v1455 = vrot.slane %v1191, 6
      %v1456 = vsel %vm537, %v1453, %v1455
      %v1465 = vsel %vm537, 0.0, %v1442
      %v1466 = vsel %vm539, %v1456, 0.0
      %v1469 = vrot.slane %v1465, 1
      %v1470 = vrot.slane %v1444, 1
      %v1471 = vsel %vm539, %v1469, %v1470
      %v1472 = vrot.slane %v1446, 1
      %v1473 = vsel %vm539, %v1470, %v1472
      %v1474 = vrot.slane %v1448, 1
      %v1475 = vsel %vm539, %v1472, %v1474
      %v1476 = vrot.slane %v1450, 1
      %v1477 = vsel %vm539, %v1474, %v1476
      %v1478 = vrot.slane %v1452, 1
      %v1479 = vsel %vm539, %v1476, %v1478
      %v1480 = vrot.slane %v1454, 1
      %v1481 = vsel %vm539, %v1478, %v1480
      %v1482 = vrot.slane %v1466, 1
      %v1483 = vsel %vm539, %v1480, %v1482
      %1484 = vrot.lane.b32.xlu0 %v1471, 8
      %v1485 = vpop.permute.xlu0 %1484
      %1486 = vrot.lane.b32.xlu0 %v1473, 8
      %v1487 = vpop.permute.xlu0 %1486
      %1488 = vrot.lane.b32.xlu0 %v1475, 8
      %v1489 = vpop.permute.xlu0 %1488
      %1490 = vrot.lane.b32.xlu0 %v1477, 8
      %v1491 = vpop.permute.xlu0 %1490
      %1492 = vrot.lane.b32.xlu0 %v1479, 8
      %v1493 = vpop.permute.xlu0 %1492
      %1494 = vrot.lane.b32.xlu0 %v1481, 8
      %v1495 = vpop.permute.xlu0 %1494
      %1496 = vrot.lane.b32.xlu0 %v1483, 8
      %v1497 = vpop.permute.xlu0 %1496
      %1498 = vrot.lane.b32.xlu0 %v1482, 8
      %v1499 = vpop.permute.xlu0 %1498
      %v1508 = vrot.slane %v1465, 2
      %v1509 = vrot.slane %v1444, 2
      %v1510 = vsel %vm582, %v1508, %v1509
      %v1511 = vrot.slane %v1446, 2
      %v1512 = vsel %vm582, %v1509, %v1511
      %v1513 = vrot.slane %v1448, 2
      %v1514 = vsel %vm582, %v1511, %v1513
      %v1515 = vrot.slane %v1450, 2
      %v1516 = vsel %vm582, %v1513, %v1515
      %v1517 = vrot.slane %v1452, 2
      %v1518 = vsel %vm582, %v1515, %v1517
      %v1519 = vrot.slane %v1454, 2
      %v1520 = vsel %vm582, %v1517, %v1519
      %v1521 = vrot.slane %v1466, 2
      %v1522 = vsel %vm582, %v1519, %v1521
      %1523 = vrot.lane.b32.xlu0 %v1510, 16
      %v1524 = vpop.permute.xlu0 %1523
      %1525 = vrot.lane.b32.xlu0 %v1512, 16
      %v1526 = vpop.permute.xlu0 %1525
      %1527 = vrot.lane.b32.xlu0 %v1514, 16
      %v1528 = vpop.permute.xlu0 %1527
      %1529 = vrot.lane.b32.xlu0 %v1516, 16
      %v1530 = vpop.permute.xlu0 %1529
      %1531 = vrot.lane.b32.xlu0 %v1518, 16
      %v1532 = vpop.permute.xlu0 %1531
      %1533 = vrot.lane.b32.xlu0 %v1520, 16
      %v1534 = vpop.permute.xlu0 %1533
      %1535 = vrot.lane.b32.xlu0 %v1522, 16
      %v1536 = vpop.permute.xlu0 %1535
      %1537 = vrot.lane.b32.xlu0 %v1521, 16
      %v1538 = vpop.permute.xlu0 %1537
      %v1547 = vrot.slane %v1465, 3
      %v1548 = vrot.slane %v1444, 3
      %v1549 = vsel %vm622, %v1547, %v1548
      %v1550 = vrot.slane %v1446, 3
      %v1551 = vsel %vm622, %v1548, %v1550
      %v1552 = vrot.slane %v1448, 3
      %v1553 = vsel %vm622, %v1550, %v1552
      %v1554 = vrot.slane %v1450, 3
      %v1555 = vsel %vm622, %v1552, %v1554
      %v1556 = vrot.slane %v1452, 3
      %v1557 = vsel %vm622, %v1554, %v1556
      %v1558 = vrot.slane %v1454, 3
      %v1559 = vsel %vm622, %v1556, %v1558
      %v1560 = vrot.slane %v1466, 3
      %v1561 = vsel %vm622, %v1558, %v1560
      %1562 = vrot.lane.b32.xlu0 %v1549, 24
      %v1563 = vpop.permute.xlu0 %1562
      %1564 = vrot.lane.b32.xlu0 %v1551, 24
      %v1565 = vpop.permute.xlu0 %1564
      %1566 = vrot.lane.b32.xlu0 %v1553, 24
      %v1567 = vpop.permute.xlu0 %1566
      %1568 = vrot.lane.b32.xlu0 %v1555, 24
      %v1569 = vpop.permute.xlu0 %1568
      %1570 = vrot.lane.b32.xlu0 %v1557, 24
      %v1571 = vpop.permute.xlu0 %1570
      %1572 = vrot.lane.b32.xlu0 %v1559, 24
      %v1573 = vpop.permute.xlu0 %1572
      %1574 = vrot.lane.b32.xlu0 %v1561, 24
      %v1575 = vpop.permute.xlu0 %1574
      %1576 = vrot.lane.b32.xlu0 %v1560, 24
      %v1577 = vpop.permute.xlu0 %1576
      %v1586 = vrot.slane %v1465, 4
      %v1587 = vrot.slane %v1444, 4
      %v1588 = vsel %vm663, %v1586, %v1587
      %v1589 = vrot.slane %v1446, 4
      %v1590 = vsel %vm663, %v1587, %v1589
      %v1591 = vrot.slane %v1448, 4
      %v1592 = vsel %vm663, %v1589, %v1591
      %v1593 = vrot.slane %v1450, 4
      %v1594 = vsel %vm663, %v1591, %v1593
      %v1595 = vrot.slane %v1452, 4
      %v1596 = vsel %vm663, %v1593, %v1595
      %v1597 = vrot.slane %v1454, 4
      %v1598 = vsel %vm663, %v1595, %v1597
      %v1599 = vrot.slane %v1466, 4
      %v1600 = vsel %vm663, %v1597, %v1599
      %v1601 = vsel %vm663, %v1599, %v679
      %1602 = vrot.lane.b32.xlu0 %v1588, 32
      %v1603 = vpop.permute.xlu0 %1602
      %1604 = vrot.lane.b32.xlu0 %v1590, 32
      %v1605 = vpop.permute.xlu0 %1604
      %1606 = vrot.lane.b32.xlu0 %v1592, 32
      %v1607 = vpop.permute.xlu0 %1606
      %1608 = vrot.lane.b32.xlu0 %v1594, 32
      %v1609 = vpop.permute.xlu0 %1608
      %1610 = vrot.lane.b32.xlu0 %v1596, 32
      %v1611 = vpop.permute.xlu0 %1610
      %1612 = vrot.lane.b32.xlu0 %v1598, 32
      %v1613 = vpop.permute.xlu0 %1612
      %1614 = vrot.lane.b32.xlu0 %v1600, 32
      %v1615 = vpop.permute.xlu0 %1614
      %1616 = vrot.lane.b32.xlu0 %v1601, 32
      %v1617 = vpop.permute.xlu0 %1616
      %v1626 = vsel %vm1400, %v1465, %v1485
      %v1627 = vsel %vm1400, %v1444, %v1487
      %v1628 = vsel %vm1400, %v1446, %v1489
      %v1629 = vsel %vm1400, %v1448, %v1491
      %v1630 = vsel %vm1400, %v1450, %v1493
      %v1631 = vsel %vm1400, %v1452, %v1495
      %v1632 = vsel %vm1400, %v1454, %v1497
      %v1633 = vsel %vm1400, %v1466, %v1499
      %v1634 = vsel %vm705, %v1626, %v1524
      %v1635 = vsel %vm705, %v1627, %v1526
      %v1636 = vsel %vm705, %v1628, %v1528
      %v1637 = vsel %vm705, %v1629, %v1530
      %v1638 = vsel %vm705, %v1630, %v1532
      %v1639 = vsel %vm705, %v1631, %v1534
      %v1640 = vsel %vm705, %v1632, %v1536
      %v1641 = vsel %vm705, %v1633, %v1538
      %v1642 = vsel %vm1417, %v1634, %v1563
      %v1643 = vsel %vm1417, %v1635, %v1565
      %v1644 = vsel %vm1417, %v1636, %v1567
      %v1645 = vsel %vm1417, %v1637, %v1569
      %v1646 = vsel %vm1417, %v1638, %v1571
      %v1647 = vsel %vm1417, %v1639, %v1573
      %v1648 = vsel %vm1417, %v1640, %v1575
      %v1649 = vsel %vm1417, %v1641, %v1577
      %v1650 = vsel %vm714, %v1642, %v1603
      %v1651 = vsel %vm714, %v1643, %v1605
      %v1652 = vsel %vm714, %v1644, %v1607
      %v1653 = vsel %vm714, %v1645, %v1609
      %v1654 = vsel %vm714, %v1646, %v1611
      %v1655 = vsel %vm714, %v1647, %v1613
      %v1656 = vsel %vm714, %v1648, %v1615
      %v1657 = vsel %vm714, %v1649, %v1617
      %v1658 = vpack.c.bf16 %v1427, %v1426
      %v1659 = vpack.c.bf16 %v1429, %v1428
      %v1660 = vpack.c.bf16 %v1431, %v1430
      %v1661 = vpack.c.bf16 %v1433, %v1432
      %v1662 = vld [vmem:[%s6] sm:$0xf]
      %v1663 = vld [vmem:[%s6 + $0x4] sm:$0xf]
      %v1664 = vld [vmem:[%s6 + $0x8] sm:$0xf]
      %v1665 = vld [vmem:[%s6 + $0xc] sm:$0xf]
      %v1666 = vld [vmem:[%s6 + $0x10] sm:$0xf]
      %v1667 = vpack.c.bf16 %v1651, %v1650
      %v1668 = vpack.c.bf16 %v1653, %v1652
      %v1669 = vpack.c.bf16 %v1655, %v1654
      %v1670 = vpack.c.bf16 %v1657, %v1656
      %v1671 = vld [vmem:[%s7] sm:$0xf]
      %v1672 = vld [vmem:[%s7 + $0x4] sm:$0xf]
      %v1673 = vld [vmem:[%s7 + $0x8] sm:$0xf]
      %v1674 = vld [vmem:[%s7 + $0xc] sm:$0xf]
      %v1675 = vld [vmem:[%s7 + $0x10] sm:$0xf]
      %v1681 = vunpack.c.l.b16 %v1671
      %v1682 = vunpack.c.l.b16 %v1672
      %v1683 = vunpack.c.l.b16 %v1673
      %v1684 = vunpack.c.l.b16 %v1674
      %v1685 = vunpack.c.l.b16 %v1675
      %v1686 = vpack.c.b16 %v1682, %v1681
      %v1687 = vpack.c.b16 %v1684, %v1683
      %v1688 = vpack.c.b16 %v1685, %v1685
      %vm1691 = vcmask 326656
      %v1693 = vsel %vm1691, %v1667, 0
      %v1696 = vsel %vm1691, %v1668, 0
      %v1699 = vsel %vm1691, %v1669, 0
      %v1702 = vsel %vm1691, %v1670, 0
      %v1705 = vsel %vm663, %v1688, 0
      %1707 = vmatpush.bf16.msra.mxu0 0
      %1708 = vmatpush.bf16.msra.mxu0 0
      %1709 = vmatpush.bf16.msra.mxu0 0
      %1710 = vmatpush.bf16.msra.mxu0 0
      %1711 = vmatpush.bf16.msra.mxu0 0
      %1712 = vmatpush.bf16.msra.mxu0 %v1705
      %1713 = vmatpush.bf16.msra.mxu0 %v1687
      %1714 = vmatpush.bf16.msra.mxu0 %v1686
      %1715 = vmatmul.bf16.gmra.mxu0 %v1693
      %v1716 = vpop.f32.mrf.mxu0
      %v1717 = vadd.f32 0.0, %v1716
      %v1718 = vpop.f32.mrf.mxu0
      %v1719 = vadd.f32 0.0, %v1718
      %1720 = vmatmul.bf16.gmra.mxu0 %v1696
      %v1721 = vpop.f32.mrf.mxu0
      %v1722 = vadd.f32 0.0, %v1721
      %v1723 = vpop.f32.mrf.mxu0
      %v1724 = vadd.f32 0.0, %v1723
      %1725 = vmatmul.bf16.gmra.mxu0 %v1699
      %v1726 = vpop.f32.mrf.mxu0
      %v1727 = vadd.f32 0.0, %v1726
      %v1728 = vpop.f32.mrf.mxu0
      %v1729 = vadd.f32 0.0, %v1728
      %1730 = vmatmul.bf16.gmra.mxu0 %v1702
      %v1731 = vpop.f32.mrf.mxu0
      %v1732 = vadd.f32 0.0, %v1731
      %v1733 = vpop.f32.mrf.mxu0
      %v1734 = vadd.f32 0.0, %v1733
      %1735 = vdwg.mxu0
      %v1741 = vunpack.c.l.b16 %v1662
      %v1742 = vunpack.c.l.b16 %v1663
      %v1743 = vunpack.c.l.b16 %v1664
      %v1744 = vunpack.c.l.b16 %v1665
      %v1745 = vunpack.c.l.b16 %v1666
      %v1746 = vpack.c.b16 %v1742, %v1741
      %v1747 = vpack.c.b16 %v1744, %v1743
      %v1748 = vpack.c.b16 %v1745, %v1745
      %v1752 = vsel %vm1691, %v1658, 0
      %v1755 = vsel %vm1691, %v1659, 0
      %v1758 = vsel %vm1691, %v1660, 0
      %v1761 = vsel %vm1691, %v1661, 0
      %v1764 = vsel %vm663, %v1748, 0
      %1766 = vmatpush.bf16.msra.mxu0 0
      %1767 = vmatpush.bf16.msra.mxu0 0
      %1768 = vmatpush.bf16.msra.mxu0 0
      %1769 = vmatpush.bf16.msra.mxu0 0
      %1770 = vmatpush.bf16.msra.mxu0 0
      %1771 = vmatpush.bf16.msra.mxu0 %v1764
      %1772 = vmatpush.bf16.msra.mxu0 %v1747
      %1773 = vmatpush.bf16.msra.mxu0 %v1746
      %1774 = vmatmul.bf16.gmra.mxu0 %v1752
      %v1775 = vpop.f32.mrf.mxu0
      %v1776 = vadd.f32 %v1717, %v1775
      %v1777 = vpop.f32.mrf.mxu0
      %v1778 = vadd.f32 %v1719, %v1777
      %1779 = vmatmul.bf16.gmra.mxu0 %v1755
      %v1780 = vpop.f32.mrf.mxu0
      %v1781 = vadd.f32 %v1722, %v1780
      %v1782 = vpop.f32.mrf.mxu0
      %v1783 = vadd.f32 %v1724, %v1782
      %1784 = vmatmul.bf16.gmra.mxu0 %v1758
      %v1785 = vpop.f32.mrf.mxu0
      %v1786 = vadd.f32 %v1727, %v1785
      %v1787 = vpop.f32.mrf.mxu0
      %v1788 = vadd.f32 %v1729, %v1787
      %1789 = vmatmul.bf16.gmra.mxu0 %v1761
      %v1790 = vpop.f32.mrf.mxu0
      %v1791 = vadd.f32 %v1732, %v1790
      %v1792 = vpop.f32.mrf.mxu0
      %v1793 = vadd.f32 %v1734, %v1792
      %1794 = vdwg.mxu0
      %v1795 = vld [vmem:[%s8] sm:$0x1]
      %v1797 = vperm.slane %v1795, 0
      %v1799 = vadd.f32 %v1776, %v1797
      %v1800 = vadd.f32 %v1778, %v1797
      %v1801 = vadd.f32 %v1781, %v1797
      %v1802 = vadd.f32 %v1783, %v1797
      %v1803 = vadd.f32 %v1786, %v1797
      %v1804 = vadd.f32 %v1788, %v1797
      %v1805 = vadd.f32 %v1791, %v1797
      %v1806 = vadd.f32 %v1793, %v1797
      %vm1807 = vcmp.ge.f32.partialorder %v1799, 0.0
      %vm1808 = vcmp.ge.f32.partialorder %v1800, 0.0
      %vm1809 = vcmp.ge.f32.partialorder %v1801, 0.0
      %vm1810 = vcmp.ge.f32.partialorder %v1802, 0.0
      %vm1811 = vcmp.ge.f32.partialorder %v1803, 0.0
      %vm1812 = vcmp.ge.f32.partialorder %v1804, 0.0
      %vm1813 = vcmp.ge.f32.partialorder %v1805, 0.0
      %vm1814 = vcmp.ge.f32.partialorder %v1806, 0.0
      %v1815 = vmul.f32 %v1799, 0.1
      %v1816 = vmul.f32 %v1800, 0.1
      %v1817 = vmul.f32 %v1801, 0.1
      %v1818 = vmul.f32 %v1802, 0.1
      %v1819 = vmul.f32 %v1803, 0.1
      %v1820 = vmul.f32 %v1804, 0.1
      %v1821 = vmul.f32 %v1805, 0.1
      %v1822 = vmul.f32 %v1806, 0.1
      %v1823 = vsel %vm1807, %v1799, %v1815
      %v1824 = vsel %vm1808, %v1800, %v1816
      %v1825 = vsel %vm1809, %v1801, %v1817
      %v1826 = vsel %vm1810, %v1802, %v1818
      %v1827 = vsel %vm1811, %v1803, %v1819
      %v1828 = vsel %vm1812, %v1804, %v1820
      %v1829 = vsel %vm1813, %v1805, %v1821
      %v1830 = vsel %vm1814, %v1806, %v1822
      %v1831 = vpack.c.bf16 %v1823, %v1823
      %v1832 = vpack.c.bf16 %v1824, %v1824
      %v1833 = vpack.c.bf16 %v1825, %v1825
      %v1834 = vpack.c.bf16 %v1826, %v1826
      %v1835 = vpack.c.bf16 %v1827, %v1827
      %v1836 = vpack.c.bf16 %v1828, %v1828
      %v1837 = vpack.c.bf16 %v1829, %v1829
      %v1838 = vpack.c.bf16 %v1830, %v1830
      %vm1839 = vcmask 60416
      %1840 = vst.msk [vmem:[%s352] sm:$0xf] %vm1839, %v1831
      %1841 = vst.msk [vmem:[%s352 + $0x4] sm:$0xf] %vm1839, %v1832
      %1842 = vst.msk [vmem:[%s352 + $0x8] sm:$0xf] %vm1839, %v1833
      %1843 = vst.msk [vmem:[%s352 + $0xc] sm:$0xf] %vm1839, %v1834
      %1844 = vst.msk [vmem:[%s352 + $0x10] sm:$0xf] %vm1839, %v1835
      %1845 = vst.msk [vmem:[%s352 + $0x14] sm:$0xf] %vm1839, %v1836
      %1846 = vst.msk [vmem:[%s352 + $0x18] sm:$0xf] %vm1839, %v1837
      %vm1847 = vcmask 59392
      %vm1848 = vsmask.f32 2304
      %vm1849 = vmand %vm1847, %vm1848
      %v1850 = vld [vmem:[%s352 + $0x1c] sm:$0x7]
      %v1851 = vsel %vm1849, %v1838, %v1850
      %1852 = vst [vmem:[%s352 + $0x1c] sm:$0x7] %v1851
      %p1853 = scmp.lt.s32.totalorder %s20, 1
      %s1854 = scalar_select %p1853, %s20, 1
      %s1855 = smul.addr %s1854, 8
      %s1856 = smul.addr %s1855, 4
      %s1857 = scalar_lea.vmem %s9, %s1856
      // Predicated region
      $region57: #{wave_unet_forward.10} parent=55 // pred_check
        %p1858 = pneg %p237
      $region58: #{wave_unet_forward.10} parent=55 // pred_check_branch
        %1860 = sbr.rel (%p1858) target = $region60
      $region59: #{wave_unet_forward.10} parent=55 // pred_region
        _
      $region60: #{wave_unet_forward.10} parent=55 // pred_fallthru
        _
    $region56: #{wave_unet_forward.10} parent=5 // pred_fallthru
      _
    %p1861 = scmp.le.s32.totalorder 2, %s15
    // Predicated region
    $region61: #{wave_unet_forward.10} parent=5 // pred_check
      %p1862 = pneg %p1861
    $region62: #{wave_unet_forward.10} parent=5 // pred_check_branch
      %1864 = sbr.rel (%p1862) target = $region64
    $region63: #{wave_unet_forward.10} parent=5 // pred_region
      %s1865 = ssub.s32 %s15, 2
      // Predicated region
      $region65: #{wave_unet_forward.10} parent=63 // pred_check
        %p1866 = pneg %p243
      $region66: #{wave_unet_forward.10} parent=63 // pred_check_branch
        %1868 = sbr.rel (%p1866) target = $region68
      $region67: #{wave_unet_forward.10} parent=63 // pred_region
        %p1869 = scmp.lt.s32.totalorder %s21, 1
        %s1870 = scalar_select %p1869, %s21, 1
        %s1871 = smul.addr %s1870, 8
        %s1872 = smul.addr %s1871, 4
        %s1873 = scalar_lea.vmem %s9, %s1872
      $region68: #{wave_unet_forward.10} parent=63 // pred_fallthru
        _
    $region64: #{wave_unet_forward.10} parent=5 // pred_fallthru
      _
  $region6: #{wave_unet_forward.10} parent=0 // loop_footer
    %s19 = sadd.s32 1, %s15
  $region7: #{wave_unet_forward.10} parent=0 // loop_footer_branch
    %14 = sbr.rel target = $region3
  $region8: #{wave_unet_forward.10} parent=0 // loop_exit
    _

</llo_original>
